<compile_context>
chip_gen: v6e
topology: v6e:2x2x1
jax: 0.10.0
libtpu: 0.0.40
codegen_flags: <defaults>
</compile_context>

<pallas_src>
import functools

import jax
import jax.numpy as jnp
import numpy as np
from jax.experimental import pallas as pl
from jax.experimental.pallas import tpu as pltpu


def _decoder_kernel(high_ref, diff_ref,
                    w1_ref, b1_ref,
                    w2_ref, b2_ref,
                    w3_ref, b3_ref,
                    out_ref, *, H, W, cps):
    HW = H * W
    cin_p, cm_p, co_p = cps

    # Flattened-pixel index helpers (hoisted; reused by all three layers).
    pos = jax.lax.broadcasted_iota(jnp.int32, (HW, 1), 0)
    wpos = pos % W
    is_left = wpos == 0            # column 0  -> no (w-1) neighbour
    is_right = wpos == W - 1       # column W-1 -> no (w+1) neighbour
    is_top = pos < W               # row 0     -> no (h-1) neighbour
    is_bot = pos >= HW - W         # row H-1   -> no (h+1) neighbour

    def conv3x3_bias_relu(x, w_ref, b_ref, cp_in):
        # kw taps: x[h, w-1], x[h, w], x[h, w+1] via XLU rolls along the
        # flattened sublane axis, zero-filled at the image w-boundary.
        left = jnp.where(is_left, 0.0, pltpu.roll(x, shift=1, axis=0))
        right = jnp.where(is_right, 0.0, pltpu.roll(x, shift=HW - 1, axis=0))
        taps = (left, x, right)

        # Per-kh partial sums: 3 MXU matmuls each (K = cp_in), f32 accumulate.
        def psum(kh):
            acc = jnp.dot(taps[0], w_ref[pl.ds(3 * kh * cp_in, cp_in), :],
                          preferred_element_type=jnp.float32)
            for kw in (1, 2):
                acc += jnp.dot(
                    taps[kw],
                    w_ref[pl.ds((3 * kh + kw) * cp_in, cp_in), :],
                    preferred_element_type=jnp.float32)
            return acc

        p0, p1, p2 = psum(0), psum(1), psum(2)

        # kh taps: shift the per-kh outputs by +/- one image row (a roll by
        # W, sublane-aligned for W % 8 == 0) and zero the out-of-image rows.
        y = (p1
             + jnp.where(is_top, 0.0, pltpu.roll(p0, shift=W, axis=0))
             + jnp.where(is_bot, 0.0, pltpu.roll(p2, shift=HW - W, axis=0)))

        # BN scale is pre-folded into w; only bias + ReLU remain (VPU).
        return jnp.maximum(y + b_ref[...], 0.0)

    high = high_ref[0]                       # (H*W, cin_p), lane = channels
    diff = diff_ref[0]
    x = jax.nn.sigmoid(diff) * high + high   # gating: EUP sigmoid + VPU fma

    x = conv3x3_bias_relu(x, w1_ref, b1_ref, cin_p)
    x = conv3x3_bias_relu(x, w2_ref, b2_ref, cm_p)
    x = conv3x3_bias_relu(x, w3_ref, b3_ref, cm_p)

    out_ref[0] = x.astype(out_ref.dtype)     # lane-dense (H*W, co_p) store


def _round_up(x, m):
    return (x + m - 1) // m * m


def decoder_forward(high_nchw, diff_nchw, params):
    """Decoder forward. NCHW in / NCHW out (PyTorch layout adapter).

    The Pallas kernel itself works on lane-dense (N, H*W, C) slabs; callers
    that already hold NHWC activations should feed those directly and skip
    the transposes below.
    """
    N, cin, H, W = high_nchw.shape
    cm = params["w1"].shape[-1]
    co = params["w3"].shape[-1]

    cin_p = _round_up(cin, 128)
    cm_p = _round_up(cm, 128)
    co_p = _round_up(co, 128)
    HW = H * W

    def to_slab(x_nchw, cp):
        c = x_nchw.shape[1]
        x = jnp.transpose(x_nchw, (0, 2, 3, 1)).reshape(N, HW, c)
        return jnp.pad(x.astype(jnp.float32), ((0, 0), (0, 0), (0, cp - c)))

    def prep_w(w_hwio, scale, cp_in, cp_out):
        # Fold eval-mode BN scale (gamma/sqrt(var+eps)) into the conv weight.
        kh, kw, ci, cc = w_hwio.shape
        w = (w_hwio.astype(jnp.float32)
             * scale.astype(jnp.float32).reshape(1, 1, 1, cc))
        wp = jnp.pad(w, ((0, 0), (0, 0), (0, cp_in - ci), (0, cp_out - cc)))
        return wp.reshape(kh * kw * cp_in, cp_out)  # rows ordered (kh,kw,cin)

    def prep_b(v, cp_out):
        return jnp.pad(v.astype(jnp.float32).reshape(1, -1),
                       ((0, 0), (0, cp_out - v.size)))

    high = to_slab(high_nchw, cin_p)
    diff = to_slab(diff_nchw, cin_p)

    w1 = prep_w(params["w1"], params["s1"], cin_p, cm_p)
    w2 = prep_w(params["w2"], params["s2"], cm_p, cm_p)
    w3 = prep_w(params["w3"], params["s3"], cm_p, co_p)
    b1 = prep_b(params["b1"], cm_p)
    b2 = prep_b(params["b2"], cm_p)
    b3 = prep_b(params["b3"], co_p)

    kern = functools.partial(_decoder_kernel, H=H, W=W,
                             cps=(cin_p, cm_p, co_p))
    const = lambda b: (0, 0)

    out = pl.pallas_call(
        kern,
        out_shape=jax.ShapeDtypeStruct((N, HW, co_p), jnp.float32),
        grid=(N,),
        in_specs=[
            pl.BlockSpec((1, HW, cin_p), lambda b: (b, 0, 0)),
            pl.BlockSpec((1, HW, cin_p), lambda b: (b, 0, 0)),
            pl.BlockSpec((9 * cin_p, cm_p), const),
            pl.BlockSpec((1, cm_p), const),
            pl.BlockSpec((9 * cm_p, cm_p), const),
            pl.BlockSpec((1, cm_p), const),
            pl.BlockSpec((9 * cm_p, co_p), const),
            pl.BlockSpec((1, co_p), const),
        ],
        out_specs=pl.BlockSpec((1, HW, co_p), lambda b: (b, 0, 0)),
        compiler_params=pltpu.CompilerParams(
            dimension_semantics=("parallel",),
            vmem_limit_bytes=48 * 1024 * 1024),
    )(high, diff, w1, b1, w2, b2, w3, b3)

    # Strip channel padding; adapt back to the PyTorch NCHW interface.
    out = out[:, :, :co].reshape(N, H, W, co)
    return jnp.transpose(out, (0, 3, 1, 2))


def make_params(key, high_channel, middle_channel, out_channel, eps=1e-5):
    """Synthetic conv weights (HWIO, bias=False) + eval-mode folded BN."""
    ks = jax.random.split(key, 9)

    def bn_fold(kg, kb, c):
        gamma = 1.0 + 0.1 * jax.random.normal(kg, (c,), jnp.float32)
        beta = 0.1 * jax.random.normal(kb, (c,), jnp.float32)
        rmean = jnp.zeros((c,), jnp.float32)   # running stats (eval mode)
        rvar = jnp.ones((c,), jnp.float32)
        s = gamma / jnp.sqrt(rvar + eps)
        return s, beta - rmean * s

    w1 = 0.1 * jax.random.normal(ks[0], (3, 3, high_channel, middle_channel),
                                 jnp.float32)
    w2 = 0.1 * jax.random.normal(ks[1], (3, 3, middle_channel, middle_channel),
                                 jnp.float32)
    w3 = 0.1 * jax.random.normal(ks[2], (3, 3, middle_channel, out_channel),
                                 jnp.float32)
    s1, b1 = bn_fold(ks[3], ks[4], middle_channel)
    s2, b2 = bn_fold(ks[5], ks[6], middle_channel)
    s3, b3 = bn_fold(ks[7], ks[8], out_channel)
    return {"w1": w1, "s1": s1, "b1": b1,
            "w2": w2, "s2": s2, "b2": b2,
            "w3": w3, "s3": s3, "b3": b3}


def _reference(high_nchw, diff_nchw, params):
    """Plain-JAX reference of the same forward (for correctness check)."""
    x = jax.nn.sigmoid(diff_nchw) * high_nchw + high_nchw
    x = jnp.transpose(x, (0, 2, 3, 1))

    def layer(x, w, s, b):
        y = jax.lax.conv_general_dilated(
            x, w, window_strides=(1, 1), padding="SAME",
            dimension_numbers=("NHWC", "HWIO", "NHWC"))
        return jnp.maximum(y * s.reshape(1, 1, 1, -1) + b.reshape(1, 1, 1, -1),
                           0.0)

    x = layer(x, params["w1"], params["s1"], params["b1"])
    x = layer(x, params["w2"], params["s2"], params["b2"])
    x = layer(x, params["w3"], params["s3"], params["b3"])
    return jnp.transpose(x, (0, 3, 1, 2))


if __name__ == "__main__":
    key = jax.random.PRNGKey(0)
    k_high, k_diff, k_par = jax.random.split(key, 3)

    # Decoder(high_channel=4, middle_channel=8, out_channel=8, num_classes=...)
    # num_classes is unused in forward().
    N, H, W = 2, 16, 16
    high_channel, middle_channel, out_channel = 4, 8, 8

    high = jax.random.normal(k_high, (N, high_channel, H, W), jnp.float32)
    diff = jax.random.normal(k_diff, (N, high_channel, H, W), jnp.float32)
    params = make_params(k_par, high_channel, middle_channel, out_channel)

    out = decoder_forward(high, diff, params)
    jax.block_until_ready(out)

    ref = _reference(high, diff, params)
    np.testing.assert_allclose(np.asarray(out), np.asarray(ref),
                               rtol=1e-3, atol=1e-3)
    assert out.shape == (N, out_channel, H, W)
    print("KERNEL_OK")
</pallas_src>

<mosaic_0001>
module attributes {stable_mosaic.version = 11 : i64} {
  func.func @_decoder_kernel(%arg0: i32, %arg1: memref<1x256x128xf32, #tpu.memory_space<vmem>>, %arg2: memref<1x256x128xf32, #tpu.memory_space<vmem>>, %arg3: memref<1152x128xf32, #tpu.memory_space<vmem>>, %arg4: memref<1x128xf32, #tpu.memory_space<vmem>>, %arg5: memref<1152x128xf32, #tpu.memory_space<vmem>>, %arg6: memref<1x128xf32, #tpu.memory_space<vmem>>, %arg7: memref<1152x128xf32, #tpu.memory_space<vmem>>, %arg8: memref<1x128xf32, #tpu.memory_space<vmem>>, %arg9: memref<1x256x128xf32, #tpu.memory_space<vmem>>) attributes {dimension_semantics = [#tpu.dimension_semantics<parallel>], iteration_bounds = array<i64: 2>, scalar_prefetch = 0 : i64, scratch_operands = 0 : i64, tpu.core_type = #tpu.core_type<tc>, window_params = [{transform_indices = @transform_0, window_bounds = array<i64: 1, 256, 128>}, {transform_indices = @transform_1, window_bounds = array<i64: 1, 256, 128>}, {pipeline_mode = #tpu.pipeline_mode<synchronous>, transform_indices = @transform_2, window_bounds = array<i64: 1152, 128>}, {pipeline_mode = #tpu.pipeline_mode<synchronous>, transform_indices = @transform_3, window_bounds = array<i64: 1, 128>}, {pipeline_mode = #tpu.pipeline_mode<synchronous>, transform_indices = @transform_4, window_bounds = array<i64: 1152, 128>}, {pipeline_mode = #tpu.pipeline_mode<synchronous>, transform_indices = @transform_5, window_bounds = array<i64: 1, 128>}, {pipeline_mode = #tpu.pipeline_mode<synchronous>, transform_indices = @transform_6, window_bounds = array<i64: 1152, 128>}, {pipeline_mode = #tpu.pipeline_mode<synchronous>, transform_indices = @transform_7, window_bounds = array<i64: 1, 128>}, {transform_indices = @transform_8, window_bounds = array<i64: 1, 256, 128>}]} {
    %0 = tpu.iota {dimensions = array<i32: 0>} : vector<256x1xi32>
    %c16_i32 = arith.constant 16 : i32
    %c0_i32 = arith.constant 0 : i32
    %1 = arith.cmpi eq, %c16_i32, %c0_i32 : i32
    %c1_i32 = arith.constant 1 : i32
    %2 = arith.select %1, %c1_i32, %c16_i32 : i32
    %3 = vector.broadcast %2 : i32 to vector<256x1xi32>
    %4 = arith.remsi %0, %3 : vector<256x1xi32>
    %c0_i32_0 = arith.constant 0 : i32
    %5 = vector.broadcast %c0_i32_0 : i32 to vector<256x1xi32>
    %6 = arith.cmpi ne, %4, %5 : vector<256x1xi32>
    %c0_i32_1 = arith.constant 0 : i32
    %7 = vector.broadcast %c0_i32_1 : i32 to vector<256x1xi32>
    %8 = arith.cmpi slt, %4, %7 : vector<256x1xi32>
    %c0_i32_2 = arith.constant 0 : i32
    %9 = arith.cmpi slt, %2, %c0_i32_2 : i32
    %10 = vector.broadcast %9 : i1 to vector<256x1xi1>
    %11 = vector.broadcast %10 : vector<256x1xi1> to vector<256x1xi1>
    %12 = arith.xori %8, %11 : vector<256x1xi1>
    %13 = arith.andi %12, %6 : vector<256x1xi1>
    %14 = vector.broadcast %2 : i32 to vector<256x1xi32>
    %15 = arith.addi %4, %14 : vector<256x1xi32>
    %16 = arith.select %13, %15, %4 : vector<256x1xi1>, vector<256x1xi32>
    %c0_i32_3 = arith.constant 0 : i32
    %17 = vector.broadcast %c0_i32_3 : i32 to vector<256x1xi32>
    %18 = arith.cmpi eq, %16, %17 : vector<256x1xi32>
    %c15_i32 = arith.constant 15 : i32
    %19 = vector.broadcast %c15_i32 : i32 to vector<256x1xi32>
    %20 = arith.cmpi eq, %16, %19 : vector<256x1xi32>
    %c16_i32_4 = arith.constant 16 : i32
    %21 = vector.broadcast %c16_i32_4 : i32 to vector<256x1xi32>
    %22 = arith.cmpi slt, %0, %21 : vector<256x1xi32>
    %c240_i32 = arith.constant 240 : i32
    %23 = vector.broadcast %c240_i32 : i32 to vector<256x1xi32>
    %24 = arith.cmpi sge, %0, %23 : vector<256x1xi32>
    %c0 = arith.constant 0 : index
    %c0_5 = arith.constant 0 : index
    %c0_6 = arith.constant 0 : index
    %25 = vector.load %arg1[%c0, %c0_5, %c0_6] : memref<1x256x128xf32, #tpu.memory_space<vmem>>, vector<1x256x128xf32>
    %26 = vector.shape_cast %25 : vector<1x256x128xf32> to vector<256x128xf32>
    %c0_7 = arith.constant 0 : index
    %c0_8 = arith.constant 0 : index
    %c0_9 = arith.constant 0 : index
    %27 = vector.load %arg2[%c0_7, %c0_8, %c0_9] : memref<1x256x128xf32, #tpu.memory_space<vmem>>, vector<1x256x128xf32>
    %28 = vector.shape_cast %27 : vector<1x256x128xf32> to vector<256x128xf32>
    %29 = arith.negf %28 : vector<256x128xf32>
    %30 = math.exp %29 : vector<256x128xf32>
    %cst = arith.constant 1.000000e+00 : f32
    %31 = vector.broadcast %cst : f32 to vector<256x128xf32>
    %32 = arith.addf %31, %30 : vector<256x128xf32>
    %33 = arith.divf %31, %32 : vector<256x128xf32>
    %34 = arith.mulf %33, %26 : vector<256x128xf32>
    %35 = arith.addf %34, %26 : vector<256x128xf32>
    %c1_i32_10 = arith.constant 1 : i32
    %36 = tpu.dynamic_rotate %35 by %c1_i32_10 dim 0 : vector<256x128xf32>, i32 -> vector<256x128xf32>
    %cst_11 = arith.constant 0.000000e+00 : f32
    %37 = vector.shape_cast %18 : vector<256x1xi1> to vector<256x1xi1>
    %38 = vector.broadcast %37 : vector<256x1xi1> to vector<256x128xi1>
    %39 = vector.broadcast %cst_11 : f32 to vector<256x128xf32>
    %40 = arith.select %38, %39, %36 : vector<256x128xi1>, vector<256x128xf32>
    %c255_i32 = arith.constant 255 : i32
    %41 = tpu.dynamic_rotate %35 by %c255_i32 dim 0 : vector<256x128xf32>, i32 -> vector<256x128xf32>
    %cst_12 = arith.constant 0.000000e+00 : f32
    %42 = vector.shape_cast %20 : vector<256x1xi1> to vector<256x1xi1>
    %43 = vector.broadcast %42 : vector<256x1xi1> to vector<256x128xi1>
    %44 = vector.broadcast %cst_12 : f32 to vector<256x128xf32>
    %45 = arith.select %43, %44, %41 : vector<256x128xi1>, vector<256x128xf32>
    %c0_13 = arith.constant 0 : index
    %c0_14 = arith.constant 0 : index
    %46 = vector.load %arg3[%c0_13, %c0_14] : memref<1152x128xf32, #tpu.memory_space<vmem>>, vector<128x128xf32>
    %cst_15 = arith.constant dense<0.000000e+00> : vector<256x128xf32>
    %47 = tpu.matmul %40, %46, %cst_15 {dimension_numbers = #tpu.dot_dimension_numbers<[1], [0], [0], [1], [0, 0, 1, 1], [], []>} : vector<256x128xf32>, vector<128x128xf32>, vector<256x128xf32> -> vector<256x128xf32>
    %c128 = arith.constant 128 : index
    %c0_16 = arith.constant 0 : index
    %48 = vector.load %arg3[%c128, %c0_16] : memref<1152x128xf32, #tpu.memory_space<vmem>>, vector<128x128xf32>
    %cst_17 = arith.constant dense<0.000000e+00> : vector<256x128xf32>
    %49 = tpu.matmul %35, %48, %cst_17 {dimension_numbers = #tpu.dot_dimension_numbers<[1], [0], [0], [1], [0, 0, 1, 1], [], []>} : vector<256x128xf32>, vector<128x128xf32>, vector<256x128xf32> -> vector<256x128xf32>
    %50 = arith.addf %47, %49 : vector<256x128xf32>
    %c256 = arith.constant 256 : index
    %c0_18 = arith.constant 0 : index
    %51 = vector.load %arg3[%c256, %c0_18] : memref<1152x128xf32, #tpu.memory_space<vmem>>, vector<128x128xf32>
    %cst_19 = arith.constant dense<0.000000e+00> : vector<256x128xf32>
    %52 = tpu.matmul %45, %51, %cst_19 {dimension_numbers = #tpu.dot_dimension_numbers<[1], [0], [0], [1], [0, 0, 1, 1], [], []>} : vector<256x128xf32>, vector<128x128xf32>, vector<256x128xf32> -> vector<256x128xf32>
    %53 = arith.addf %50, %52 : vector<256x128xf32>
    %c384 = arith.constant 384 : index
    %c0_20 = arith.constant 0 : index
    %54 = vector.load %arg3[%c384, %c0_20] : memref<1152x128xf32, #tpu.memory_space<vmem>>, vector<128x128xf32>
    %cst_21 = arith.constant dense<0.000000e+00> : vector<256x128xf32>
    %55 = tpu.matmul %40, %54, %cst_21 {dimension_numbers = #tpu.dot_dimension_numbers<[1], [0], [0], [1], [0, 0, 1, 1], [], []>} : vector<256x128xf32>, vector<128x128xf32>, vector<256x128xf32> -> vector<256x128xf32>
    %c512 = arith.constant 512 : index
    %c0_22 = arith.constant 0 : index
    %56 = vector.load %arg3[%c512, %c0_22] : memref<1152x128xf32, #tpu.memory_space<vmem>>, vector<128x128xf32>
    %cst_23 = arith.constant dense<0.000000e+00> : vector<256x128xf32>
    %57 = tpu.matmul %35, %56, %cst_23 {dimension_numbers = #tpu.dot_dimension_numbers<[1], [0], [0], [1], [0, 0, 1, 1], [], []>} : vector<256x128xf32>, vector<128x128xf32>, vector<256x128xf32> -> vector<256x128xf32>
    %58 = arith.addf %55, %57 : vector<256x128xf32>
    %c640 = arith.constant 640 : index
    %c0_24 = arith.constant 0 : index
    %59 = vector.load %arg3[%c640, %c0_24] : memref<1152x128xf32, #tpu.memory_space<vmem>>, vector<128x128xf32>
    %cst_25 = arith.constant dense<0.000000e+00> : vector<256x128xf32>
    %60 = tpu.matmul %45, %59, %cst_25 {dimension_numbers = #tpu.dot_dimension_numbers<[1], [0], [0], [1], [0, 0, 1, 1], [], []>} : vector<256x128xf32>, vector<128x128xf32>, vector<256x128xf32> -> vector<256x128xf32>
    %61 = arith.addf %58, %60 : vector<256x128xf32>
    %c768 = arith.constant 768 : index
    %c0_26 = arith.constant 0 : index
    %62 = vector.load %arg3[%c768, %c0_26] : memref<1152x128xf32, #tpu.memory_space<vmem>>, vector<128x128xf32>
    %cst_27 = arith.constant dense<0.000000e+00> : vector<256x128xf32>
    %63 = tpu.matmul %40, %62, %cst_27 {dimension_numbers = #tpu.dot_dimension_numbers<[1], [0], [0], [1], [0, 0, 1, 1], [], []>} : vector<256x128xf32>, vector<128x128xf32>, vector<256x128xf32> -> vector<256x128xf32>
    %c896 = arith.constant 896 : index
    %c0_28 = arith.constant 0 : index
    %64 = vector.load %arg3[%c896, %c0_28] : memref<1152x128xf32, #tpu.memory_space<vmem>>, vector<128x128xf32>
    %cst_29 = arith.constant dense<0.000000e+00> : vector<256x128xf32>
    %65 = tpu.matmul %35, %64, %cst_29 {dimension_numbers = #tpu.dot_dimension_numbers<[1], [0], [0], [1], [0, 0, 1, 1], [], []>} : vector<256x128xf32>, vector<128x128xf32>, vector<256x128xf32> -> vector<256x128xf32>
    %66 = arith.addf %63, %65 : vector<256x128xf32>
    %c1024 = arith.constant 1024 : index
    %c0_30 = arith.constant 0 : index
    %67 = vector.load %arg3[%c1024, %c0_30] : memref<1152x128xf32, #tpu.memory_space<vmem>>, vector<128x128xf32>
    %cst_31 = arith.constant dense<0.000000e+00> : vector<256x128xf32>
    %68 = tpu.matmul %45, %67, %cst_31 {dimension_numbers = #tpu.dot_dimension_numbers<[1], [0], [0], [1], [0, 0, 1, 1], [], []>} : vector<256x128xf32>, vector<128x128xf32>, vector<256x128xf32> -> vector<256x128xf32>
    %69 = arith.addf %66, %68 : vector<256x128xf32>
    %c16_i32_32 = arith.constant 16 : i32
    %70 = tpu.dynamic_rotate %53 by %c16_i32_32 dim 0 : vector<256x128xf32>, i32 -> vector<256x128xf32>
    %cst_33 = arith.constant 0.000000e+00 : f32
    %71 = vector.shape_cast %22 : vector<256x1xi1> to vector<256x1xi1>
    %72 = vector.broadcast %71 : vector<256x1xi1> to vector<256x128xi1>
    %73 = vector.broadcast %cst_33 : f32 to vector<256x128xf32>
    %74 = arith.select %72, %73, %70 : vector<256x128xi1>, vector<256x128xf32>
    %75 = arith.addf %61, %74 : vector<256x128xf32>
    %c240_i32_34 = arith.constant 240 : i32
    %76 = tpu.dynamic_rotate %69 by %c240_i32_34 dim 0 : vector<256x128xf32>, i32 -> vector<256x128xf32>
    %cst_35 = arith.constant 0.000000e+00 : f32
    %77 = vector.shape_cast %24 : vector<256x1xi1> to vector<256x1xi1>
    %78 = vector.broadcast %77 : vector<256x1xi1> to vector<256x128xi1>
    %79 = vector.broadcast %cst_35 : f32 to vector<256x128xf32>
    %80 = arith.select %78, %79, %76 : vector<256x128xi1>, vector<256x128xf32>
    %81 = arith.addf %75, %80 : vector<256x128xf32>
    %c0_36 = arith.constant 0 : index
    %c0_37 = arith.constant 0 : index
    %82 = vector.load %arg4[%c0_36, %c0_37] : memref<1x128xf32, #tpu.memory_space<vmem>>, vector<1x128xf32>
    %83 = vector.broadcast %82 : vector<1x128xf32> to vector<256x128xf32>
    %84 = arith.addf %81, %83 : vector<256x128xf32>
    %cst_38 = arith.constant 0.000000e+00 : f32
    %85 = vector.broadcast %cst_38 : f32 to vector<256x128xf32>
    %86 = arith.maximumf %84, %85 : vector<256x128xf32>
    %c1_i32_39 = arith.constant 1 : i32
    %87 = tpu.dynamic_rotate %86 by %c1_i32_39 dim 0 : vector<256x128xf32>, i32 -> vector<256x128xf32>
    %cst_40 = arith.constant 0.000000e+00 : f32
    %88 = vector.shape_cast %18 : vector<256x1xi1> to vector<256x1xi1>
    %89 = vector.broadcast %88 : vector<256x1xi1> to vector<256x128xi1>
    %90 = vector.broadcast %cst_40 : f32 to vector<256x128xf32>
    %91 = arith.select %89, %90, %87 : vector<256x128xi1>, vector<256x128xf32>
    %c255_i32_41 = arith.constant 255 : i32
    %92 = tpu.dynamic_rotate %86 by %c255_i32_41 dim 0 : vector<256x128xf32>, i32 -> vector<256x128xf32>
    %cst_42 = arith.constant 0.000000e+00 : f32
    %93 = vector.shape_cast %20 : vector<256x1xi1> to vector<256x1xi1>
    %94 = vector.broadcast %93 : vector<256x1xi1> to vector<256x128xi1>
    %95 = vector.broadcast %cst_42 : f32 to vector<256x128xf32>
    %96 = arith.select %94, %95, %92 : vector<256x128xi1>, vector<256x128xf32>
    %c0_43 = arith.constant 0 : index
    %c0_44 = arith.constant 0 : index
    %97 = vector.load %arg5[%c0_43, %c0_44] : memref<1152x128xf32, #tpu.memory_space<vmem>>, vector<128x128xf32>
    %cst_45 = arith.constant dense<0.000000e+00> : vector<256x128xf32>
    %98 = tpu.matmul %91, %97, %cst_45 {dimension_numbers = #tpu.dot_dimension_numbers<[1], [0], [0], [1], [0, 0, 1, 1], [], []>} : vector<256x128xf32>, vector<128x128xf32>, vector<256x128xf32> -> vector<256x128xf32>
    %c128_46 = arith.constant 128 : index
    %c0_47 = arith.constant 0 : index
    %99 = vector.load %arg5[%c128_46, %c0_47] : memref<1152x128xf32, #tpu.memory_space<vmem>>, vector<128x128xf32>
    %cst_48 = arith.constant dense<0.000000e+00> : vector<256x128xf32>
    %100 = tpu.matmul %86, %99, %cst_48 {dimension_numbers = #tpu.dot_dimension_numbers<[1], [0], [0], [1], [0, 0, 1, 1], [], []>} : vector<256x128xf32>, vector<128x128xf32>, vector<256x128xf32> -> vector<256x128xf32>
    %101 = arith.addf %98, %100 : vector<256x128xf32>
    %c256_49 = arith.constant 256 : index
    %c0_50 = arith.constant 0 : index
    %102 = vector.load %arg5[%c256_49, %c0_50] : memref<1152x128xf32, #tpu.memory_space<vmem>>, vector<128x128xf32>
    %cst_51 = arith.constant dense<0.000000e+00> : vector<256x128xf32>
    %103 = tpu.matmul %96, %102, %cst_51 {dimension_numbers = #tpu.dot_dimension_numbers<[1], [0], [0], [1], [0, 0, 1, 1], [], []>} : vector<256x128xf32>, vector<128x128xf32>, vector<256x128xf32> -> vector<256x128xf32>
    %104 = arith.addf %101, %103 : vector<256x128xf32>
    %c384_52 = arith.constant 384 : index
    %c0_53 = arith.constant 0 : index
    %105 = vector.load %arg5[%c384_52, %c0_53] : memref<1152x128xf32, #tpu.memory_space<vmem>>, vector<128x128xf32>
    %cst_54 = arith.constant dense<0.000000e+00> : vector<256x128xf32>
    %106 = tpu.matmul %91, %105, %cst_54 {dimension_numbers = #tpu.dot_dimension_numbers<[1], [0], [0], [1], [0, 0, 1, 1], [], []>} : vector<256x128xf32>, vector<128x128xf32>, vector<256x128xf32> -> vector<256x128xf32>
    %c512_55 = arith.constant 512 : index
    %c0_56 = arith.constant 0 : index
    %107 = vector.load %arg5[%c512_55, %c0_56] : memref<1152x128xf32, #tpu.memory_space<vmem>>, vector<128x128xf32>
    %cst_57 = arith.constant dense<0.000000e+00> : vector<256x128xf32>
    %108 = tpu.matmul %86, %107, %cst_57 {dimension_numbers = #tpu.dot_dimension_numbers<[1], [0], [0], [1], [0, 0, 1, 1], [], []>} : vector<256x128xf32>, vector<128x128xf32>, vector<256x128xf32> -> vector<256x128xf32>
    %109 = arith.addf %106, %108 : vector<256x128xf32>
    %c640_58 = arith.constant 640 : index
    %c0_59 = arith.constant 0 : index
    %110 = vector.load %arg5[%c640_58, %c0_59] : memref<1152x128xf32, #tpu.memory_space<vmem>>, vector<128x128xf32>
    %cst_60 = arith.constant dense<0.000000e+00> : vector<256x128xf32>
    %111 = tpu.matmul %96, %110, %cst_60 {dimension_numbers = #tpu.dot_dimension_numbers<[1], [0], [0], [1], [0, 0, 1, 1], [], []>} : vector<256x128xf32>, vector<128x128xf32>, vector<256x128xf32> -> vector<256x128xf32>
    %112 = arith.addf %109, %111 : vector<256x128xf32>
    %c768_61 = arith.constant 768 : index
    %c0_62 = arith.constant 0 : index
    %113 = vector.load %arg5[%c768_61, %c0_62] : memref<1152x128xf32, #tpu.memory_space<vmem>>, vector<128x128xf32>
    %cst_63 = arith.constant dense<0.000000e+00> : vector<256x128xf32>
    %114 = tpu.matmul %91, %113, %cst_63 {dimension_numbers = #tpu.dot_dimension_numbers<[1], [0], [0], [1], [0, 0, 1, 1], [], []>} : vector<256x128xf32>, vector<128x128xf32>, vector<256x128xf32> -> vector<256x128xf32>
    %c896_64 = arith.constant 896 : index
    %c0_65 = arith.constant 0 : index
    %115 = vector.load %arg5[%c896_64, %c0_65] : memref<1152x128xf32, #tpu.memory_space<vmem>>, vector<128x128xf32>
    %cst_66 = arith.constant dense<0.000000e+00> : vector<256x128xf32>
    %116 = tpu.matmul %86, %115, %cst_66 {dimension_numbers = #tpu.dot_dimension_numbers<[1], [0], [0], [1], [0, 0, 1, 1], [], []>} : vector<256x128xf32>, vector<128x128xf32>, vector<256x128xf32> -> vector<256x128xf32>
    %117 = arith.addf %114, %116 : vector<256x128xf32>
    %c1024_67 = arith.constant 1024 : index
    %c0_68 = arith.constant 0 : index
    %118 = vector.load %arg5[%c1024_67, %c0_68] : memref<1152x128xf32, #tpu.memory_space<vmem>>, vector<128x128xf32>
    %cst_69 = arith.constant dense<0.000000e+00> : vector<256x128xf32>
    %119 = tpu.matmul %96, %118, %cst_69 {dimension_numbers = #tpu.dot_dimension_numbers<[1], [0], [0], [1], [0, 0, 1, 1], [], []>} : vector<256x128xf32>, vector<128x128xf32>, vector<256x128xf32> -> vector<256x128xf32>
    %120 = arith.addf %117, %119 : vector<256x128xf32>
    %c16_i32_70 = arith.constant 16 : i32
    %121 = tpu.dynamic_rotate %104 by %c16_i32_70 dim 0 : vector<256x128xf32>, i32 -> vector<256x128xf32>
    %cst_71 = arith.constant 0.000000e+00 : f32
    %122 = vector.shape_cast %22 : vector<256x1xi1> to vector<256x1xi1>
    %123 = vector.broadcast %122 : vector<256x1xi1> to vector<256x128xi1>
    %124 = vector.broadcast %cst_71 : f32 to vector<256x128xf32>
    %125 = arith.select %123, %124, %121 : vector<256x128xi1>, vector<256x128xf32>
    %126 = arith.addf %112, %125 : vector<256x128xf32>
    %c240_i32_72 = arith.constant 240 : i32
    %127 = tpu.dynamic_rotate %120 by %c240_i32_72 dim 0 : vector<256x128xf32>, i32 -> vector<256x128xf32>
    %cst_73 = arith.constant 0.000000e+00 : f32
    %128 = vector.shape_cast %24 : vector<256x1xi1> to vector<256x1xi1>
    %129 = vector.broadcast %128 : vector<256x1xi1> to vector<256x128xi1>
    %130 = vector.broadcast %cst_73 : f32 to vector<256x128xf32>
    %131 = arith.select %129, %130, %127 : vector<256x128xi1>, vector<256x128xf32>
    %132 = arith.addf %126, %131 : vector<256x128xf32>
    %c0_74 = arith.constant 0 : index
    %c0_75 = arith.constant 0 : index
    %133 = vector.load %arg6[%c0_74, %c0_75] : memref<1x128xf32, #tpu.memory_space<vmem>>, vector<1x128xf32>
    %134 = vector.broadcast %133 : vector<1x128xf32> to vector<256x128xf32>
    %135 = arith.addf %132, %134 : vector<256x128xf32>
    %cst_76 = arith.constant 0.000000e+00 : f32
    %136 = vector.broadcast %cst_76 : f32 to vector<256x128xf32>
    %137 = arith.maximumf %135, %136 : vector<256x128xf32>
    %c1_i32_77 = arith.constant 1 : i32
    %138 = tpu.dynamic_rotate %137 by %c1_i32_77 dim 0 : vector<256x128xf32>, i32 -> vector<256x128xf32>
    %cst_78 = arith.constant 0.000000e+00 : f32
    %139 = vector.shape_cast %18 : vector<256x1xi1> to vector<256x1xi1>
    %140 = vector.broadcast %139 : vector<256x1xi1> to vector<256x128xi1>
    %141 = vector.broadcast %cst_78 : f32 to vector<256x128xf32>
    %142 = arith.select %140, %141, %138 : vector<256x128xi1>, vector<256x128xf32>
    %c255_i32_79 = arith.constant 255 : i32
    %143 = tpu.dynamic_rotate %137 by %c255_i32_79 dim 0 : vector<256x128xf32>, i32 -> vector<256x128xf32>
    %cst_80 = arith.constant 0.000000e+00 : f32
    %144 = vector.shape_cast %20 : vector<256x1xi1> to vector<256x1xi1>
    %145 = vector.broadcast %144 : vector<256x1xi1> to vector<256x128xi1>
    %146 = vector.broadcast %cst_80 : f32 to vector<256x128xf32>
    %147 = arith.select %145, %146, %143 : vector<256x128xi1>, vector<256x128xf32>
    %c0_81 = arith.constant 0 : index
    %c0_82 = arith.constant 0 : index
    %148 = vector.load %arg7[%c0_81, %c0_82] : memref<1152x128xf32, #tpu.memory_space<vmem>>, vector<128x128xf32>
    %cst_83 = arith.constant dense<0.000000e+00> : vector<256x128xf32>
    %149 = tpu.matmul %142, %148, %cst_83 {dimension_numbers = #tpu.dot_dimension_numbers<[1], [0], [0], [1], [0, 0, 1, 1], [], []>} : vector<256x128xf32>, vector<128x128xf32>, vector<256x128xf32> -> vector<256x128xf32>
    %c128_84 = arith.constant 128 : index
    %c0_85 = arith.constant 0 : index
    %150 = vector.load %arg7[%c128_84, %c0_85] : memref<1152x128xf32, #tpu.memory_space<vmem>>, vector<128x128xf32>
    %cst_86 = arith.constant dense<0.000000e+00> : vector<256x128xf32>
    %151 = tpu.matmul %137, %150, %cst_86 {dimension_numbers = #tpu.dot_dimension_numbers<[1], [0], [0], [1], [0, 0, 1, 1], [], []>} : vector<256x128xf32>, vector<128x128xf32>, vector<256x128xf32> -> vector<256x128xf32>
    %152 = arith.addf %149, %151 : vector<256x128xf32>
    %c256_87 = arith.constant 256 : index
    %c0_88 = arith.constant 0 : index
    %153 = vector.load %arg7[%c256_87, %c0_88] : memref<1152x128xf32, #tpu.memory_space<vmem>>, vector<128x128xf32>
    %cst_89 = arith.constant dense<0.000000e+00> : vector<256x128xf32>
    %154 = tpu.matmul %147, %153, %cst_89 {dimension_numbers = #tpu.dot_dimension_numbers<[1], [0], [0], [1], [0, 0, 1, 1], [], []>} : vector<256x128xf32>, vector<128x128xf32>, vector<256x128xf32> -> vector<256x128xf32>
    %155 = arith.addf %152, %154 : vector<256x128xf32>
    %c384_90 = arith.constant 384 : index
    %c0_91 = arith.constant 0 : index
    %156 = vector.load %arg7[%c384_90, %c0_91] : memref<1152x128xf32, #tpu.memory_space<vmem>>, vector<128x128xf32>
    %cst_92 = arith.constant dense<0.000000e+00> : vector<256x128xf32>
    %157 = tpu.matmul %142, %156, %cst_92 {dimension_numbers = #tpu.dot_dimension_numbers<[1], [0], [0], [1], [0, 0, 1, 1], [], []>} : vector<256x128xf32>, vector<128x128xf32>, vector<256x128xf32> -> vector<256x128xf32>
    %c512_93 = arith.constant 512 : index
    %c0_94 = arith.constant 0 : index
    %158 = vector.load %arg7[%c512_93, %c0_94] : memref<1152x128xf32, #tpu.memory_space<vmem>>, vector<128x128xf32>
    %cst_95 = arith.constant dense<0.000000e+00> : vector<256x128xf32>
    %159 = tpu.matmul %137, %158, %cst_95 {dimension_numbers = #tpu.dot_dimension_numbers<[1], [0], [0], [1], [0, 0, 1, 1], [], []>} : vector<256x128xf32>, vector<128x128xf32>, vector<256x128xf32> -> vector<256x128xf32>
    %160 = arith.addf %157, %159 : vector<256x128xf32>
    %c640_96 = arith.constant 640 : index
    %c0_97 = arith.constant 0 : index
    %161 = vector.load %arg7[%c640_96, %c0_97] : memref<1152x128xf32, #tpu.memory_space<vmem>>, vector<128x128xf32>
    %cst_98 = arith.constant dense<0.000000e+00> : vector<256x128xf32>
    %162 = tpu.matmul %147, %161, %cst_98 {dimension_numbers = #tpu.dot_dimension_numbers<[1], [0], [0], [1], [0, 0, 1, 1], [], []>} : vector<256x128xf32>, vector<128x128xf32>, vector<256x128xf32> -> vector<256x128xf32>
    %163 = arith.addf %160, %162 : vector<256x128xf32>
    %c768_99 = arith.constant 768 : index
    %c0_100 = arith.constant 0 : index
    %164 = vector.load %arg7[%c768_99, %c0_100] : memref<1152x128xf32, #tpu.memory_space<vmem>>, vector<128x128xf32>
    %cst_101 = arith.constant dense<0.000000e+00> : vector<256x128xf32>
    %165 = tpu.matmul %142, %164, %cst_101 {dimension_numbers = #tpu.dot_dimension_numbers<[1], [0], [0], [1], [0, 0, 1, 1], [], []>} : vector<256x128xf32>, vector<128x128xf32>, vector<256x128xf32> -> vector<256x128xf32>
    %c896_102 = arith.constant 896 : index
    %c0_103 = arith.constant 0 : index
    %166 = vector.load %arg7[%c896_102, %c0_103] : memref<1152x128xf32, #tpu.memory_space<vmem>>, vector<128x128xf32>
    %cst_104 = arith.constant dense<0.000000e+00> : vector<256x128xf32>
    %167 = tpu.matmul %137, %166, %cst_104 {dimension_numbers = #tpu.dot_dimension_numbers<[1], [0], [0], [1], [0, 0, 1, 1], [], []>} : vector<256x128xf32>, vector<128x128xf32>, vector<256x128xf32> -> vector<256x128xf32>
    %168 = arith.addf %165, %167 : vector<256x128xf32>
    %c1024_105 = arith.constant 1024 : index
    %c0_106 = arith.constant 0 : index
    %169 = vector.load %arg7[%c1024_105, %c0_106] : memref<1152x128xf32, #tpu.memory_space<vmem>>, vector<128x128xf32>
    %cst_107 = arith.constant dense<0.000000e+00> : vector<256x128xf32>
    %170 = tpu.matmul %147, %169, %cst_107 {dimension_numbers = #tpu.dot_dimension_numbers<[1], [0], [0], [1], [0, 0, 1, 1], [], []>} : vector<256x128xf32>, vector<128x128xf32>, vector<256x128xf32> -> vector<256x128xf32>
    %171 = arith.addf %168, %170 : vector<256x128xf32>
    %c16_i32_108 = arith.constant 16 : i32
    %172 = tpu.dynamic_rotate %155 by %c16_i32_108 dim 0 : vector<256x128xf32>, i32 -> vector<256x128xf32>
    %cst_109 = arith.constant 0.000000e+00 : f32
    %173 = vector.shape_cast %22 : vector<256x1xi1> to vector<256x1xi1>
    %174 = vector.broadcast %173 : vector<256x1xi1> to vector<256x128xi1>
    %175 = vector.broadcast %cst_109 : f32 to vector<256x128xf32>
    %176 = arith.select %174, %175, %172 : vector<256x128xi1>, vector<256x128xf32>
    %177 = arith.addf %163, %176 : vector<256x128xf32>
    %c240_i32_110 = arith.constant 240 : i32
    %178 = tpu.dynamic_rotate %171 by %c240_i32_110 dim 0 : vector<256x128xf32>, i32 -> vector<256x128xf32>
    %cst_111 = arith.constant 0.000000e+00 : f32
    %179 = vector.shape_cast %24 : vector<256x1xi1> to vector<256x1xi1>
    %180 = vector.broadcast %179 : vector<256x1xi1> to vector<256x128xi1>
    %181 = vector.broadcast %cst_111 : f32 to vector<256x128xf32>
    %182 = arith.select %180, %181, %178 : vector<256x128xi1>, vector<256x128xf32>
    %183 = arith.addf %177, %182 : vector<256x128xf32>
    %c0_112 = arith.constant 0 : index
    %c0_113 = arith.constant 0 : index
    %184 = vector.load %arg8[%c0_112, %c0_113] : memref<1x128xf32, #tpu.memory_space<vmem>>, vector<1x128xf32>
    %185 = vector.broadcast %184 : vector<1x128xf32> to vector<256x128xf32>
    %186 = arith.addf %183, %185 : vector<256x128xf32>
    %cst_114 = arith.constant 0.000000e+00 : f32
    %187 = vector.broadcast %cst_114 : f32 to vector<256x128xf32>
    %188 = arith.maximumf %186, %187 : vector<256x128xf32>
    %c0_115 = arith.constant 0 : index
    %c0_116 = arith.constant 0 : index
    %c0_117 = arith.constant 0 : index
    %189 = vector.load %arg9[%c0_115, %c0_116, %c0_117] : memref<1x256x128xf32, #tpu.memory_space<vmem>>, vector<1x256x128xf32>
    %190 = vector.shape_cast %189 : vector<1x256x128xf32> to vector<256x128xf32>
    %191 = vector.shape_cast %188 : vector<256x128xf32> to vector<1x256x128xf32>
    tpu.vector_store %arg9[%c0_115, %c0_116, %c0_117], %191 {strides = array<i32>} : memref<1x256x128xf32, #tpu.memory_space<vmem>>, vector<1x256x128xf32>,
    return
  }
  func.func @transform_0(%arg0: i32) -> (i32, i32, i32) {
    %c0_i32 = arith.constant 0 : i32
    %c0_i32_0 = arith.constant 0 : i32
    %c0_i32_1 = arith.constant 0 : i32
    return %arg0, %c0_i32, %c0_i32_0 : i32, i32, i32
  }
  func.func @transform_1(%arg0: i32) -> (i32, i32, i32) {
    %c0_i32 = arith.constant 0 : i32
    %c0_i32_0 = arith.constant 0 : i32
    %c0_i32_1 = arith.constant 0 : i32
    return %arg0, %c0_i32, %c0_i32_0 : i32, i32, i32
  }
  func.func @transform_2(%arg0: i32) -> (i32, i32) {
    %c0_i32 = arith.constant 0 : i32
    %c0_i32_0 = arith.constant 0 : i32
    %c0_i32_1 = arith.constant 0 : i32
    return %c0_i32, %c0_i32_0 : i32, i32
  }
  func.func @transform_3(%arg0: i32) -> (i32, i32) {
    %c0_i32 = arith.constant 0 : i32
    %c0_i32_0 = arith.constant 0 : i32
    %c0_i32_1 = arith.constant 0 : i32
    return %c0_i32, %c0_i32_0 : i32, i32
  }
  func.func @transform_4(%arg0: i32) -> (i32, i32) {
    %c0_i32 = arith.constant 0 : i32
    %c0_i32_0 = arith.constant 0 : i32
    %c0_i32_1 = arith.constant 0 : i32
    return %c0_i32, %c0_i32_0 : i32, i32
  }
  func.func @transform_5(%arg0: i32) -> (i32, i32) {
    %c0_i32 = arith.constant 0 : i32
    %c0_i32_0 = arith.constant 0 : i32
    %c0_i32_1 = arith.constant 0 : i32
    return %c0_i32, %c0_i32_0 : i32, i32
  }
  func.func @transform_6(%arg0: i32) -> (i32, i32) {
    %c0_i32 = arith.constant 0 : i32
    %c0_i32_0 = arith.constant 0 : i32
    %c0_i32_1 = arith.constant 0 : i32
    return %c0_i32, %c0_i32_0 : i32, i32
  }
  func.func @transform_7(%arg0: i32) -> (i32, i32) {
    %c0_i32 = arith.constant 0 : i32
    %c0_i32_0 = arith.constant 0 : i32
    %c0_i32_1 = arith.constant 0 : i32
    return %c0_i32, %c0_i32_0 : i32, i32
  }
  func.func @transform_8(%arg0: i32) -> (i32, i32, i32) {
    %c0_i32 = arith.constant 0 : i32
    %c0_i32_0 = arith.constant 0 : i32
    %c0_i32_1 = arith.constant 0 : i32
    return %arg0, %c0_i32, %c0_i32_0 : i32, i32, i32
  }
}

</mosaic_0001>

<llo_original>
// kernel: tpu_custom_call.1
$region0: #{tpu_custom_call.1}
  #allocation0 [shape = 'u32[]', space=smem, size = 0x4, offset = 0x4, fixed_abs, tag = 'smem constant byte address 0x4 - core index']
  #allocation1 [shape = 'u32[144,128]{1,0:T(1,128)}', space=vmem, size = 0x12000, scoped, tag = 'internal scratch']
  %s0 = inlined_call_operand.hbm [shape: f32[2,256,128], index: 0, kind: input, shape index: {}]
  %s1 = inlined_call_operand.hbm [shape: f32[2,256,128], index: 1, kind: input, shape index: {}]
  %s2 = inlined_call_operand.hbm [shape: f32[1152,128], index: 2, kind: input, shape index: {}]
  %s3 = inlined_call_operand.vmem [shape: f32[1,128], index: 3, kind: input, shape index: {}]
  %s4 = inlined_call_operand.hbm [shape: f32[1152,128], index: 4, kind: input, shape index: {}]
  %s5 = inlined_call_operand.vmem [shape: f32[1,128], index: 5, kind: input, shape index: {}]
  %s6 = inlined_call_operand.hbm [shape: f32[1152,128], index: 6, kind: input, shape index: {}]
  %s7 = inlined_call_operand.vmem [shape: f32[1,128], index: 7, kind: input, shape index: {}]
  %s8 = inlined_call_operand.hbm [shape: f32[2,256,128], index: 8, kind: output, shape index: {}]
  %s9 = sld [smem:[#allocation0]]
  $region85: #{tpu_custom_call.1} parent=0
    _
  %s11 = ssub.s32 1, %s9
  %s12 = scalar_select 0, %s11, %s9
  $region1: #{tpu_custom_call.1} parent=0
    #allocation2 [shape = 'u8[262144]{0}', space=vmem, size = 0x40000, scoped, tag = 'input window, operand 0']
    #allocation3 [shape = 's32[2]{0}', space=sflag, size = 0x8, scoped, tag = 'scoped memory for tpu_custom_call.1']
    #allocation4 [shape = 's32[2]{0}', space=sflag, size = 0x8, scoped, tag = 'scoped memory for tpu_custom_call.1']
    #allocation5 [shape = 'u8[262144]{0}', space=vmem, size = 0x40000, scoped, tag = 'input window, operand 1']
    #allocation6 [shape = 's32[2]{0}', space=sflag, size = 0x8, scoped, tag = 'scoped memory for tpu_custom_call.1']
    #allocation7 [shape = 'u8[589824]{0}', space=vmem, size = 0x90000, scoped, tag = 'input window, operand 2, single buffered']
    #allocation8 [shape = 'u8[589824]{0}', space=vmem, size = 0x90000, scoped, tag = 'input window, operand 4, single buffered']
    #allocation9 [shape = 's32[1]{0}', space=sflag, size = 0x4, scoped, tag = 'scoped memory for tpu_custom_call.1']
    #allocation10 [shape = 'u8[589824]{0}', space=vmem, size = 0x90000, scoped, tag = 'input window, operand 6, single buffered']
    #allocation11 [shape = 'u8[262144]{0}', space=vmem, size = 0x40000, scoped, tag = 'output window, operand 0']
    %13 = vsyncpa [#allocation3], 0
    %s14 = scalar_lea.sflag [#allocation3], 1
    %15 = vsyncpa %s14, 0
    %16 = vsyncpa [#allocation6], 0
    %s17 = scalar_lea.sflag [#allocation6], 1
    %18 = vsyncpa %s17, 0
    %19 = vsyncpa [#allocation9], 0
    %20 = vsyncpa [#allocation4], 0
    %s21 = scalar_lea.sflag [#allocation4], 1
    %22 = vsyncpa %s21, 0
    loop: start=0, step=1, limit=4
    $region2: #{tpu_custom_call.1} parent=1 // loop_pre_header
      _
    $region3: #{tpu_custom_call.1} parent=1 // loop_header
      %s24 = sphi 0, %s28
      %p25 = scmp.ge.s32.totalorder %s24, 4
      %s34 = sphi 0, %s36
      %s37 = sphi 0, %s34
      %s38 = sphi 0, %s37
      %s54 = sphi 0, %s38
      %s60 = sphi 0, %s62
      %s63 = sphi 0, %s60
      %s64 = sphi 0, %s63
      %s80 = sphi 0, %s64
      %s84 = sphi 0, %s84
      %s86 = sphi 0, %s84
      %s87 = sphi 0, %s86
      %s101 = sphi 0, %s87
      %s105 = sphi 0, %s105
      %s107 = sphi 0, %s105
      %s108 = sphi 0, %s107
      %s122 = sphi 0, %s108
      %s126 = sphi 0, %s126
      %s128 = sphi 0, %s126
      %s129 = sphi 0, %s128
      %s143 = sphi 0, %s129
      %s147 = sphi 0, %s147
      %s149 = sphi 0, %s147
      %s150 = sphi 0, %s149
      %s164 = sphi 0, %s150
      %s168 = sphi 0, %s168
      %s170 = sphi 0, %s168
      %s171 = sphi 0, %s170
      %s185 = sphi 0, %s171
      %s189 = sphi 0, %s189
      %s191 = sphi 0, %s189
      %s192 = sphi 0, %s191
      %s206 = sphi 0, %s192
      %s212 = sphi 0, %s214
      %s215 = sphi 0, %s212
      %s216 = sphi 0, %s215
      %s232 = sphi 0, %s216
    $region4: #{tpu_custom_call.1} parent=1 // loop_header_branch
      %27 = sbr.rel (%p25) target = $region8
    $region5: #{tpu_custom_call.1} parent=1 // loop_body
      %s29 = ssub.s32 %s24, 1
      %s30 = ssub.s32 %s24, 2
      %s31 = sadd.s32 %s24, 1
      %s32 = ssub.s32 %s24, %s31
      %p33 = scmp.eq.s32.totalorder %s32, 0
      %s35 = sadd.s32 %s34, 1
      %s36 = scalar_select %p33, %s34, %s35
      %p39 = pneg %p33
      %p40 = scmp.eq.s32.totalorder %s24, 1
      %p41 = por %p39, %p40
      %p42 = scmp.ne.s32.totalorder %s34, %s37
      %p43 = scmp.eq.s32.totalorder %s24, 0
      %p44 = por %p42, %p43
      %p45 = scmp.ne.s32.totalorder %s34, %s37
      %p46 = scmp.eq.s32.totalorder %s29, 1
      %p47 = por %p45, %p46
      %p48 = scmp.ne.s32.totalorder %s37, %s38
      %p49 = scmp.eq.s32.totalorder %s29, 0
      %p50 = por %p48, %p49
      %p51 = scmp.ne.s32.totalorder %s37, %s38
      %p52 = scmp.eq.s32.totalorder %s30, 1
      %p53 = por %p51, %p52
      %p55 = scmp.ne.s32.totalorder %s38, %s54
      %p56 = scmp.eq.s32.totalorder %s30, 0
      %p57 = por %p55, %p56
      %s58 = ssub.s32 %s24, %s31
      %p59 = scmp.eq.s32.totalorder %s58, 0
      %s61 = sadd.s32 %s60, 1
      %s62 = scalar_select %p59, %s60, %s61
      %p65 = pneg %p59
      %p66 = scmp.eq.s32.totalorder %s24, 1
      %p67 = por %p65, %p66
      %p68 = scmp.ne.s32.totalorder %s60, %s63
      %p69 = scmp.eq.s32.totalorder %s24, 0
      %p70 = por %p68, %p69
      %p71 = scmp.ne.s32.totalorder %s60, %s63
      %p72 = scmp.eq.s32.totalorder %s29, 1
      %p73 = por %p71, %p72
      %p74 = scmp.ne.s32.totalorder %s63, %s64
      %p75 = scmp.eq.s32.totalorder %s29, 0
      %p76 = por %p74, %p75
      %p77 = scmp.ne.s32.totalorder %s63, %s64
      %p78 = scmp.eq.s32.totalorder %s30, 1
      %p79 = por %p77, %p78
      %p81 = scmp.ne.s32.totalorder %s64, %s80
      %p82 = scmp.eq.s32.totalorder %s30, 0
      %p83 = por %p81, %p82
      %s85 = sadd.s32 %s84, 1
      %p88 = scmp.eq.s32.totalorder %s24, 1
      %p89 = scmp.ne.s32.totalorder %s84, %s86
      %p90 = scmp.eq.s32.totalorder %s24, 0
      %p91 = por %p89, %p90
      %p92 = scmp.ne.s32.totalorder %s84, %s86
      %p93 = scmp.eq.s32.totalorder %s29, 1
      %p94 = por %p92, %p93
      %p95 = scmp.ne.s32.totalorder %s86, %s87
      %p96 = scmp.eq.s32.totalorder %s29, 0
      %p97 = por %p95, %p96
      %p98 = scmp.ne.s32.totalorder %s86, %s87
      %p99 = scmp.eq.s32.totalorder %s30, 1
      %p100 = por %p98, %p99
      %p102 = scmp.ne.s32.totalorder %s87, %s101
      %p103 = scmp.eq.s32.totalorder %s30, 0
      %p104 = por %p102, %p103
      %s106 = sadd.s32 %s105, 1
      %p109 = scmp.eq.s32.totalorder %s24, 1
      %p110 = scmp.ne.s32.totalorder %s105, %s107
      %p111 = scmp.eq.s32.totalorder %s24, 0
      %p112 = por %p110, %p111
      %p113 = scmp.ne.s32.totalorder %s105, %s107
      %p114 = scmp.eq.s32.totalorder %s29, 1
      %p115 = por %p113, %p114
      %p116 = scmp.ne.s32.totalorder %s107, %s108
      %p117 = scmp.eq.s32.totalorder %s29, 0
      %p118 = por %p116, %p117
      %p119 = scmp.ne.s32.totalorder %s107, %s108
      %p120 = scmp.eq.s32.totalorder %s30, 1
      %p121 = por %p119, %p120
      %p123 = scmp.ne.s32.totalorder %s108, %s122
      %p124 = scmp.eq.s32.totalorder %s30, 0
      %p125 = por %p123, %p124
      %s127 = sadd.s32 %s126, 1
      %p130 = scmp.eq.s32.totalorder %s24, 1
      %p131 = scmp.ne.s32.totalorder %s126, %s128
      %p132 = scmp.eq.s32.totalorder %s24, 0
      %p133 = por %p131, %p132
      %p134 = scmp.ne.s32.totalorder %s126, %s128
      %p135 = scmp.eq.s32.totalorder %s29, 1
      %p136 = por %p134, %p135
      %p137 = scmp.ne.s32.totalorder %s128, %s129
      %p138 = scmp.eq.s32.totalorder %s29, 0
      %p139 = por %p137, %p138
      %p140 = scmp.ne.s32.totalorder %s128, %s129
      %p141 = scmp.eq.s32.totalorder %s30, 1
      %p142 = por %p140, %p141
      %p144 = scmp.ne.s32.totalorder %s129, %s143
      %p145 = scmp.eq.s32.totalorder %s30, 0
      %p146 = por %p144, %p145
      %s148 = sadd.s32 %s147, 1
      %p151 = scmp.eq.s32.totalorder %s24, 1
      %p152 = scmp.ne.s32.totalorder %s147, %s149
      %p153 = scmp.eq.s32.totalorder %s24, 0
      %p154 = por %p152, %p153
      %p155 = scmp.ne.s32.totalorder %s147, %s149
      %p156 = scmp.eq.s32.totalorder %s29, 1
      %p157 = por %p155, %p156
      %p158 = scmp.ne.s32.totalorder %s149, %s150
      %p159 = scmp.eq.s32.totalorder %s29, 0
      %p160 = por %p158, %p159
      %p161 = scmp.ne.s32.totalorder %s149, %s150
      %p162 = scmp.eq.s32.totalorder %s30, 1
      %p163 = por %p161, %p162
      %p165 = scmp.ne.s32.totalorder %s150, %s164
      %p166 = scmp.eq.s32.totalorder %s30, 0
      %p167 = por %p165, %p166
      %s169 = sadd.s32 %s168, 1
      %p172 = scmp.eq.s32.totalorder %s24, 1
      %p173 = scmp.ne.s32.totalorder %s168, %s170
      %p174 = scmp.eq.s32.totalorder %s24, 0
      %p175 = por %p173, %p174
      %p176 = scmp.ne.s32.totalorder %s168, %s170
      %p177 = scmp.eq.s32.totalorder %s29, 1
      %p178 = por %p176, %p177
      %p179 = scmp.ne.s32.totalorder %s170, %s171
      %p180 = scmp.eq.s32.totalorder %s29, 0
      %p181 = por %p179, %p180
      %p182 = scmp.ne.s32.totalorder %s170, %s171
      %p183 = scmp.eq.s32.totalorder %s30, 1
      %p184 = por %p182, %p183
      %p186 = scmp.ne.s32.totalorder %s171, %s185
      %p187 = scmp.eq.s32.totalorder %s30, 0
      %p188 = por %p186, %p187
      %s190 = sadd.s32 %s189, 1
      %p193 = scmp.eq.s32.totalorder %s24, 1
      %p194 = scmp.ne.s32.totalorder %s189, %s191
      %p195 = scmp.eq.s32.totalorder %s24, 0
      %p196 = por %p194, %p195
      %p197 = scmp.ne.s32.totalorder %s189, %s191
      %p198 = scmp.eq.s32.totalorder %s29, 1
      %p199 = por %p197, %p198
      %p200 = scmp.ne.s32.totalorder %s191, %s192
      %p201 = scmp.eq.s32.totalorder %s29, 0
      %p202 = por %p200, %p201
      %p203 = scmp.ne.s32.totalorder %s191, %s192
      %p204 = scmp.eq.s32.totalorder %s30, 1
      %p205 = por %p203, %p204
      %p207 = scmp.ne.s32.totalorder %s192, %s206
      %p208 = scmp.eq.s32.totalorder %s30, 0
      %p209 = por %p207, %p208
      %s210 = ssub.s32 %s24, %s31
      %p211 = scmp.eq.s32.totalorder %s210, 0
      %s213 = sadd.s32 %s212, 1
      %s214 = scalar_select %p211, %s212, %s213
      %p217 = pneg %p211
      %p218 = scmp.eq.s32.totalorder %s24, 1
      %p219 = por %p217, %p218
      %p220 = scmp.ne.s32.totalorder %s212, %s215
      %p221 = scmp.eq.s32.totalorder %s24, 0
      %p222 = por %p220, %p221
      %p223 = scmp.ne.s32.totalorder %s212, %s215
      %p224 = scmp.eq.s32.totalorder %s29, 1
      %p225 = por %p223, %p224
      %p226 = scmp.ne.s32.totalorder %s215, %s216
      %p227 = scmp.eq.s32.totalorder %s29, 0
      %p228 = por %p226, %p227
      %p229 = scmp.ne.s32.totalorder %s215, %s216
      %p230 = scmp.eq.s32.totalorder %s30, 1
      %p231 = por %p229, %p230
      %p233 = scmp.ne.s32.totalorder %s216, %s232
      %p234 = scmp.eq.s32.totalorder %s30, 0
      %p235 = por %p233, %p234
      %p236 = scmp.le.s32.totalorder 1, %s24
      %p237 = scmp.lt.s32.totalorder %s24, 3
      %p238 = pnand %p236, %p237
      %p239 = pneg %p238
      // Predicated region
      $region9: #{tpu_custom_call.1} parent=5 // pred_check
        _
      $region10: #{tpu_custom_call.1} parent=5 // pred_check_branch
        %241 = sbr.rel (%p238) target = $region12
      $region11: #{tpu_custom_call.1} parent=5 // pred_region
        %s242 = ssub.s32 %s24, 1
        // Predicated region
        $region13: #{tpu_custom_call.1} parent=11 // pred_check
          %p243 = pneg %p97
        $region14: #{tpu_custom_call.1} parent=11 // pred_check_branch
          %245 = sbr.rel (%p243) target = $region16
        $region15: #{tpu_custom_call.1} parent=11 // pred_region
          %s247 = ssub.s32 18432, 18432
          %248 = vsyncadd [#allocation6], %s247
          %s249 = sshll.u32 [#allocation7], 4
          %s250 = int_to_ptr.vmem [resolvable:$true] %s249
          %255 = dma.hbm_to_vmem [thread:$0]  %s2, 18432, %s250, [#allocation6], 128, 128, 8
        $region16: #{tpu_custom_call.1} parent=11 // pred_fallthru
          _
        // Predicated region
        $region17: #{tpu_custom_call.1} parent=11 // pred_check
          %p256 = pneg %p118
        $region18: #{tpu_custom_call.1} parent=11 // pred_check_branch
          %258 = sbr.rel (%p256) target = $region20
        $region19: #{tpu_custom_call.1} parent=11 // pred_region
          _
        $region20: #{tpu_custom_call.1} parent=11 // pred_fallthru
          _
        // Predicated region
        $region21: #{tpu_custom_call.1} parent=11 // pred_check
          %p259 = pneg %p139
        $region22: #{tpu_custom_call.1} parent=11 // pred_check_branch
          %261 = sbr.rel (%p259) target = $region24
        $region23: #{tpu_custom_call.1} parent=11 // pred_region
          %s263 = ssub.s32 18432, 18432
          %264 = vsyncadd [#allocation9], %s263
          %s265 = sshll.u32 [#allocation8], 4
          %s266 = int_to_ptr.vmem [resolvable:$true] %s265
          %271 = dma.hbm_to_vmem [thread:$0]  %s4, 18432, %s266, [#allocation9], 128, 128, 8
        $region24: #{tpu_custom_call.1} parent=11 // pred_fallthru
          _
        // Predicated region
        $region25: #{tpu_custom_call.1} parent=11 // pred_check
          %p272 = pneg %p160
        $region26: #{tpu_custom_call.1} parent=11 // pred_check_branch
          %274 = sbr.rel (%p272) target = $region28
        $region27: #{tpu_custom_call.1} parent=11 // pred_region
          _
        $region28: #{tpu_custom_call.1} parent=11 // pred_fallthru
          _
        // Predicated region
        $region29: #{tpu_custom_call.1} parent=11 // pred_check
          %p275 = pneg %p181
        $region30: #{tpu_custom_call.1} parent=11 // pred_check_branch
          %277 = sbr.rel (%p275) target = $region32
        $region31: #{tpu_custom_call.1} parent=11 // pred_region
          %s279 = ssub.s32 18432, 18432
          %280 = vsyncadd [#allocation9], %s279
          %s281 = sshll.u32 [#allocation10], 4
          %s282 = int_to_ptr.vmem [resolvable:$true] %s281
          %287 = dma.hbm_to_vmem [thread:$0]  %s6, 18432, %s282, [#allocation9], 128, 128, 8
        $region32: #{tpu_custom_call.1} parent=11 // pred_fallthru
          _
        // Predicated region
        $region33: #{tpu_custom_call.1} parent=11 // pred_check
          %p288 = pneg %p202
        $region34: #{tpu_custom_call.1} parent=11 // pred_check_branch
          %290 = sbr.rel (%p288) target = $region36
        $region35: #{tpu_custom_call.1} parent=11 // pred_region
          _
        $region36: #{tpu_custom_call.1} parent=11 // pred_fallthru
          _
      $region12: #{tpu_custom_call.1} parent=5 // pred_fallthru
        _
      %p291 = scmp.lt.s32.totalorder %s24, 2
      // Predicated region
      $region37: #{tpu_custom_call.1} parent=5 // pred_check
        %p292 = pneg %p291
      $region38: #{tpu_custom_call.1} parent=5 // pred_check_branch
        %294 = sbr.rel (%p292) target = $region40
      $region39: #{tpu_custom_call.1} parent=5 // pred_region
        // Predicated region
        $region41: #{tpu_custom_call.1} parent=39 // pred_check
          %p295 = pneg %p44
        $region42: #{tpu_custom_call.1} parent=39 // pred_check_branch
          %297 = sbr.rel (%p295) target = $region44
        $region43: #{tpu_custom_call.1} parent=39 // pred_region
          %s298 = sand.u32 %s34, 1
          %s299 = scalar_lea.sflag [#allocation3], %s298
          %s300 = sand.u32 %s34, 1
          %s301 = smul.addr %s300, 256
          %s302 = scalar_lea.vmem [#allocation2], %s301
          %s304 = ssub.s32 4096, 4096
          %305 = vsyncadd %s299, %s304
          %s306 = smul.addr %s24, 32
          %s307 = smul.addr %s306, 128
          %s308 = scalar_lea.hbm %s0, %s307
          %s309 = sshll.u32 %s302, 4
          %s310 = int_to_ptr.vmem [resolvable:$true] %s309
          %315 = dma.hbm_to_vmem [thread:$0]  %s308, 4096, %s310, %s299, 128, 128, 8
        $region44: #{tpu_custom_call.1} parent=39 // pred_fallthru
          _
        // Predicated region
        $region45: #{tpu_custom_call.1} parent=39 // pred_check
          %p316 = pneg %p70
        $region46: #{tpu_custom_call.1} parent=39 // pred_check_branch
          %318 = sbr.rel (%p316) target = $region48
        $region47: #{tpu_custom_call.1} parent=39 // pred_region
          %s319 = sand.u32 %s24, 1
          %s320 = scalar_lea.sflag [#allocation6], %s319
          %s321 = sand.u32 %s60, 1
          %s322 = smul.addr %s321, 256
          %s323 = scalar_lea.vmem [#allocation5], %s322
          %s325 = ssub.s32 4096, 4096
          %326 = vsyncadd %s320, %s325
          %s327 = smul.addr %s24, 32
          %s328 = smul.addr %s327, 128
          %s329 = scalar_lea.hbm %s1, %s328
          %s330 = sshll.u32 %s323, 4
          %s331 = int_to_ptr.vmem [resolvable:$true] %s330
          %336 = dma.hbm_to_vmem [thread:$0]  %s329, 4096, %s331, %s320, 128, 128, 8
        $region48: #{tpu_custom_call.1} parent=39 // pred_fallthru
          _
      $region40: #{tpu_custom_call.1} parent=5 // pred_fallthru
        _
      %p337 = scmp.le.s32.totalorder 1, %s24
      %p338 = scmp.lt.s32.totalorder %s24, 3
      %p339 = pnand %p337, %p338
      %p340 = pneg %p339
      // Predicated region
      $region49: #{tpu_custom_call.1} parent=5 // pred_check
        _
      $region50: #{tpu_custom_call.1} parent=5 // pred_check_branch
        %342 = sbr.rel (%p339) target = $region52
      $region51: #{tpu_custom_call.1} parent=5 // pred_region
        %s343 = ssub.s32 %s24, 1
        %s344 = sand.u32 %s37, 1
        %s345 = scalar_lea.sflag [#allocation3], %s344
        %s346 = sand.u32 %s37, 1
        %s347 = smul.addr %s346, 256
        %s348 = scalar_lea.vmem [#allocation2], %s347
        // Predicated region
        $region53: #{tpu_custom_call.1} parent=51 // pred_check
          %p349 = pneg %p50
        $region54: #{tpu_custom_call.1} parent=51 // pred_check_branch
          %351 = sbr.rel (%p349) target = $region56
        $region55: #{tpu_custom_call.1} parent=51 // pred_region
          %352 = dma.done %s345, 4096
        $region56: #{tpu_custom_call.1} parent=51 // pred_fallthru
          _
        %s353 = sand.u32 %s29, 1
        %s354 = scalar_lea.sflag [#allocation6], %s353
        %s355 = sand.u32 %s63, 1
        %s356 = smul.addr %s355, 256
        %s357 = scalar_lea.vmem [#allocation5], %s356
        // Predicated region
        $region57: #{tpu_custom_call.1} parent=51 // pred_check
          %p358 = pneg %p76
        $region58: #{tpu_custom_call.1} parent=51 // pred_check_branch
          %360 = sbr.rel (%p358) target = $region60
        $region59: #{tpu_custom_call.1} parent=51 // pred_region
          %361 = dma.done %s354, 4096
        $region60: #{tpu_custom_call.1} parent=51 // pred_fallthru
          _
        // Predicated region
        $region61: #{tpu_custom_call.1} parent=51 // pred_check
          %p362 = pneg %p97
        $region62: #{tpu_custom_call.1} parent=51 // pred_check_branch
          %364 = sbr.rel (%p362) target = $region64
        $region63: #{tpu_custom_call.1} parent=51 // pred_region
          %365 = dma.done [#allocation6], 18432
        $region64: #{tpu_custom_call.1} parent=51 // pred_fallthru
          _
        // Predicated region
        $region65: #{tpu_custom_call.1} parent=51 // pred_check
          %p366 = pneg %p139
        $region66: #{tpu_custom_call.1} parent=51 // pred_check_branch
          %368 = sbr.rel (%p366) target = $region68
        $region67: #{tpu_custom_call.1} parent=51 // pred_region
          %369 = dma.done [#allocation9], 18432
        $region68: #{tpu_custom_call.1} parent=51 // pred_fallthru
          _
        // Predicated region
        $region69: #{tpu_custom_call.1} parent=51 // pred_check
          %p370 = pneg %p181
        $region70: #{tpu_custom_call.1} parent=51 // pred_check_branch
          %372 = sbr.rel (%p370) target = $region72
        $region71: #{tpu_custom_call.1} parent=51 // pred_region
          %373 = dma.done [#allocation9], 18432
        $region72: #{tpu_custom_call.1} parent=51 // pred_fallthru
          _
        %s374 = sand.u32 %s37, 1
        %s375 = scalar_lea.sflag [#allocation3], %s374
        %s376 = sand.u32 %s37, 1
        %s377 = smul.addr %s376, 256
        %s378 = scalar_lea.vmem [#allocation2], %s377
        %p379 = pneg %p50
        %p380 = pneg %p47
        %s381 = sand.u32 %s29, 1
        %s382 = scalar_lea.sflag [#allocation6], %s381
        %s383 = sand.u32 %s63, 1
        %s384 = smul.addr %s383, 256
        %s385 = scalar_lea.vmem [#allocation5], %s384
        %p386 = pneg %p76
        %p387 = pneg %p73
        %p388 = pneg %p97
        %p389 = pneg %p94
        %p390 = pneg %p118
        %p391 = pneg %p115
        %p392 = pneg %p139
        %p393 = pneg %p136
        %p394 = pneg %p160
        %p395 = pneg %p157
        %p396 = pneg %p181
        %p397 = pneg %p178
        %p398 = pneg %p202
        %p399 = pneg %p199
        %p400 = pneg %p228
        %p401 = pneg %p225
        %s402 = sand.u32 %s215, 1
        %s403 = scalar_lea.sflag [#allocation4], %s402
        %s404 = sand.u32 %s215, 1
        %s405 = smul.addr %s404, 256
        %s406 = scalar_lea.vmem [#allocation11], %s405
        %v407 = vlaneseq
        %v408 = vshrl.u32 %v407, 7
        %v409 = vadd.s32 %v408, 8
        %v410 = vadd.s32 %v408, 16
        %v411 = vadd.s32 %v408, 24
        %v412 = vadd.s32 %v408, 32
        %v413 = vadd.s32 %v408, 40
        %v414 = vadd.s32 %v408, 48
        %v415 = vadd.s32 %v408, 56
        %v416 = vadd.s32 %v408, 64
        %v417 = vadd.s32 %v408, 72
        %v418 = vadd.s32 %v408, 80
        %v419 = vadd.s32 %v408, 88
        %v420 = vadd.s32 %v408, 96
        %v421 = vadd.s32 %v408, 104
        %v422 = vadd.s32 %v408, 112
        %v423 = vadd.s32 %v408, 120
        %v424 = vadd.s32 %v408, 128
        %v425 = vadd.s32 %v408, 136
        %v426 = vadd.s32 %v408, 144
        %v427 = vadd.s32 %v408, 152
        %v428 = vadd.s32 %v408, 160
        %v429 = vadd.s32 %v408, 168
        %v430 = vadd.s32 %v408, 176
        %v431 = vadd.s32 %v408, 184
        %v432 = vadd.s32 %v408, 192
        %v433 = vadd.s32 %v408, 200
        %v434 = vadd.s32 %v408, 208
        %v435 = vadd.s32 %v408, 216
        %v436 = vadd.s32 %v408, 224
        %v437 = vadd.s32 %v408, 232
        %v438 = vadd.s32 %v408, 240
        %v439 = vadd.s32 %v408, 248
        %vm440 = vcmp.lt.s32.totalorder %v408, 0
        %v441 = vsub.s32 0, %v408
        %v442 = vsel %vm440, %v441, %v408
        %v443 = vshrl.u32 %v442, 4
        %v444 = vand.u32 %v442, 15
        %v445 = vsub.s32 0, %v444
        %v446 = vsel %vm440, %v445, %v444
        %vm447 = vcmp.lt.s32.totalorder %v409, 0
        %v448 = vsub.s32 0, %v409
        %v449 = vsel %vm447, %v448, %v409
        %v450 = vshrl.u32 %v449, 4
        %v451 = vand.u32 %v449, 15
        %v452 = vsub.s32 0, %v451
        %v453 = vsel %vm447, %v452, %v451
        %vm454 = vcmp.lt.s32.totalorder %v410, 0
        %v455 = vsub.s32 0, %v410
        %v456 = vsel %vm454, %v455, %v410
        %v457 = vshrl.u32 %v456, 4
        %v458 = vand.u32 %v456, 15
        %v459 = vsub.s32 0, %v458
        %v460 = vsel %vm454, %v459, %v458
        %vm461 = vcmp.lt.s32.totalorder %v411, 0
        %v462 = vsub.s32 0, %v411
        %v463 = vsel %vm461, %v462, %v411
        %v464 = vshrl.u32 %v463, 4
        %v465 = vand.u32 %v463, 15
        %v466 = vsub.s32 0, %v465
        %v467 = vsel %vm461, %v466, %v465
        %vm468 = vcmp.lt.s32.totalorder %v412, 0
        %v469 = vsub.s32 0, %v412
        %v470 = vsel %vm468, %v469, %v412
        %v471 = vshrl.u32 %v470, 4
        %v472 = vand.u32 %v470, 15
        %v473 = vsub.s32 0, %v472
        %v474 = vsel %vm468, %v473, %v472
        %vm475 = vcmp.lt.s32.totalorder %v413, 0
        %v476 = vsub.s32 0, %v413
        %v477 = vsel %vm475, %v476, %v413
        %v478 = vshrl.u32 %v477, 4
        %v479 = vand.u32 %v477, 15
        %v480 = vsub.s32 0, %v479
        %v481 = vsel %vm475, %v480, %v479
        %vm482 = vcmp.lt.s32.totalorder %v414, 0
        %v483 = vsub.s32 0, %v414
        %v484 = vsel %vm482, %v483, %v414
        %v485 = vshrl.u32 %v484, 4
        %v486 = vand.u32 %v484, 15
        %v487 = vsub.s32 0, %v486
        %v488 = vsel %vm482, %v487, %v486
        %vm489 = vcmp.lt.s32.totalorder %v415, 0
        %v490 = vsub.s32 0, %v415
        %v491 = vsel %vm489, %v490, %v415
        %v492 = vshrl.u32 %v491, 4
        %v493 = vand.u32 %v491, 15
        %v494 = vsub.s32 0, %v493
        %v495 = vsel %vm489, %v494, %v493
        %vm496 = vcmp.lt.s32.totalorder %v416, 0
        %v497 = vsub.s32 0, %v416
        %v498 = vsel %vm496, %v497, %v416
        %v499 = vshrl.u32 %v498, 4
        %v500 = vand.u32 %v498, 15
        %v501 = vsub.s32 0, %v500
        %v502 = vsel %vm496, %v501, %v500
        %vm503 = vcmp.lt.s32.totalorder %v417, 0
        %v504 = vsub.s32 0, %v417
        %v505 = vsel %vm503, %v504, %v417
        %v506 = vshrl.u32 %v505, 4
        %v507 = vand.u32 %v505, 15
        %v508 = vsub.s32 0, %v507
        %v509 = vsel %vm503, %v508, %v507
        %vm510 = vcmp.lt.s32.totalorder %v418, 0
        %v511 = vsub.s32 0, %v418
        %v512 = vsel %vm510, %v511, %v418
        %v513 = vshrl.u32 %v512, 4
        %v514 = vand.u32 %v512, 15
        %v515 = vsub.s32 0, %v514
        %v516 = vsel %vm510, %v515, %v514
        %vm517 = vcmp.lt.s32.totalorder %v419, 0
        %v518 = vsub.s32 0, %v419
        %v519 = vsel %vm517, %v518, %v419
        %v520 = vshrl.u32 %v519, 4
        %v521 = vand.u32 %v519, 15
        %v522 = vsub.s32 0, %v521
        %v523 = vsel %vm517, %v522, %v521
        %vm524 = vcmp.lt.s32.totalorder %v420, 0
        %v525 = vsub.s32 0, %v420
        %v526 = vsel %vm524, %v525, %v420
        %v527 = vshrl.u32 %v526, 4
        %v528 = vand.u32 %v526, 15
        %v529 = vsub.s32 0, %v528
        %v530 = vsel %vm524, %v529, %v528
        %vm531 = vcmp.lt.s32.totalorder %v421, 0
        %v532 = vsub.s32 0, %v421
        %v533 = vsel %vm531, %v532, %v421
        %v534 = vshrl.u32 %v533, 4
        %v535 = vand.u32 %v533, 15
        %v536 = vsub.s32 0, %v535
        %v537 = vsel %vm531, %v536, %v535
        %vm538 = vcmp.lt.s32.totalorder %v422, 0
        %v539 = vsub.s32 0, %v422
        %v540 = vsel %vm538, %v539, %v422
        %v541 = vshrl.u32 %v540, 4
        %v542 = vand.u32 %v540, 15
        %v543 = vsub.s32 0, %v542
        %v544 = vsel %vm538, %v543, %v542
        %vm545 = vcmp.lt.s32.totalorder %v423, 0
        %v546 = vsub.s32 0, %v423
        %v547 = vsel %vm545, %v546, %v423
        %v548 = vshrl.u32 %v547, 4
        %v549 = vand.u32 %v547, 15
        %v550 = vsub.s32 0, %v549
        %v551 = vsel %vm545, %v550, %v549
        %vm552 = vcmp.lt.s32.totalorder %v424, 0
        %v553 = vsub.s32 0, %v424
        %v554 = vsel %vm552, %v553, %v424
        %v555 = vshrl.u32 %v554, 4
        %v556 = vand.u32 %v554, 15
        %v557 = vsub.s32 0, %v556
        %v558 = vsel %vm552, %v557, %v556
        %vm559 = vcmp.lt.s32.totalorder %v425, 0
        %v560 = vsub.s32 0, %v425
        %v561 = vsel %vm559, %v560, %v425
        %v562 = vshrl.u32 %v561, 4
        %v563 = vand.u32 %v561, 15
        %v564 = vsub.s32 0, %v563
        %v565 = vsel %vm559, %v564, %v563
        %vm566 = vcmp.lt.s32.totalorder %v426, 0
        %v567 = vsub.s32 0, %v426
        %v568 = vsel %vm566, %v567, %v426
        %v569 = vshrl.u32 %v568, 4
        %v570 = vand.u32 %v568, 15
        %v571 = vsub.s32 0, %v570
        %v572 = vsel %vm566, %v571, %v570
        %vm573 = vcmp.lt.s32.totalorder %v427, 0
        %v574 = vsub.s32 0, %v427
        %v575 = vsel %vm573, %v574, %v427
        %v576 = vshrl.u32 %v575, 4
        %v577 = vand.u32 %v575, 15
        %v578 = vsub.s32 0, %v577
        %v579 = vsel %vm573, %v578, %v577
        %vm580 = vcmp.lt.s32.totalorder %v428, 0
        %v581 = vsub.s32 0, %v428
        %v582 = vsel %vm580, %v581, %v428
        %v583 = vshrl.u32 %v582, 4
        %v584 = vand.u32 %v582, 15
        %v585 = vsub.s32 0, %v584
        %v586 = vsel %vm580, %v585, %v584
        %vm587 = vcmp.lt.s32.totalorder %v429, 0
        %v588 = vsub.s32 0, %v429
        %v589 = vsel %vm587, %v588, %v429
        %v590 = vshrl.u32 %v589, 4
        %v591 = vand.u32 %v589, 15
        %v592 = vsub.s32 0, %v591
        %v593 = vsel %vm587, %v592, %v591
        %vm594 = vcmp.lt.s32.totalorder %v430, 0
        %v595 = vsub.s32 0, %v430
        %v596 = vsel %vm594, %v595, %v430
        %v597 = vshrl.u32 %v596, 4
        %v598 = vand.u32 %v596, 15
        %v599 = vsub.s32 0, %v598
        %v600 = vsel %vm594, %v599, %v598
        %vm601 = vcmp.lt.s32.totalorder %v431, 0
        %v602 = vsub.s32 0, %v431
        %v603 = vsel %vm601, %v602, %v431
        %v604 = vshrl.u32 %v603, 4
        %v605 = vand.u32 %v603, 15
        %v606 = vsub.s32 0, %v605
        %v607 = vsel %vm601, %v606, %v605
        %vm608 = vcmp.lt.s32.totalorder %v432, 0
        %v609 = vsub.s32 0, %v432
        %v610 = vsel %vm608, %v609, %v432
        %v611 = vshrl.u32 %v610, 4
        %v612 = vand.u32 %v610, 15
        %v613 = vsub.s32 0, %v612
        %v614 = vsel %vm608, %v613, %v612
        %vm615 = vcmp.lt.s32.totalorder %v433, 0
        %v616 = vsub.s32 0, %v433
        %v617 = vsel %vm615, %v616, %v433
        %v618 = vshrl.u32 %v617, 4
        %v619 = vand.u32 %v617, 15
        %v620 = vsub.s32 0, %v619
        %v621 = vsel %vm615, %v620, %v619
        %vm622 = vcmp.lt.s32.totalorder %v434, 0
        %v623 = vsub.s32 0, %v434
        %v624 = vsel %vm622, %v623, %v434
        %v625 = vshrl.u32 %v624, 4
        %v626 = vand.u32 %v624, 15
        %v627 = vsub.s32 0, %v626
        %v628 = vsel %vm622, %v627, %v626
        %vm629 = vcmp.lt.s32.totalorder %v435, 0
        %v630 = vsub.s32 0, %v435
        %v631 = vsel %vm629, %v630, %v435
        %v632 = vshrl.u32 %v631, 4
        %v633 = vand.u32 %v631, 15
        %v634 = vsub.s32 0, %v633
        %v635 = vsel %vm629, %v634, %v633
        %vm636 = vcmp.lt.s32.totalorder %v436, 0
        %v637 = vsub.s32 0, %v436
        %v638 = vsel %vm636, %v637, %v436
        %v639 = vshrl.u32 %v638, 4
        %v640 = vand.u32 %v638, 15
        %v641 = vsub.s32 0, %v640
        %v642 = vsel %vm636, %v641, %v640
        %vm643 = vcmp.lt.s32.totalorder %v437, 0
        %v644 = vsub.s32 0, %v437
        %v645 = vsel %vm643, %v644, %v437
        %v646 = vshrl.u32 %v645, 4
        %v647 = vand.u32 %v645, 15
        %v648 = vsub.s32 0, %v647
        %v649 = vsel %vm643, %v648, %v647
        %vm650 = vcmp.lt.s32.totalorder %v438, 0
        %v651 = vsub.s32 0, %v438
        %v652 = vsel %vm650, %v651, %v438
        %v653 = vshrl.u32 %v652, 4
        %v654 = vand.u32 %v652, 15
        %v655 = vsub.s32 0, %v654
        %v656 = vsel %vm650, %v655, %v654
        %vm657 = vcmp.lt.s32.totalorder %v439, 0
        %v658 = vsub.s32 0, %v439
        %v659 = vsel %vm657, %v658, %v439
        %v660 = vshrl.u32 %v659, 4
        %v661 = vand.u32 %v659, 15
        %v662 = vsub.s32 0, %v661
        %v663 = vsel %vm657, %v662, %v661
        %vm664 = vcmp.ne.s32.totalorder %v446, 0
        %vm665 = vcmp.ne.s32.totalorder %v453, 0
        %vm666 = vcmp.ne.s32.totalorder %v460, 0
        %vm667 = vcmp.ne.s32.totalorder %v467, 0
        %vm668 = vcmp.ne.s32.totalorder %v474, 0
        %vm669 = vcmp.ne.s32.totalorder %v481, 0
        %vm670 = vcmp.ne.s32.totalorder %v488, 0
        %vm671 = vcmp.ne.s32.totalorder %v495, 0
        %vm672 = vcmp.ne.s32.totalorder %v502, 0
        %vm673 = vcmp.ne.s32.totalorder %v509, 0
        %vm674 = vcmp.ne.s32.totalorder %v516, 0
        %vm675 = vcmp.ne.s32.totalorder %v523, 0
        %vm676 = vcmp.ne.s32.totalorder %v530, 0
        %vm677 = vcmp.ne.s32.totalorder %v537, 0
        %vm678 = vcmp.ne.s32.totalorder %v544, 0
        %vm679 = vcmp.ne.s32.totalorder %v551, 0
        %vm680 = vcmp.ne.s32.totalorder %v558, 0
        %vm681 = vcmp.ne.s32.totalorder %v565, 0
        %vm682 = vcmp.ne.s32.totalorder %v572, 0
        %vm683 = vcmp.ne.s32.totalorder %v579, 0
        %vm684 = vcmp.ne.s32.totalorder %v586, 0
        %vm685 = vcmp.ne.s32.totalorder %v593, 0
        %vm686 = vcmp.ne.s32.totalorder %v600, 0
        %vm687 = vcmp.ne.s32.totalorder %v607, 0
        %vm688 = vcmp.ne.s32.totalorder %v614, 0
        %vm689 = vcmp.ne.s32.totalorder %v621, 0
        %vm690 = vcmp.ne.s32.totalorder %v628, 0
        %vm691 = vcmp.ne.s32.totalorder %v635, 0
        %vm692 = vcmp.ne.s32.totalorder %v642, 0
        %vm693 = vcmp.ne.s32.totalorder %v649, 0
        %vm694 = vcmp.ne.s32.totalorder %v656, 0
        %vm695 = vcmp.ne.s32.totalorder %v663, 0
        %vm696 = vcmp.lt.s32.totalorder %v446, 0
        %vm697 = vcmp.lt.s32.totalorder %v453, 0
        %vm698 = vcmp.lt.s32.totalorder %v460, 0
        %vm699 = vcmp.lt.s32.totalorder %v467, 0
        %vm700 = vcmp.lt.s32.totalorder %v474, 0
        %vm701 = vcmp.lt.s32.totalorder %v481, 0
        %vm702 = vcmp.lt.s32.totalorder %v488, 0
        %vm703 = vcmp.lt.s32.totalorder %v495, 0
        %vm704 = vcmp.lt.s32.totalorder %v502, 0
        %vm705 = vcmp.lt.s32.totalorder %v509, 0
        %vm706 = vcmp.lt.s32.totalorder %v516, 0
        %vm707 = vcmp.lt.s32.totalorder %v523, 0
        %vm708 = vcmp.lt.s32.totalorder %v530, 0
        %vm709 = vcmp.lt.s32.totalorder %v537, 0
        %vm710 = vcmp.lt.s32.totalorder %v544, 0
        %vm711 = vcmp.lt.s32.totalorder %v551, 0
        %vm712 = vcmp.lt.s32.totalorder %v558, 0
        %vm713 = vcmp.lt.s32.totalorder %v565, 0
        %vm714 = vcmp.lt.s32.totalorder %v572, 0
        %vm715 = vcmp.lt.s32.totalorder %v579, 0
        %vm716 = vcmp.lt.s32.totalorder %v586, 0
        %vm717 = vcmp.lt.s32.totalorder %v593, 0
        %vm718 = vcmp.lt.s32.totalorder %v600, 0
        %vm719 = vcmp.lt.s32.totalorder %v607, 0
        %vm720 = vcmp.lt.s32.totalorder %v614, 0
        %vm721 = vcmp.lt.s32.totalorder %v621, 0
        %vm722 = vcmp.lt.s32.totalorder %v628, 0
        %vm723 = vcmp.lt.s32.totalorder %v635, 0
        %vm724 = vcmp.lt.s32.totalorder %v642, 0
        %vm725 = vcmp.lt.s32.totalorder %v649, 0
        %vm726 = vcmp.lt.s32.totalorder %v656, 0
        %vm727 = vcmp.lt.s32.totalorder %v663, 0
        %vm728 = vmand %vm696, %vm664
        %vm729 = vmand %vm697, %vm665
        %vm730 = vmand %vm698, %vm666
        %vm731 = vmand %vm699, %vm667
        %vm732 = vmand %vm700, %vm668
        %vm733 = vmand %vm701, %vm669
        %vm734 = vmand %vm702, %vm670
        %vm735 = vmand %vm703, %vm671
        %vm736 = vmand %vm704, %vm672
        %vm737 = vmand %vm705, %vm673
        %vm738 = vmand %vm706, %vm674
        %vm739 = vmand %vm707, %vm675
        %vm740 = vmand %vm708, %vm676
        %vm741 = vmand %vm709, %vm677
        %vm742 = vmand %vm710, %vm678
        %vm743 = vmand %vm711, %vm679
        %vm744 = vmand %vm712, %vm680
        %vm745 = vmand %vm713, %vm681
        %vm746 = vmand %vm714, %vm682
        %vm747 = vmand %vm715, %vm683
        %vm748 = vmand %vm716, %vm684
        %vm749 = vmand %vm717, %vm685
        %vm750 = vmand %vm718, %vm686
        %vm751 = vmand %vm719, %vm687
        %vm752 = vmand %vm720, %vm688
        %vm753 = vmand %vm721, %vm689
        %vm754 = vmand %vm722, %vm690
        %vm755 = vmand %vm723, %vm691
        %vm756 = vmand %vm724, %vm692
        %vm757 = vmand %vm725, %vm693
        %vm758 = vmand %vm726, %vm694
        %vm759 = vmand %vm727, %vm695
        %v760 = vadd.s32 %v446, 16
        %v761 = vadd.s32 %v453, 16
        %v762 = vadd.s32 %v460, 16
        %v763 = vadd.s32 %v467, 16
        %v764 = vadd.s32 %v474, 16
        %v765 = vadd.s32 %v481, 16
        %v766 = vadd.s32 %v488, 16
        %v767 = vadd.s32 %v495, 16
        %v768 = vadd.s32 %v502, 16
        %v769 = vadd.s32 %v509, 16
        %v770 = vadd.s32 %v516, 16
        %v771 = vadd.s32 %v523, 16
        %v772 = vadd.s32 %v530, 16
        %v773 = vadd.s32 %v537, 16
        %v774 = vadd.s32 %v544, 16
        %v775 = vadd.s32 %v551, 16
        %v776 = vadd.s32 %v558, 16
        %v777 = vadd.s32 %v565, 16
        %v778 = vadd.s32 %v572, 16
        %v779 = vadd.s32 %v579, 16
        %v780 = vadd.s32 %v586, 16
        %v781 = vadd.s32 %v593, 16
        %v782 = vadd.s32 %v600, 16
        %v783 = vadd.s32 %v607, 16
        %v784 = vadd.s32 %v614, 16
        %v785 = vadd.s32 %v621, 16
        %v786 = vadd.s32 %v628, 16
        %v787 = vadd.s32 %v635, 16
        %v788 = vadd.s32 %v642, 16
        %v789 = vadd.s32 %v649, 16
        %v790 = vadd.s32 %v656, 16
        %v791 = vadd.s32 %v663, 16
        %v792 = vsel %vm728, %v760, %v446
        %v793 = vsel %vm729, %v761, %v453
        %v794 = vsel %vm730, %v762, %v460
        %v795 = vsel %vm731, %v763, %v467
        %v796 = vsel %vm732, %v764, %v474
        %v797 = vsel %vm733, %v765, %v481
        %v798 = vsel %vm734, %v766, %v488
        %v799 = vsel %vm735, %v767, %v495
        %v800 = vsel %vm736, %v768, %v502
        %v801 = vsel %vm737, %v769, %v509
        %v802 = vsel %vm738, %v770, %v516
        %v803 = vsel %vm739, %v771, %v523
        %v804 = vsel %vm740, %v772, %v530
        %v805 = vsel %vm741, %v773, %v537
        %v806 = vsel %vm742, %v774, %v544
        %v807 = vsel %vm743, %v775, %v551
        %v808 = vsel %vm744, %v776, %v558
        %v809 = vsel %vm745, %v777, %v565
        %v810 = vsel %vm746, %v778, %v572
        %v811 = vsel %vm747, %v779, %v579
        %v812 = vsel %vm748, %v780, %v586
        %v813 = vsel %vm749, %v781, %v593
        %v814 = vsel %vm750, %v782, %v600
        %v815 = vsel %vm751, %v783, %v607
        %v816 = vsel %vm752, %v784, %v614
        %v817 = vsel %vm753, %v785, %v621
        %v818 = vsel %vm754, %v786, %v628
        %v819 = vsel %vm755, %v787, %v635
        %v820 = vsel %vm756, %v788, %v642
        %v821 = vsel %vm757, %v789, %v649
        %v822 = vsel %vm758, %v790, %v656
        %v823 = vsel %vm759, %v791, %v663
        %vm824 = vcmp.eq.s32.totalorder %v792, 0
        %vm825 = vcmp.eq.s32.totalorder %v793, 0
        %vm826 = vcmp.eq.s32.totalorder %v794, 0
        %vm827 = vcmp.eq.s32.totalorder %v795, 0
        %vm828 = vcmp.eq.s32.totalorder %v796, 0
        %vm829 = vcmp.eq.s32.totalorder %v797, 0
        %vm830 = vcmp.eq.s32.totalorder %v798, 0
        %vm831 = vcmp.eq.s32.totalorder %v799, 0
        %vm832 = vcmp.eq.s32.totalorder %v800, 0
        %vm833 = vcmp.eq.s32.totalorder %v801, 0
        %vm834 = vcmp.eq.s32.totalorder %v802, 0
        %vm835 = vcmp.eq.s32.totalorder %v803, 0
        %vm836 = vcmp.eq.s32.totalorder %v804, 0
        %vm837 = vcmp.eq.s32.totalorder %v805, 0
        %vm838 = vcmp.eq.s32.totalorder %v806, 0
        %vm839 = vcmp.eq.s32.totalorder %v807, 0
        %vm840 = vcmp.eq.s32.totalorder %v808, 0
        %vm841 = vcmp.eq.s32.totalorder %v809, 0
        %vm842 = vcmp.eq.s32.totalorder %v810, 0
        %vm843 = vcmp.eq.s32.totalorder %v811, 0
        %vm844 = vcmp.eq.s32.totalorder %v812, 0
        %vm845 = vcmp.eq.s32.totalorder %v813, 0
        %vm846 = vcmp.eq.s32.totalorder %v814, 0
        %vm847 = vcmp.eq.s32.totalorder %v815, 0
        %vm848 = vcmp.eq.s32.totalorder %v816, 0
        %vm849 = vcmp.eq.s32.totalorder %v817, 0
        %vm850 = vcmp.eq.s32.totalorder %v818, 0
        %vm851 = vcmp.eq.s32.totalorder %v819, 0
        %vm852 = vcmp.eq.s32.totalorder %v820, 0
        %vm853 = vcmp.eq.s32.totalorder %v821, 0
        %vm854 = vcmp.eq.s32.totalorder %v822, 0
        %vm855 = vcmp.eq.s32.totalorder %v823, 0
        %vm856 = vcmp.eq.s32.totalorder %v792, 15
        %vm857 = vcmp.eq.s32.totalorder %v793, 15
        %vm858 = vcmp.eq.s32.totalorder %v794, 15
        %vm859 = vcmp.eq.s32.totalorder %v795, 15
        %vm860 = vcmp.eq.s32.totalorder %v796, 15
        %vm861 = vcmp.eq.s32.totalorder %v797, 15
        %vm862 = vcmp.eq.s32.totalorder %v798, 15
        %vm863 = vcmp.eq.s32.totalorder %v799, 15
        %vm864 = vcmp.eq.s32.totalorder %v800, 15
        %vm865 = vcmp.eq.s32.totalorder %v801, 15
        %vm866 = vcmp.eq.s32.totalorder %v802, 15
        %vm867 = vcmp.eq.s32.totalorder %v803, 15
        %vm868 = vcmp.eq.s32.totalorder %v804, 15
        %vm869 = vcmp.eq.s32.totalorder %v805, 15
        %vm870 = vcmp.eq.s32.totalorder %v806, 15
        %vm871 = vcmp.eq.s32.totalorder %v807, 15
        %vm872 = vcmp.eq.s32.totalorder %v808, 15
        %vm873 = vcmp.eq.s32.totalorder %v809, 15
        %vm874 = vcmp.eq.s32.totalorder %v810, 15
        %vm875 = vcmp.eq.s32.totalorder %v811, 15
        %vm876 = vcmp.eq.s32.totalorder %v812, 15
        %vm877 = vcmp.eq.s32.totalorder %v813, 15
        %vm878 = vcmp.eq.s32.totalorder %v814, 15
        %vm879 = vcmp.eq.s32.totalorder %v815, 15
        %vm880 = vcmp.eq.s32.totalorder %v816, 15
        %vm881 = vcmp.eq.s32.totalorder %v817, 15
        %vm882 = vcmp.eq.s32.totalorder %v818, 15
        %vm883 = vcmp.eq.s32.totalorder %v819, 15
        %vm884 = vcmp.eq.s32.totalorder %v820, 15
        %vm885 = vcmp.eq.s32.totalorder %v821, 15
        %vm886 = vcmp.eq.s32.totalorder %v822, 15
        %vm887 = vcmp.eq.s32.totalorder %v823, 15
        %vm888 = vcmp.lt.s32.totalorder %v408, 16
        %vm889 = vcmp.lt.s32.totalorder %v409, 16
        %vm890 = vcmp.lt.s32.totalorder %v410, 16
        %vm891 = vcmp.lt.s32.totalorder %v411, 16
        %vm892 = vcmp.lt.s32.totalorder %v412, 16
        %vm893 = vcmp.lt.s32.totalorder %v413, 16
        %vm894 = vcmp.lt.s32.totalorder %v414, 16
        %vm895 = vcmp.lt.s32.totalorder %v415, 16
        %vm896 = vcmp.lt.s32.totalorder %v416, 16
        %vm897 = vcmp.lt.s32.totalorder %v417, 16
        %vm898 = vcmp.lt.s32.totalorder %v418, 16
        %vm899 = vcmp.lt.s32.totalorder %v419, 16
        %vm900 = vcmp.lt.s32.totalorder %v420, 16
        %vm901 = vcmp.lt.s32.totalorder %v421, 16
        %vm902 = vcmp.lt.s32.totalorder %v422, 16
        %vm903 = vcmp.lt.s32.totalorder %v423, 16
        %vm904 = vcmp.lt.s32.totalorder %v424, 16
        %vm905 = vcmp.lt.s32.totalorder %v425, 16
        %vm906 = vcmp.lt.s32.totalorder %v426, 16
        %vm907 = vcmp.lt.s32.totalorder %v427, 16
        %vm908 = vcmp.lt.s32.totalorder %v428, 16
        %vm909 = vcmp.lt.s32.totalorder %v429, 16
        %vm910 = vcmp.lt.s32.totalorder %v430, 16
        %vm911 = vcmp.lt.s32.totalorder %v431, 16
        %vm912 = vcmp.lt.s32.totalorder %v432, 16
        %vm913 = vcmp.lt.s32.totalorder %v433, 16
        %vm914 = vcmp.lt.s32.totalorder %v434, 16
        %vm915 = vcmp.lt.s32.totalorder %v435, 16
        %vm916 = vcmp.lt.s32.totalorder %v436, 16
        %vm917 = vcmp.lt.s32.totalorder %v437, 16
        %vm918 = vcmp.lt.s32.totalorder %v438, 16
        %vm919 = vcmp.lt.s32.totalorder %v439, 16
        %vm920 = vcmp.ge.s32.totalorder %v408, 240
        %vm921 = vcmp.ge.s32.totalorder %v409, 240
        %vm922 = vcmp.ge.s32.totalorder %v410, 240
        %vm923 = vcmp.ge.s32.totalorder %v411, 240
        %vm924 = vcmp.ge.s32.totalorder %v412, 240
        %vm925 = vcmp.ge.s32.totalorder %v413, 240
        %vm926 = vcmp.ge.s32.totalorder %v414, 240
        %vm927 = vcmp.ge.s32.totalorder %v415, 240
        %vm928 = vcmp.ge.s32.totalorder %v416, 240
        %vm929 = vcmp.ge.s32.totalorder %v417, 240
        %vm930 = vcmp.ge.s32.totalorder %v418, 240
        %vm931 = vcmp.ge.s32.totalorder %v419, 240
        %vm932 = vcmp.ge.s32.totalorder %v420, 240
        %vm933 = vcmp.ge.s32.totalorder %v421, 240
        %vm934 = vcmp.ge.s32.totalorder %v422, 240
        %vm935 = vcmp.ge.s32.totalorder %v423, 240
        %vm936 = vcmp.ge.s32.totalorder %v424, 240
        %vm937 = vcmp.ge.s32.totalorder %v425, 240
        %vm938 = vcmp.ge.s32.totalorder %v426, 240
        %vm939 = vcmp.ge.s32.totalorder %v427, 240
        %vm940 = vcmp.ge.s32.totalorder %v428, 240
        %vm941 = vcmp.ge.s32.totalorder %v429, 240
        %vm942 = vcmp.ge.s32.totalorder %v430, 240
        %vm943 = vcmp.ge.s32.totalorder %v431, 240
        %vm944 = vcmp.ge.s32.totalorder %v432, 240
        %vm945 = vcmp.ge.s32.totalorder %v433, 240
        %vm946 = vcmp.ge.s32.totalorder %v434, 240
        %vm947 = vcmp.ge.s32.totalorder %v435, 240
        %vm948 = vcmp.ge.s32.totalorder %v436, 240
        %vm949 = vcmp.ge.s32.totalorder %v437, 240
        %vm950 = vcmp.ge.s32.totalorder %v438, 240
        %vm951 = vcmp.ge.s32.totalorder %v439, 240
        %v952 = vld [vmem:[%s348] sm:$0xff]
        %v953 = vld [vmem:[%s348 + $0x8] sm:$0xff]
        %v954 = vld [vmem:[%s348 + $0x10] sm:$0xff]
        %v955 = vld [vmem:[%s348 + $0x18] sm:$0xff]
        %v956 = vld [vmem:[%s348 + $0x20] sm:$0xff]
        %v957 = vld [vmem:[%s348 + $0x28] sm:$0xff]
        %v958 = vld [vmem:[%s348 + $0x30] sm:$0xff]
        %v959 = vld [vmem:[%s348 + $0x38] sm:$0xff]
        %v960 = vld [vmem:[%s348 + $0x40] sm:$0xff]
        %v961 = vld [vmem:[%s348 + $0x48] sm:$0xff]
        %v962 = vld [vmem:[%s348 + $0x50] sm:$0xff]
        %v963 = vld [vmem:[%s348 + $0x58] sm:$0xff]
        %v964 = vld [vmem:[%s348 + $0x60] sm:$0xff]
        %v965 = vld [vmem:[%s348 + $0x68] sm:$0xff]
        %v966 = vld [vmem:[%s348 + $0x70] sm:$0xff]
        %v967 = vld [vmem:[%s348 + $0x78] sm:$0xff]
        %v968 = vld [vmem:[%s348 + $0x80] sm:$0xff]
        %v969 = vld [vmem:[%s348 + $0x88] sm:$0xff]
        %v970 = vld [vmem:[%s348 + $0x90] sm:$0xff]
        %v971 = vld [vmem:[%s348 + $0x98] sm:$0xff]
        %v972 = vld [vmem:[%s348 + $0xa0] sm:$0xff]
        %v973 = vld [vmem:[%s348 + $0xa8] sm:$0xff]
        %v974 = vld [vmem:[%s348 + $0xb0] sm:$0xff]
        %v975 = vld [vmem:[%s348 + $0xb8] sm:$0xff]
        %v976 = vld [vmem:[%s348 + $0xc0] sm:$0xff]
        %v977 = vld [vmem:[%s348 + $0xc8] sm:$0xff]
        %v978 = vld [vmem:[%s348 + $0xd0] sm:$0xff]
        %v979 = vld [vmem:[%s348 + $0xd8] sm:$0xff]
        %v980 = vld [vmem:[%s348 + $0xe0] sm:$0xff]
        %v981 = vld [vmem:[%s348 + $0xe8] sm:$0xff]
        %v982 = vld [vmem:[%s348 + $0xf0] sm:$0xff]
        %v983 = vld [vmem:[%s348 + $0xf8] sm:$0xff]
        %v984 = vld [vmem:[%s357] sm:$0xff]
        %v985 = vld [vmem:[%s357 + $0x8] sm:$0xff]
        %v986 = vld [vmem:[%s357 + $0x10] sm:$0xff]
        %v987 = vld [vmem:[%s357 + $0x18] sm:$0xff]
        %v988 = vld [vmem:[%s357 + $0x20] sm:$0xff]
        %v989 = vld [vmem:[%s357 + $0x28] sm:$0xff]
        %v990 = vld [vmem:[%s357 + $0x30] sm:$0xff]
        %v991 = vld [vmem:[%s357 + $0x38] sm:$0xff]
        %v992 = vld [vmem:[%s357 + $0x40] sm:$0xff]
        %v993 = vld [vmem:[%s357 + $0x48] sm:$0xff]
        %v994 = vld [vmem:[%s357 + $0x50] sm:$0xff]
        %v995 = vld [vmem:[%s357 + $0x58] sm:$0xff]
        %v996 = vld [vmem:[%s357 + $0x60] sm:$0xff]
        %v997 = vld [vmem:[%s357 + $0x68] sm:$0xff]
        %v998 = vld [vmem:[%s357 + $0x70] sm:$0xff]
        %v999 = vld [vmem:[%s357 + $0x78] sm:$0xff]
        %v1000 = vld [vmem:[%s357 + $0x80] sm:$0xff]
        %v1001 = vld [vmem:[%s357 + $0x88] sm:$0xff]
        %v1002 = vld [vmem:[%s357 + $0x90] sm:$0xff]
        %v1003 = vld [vmem:[%s357 + $0x98] sm:$0xff]
        %v1004 = vld [vmem:[%s357 + $0xa0] sm:$0xff]
        %v1005 = vld [vmem:[%s357 + $0xa8] sm:$0xff]
        %v1006 = vld [vmem:[%s357 + $0xb0] sm:$0xff]
        %v1007 = vld [vmem:[%s357 + $0xb8] sm:$0xff]
        %v1008 = vld [vmem:[%s357 + $0xc0] sm:$0xff]
        %v1009 = vld [vmem:[%s357 + $0xc8] sm:$0xff]
        %v1010 = vld [vmem:[%s357 + $0xd0] sm:$0xff]
        %v1011 = vld [vmem:[%s357 + $0xd8] sm:$0xff]
        %v1012 = vld [vmem:[%s357 + $0xe0] sm:$0xff]
        %v1013 = vld [vmem:[%s357 + $0xe8] sm:$0xff]
        %v1014 = vld [vmem:[%s357 + $0xf0] sm:$0xff]
        %v1015 = vld [vmem:[%s357 + $0xf8] sm:$0xff]
        %v1016 = vxor.u32 %v984, 2147483648
        %v1017 = vxor.u32 %v985, 2147483648
        %v1018 = vxor.u32 %v986, 2147483648
        %v1019 = vxor.u32 %v987, 2147483648
        %v1020 = vxor.u32 %v988, 2147483648
        %v1021 = vxor.u32 %v989, 2147483648
        %v1022 = vxor.u32 %v990, 2147483648
        %v1023 = vxor.u32 %v991, 2147483648
        %v1024 = vxor.u32 %v992, 2147483648
        %v1025 = vxor.u32 %v993, 2147483648
        %v1026 = vxor.u32 %v994, 2147483648
        %v1027 = vxor.u32 %v995, 2147483648
        %v1028 = vxor.u32 %v996, 2147483648
        %v1029 = vxor.u32 %v997, 2147483648
        %v1030 = vxor.u32 %v998, 2147483648
        %v1031 = vxor.u32 %v999, 2147483648
        %v1032 = vxor.u32 %v1000, 2147483648
        %v1033 = vxor.u32 %v1001, 2147483648
        %v1034 = vxor.u32 %v1002, 2147483648
        %v1035 = vxor.u32 %v1003, 2147483648
        %v1036 = vxor.u32 %v1004, 2147483648
        %v1037 = vxor.u32 %v1005, 2147483648
        %v1038 = vxor.u32 %v1006, 2147483648
        %v1039 = vxor.u32 %v1007, 2147483648
        %v1040 = vxor.u32 %v1008, 2147483648
        %v1041 = vxor.u32 %v1009, 2147483648
        %v1042 = vxor.u32 %v1010, 2147483648
        %v1043 = vxor.u32 %v1011, 2147483648
        %v1044 = vxor.u32 %v1012, 2147483648
        %v1045 = vxor.u32 %v1013, 2147483648
        %v1046 = vxor.u32 %v1014, 2147483648
        %v1047 = vxor.u32 %v1015, 2147483648
        %v1048 = vmul.f32 %v1016, 1.442695
        %v1049 = vpow.pop %v1048
        %v1050 = vmul.f32 %v1017, 1.442695
        %v1051 = vpow.pop %v1050
        %v1052 = vmul.f32 %v1018, 1.442695
        %v1053 = vpow.pop %v1052
        %v1054 = vmul.f32 %v1019, 1.442695
        %v1055 = vpow.pop %v1054
        %v1056 = vmul.f32 %v1020, 1.442695
        %v1057 = vpow.pop %v1056
        %v1058 = vmul.f32 %v1021, 1.442695
        %v1059 = vpow.pop %v1058
        %v1060 = vmul.f32 %v1022, 1.442695
        %v1061 = vpow.pop %v1060
        %v1062 = vmul.f32 %v1023, 1.442695
        %v1063 = vpow.pop %v1062
        %v1064 = vmul.f32 %v1024, 1.442695
        %v1065 = vpow.pop %v1064
        %v1066 = vmul.f32 %v1025, 1.442695
        %v1067 = vpow.pop %v1066
        %v1068 = vmul.f32 %v1026, 1.442695
        %v1069 = vpow.pop %v1068
        %v1070 = vmul.f32 %v1027, 1.442695
        %v1071 = vpow.pop %v1070
        %v1072 = vmul.f32 %v1028, 1.442695
        %v1073 = vpow.pop %v1072
        %v1074 = vmul.f32 %v1029, 1.442695
        %v1075 = vpow.pop %v1074
        %v1076 = vmul.f32 %v1030, 1.442695
        %v1077 = vpow.pop %v1076
        %v1078 = vmul.f32 %v1031, 1.442695
        %v1079 = vpow.pop %v1078
        %v1080 = vmul.f32 %v1032, 1.442695
        %v1081 = vpow.pop %v1080
        %v1082 = vmul.f32 %v1033, 1.442695
        %v1083 = vpow.pop %v1082
        %v1084 = vmul.f32 %v1034, 1.442695
        %v1085 = vpow.pop %v1084
        %v1086 = vmul.f32 %v1035, 1.442695
        %v1087 = vpow.pop %v1086
        %v1088 = vmul.f32 %v1036, 1.442695
        %v1089 = vpow.pop %v1088
        %v1090 = vmul.f32 %v1037, 1.442695
        %v1091 = vpow.pop %v1090
        %v1092 = vmul.f32 %v1038, 1.442695
        %v1093 = vpow.pop %v1092
        %v1094 = vmul.f32 %v1039, 1.442695
        %v1095 = vpow.pop %v1094
        %v1096 = vmul.f32 %v1040, 1.442695
        %v1097 = vpow.pop %v1096
        %v1098 = vmul.f32 %v1041, 1.442695
        %v1099 = vpow.pop %v1098
        %v1100 = vmul.f32 %v1042, 1.442695
        %v1101 = vpow.pop %v1100
        %v1102 = vmul.f32 %v1043, 1.442695
        %v1103 = vpow.pop %v1102
        %v1104 = vmul.f32 %v1044, 1.442695
        %v1105 = vpow.pop %v1104
        %v1106 = vmul.f32 %v1045, 1.442695
        %v1107 = vpow.pop %v1106
        %v1108 = vmul.f32 %v1046, 1.442695
        %v1109 = vpow.pop %v1108
        %v1110 = vmul.f32 %v1047, 1.442695
        %v1111 = vpow.pop %v1110
        %v1112 = vadd.f32 %v1049, 1.0
        %v1113 = vadd.f32 %v1051, 1.0
        %v1114 = vadd.f32 %v1053, 1.0
        %v1115 = vadd.f32 %v1055, 1.0
        %v1116 = vadd.f32 %v1057, 1.0
        %v1117 = vadd.f32 %v1059, 1.0
        %v1118 = vadd.f32 %v1061, 1.0
        %v1119 = vadd.f32 %v1063, 1.0
        %v1120 = vadd.f32 %v1065, 1.0
        %v1121 = vadd.f32 %v1067, 1.0
        %v1122 = vadd.f32 %v1069, 1.0
        %v1123 = vadd.f32 %v1071, 1.0
        %v1124 = vadd.f32 %v1073, 1.0
        %v1125 = vadd.f32 %v1075, 1.0
        %v1126 = vadd.f32 %v1077, 1.0
        %v1127 = vadd.f32 %v1079, 1.0
        %v1128 = vadd.f32 %v1081, 1.0
        %v1129 = vadd.f32 %v1083, 1.0
        %v1130 = vadd.f32 %v1085, 1.0
        %v1131 = vadd.f32 %v1087, 1.0
        %v1132 = vadd.f32 %v1089, 1.0
        %v1133 = vadd.f32 %v1091, 1.0
        %v1134 = vadd.f32 %v1093, 1.0
        %v1135 = vadd.f32 %v1095, 1.0
        %v1136 = vadd.f32 %v1097, 1.0
        %v1137 = vadd.f32 %v1099, 1.0
        %v1138 = vadd.f32 %v1101, 1.0
        %v1139 = vadd.f32 %v1103, 1.0
        %v1140 = vadd.f32 %v1105, 1.0
        %v1141 = vadd.f32 %v1107, 1.0
        %v1142 = vadd.f32 %v1109, 1.0
        %v1143 = vadd.f32 %v1111, 1.0
        %v1144 = vrcp.pop %v1112
        %v1145 = vmul.f32 1.0, %v1144
        %v1146 = vrcp.pop %v1113
        %v1147 = vmul.f32 1.0, %v1146
        %v1148 = vrcp.pop %v1114
        %v1149 = vmul.f32 1.0, %v1148
        %v1150 = vrcp.pop %v1115
        %v1151 = vmul.f32 1.0, %v1150
        %v1152 = vrcp.pop %v1116
        %v1153 = vmul.f32 1.0, %v1152
        %v1154 = vrcp.pop %v1117
        %v1155 = vmul.f32 1.0, %v1154
        %v1156 = vrcp.pop %v1118
        %v1157 = vmul.f32 1.0, %v1156
        %v1158 = vrcp.pop %v1119
        %v1159 = vmul.f32 1.0, %v1158
        %v1160 = vrcp.pop %v1120
        %v1161 = vmul.f32 1.0, %v1160
        %v1162 = vrcp.pop %v1121
        %v1163 = vmul.f32 1.0, %v1162
        %v1164 = vrcp.pop %v1122
        %v1165 = vmul.f32 1.0, %v1164
        %v1166 = vrcp.pop %v1123
        %v1167 = vmul.f32 1.0, %v1166
        %v1168 = vrcp.pop %v1124
        %v1169 = vmul.f32 1.0, %v1168
        %v1170 = vrcp.pop %v1125
        %v1171 = vmul.f32 1.0, %v1170
        %v1172 = vrcp.pop %v1126
        %v1173 = vmul.f32 1.0, %v1172
        %v1174 = vrcp.pop %v1127
        %v1175 = vmul.f32 1.0, %v1174
        %v1176 = vrcp.pop %v1128
        %v1177 = vmul.f32 1.0, %v1176
        %v1178 = vrcp.pop %v1129
        %v1179 = vmul.f32 1.0, %v1178
        %v1180 = vrcp.pop %v1130
        %v1181 = vmul.f32 1.0, %v1180
        %v1182 = vrcp.pop %v1131
        %v1183 = vmul.f32 1.0, %v1182
        %v1184 = vrcp.pop %v1132
        %v1185 = vmul.f32 1.0, %v1184
        %v1186 = vrcp.pop %v1133
        %v1187 = vmul.f32 1.0, %v1186
        %v1188 = vrcp.pop %v1134
        %v1189 = vmul.f32 1.0, %v1188
        %v1190 = vrcp.pop %v1135
        %v1191 = vmul.f32 1.0, %v1190
        %v1192 = vrcp.pop %v1136
        %v1193 = vmul.f32 1.0, %v1192
        %v1194 = vrcp.pop %v1137
        %v1195 = vmul.f32 1.0, %v1194
        %v1196 = vrcp.pop %v1138
        %v1197 = vmul.f32 1.0, %v1196
        %v1198 = vrcp.pop %v1139
        %v1199 = vmul.f32 1.0, %v1198
        %v1200 = vrcp.pop %v1140
        %v1201 = vmul.f32 1.0, %v1200
        %v1202 = vrcp.pop %v1141
        %v1203 = vmul.f32 1.0, %v1202
        %v1204 = vrcp.pop %v1142
        %v1205 = vmul.f32 1.0, %v1204
        %v1206 = vrcp.pop %v1143
        %v1207 = vmul.f32 1.0, %v1206
        %v1208 = vmul.f32 %v1145, %v952
        %v1209 = vmul.f32 %v1147, %v953
        %v1210 = vmul.f32 %v1149, %v954
        %v1211 = vmul.f32 %v1151, %v955
        %v1212 = vmul.f32 %v1153, %v956
        %v1213 = vmul.f32 %v1155, %v957
        %v1214 = vmul.f32 %v1157, %v958
        %v1215 = vmul.f32 %v1159, %v959
        %v1216 = vmul.f32 %v1161, %v960
        %v1217 = vmul.f32 %v1163, %v961
        %v1218 = vmul.f32 %v1165, %v962
        %v1219 = vmul.f32 %v1167, %v963
        %v1220 = vmul.f32 %v1169, %v964
        %v1221 = vmul.f32 %v1171, %v965
        %v1222 = vmul.f32 %v1173, %v966
        %v1223 = vmul.f32 %v1175, %v967
        %v1224 = vmul.f32 %v1177, %v968
        %v1225 = vmul.f32 %v1179, %v969
        %v1226 = vmul.f32 %v1181, %v970
        %v1227 = vmul.f32 %v1183, %v971
        %v1228 = vmul.f32 %v1185, %v972
        %v1229 = vmul.f32 %v1187, %v973
        %v1230 = vmul.f32 %v1189, %v974
        %v1231 = vmul.f32 %v1191, %v975
        %v1232 = vmul.f32 %v1193, %v976
        %v1233 = vmul.f32 %v1195, %v977
        %v1234 = vmul.f32 %v1197, %v978
        %v1235 = vmul.f32 %v1199, %v979
        %v1236 = vmul.f32 %v1201, %v980
        %v1237 = vmul.f32 %v1203, %v981
        %v1238 = vmul.f32 %v1205, %v982
        %v1239 = vmul.f32 %v1207, %v983
        %v1240 = vadd.f32 %v1208, %v952
        %v1241 = vadd.f32 %v1209, %v953
        %v1242 = vadd.f32 %v1210, %v954
        %v1243 = vadd.f32 %v1211, %v955
        %v1244 = vadd.f32 %v1212, %v956
        %v1245 = vadd.f32 %v1213, %v957
        %v1246 = vadd.f32 %v1214, %v958
        %v1247 = vadd.f32 %v1215, %v959
        %v1248 = vadd.f32 %v1216, %v960
        %v1249 = vadd.f32 %v1217, %v961
        %v1250 = vadd.f32 %v1218, %v962
        %v1251 = vadd.f32 %v1219, %v963
        %v1252 = vadd.f32 %v1220, %v964
        %v1253 = vadd.f32 %v1221, %v965
        %v1254 = vadd.f32 %v1222, %v966
        %v1255 = vadd.f32 %v1223, %v967
        %v1256 = vadd.f32 %v1224, %v968
        %v1257 = vadd.f32 %v1225, %v969
        %v1258 = vadd.f32 %v1226, %v970
        %v1259 = vadd.f32 %v1227, %v971
        %v1260 = vadd.f32 %v1228, %v972
        %v1261 = vadd.f32 %v1229, %v973
        %v1262 = vadd.f32 %v1230, %v974
        %v1263 = vadd.f32 %v1231, %v975
        %v1264 = vadd.f32 %v1232, %v976
        %v1265 = vadd.f32 %v1233, %v977
        %v1266 = vadd.f32 %v1234, %v978
        %v1267 = vadd.f32 %v1235, %v979
        %v1268 = vadd.f32 %v1236, %v980
        %v1269 = vadd.f32 %v1237, %v981
        %v1270 = vadd.f32 %v1238, %v982
        %v1271 = vadd.f32 %v1239, %v983
        %v1272 = vrot.slane %v1240, 7
        %v1273 = vrot.slane %v1241, 7
        %v1274 = vrot.slane %v1242, 7
        %v1275 = vrot.slane %v1243, 7
        %v1276 = vrot.slane %v1244, 7
        %v1277 = vrot.slane %v1245, 7
        %v1278 = vrot.slane %v1246, 7
        %v1279 = vrot.slane %v1247, 7
        %v1280 = vrot.slane %v1248, 7
        %v1281 = vrot.slane %v1249, 7
        %v1282 = vrot.slane %v1250, 7
        %v1283 = vrot.slane %v1251, 7
        %v1284 = vrot.slane %v1252, 7
        %v1285 = vrot.slane %v1253, 7
        %v1286 = vrot.slane %v1254, 7
        %v1287 = vrot.slane %v1255, 7
        %v1288 = vrot.slane %v1256, 7
        %v1289 = vrot.slane %v1257, 7
        %v1290 = vrot.slane %v1258, 7
        %v1291 = vrot.slane %v1259, 7
        %v1292 = vrot.slane %v1260, 7
        %v1293 = vrot.slane %v1261, 7
        %v1294 = vrot.slane %v1262, 7
        %v1295 = vrot.slane %v1263, 7
        %v1296 = vrot.slane %v1264, 7
        %v1297 = vrot.slane %v1265, 7
        %v1298 = vrot.slane %v1266, 7
        %v1299 = vrot.slane %v1267, 7
        %v1300 = vrot.slane %v1268, 7
        %v1301 = vrot.slane %v1269, 7
        %v1302 = vrot.slane %v1270, 7
        %v1303 = vrot.slane %v1271, 7
        %vm1304 = vcmp.lt.s32.totalorder %v408, 1
        %v1305 = vsel %vm1304, %v1302, %v1303
        %v1306 = vsel %vm1304, %v1301, %v1302
        %v1307 = vsel %vm1304, %v1300, %v1301
        %v1308 = vsel %vm1304, %v1299, %v1300
        %v1309 = vsel %vm1304, %v1298, %v1299
        %v1310 = vsel %vm1304, %v1297, %v1298
        %v1311 = vsel %vm1304, %v1296, %v1297
        %v1312 = vsel %vm1304, %v1295, %v1296
        %v1313 = vsel %vm1304, %v1294, %v1295
        %v1314 = vsel %vm1304, %v1293, %v1294
        %v1315 = vsel %vm1304, %v1292, %v1293
        %v1316 = vsel %vm1304, %v1291, %v1292
        %v1317 = vsel %vm1304, %v1290, %v1291
        %v1318 = vsel %vm1304, %v1289, %v1290
        %v1319 = vsel %vm1304, %v1288, %v1289
        %v1320 = vsel %vm1304, %v1287, %v1288
        %v1321 = vsel %vm1304, %v1286, %v1287
        %v1322 = vsel %vm1304, %v1285, %v1286
        %v1323 = vsel %vm1304, %v1284, %v1285
        %v1324 = vsel %vm1304, %v1283, %v1284
        %v1325 = vsel %vm1304, %v1282, %v1283
        %v1326 = vsel %vm1304, %v1281, %v1282
        %v1327 = vsel %vm1304, %v1280, %v1281
        %v1328 = vsel %vm1304, %v1279, %v1280
        %v1329 = vsel %vm1304, %v1278, %v1279
        %v1330 = vsel %vm1304, %v1277, %v1278
        %v1331 = vsel %vm1304, %v1276, %v1277
        %v1332 = vsel %vm1304, %v1275, %v1276
        %v1333 = vsel %vm1304, %v1274, %v1275
        %v1334 = vsel %vm1304, %v1273, %v1274
        %v1335 = vsel %vm1304, %v1272, %v1273
        %v1336 = vsel %vm1304, %v1303, %v1272
        %v1337 = vsel %vm824, 1, 0
        %v1338 = vsel %vm825, 1, 0
        %v1339 = vsel %vm826, 1, 0
        %v1340 = vsel %vm827, 1, 0
        %v1341 = vsel %vm828, 1, 0
        %v1342 = vsel %vm829, 1, 0
        %v1343 = vsel %vm830, 1, 0
        %v1344 = vsel %vm831, 1, 0
        %v1345 = vsel %vm832, 1, 0
        %v1346 = vsel %vm833, 1, 0
        %v1347 = vsel %vm834, 1, 0
        %v1348 = vsel %vm835, 1, 0
        %v1349 = vsel %vm836, 1, 0
        %v1350 = vsel %vm837, 1, 0
        %v1351 = vsel %vm838, 1, 0
        %v1352 = vsel %vm839, 1, 0
        %v1353 = vsel %vm840, 1, 0
        %v1354 = vsel %vm841, 1, 0
        %v1355 = vsel %vm842, 1, 0
        %v1356 = vsel %vm843, 1, 0
        %v1357 = vsel %vm844, 1, 0
        %v1358 = vsel %vm845, 1, 0
        %v1359 = vsel %vm846, 1, 0
        %v1360 = vsel %vm847, 1, 0
        %v1361 = vsel %vm848, 1, 0
        %v1362 = vsel %vm849, 1, 0
        %v1363 = vsel %vm850, 1, 0
        %v1364 = vsel %vm851, 1, 0
        %v1365 = vsel %vm852, 1, 0
        %v1366 = vsel %vm853, 1, 0
        %v1367 = vsel %vm854, 1, 0
        %v1368 = vsel %vm855, 1, 0
        %vm1369 = vcmp.eq.s32.totalorder %v1337, 1
        %vm1370 = vcmp.eq.s32.totalorder %v1338, 1
        %vm1371 = vcmp.eq.s32.totalorder %v1339, 1
        %vm1372 = vcmp.eq.s32.totalorder %v1340, 1
        %vm1373 = vcmp.eq.s32.totalorder %v1341, 1
        %vm1374 = vcmp.eq.s32.totalorder %v1342, 1
        %vm1375 = vcmp.eq.s32.totalorder %v1343, 1
        %vm1376 = vcmp.eq.s32.totalorder %v1344, 1
        %vm1377 = vcmp.eq.s32.totalorder %v1345, 1
        %vm1378 = vcmp.eq.s32.totalorder %v1346, 1
        %vm1379 = vcmp.eq.s32.totalorder %v1347, 1
        %vm1380 = vcmp.eq.s32.totalorder %v1348, 1
        %vm1381 = vcmp.eq.s32.totalorder %v1349, 1
        %vm1382 = vcmp.eq.s32.totalorder %v1350, 1
        %vm1383 = vcmp.eq.s32.totalorder %v1351, 1
        %vm1384 = vcmp.eq.s32.totalorder %v1352, 1
        %vm1385 = vcmp.eq.s32.totalorder %v1353, 1
        %vm1386 = vcmp.eq.s32.totalorder %v1354, 1
        %vm1387 = vcmp.eq.s32.totalorder %v1355, 1
        %vm1388 = vcmp.eq.s32.totalorder %v1356, 1
        %vm1389 = vcmp.eq.s32.totalorder %v1357, 1
        %vm1390 = vcmp.eq.s32.totalorder %v1358, 1
        %vm1391 = vcmp.eq.s32.totalorder %v1359, 1
        %vm1392 = vcmp.eq.s32.totalorder %v1360, 1
        %vm1393 = vcmp.eq.s32.totalorder %v1361, 1
        %vm1394 = vcmp.eq.s32.totalorder %v1362, 1
        %vm1395 = vcmp.eq.s32.totalorder %v1363, 1
        %vm1396 = vcmp.eq.s32.totalorder %v1364, 1
        %vm1397 = vcmp.eq.s32.totalorder %v1365, 1
        %vm1398 = vcmp.eq.s32.totalorder %v1366, 1
        %vm1399 = vcmp.eq.s32.totalorder %v1367, 1
        %vm1400 = vcmp.eq.s32.totalorder %v1368, 1
        %v1401 = vsel %vm1369, 0.0, %v1336
        %v1402 = vsel %vm1370, 0.0, %v1335
        %v1403 = vsel %vm1371, 0.0, %v1334
        %v1404 = vsel %vm1372, 0.0, %v1333
        %v1405 = vsel %vm1373, 0.0, %v1332
        %v1406 = vsel %vm1374, 0.0, %v1331
        %v1407 = vsel %vm1375, 0.0, %v1330
        %v1408 = vsel %vm1376, 0.0, %v1329
        %v1409 = vsel %vm1377, 0.0, %v1328
        %v1410 = vsel %vm1378, 0.0, %v1327
        %v1411 = vsel %vm1379, 0.0, %v1326
        %v1412 = vsel %vm1380, 0.0, %v1325
        %v1413 = vsel %vm1381, 0.0, %v1324
        %v1414 = vsel %vm1382, 0.0, %v1323
        %v1415 = vsel %vm1383, 0.0, %v1322
        %v1416 = vsel %vm1384, 0.0, %v1321
        %v1417 = vsel %vm1385, 0.0, %v1320
        %v1418 = vsel %vm1386, 0.0, %v1319
        %v1419 = vsel %vm1387, 0.0, %v1318
        %v1420 = vsel %vm1388, 0.0, %v1317
        %v1421 = vsel %vm1389, 0.0, %v1316
        %v1422 = vsel %vm1390, 0.0, %v1315
        %v1423 = vsel %vm1391, 0.0, %v1314
        %v1424 = vsel %vm1392, 0.0, %v1313
        %v1425 = vsel %vm1393, 0.0, %v1312
        %v1426 = vsel %vm1394, 0.0, %v1311
        %v1427 = vsel %vm1395, 0.0, %v1310
        %v1428 = vsel %vm1396, 0.0, %v1309
        %v1429 = vsel %vm1397, 0.0, %v1308
        %v1430 = vsel %vm1398, 0.0, %v1307
        %v1431 = vsel %vm1399, 0.0, %v1306
        %v1432 = vsel %vm1400, 0.0, %v1305
        %v1433 = vrot.slane %v1240, 1
        %v1434 = vrot.slane %v1241, 1
        %v1435 = vrot.slane %v1242, 1
        %v1436 = vrot.slane %v1243, 1
        %v1437 = vrot.slane %v1244, 1
        %v1438 = vrot.slane %v1245, 1
        %v1439 = vrot.slane %v1246, 1
        %v1440 = vrot.slane %v1247, 1
        %v1441 = vrot.slane %v1248, 1
        %v1442 = vrot.slane %v1249, 1
        %v1443 = vrot.slane %v1250, 1
        %v1444 = vrot.slane %v1251, 1
        %v1445 = vrot.slane %v1252, 1
        %v1446 = vrot.slane %v1253, 1
        %v1447 = vrot.slane %v1254, 1
        %v1448 = vrot.slane %v1255, 1
        %v1449 = vrot.slane %v1256, 1
        %v1450 = vrot.slane %v1257, 1
        %v1451 = vrot.slane %v1258, 1
        %v1452 = vrot.slane %v1259, 1
        %v1453 = vrot.slane %v1260, 1
        %v1454 = vrot.slane %v1261, 1
        %v1455 = vrot.slane %v1262, 1
        %v1456 = vrot.slane %v1263, 1
        %v1457 = vrot.slane %v1264, 1
        %v1458 = vrot.slane %v1265, 1
        %v1459 = vrot.slane %v1266, 1
        %v1460 = vrot.slane %v1267, 1
        %v1461 = vrot.slane %v1268, 1
        %v1462 = vrot.slane %v1269, 1
        %v1463 = vrot.slane %v1270, 1
        %v1464 = vrot.slane %v1271, 1
        %vm1465 = vcmp.lt.s32.totalorder %v408, 7
        %v1466 = vsel %vm1465, %v1463, %v1464
        %v1467 = vsel %vm1465, %v1462, %v1463
        %v1468 = vsel %vm1465, %v1461, %v1462
        %v1469 = vsel %vm1465, %v1460, %v1461
        %v1470 = vsel %vm1465, %v1459, %v1460
        %v1471 = vsel %vm1465, %v1458, %v1459
        %v1472 = vsel %vm1465, %v1457, %v1458
        %v1473 = vsel %vm1465, %v1456, %v1457
        %v1474 = vsel %vm1465, %v1455, %v1456
        %v1475 = vsel %vm1465, %v1454, %v1455
        %v1476 = vsel %vm1465, %v1453, %v1454
        %v1477 = vsel %vm1465, %v1452, %v1453
        %v1478 = vsel %vm1465, %v1451, %v1452
        %v1479 = vsel %vm1465, %v1450, %v1451
        %v1480 = vsel %vm1465, %v1449, %v1450
        %v1481 = vsel %vm1465, %v1448, %v1449
        %v1482 = vsel %vm1465, %v1447, %v1448
        %v1483 = vsel %vm1465, %v1446, %v1447
        %v1484 = vsel %vm1465, %v1445, %v1446
        %v1485 = vsel %vm1465, %v1444, %v1445
        %v1486 = vsel %vm1465, %v1443, %v1444
        %v1487 = vsel %vm1465, %v1442, %v1443
        %v1488 = vsel %vm1465, %v1441, %v1442
        %v1489 = vsel %vm1465, %v1440, %v1441
        %v1490 = vsel %vm1465, %v1439, %v1440
        %v1491 = vsel %vm1465, %v1438, %v1439
        %v1492 = vsel %vm1465, %v1437, %v1438
        %v1493 = vsel %vm1465, %v1436, %v1437
        %v1494 = vsel %vm1465, %v1435, %v1436
        %v1495 = vsel %vm1465, %v1434, %v1435
        %v1496 = vsel %vm1465, %v1433, %v1434
        %v1497 = vsel %vm1465, %v1464, %v1433
        %v1498 = vsel %vm856, 1, 0
        %v1499 = vsel %vm857, 1, 0
        %v1500 = vsel %vm858, 1, 0
        %v1501 = vsel %vm859, 1, 0
        %v1502 = vsel %vm860, 1, 0
        %v1503 = vsel %vm861, 1, 0
        %v1504 = vsel %vm862, 1, 0
        %v1505 = vsel %vm863, 1, 0
        %v1506 = vsel %vm864, 1, 0
        %v1507 = vsel %vm865, 1, 0
        %v1508 = vsel %vm866, 1, 0
        %v1509 = vsel %vm867, 1, 0
        %v1510 = vsel %vm868, 1, 0
        %v1511 = vsel %vm869, 1, 0
        %v1512 = vsel %vm870, 1, 0
        %v1513 = vsel %vm871, 1, 0
        %v1514 = vsel %vm872, 1, 0
        %v1515 = vsel %vm873, 1, 0
        %v1516 = vsel %vm874, 1, 0
        %v1517 = vsel %vm875, 1, 0
        %v1518 = vsel %vm876, 1, 0
        %v1519 = vsel %vm877, 1, 0
        %v1520 = vsel %vm878, 1, 0
        %v1521 = vsel %vm879, 1, 0
        %v1522 = vsel %vm880, 1, 0
        %v1523 = vsel %vm881, 1, 0
        %v1524 = vsel %vm882, 1, 0
        %v1525 = vsel %vm883, 1, 0
        %v1526 = vsel %vm884, 1, 0
        %v1527 = vsel %vm885, 1, 0
        %v1528 = vsel %vm886, 1, 0
        %v1529 = vsel %vm887, 1, 0
        %vm1530 = vcmp.eq.s32.totalorder %v1498, 1
        %vm1531 = vcmp.eq.s32.totalorder %v1499, 1
        %vm1532 = vcmp.eq.s32.totalorder %v1500, 1
        %vm1533 = vcmp.eq.s32.totalorder %v1501, 1
        %vm1534 = vcmp.eq.s32.totalorder %v1502, 1
        %vm1535 = vcmp.eq.s32.totalorder %v1503, 1
        %vm1536 = vcmp.eq.s32.totalorder %v1504, 1
        %vm1537 = vcmp.eq.s32.totalorder %v1505, 1
        %vm1538 = vcmp.eq.s32.totalorder %v1506, 1
        %vm1539 = vcmp.eq.s32.totalorder %v1507, 1
        %vm1540 = vcmp.eq.s32.totalorder %v1508, 1
        %vm1541 = vcmp.eq.s32.totalorder %v1509, 1
        %vm1542 = vcmp.eq.s32.totalorder %v1510, 1
        %vm1543 = vcmp.eq.s32.totalorder %v1511, 1
        %vm1544 = vcmp.eq.s32.totalorder %v1512, 1
        %vm1545 = vcmp.eq.s32.totalorder %v1513, 1
        %vm1546 = vcmp.eq.s32.totalorder %v1514, 1
        %vm1547 = vcmp.eq.s32.totalorder %v1515, 1
        %vm1548 = vcmp.eq.s32.totalorder %v1516, 1
        %vm1549 = vcmp.eq.s32.totalorder %v1517, 1
        %vm1550 = vcmp.eq.s32.totalorder %v1518, 1
        %vm1551 = vcmp.eq.s32.totalorder %v1519, 1
        %vm1552 = vcmp.eq.s32.totalorder %v1520, 1
        %vm1553 = vcmp.eq.s32.totalorder %v1521, 1
        %vm1554 = vcmp.eq.s32.totalorder %v1522, 1
        %vm1555 = vcmp.eq.s32.totalorder %v1523, 1
        %vm1556 = vcmp.eq.s32.totalorder %v1524, 1
        %vm1557 = vcmp.eq.s32.totalorder %v1525, 1
        %vm1558 = vcmp.eq.s32.totalorder %v1526, 1
        %vm1559 = vcmp.eq.s32.totalorder %v1527, 1
        %vm1560 = vcmp.eq.s32.totalorder %v1528, 1
        %vm1561 = vcmp.eq.s32.totalorder %v1529, 1
        %v1562 = vsel %vm1530, 0.0, %v1496
        %v1563 = vsel %vm1531, 0.0, %v1495
        %v1564 = vsel %vm1532, 0.0, %v1494
        %v1565 = vsel %vm1533, 0.0, %v1493
        %v1566 = vsel %vm1534, 0.0, %v1492
        %v1567 = vsel %vm1535, 0.0, %v1491
        %v1568 = vsel %vm1536, 0.0, %v1490
        %v1569 = vsel %vm1537, 0.0, %v1489
        %v1570 = vsel %vm1538, 0.0, %v1488
        %v1571 = vsel %vm1539, 0.0, %v1487
        %v1572 = vsel %vm1540, 0.0, %v1486
        %v1573 = vsel %vm1541, 0.0, %v1485
        %v1574 = vsel %vm1542, 0.0, %v1484
        %v1575 = vsel %vm1543, 0.0, %v1483
        %v1576 = vsel %vm1544, 0.0, %v1482
        %v1577 = vsel %vm1545, 0.0, %v1481
        %v1578 = vsel %vm1546, 0.0, %v1480
        %v1579 = vsel %vm1547, 0.0, %v1479
        %v1580 = vsel %vm1548, 0.0, %v1478
        %v1581 = vsel %vm1549, 0.0, %v1477
        %v1582 = vsel %vm1550, 0.0, %v1476
        %v1583 = vsel %vm1551, 0.0, %v1475
        %v1584 = vsel %vm1552, 0.0, %v1474
        %v1585 = vsel %vm1553, 0.0, %v1473
        %v1586 = vsel %vm1554, 0.0, %v1472
        %v1587 = vsel %vm1555, 0.0, %v1471
        %v1588 = vsel %vm1556, 0.0, %v1470
        %v1589 = vsel %vm1557, 0.0, %v1469
        %v1590 = vsel %vm1558, 0.0, %v1468
        %v1591 = vsel %vm1559, 0.0, %v1467
        %v1592 = vsel %vm1560, 0.0, %v1466
        %v1593 = vsel %vm1561, 0.0, %v1497
        %v1594 = vld [vmem:[#allocation7] sm:$0xff]
        %v1595 = vld [vmem:[#allocation7 + $0x8] sm:$0xff]
        %v1596 = vld [vmem:[#allocation7 + $0x10] sm:$0xff]
        %v1597 = vld [vmem:[#allocation7 + $0x18] sm:$0xff]
        %v1598 = vld [vmem:[#allocation7 + $0x20] sm:$0xff]
        %v1599 = vld [vmem:[#allocation7 + $0x28] sm:$0xff]
        %v1600 = vld [vmem:[#allocation7 + $0x30] sm:$0xff]
        %v1601 = vld [vmem:[#allocation7 + $0x38] sm:$0xff]
        %v1602 = vld [vmem:[#allocation7 + $0x40] sm:$0xff]
        %v1603 = vld [vmem:[#allocation7 + $0x48] sm:$0xff]
        %v1604 = vld [vmem:[#allocation7 + $0x50] sm:$0xff]
        %v1605 = vld [vmem:[#allocation7 + $0x58] sm:$0xff]
        %v1606 = vld [vmem:[#allocation7 + $0x60] sm:$0xff]
        %v1607 = vld [vmem:[#allocation7 + $0x68] sm:$0xff]
        %v1608 = vld [vmem:[#allocation7 + $0x70] sm:$0xff]
        %v1609 = vld [vmem:[#allocation7 + $0x78] sm:$0xff]
        %v1610 = vld [vmem:[#allocation7 + $0x80] sm:$0xff]
        %v1611 = vld [vmem:[#allocation7 + $0x88] sm:$0xff]
        %v1612 = vld [vmem:[#allocation7 + $0x90] sm:$0xff]
        %v1613 = vld [vmem:[#allocation7 + $0x98] sm:$0xff]
        %v1614 = vld [vmem:[#allocation7 + $0xa0] sm:$0xff]
        %v1615 = vld [vmem:[#allocation7 + $0xa8] sm:$0xff]
        %v1616 = vld [vmem:[#allocation7 + $0xb0] sm:$0xff]
        %v1617 = vld [vmem:[#allocation7 + $0xb8] sm:$0xff]
        %v1618 = vld [vmem:[#allocation7 + $0xc0] sm:$0xff]
        %v1619 = vld [vmem:[#allocation7 + $0xc8] sm:$0xff]
        %v1620 = vld [vmem:[#allocation7 + $0xd0] sm:$0xff]
        %v1621 = vld [vmem:[#allocation7 + $0xd8] sm:$0xff]
        %v1622 = vld [vmem:[#allocation7 + $0xe0] sm:$0xff]
        %v1623 = vld [vmem:[#allocation7 + $0xe8] sm:$0xff]
        %v1624 = vld [vmem:[#allocation7 + $0xf0] sm:$0xff]
        %v1625 = vld [vmem:[#allocation7 + $0xf8] sm:$0xff]
        %1626 = vmatprep.subr.mxu0 0.0
        %1627 = vmatpush1.msra.mxu0 %v1625
        %1628 = vmatprep.subr.mxu0 0.0
        %1629 = vmatpush1.msra.mxu0 %v1624
        %1630 = vmatprep.subr.mxu0 0.0
        %1631 = vmatpush1.msra.mxu0 %v1623
        %1632 = vmatprep.subr.mxu0 0.0
        %1633 = vmatpush1.msra.mxu0 %v1622
        %1634 = vmatprep.subr.mxu0 0.0
        %1635 = vmatpush1.msra.mxu0 %v1621
        %1636 = vmatprep.subr.mxu0 0.0
        %1637 = vmatpush1.msra.mxu0 %v1620
        %1638 = vmatprep.subr.mxu0 0.0
        %1639 = vmatpush1.msra.mxu0 %v1619
        %1640 = vmatprep.subr.mxu0 0.0
        %1641 = vmatpush1.msra.mxu0 %v1618
        %1642 = vmatprep.subr.mxu0 0.0
        %1643 = vmatpush1.msra.mxu0 %v1617
        %1644 = vmatprep.subr.mxu0 0.0
        %1645 = vmatpush1.msra.mxu0 %v1616
        %1646 = vmatprep.subr.mxu0 0.0
        %1647 = vmatpush1.msra.mxu0 %v1615
        %1648 = vmatprep.subr.mxu0 0.0
        %1649 = vmatpush1.msra.mxu0 %v1614
        %1650 = vmatprep.subr.mxu0 0.0
        %1651 = vmatpush1.msra.mxu0 %v1613
        %1652 = vmatprep.subr.mxu0 0.0
        %1653 = vmatpush1.msra.mxu0 %v1612
        %1654 = vmatprep.subr.mxu0 0.0
        %1655 = vmatpush1.msra.mxu0 %v1611
        %1656 = vmatprep.subr.mxu0 0.0
        %1657 = vmatpush1.msra.mxu0 %v1610
        %1658 = vmatprep.subr.mxu0 0.0
        %1659 = vmatpush2.msra.mxu0 0.0
        %1660 = vmatprep.subr.mxu0 0.0
        %1661 = vmatpush2.msra.mxu0 0.0
        %1662 = vmatprep.subr.mxu0 0.0
        %1663 = vmatpush2.msra.mxu0 0.0
        %1664 = vmatprep.subr.mxu0 0.0
        %1665 = vmatpush2.msra.mxu0 0.0
        %1666 = vmatprep.subr.mxu0 0.0
        %1667 = vmatpush2.msra.mxu0 0.0
        %1668 = vmatprep.subr.mxu0 0.0
        %1669 = vmatpush2.msra.mxu0 0.0
        %1670 = vmatprep.subr.mxu0 0.0
        %1671 = vmatpush2.msra.mxu0 0.0
        %1672 = vmatprep.subr.mxu0 0.0
        %1673 = vmatpush2.msra.mxu0 0.0
        %1674 = vmatprep.subr.mxu0 0.0
        %1675 = vmatpush2.msra.mxu0 0.0
        %1676 = vmatprep.subr.mxu0 0.0
        %1677 = vmatpush2.msra.mxu0 0.0
        %1678 = vmatprep.subr.mxu0 0.0
        %1679 = vmatpush2.msra.mxu0 0.0
        %1680 = vmatprep.subr.mxu0 0.0
        %1681 = vmatpush2.msra.mxu0 0.0
        %1682 = vmatprep.subr.mxu0 0.0
        %1683 = vmatpush2.msra.mxu0 0.0
        %1684 = vmatprep.subr.mxu0 0.0
        %1685 = vmatpush2.msra.mxu0 0.0
        %1686 = vmatprep.subr.mxu0 0.0
        %1687 = vmatpush2.msra.mxu0 0.0
        %1688 = vmatprep.subr.mxu0 0.0
        %1689 = vmatpush2.msra.mxu0 0.0
        %1690 = vmatprep.mubr.f32.mxu0 0.0
        %1691 = vmatmul.mubr.f32.gmra.mxu0 %v1240
        %v1692 = vpop.f32.mrf.mxu0
        %v1693 = vadd.f32 0.0, %v1692
        %v1694 = vpop.f32.mrf.mxu0
        %1695 = vmatprep.mubr.f32.mxu0 0.0
        %1696 = vmatmul.mubr.f32.gmra.mxu0 %v1241
        %v1697 = vpop.f32.mrf.mxu0
        %v1698 = vadd.f32 0.0, %v1697
        %v1699 = vpop.f32.mrf.mxu0
        %1700 = vmatprep.mubr.f32.mxu0 0.0
        %1701 = vmatmul.mubr.f32.gmra.mxu0 %v1242
        %v1702 = vpop.f32.mrf.mxu0
        %v1703 = vadd.f32 0.0, %v1702
        %v1704 = vpop.f32.mrf.mxu0
        %1705 = vmatprep.mubr.f32.mxu0 0.0
        %1706 = vmatmul.mubr.f32.gmra.mxu0 %v1243
        %v1707 = vpop.f32.mrf.mxu0
        %v1708 = vadd.f32 0.0, %v1707
        %v1709 = vpop.f32.mrf.mxu0
        %1710 = vmatprep.mubr.f32.mxu0 0.0
        %1711 = vmatmul.mubr.f32.gmra.mxu0 %v1244
        %v1712 = vpop.f32.mrf.mxu0
        %v1713 = vadd.f32 0.0, %v1712
        %v1714 = vpop.f32.mrf.mxu0
        %1715 = vmatprep.mubr.f32.mxu0 0.0
        %1716 = vmatmul.mubr.f32.gmra.mxu0 %v1245
        %v1717 = vpop.f32.mrf.mxu0
        %v1718 = vadd.f32 0.0, %v1717
        %v1719 = vpop.f32.mrf.mxu0
        %1720 = vmatprep.mubr.f32.mxu0 0.0
        %1721 = vmatmul.mubr.f32.gmra.mxu0 %v1246
        %v1722 = vpop.f32.mrf.mxu0
        %v1723 = vadd.f32 0.0, %v1722
        %v1724 = vpop.f32.mrf.mxu0
        %1725 = vmatprep.mubr.f32.mxu0 0.0
        %1726 = vmatmul.mubr.f32.gmra.mxu0 %v1247
        %v1727 = vpop.f32.mrf.mxu0
        %v1728 = vadd.f32 0.0, %v1727
        %v1729 = vpop.f32.mrf.mxu0
        %1730 = vmatprep.mubr.f32.mxu0 0.0
        %1731 = vmatmul.mubr.f32.gmra.mxu0 %v1248
        %v1732 = vpop.f32.mrf.mxu0
        %v1733 = vadd.f32 0.0, %v1732
        %v1734 = vpop.f32.mrf.mxu0
        %1735 = vmatprep.mubr.f32.mxu0 0.0
        %1736 = vmatmul.mubr.f32.gmra.mxu0 %v1249
        %v1737 = vpop.f32.mrf.mxu0
        %v1738 = vadd.f32 0.0, %v1737
        %v1739 = vpop.f32.mrf.mxu0
        %1740 = vmatprep.mubr.f32.mxu0 0.0
        %1741 = vmatmul.mubr.f32.gmra.mxu0 %v1250
        %v1742 = vpop.f32.mrf.mxu0
        %v1743 = vadd.f32 0.0, %v1742
        %v1744 = vpop.f32.mrf.mxu0
        %1745 = vmatprep.mubr.f32.mxu0 0.0
        %1746 = vmatmul.mubr.f32.gmra.mxu0 %v1251
        %v1747 = vpop.f32.mrf.mxu0
        %v1748 = vadd.f32 0.0, %v1747
        %v1749 = vpop.f32.mrf.mxu0
        %1750 = vmatprep.mubr.f32.mxu0 0.0
        %1751 = vmatmul.mubr.f32.gmra.mxu0 %v1252
        %v1752 = vpop.f32.mrf.mxu0
        %v1753 = vadd.f32 0.0, %v1752
        %v1754 = vpop.f32.mrf.mxu0
        %1755 = vmatprep.mubr.f32.mxu0 0.0
        %1756 = vmatmul.mubr.f32.gmra.mxu0 %v1253
        %v1757 = vpop.f32.mrf.mxu0
        %v1758 = vadd.f32 0.0, %v1757
        %v1759 = vpop.f32.mrf.mxu0
        %1760 = vmatprep.mubr.f32.mxu0 0.0
        %1761 = vmatmul.mubr.f32.gmra.mxu0 %v1254
        %v1762 = vpop.f32.mrf.mxu0
        %v1763 = vadd.f32 0.0, %v1762
        %v1764 = vpop.f32.mrf.mxu0
        %1765 = vmatprep.mubr.f32.mxu0 0.0
        %1766 = vmatmul.mubr.f32.gmra.mxu0 %v1255
        %v1767 = vpop.f32.mrf.mxu0
        %v1768 = vadd.f32 0.0, %v1767
        %v1769 = vpop.f32.mrf.mxu0
        %1770 = vmatprep.mubr.f32.mxu0 0.0
        %1771 = vmatmul.mubr.f32.gmra.mxu0 %v1256
        %v1772 = vpop.f32.mrf.mxu0
        %v1773 = vadd.f32 0.0, %v1772
        %v1774 = vpop.f32.mrf.mxu0
        %1775 = vmatprep.mubr.f32.mxu0 0.0
        %1776 = vmatmul.mubr.f32.gmra.mxu0 %v1257
        %v1777 = vpop.f32.mrf.mxu0
        %v1778 = vadd.f32 0.0, %v1777
        %v1779 = vpop.f32.mrf.mxu0
        %1780 = vmatprep.mubr.f32.mxu0 0.0
        %1781 = vmatmul.mubr.f32.gmra.mxu0 %v1258
        %v1782 = vpop.f32.mrf.mxu0
        %v1783 = vadd.f32 0.0, %v1782
        %v1784 = vpop.f32.mrf.mxu0
        %1785 = vmatprep.mubr.f32.mxu0 0.0
        %1786 = vmatmul.mubr.f32.gmra.mxu0 %v1259
        %v1787 = vpop.f32.mrf.mxu0
        %v1788 = vadd.f32 0.0, %v1787
        %v1789 = vpop.f32.mrf.mxu0
        %1790 = vmatprep.mubr.f32.mxu0 0.0
        %1791 = vmatmul.mubr.f32.gmra.mxu0 %v1260
        %v1792 = vpop.f32.mrf.mxu0
        %v1793 = vadd.f32 0.0, %v1792
        %v1794 = vpop.f32.mrf.mxu0
        %1795 = vmatprep.mubr.f32.mxu0 0.0
        %1796 = vmatmul.mubr.f32.gmra.mxu0 %v1261
        %v1797 = vpop.f32.mrf.mxu0
        %v1798 = vadd.f32 0.0, %v1797
        %v1799 = vpop.f32.mrf.mxu0
        %1800 = vmatprep.mubr.f32.mxu0 0.0
        %1801 = vmatmul.mubr.f32.gmra.mxu0 %v1262
        %v1802 = vpop.f32.mrf.mxu0
        %v1803 = vadd.f32 0.0, %v1802
        %v1804 = vpop.f32.mrf.mxu0
        %1805 = vmatprep.mubr.f32.mxu0 0.0
        %1806 = vmatmul.mubr.f32.gmra.mxu0 %v1263
        %v1807 = vpop.f32.mrf.mxu0
        %v1808 = vadd.f32 0.0, %v1807
        %v1809 = vpop.f32.mrf.mxu0
        %1810 = vmatprep.mubr.f32.mxu0 0.0
        %1811 = vmatmul.mubr.f32.gmra.mxu0 %v1264
        %v1812 = vpop.f32.mrf.mxu0
        %v1813 = vadd.f32 0.0, %v1812
        %v1814 = vpop.f32.mrf.mxu0
        %1815 = vmatprep.mubr.f32.mxu0 0.0
        %1816 = vmatmul.mubr.f32.gmra.mxu0 %v1265
        %v1817 = vpop.f32.mrf.mxu0
        %v1818 = vadd.f32 0.0, %v1817
        %v1819 = vpop.f32.mrf.mxu0
        %1820 = vmatprep.mubr.f32.mxu0 0.0
        %1821 = vmatmul.mubr.f32.gmra.mxu0 %v1266
        %v1822 = vpop.f32.mrf.mxu0
        %v1823 = vadd.f32 0.0, %v1822
        %v1824 = vpop.f32.mrf.mxu0
        %1825 = vmatprep.mubr.f32.mxu0 0.0
        %1826 = vmatmul.mubr.f32.gmra.mxu0 %v1267
        %v1827 = vpop.f32.mrf.mxu0
        %v1828 = vadd.f32 0.0, %v1827
        %v1829 = vpop.f32.mrf.mxu0
        %1830 = vmatprep.mubr.f32.mxu0 0.0
        %1831 = vmatmul.mubr.f32.gmra.mxu0 %v1268
        %v1832 = vpop.f32.mrf.mxu0
        %v1833 = vadd.f32 0.0, %v1832
        %v1834 = vpop.f32.mrf.mxu0
        %1835 = vmatprep.mubr.f32.mxu0 0.0
        %1836 = vmatmul.mubr.f32.gmra.mxu0 %v1269
        %v1837 = vpop.f32.mrf.mxu0
        %v1838 = vadd.f32 0.0, %v1837
        %v1839 = vpop.f32.mrf.mxu0
        %1840 = vmatprep.mubr.f32.mxu0 0.0
        %1841 = vmatmul.mubr.f32.gmra.mxu0 %v1270
        %v1842 = vpop.f32.mrf.mxu0
        %v1843 = vadd.f32 0.0, %v1842
        %v1844 = vpop.f32.mrf.mxu0
        %1845 = vmatprep.mubr.f32.mxu0 0.0
        %1846 = vmatmul.mubr.f32.gmra.mxu0 %v1271
        %v1847 = vpop.f32.mrf.mxu0
        %v1848 = vadd.f32 0.0, %v1847
        %v1849 = vpop.f32.mrf.mxu0
        %1850 = vdwg.mxu0
        %1851 = vmatprep.subr.mxu0 0.0
        %1852 = vmatpush1.msra.mxu0 %v1609
        %1853 = vmatprep.subr.mxu0 0.0
        %1854 = vmatpush1.msra.mxu0 %v1608
        %1855 = vmatprep.subr.mxu0 0.0
        %1856 = vmatpush1.msra.mxu0 %v1607
        %1857 = vmatprep.subr.mxu0 0.0
        %1858 = vmatpush1.msra.mxu0 %v1606
        %1859 = vmatprep.subr.mxu0 0.0
        %1860 = vmatpush1.msra.mxu0 %v1605
        %1861 = vmatprep.subr.mxu0 0.0
        %1862 = vmatpush1.msra.mxu0 %v1604
        %1863 = vmatprep.subr.mxu0 0.0
        %1864 = vmatpush1.msra.mxu0 %v1603
        %1865 = vmatprep.subr.mxu0 0.0
        %1866 = vmatpush1.msra.mxu0 %v1602
        %1867 = vmatprep.subr.mxu0 0.0
        %1868 = vmatpush1.msra.mxu0 %v1601
        %1869 = vmatprep.subr.mxu0 0.0
        %1870 = vmatpush1.msra.mxu0 %v1600
        %1871 = vmatprep.subr.mxu0 0.0
        %1872 = vmatpush1.msra.mxu0 %v1599
        %1873 = vmatprep.subr.mxu0 0.0
        %1874 = vmatpush1.msra.mxu0 %v1598
        %1875 = vmatprep.subr.mxu0 0.0
        %1876 = vmatpush1.msra.mxu0 %v1597
        %1877 = vmatprep.subr.mxu0 0.0
        %1878 = vmatpush1.msra.mxu0 %v1596
        %1879 = vmatprep.subr.mxu0 0.0
        %1880 = vmatpush1.msra.mxu0 %v1595
        %1881 = vmatprep.subr.mxu0 0.0
        %1882 = vmatpush1.msra.mxu0 %v1594
        %1883 = vmatprep.subr.mxu0 0.0
        %1884 = vmatpush2.msra.mxu0 0.0
        %1885 = vmatprep.subr.mxu0 0.0
        %1886 = vmatpush2.msra.mxu0 0.0
        %1887 = vmatprep.subr.mxu0 0.0
        %1888 = vmatpush2.msra.mxu0 0.0
        %1889 = vmatprep.subr.mxu0 0.0
        %1890 = vmatpush2.msra.mxu0 0.0
        %1891 = vmatprep.subr.mxu0 0.0
        %1892 = vmatpush2.msra.mxu0 0.0
        %1893 = vmatprep.subr.mxu0 0.0
        %1894 = vmatpush2.msra.mxu0 0.0
        %1895 = vmatprep.subr.mxu0 0.0
        %1896 = vmatpush2.msra.mxu0 0.0
        %1897 = vmatprep.subr.mxu0 0.0
        %1898 = vmatpush2.msra.mxu0 0.0
        %1899 = vmatprep.subr.mxu0 0.0
        %1900 = vmatpush2.msra.mxu0 0.0
        %1901 = vmatprep.subr.mxu0 0.0
        %1902 = vmatpush2.msra.mxu0 0.0
        %1903 = vmatprep.subr.mxu0 0.0
        %1904 = vmatpush2.msra.mxu0 0.0
        %1905 = vmatprep.subr.mxu0 0.0
        %1906 = vmatpush2.msra.mxu0 0.0
        %1907 = vmatprep.subr.mxu0 0.0
        %1908 = vmatpush2.msra.mxu0 0.0
        %1909 = vmatprep.subr.mxu0 0.0
        %1910 = vmatpush2.msra.mxu0 0.0
        %1911 = vmatprep.subr.mxu0 0.0
        %1912 = vmatpush2.msra.mxu0 0.0
        %1913 = vmatprep.subr.mxu0 0.0
        %1914 = vmatpush2.msra.mxu0 0.0
        %1915 = vmatprep.mubr.f32.mxu0 0.0
        %1916 = vmatmul.mubr.f32.gmra.mxu0 %v1401
        %v1917 = vpop.f32.mrf.mxu0
        %v1918 = vadd.f32 %v1693, %v1917
        %v1919 = vpop.f32.mrf.mxu0
        %1920 = vmatprep.mubr.f32.mxu0 0.0
        %1921 = vmatmul.mubr.f32.gmra.mxu0 %v1402
        %v1922 = vpop.f32.mrf.mxu0
        %v1923 = vadd.f32 %v1698, %v1922
        %v1924 = vpop.f32.mrf.mxu0
        %1925 = vmatprep.mubr.f32.mxu0 0.0
        %1926 = vmatmul.mubr.f32.gmra.mxu0 %v1403
        %v1927 = vpop.f32.mrf.mxu0
        %v1928 = vadd.f32 %v1703, %v1927
        %v1929 = vpop.f32.mrf.mxu0
        %1930 = vmatprep.mubr.f32.mxu0 0.0
        %1931 = vmatmul.mubr.f32.gmra.mxu0 %v1404
        %v1932 = vpop.f32.mrf.mxu0
        %v1933 = vadd.f32 %v1708, %v1932
        %v1934 = vpop.f32.mrf.mxu0
        %1935 = vmatprep.mubr.f32.mxu0 0.0
        %1936 = vmatmul.mubr.f32.gmra.mxu0 %v1405
        %v1937 = vpop.f32.mrf.mxu0
        %v1938 = vadd.f32 %v1713, %v1937
        %v1939 = vpop.f32.mrf.mxu0
        %1940 = vmatprep.mubr.f32.mxu0 0.0
        %1941 = vmatmul.mubr.f32.gmra.mxu0 %v1406
        %v1942 = vpop.f32.mrf.mxu0
        %v1943 = vadd.f32 %v1718, %v1942
        %v1944 = vpop.f32.mrf.mxu0
        %1945 = vmatprep.mubr.f32.mxu0 0.0
        %1946 = vmatmul.mubr.f32.gmra.mxu0 %v1407
        %v1947 = vpop.f32.mrf.mxu0
        %v1948 = vadd.f32 %v1723, %v1947
        %v1949 = vpop.f32.mrf.mxu0
        %1950 = vmatprep.mubr.f32.mxu0 0.0
        %1951 = vmatmul.mubr.f32.gmra.mxu0 %v1408
        %v1952 = vpop.f32.mrf.mxu0
        %v1953 = vadd.f32 %v1728, %v1952
        %v1954 = vpop.f32.mrf.mxu0
        %1955 = vmatprep.mubr.f32.mxu0 0.0
        %1956 = vmatmul.mubr.f32.gmra.mxu0 %v1409
        %v1957 = vpop.f32.mrf.mxu0
        %v1958 = vadd.f32 %v1733, %v1957
        %v1959 = vpop.f32.mrf.mxu0
        %1960 = vmatprep.mubr.f32.mxu0 0.0
        %1961 = vmatmul.mubr.f32.gmra.mxu0 %v1410
        %v1962 = vpop.f32.mrf.mxu0
        %v1963 = vadd.f32 %v1738, %v1962
        %v1964 = vpop.f32.mrf.mxu0
        %1965 = vmatprep.mubr.f32.mxu0 0.0
        %1966 = vmatmul.mubr.f32.gmra.mxu0 %v1411
        %v1967 = vpop.f32.mrf.mxu0
        %v1968 = vadd.f32 %v1743, %v1967
        %v1969 = vpop.f32.mrf.mxu0
        %1970 = vmatprep.mubr.f32.mxu0 0.0
        %1971 = vmatmul.mubr.f32.gmra.mxu0 %v1412
        %v1972 = vpop.f32.mrf.mxu0
        %v1973 = vadd.f32 %v1748, %v1972
        %v1974 = vpop.f32.mrf.mxu0
        %1975 = vmatprep.mubr.f32.mxu0 0.0
        %1976 = vmatmul.mubr.f32.gmra.mxu0 %v1413
        %v1977 = vpop.f32.mrf.mxu0
        %v1978 = vadd.f32 %v1753, %v1977
        %v1979 = vpop.f32.mrf.mxu0
        %1980 = vmatprep.mubr.f32.mxu0 0.0
        %1981 = vmatmul.mubr.f32.gmra.mxu0 %v1414
        %v1982 = vpop.f32.mrf.mxu0
        %v1983 = vadd.f32 %v1758, %v1982
        %v1984 = vpop.f32.mrf.mxu0
        %1985 = vmatprep.mubr.f32.mxu0 0.0
        %1986 = vmatmul.mubr.f32.gmra.mxu0 %v1415
        %v1987 = vpop.f32.mrf.mxu0
        %v1988 = vadd.f32 %v1763, %v1987
        %v1989 = vpop.f32.mrf.mxu0
        %1990 = vmatprep.mubr.f32.mxu0 0.0
        %1991 = vmatmul.mubr.f32.gmra.mxu0 %v1416
        %v1992 = vpop.f32.mrf.mxu0
        %v1993 = vadd.f32 %v1768, %v1992
        %v1994 = vpop.f32.mrf.mxu0
        %1995 = vmatprep.mubr.f32.mxu0 0.0
        %1996 = vmatmul.mubr.f32.gmra.mxu0 %v1417
        %v1997 = vpop.f32.mrf.mxu0
        %v1998 = vadd.f32 %v1773, %v1997
        %v1999 = vpop.f32.mrf.mxu0
        %2000 = vmatprep.mubr.f32.mxu0 0.0
        %2001 = vmatmul.mubr.f32.gmra.mxu0 %v1418
        %v2002 = vpop.f32.mrf.mxu0
        %v2003 = vadd.f32 %v1778, %v2002
        %v2004 = vpop.f32.mrf.mxu0
        %2005 = vmatprep.mubr.f32.mxu0 0.0
        %2006 = vmatmul.mubr.f32.gmra.mxu0 %v1419
        %v2007 = vpop.f32.mrf.mxu0
        %v2008 = vadd.f32 %v1783, %v2007
        %v2009 = vpop.f32.mrf.mxu0
        %2010 = vmatprep.mubr.f32.mxu0 0.0
        %2011 = vmatmul.mubr.f32.gmra.mxu0 %v1420
        %v2012 = vpop.f32.mrf.mxu0
        %v2013 = vadd.f32 %v1788, %v2012
        %v2014 = vpop.f32.mrf.mxu0
        %2015 = vmatprep.mubr.f32.mxu0 0.0
        %2016 = vmatmul.mubr.f32.gmra.mxu0 %v1421
        %v2017 = vpop.f32.mrf.mxu0
        %v2018 = vadd.f32 %v1793, %v2017
        %v2019 = vpop.f32.mrf.mxu0
        %2020 = vmatprep.mubr.f32.mxu0 0.0
        %2021 = vmatmul.mubr.f32.gmra.mxu0 %v1422
        %v2022 = vpop.f32.mrf.mxu0
        %v2023 = vadd.f32 %v1798, %v2022
        %v2024 = vpop.f32.mrf.mxu0
        %2025 = vmatprep.mubr.f32.mxu0 0.0
        %2026 = vmatmul.mubr.f32.gmra.mxu0 %v1423
        %v2027 = vpop.f32.mrf.mxu0
        %v2028 = vadd.f32 %v1803, %v2027
        %v2029 = vpop.f32.mrf.mxu0
        %2030 = vmatprep.mubr.f32.mxu0 0.0
        %2031 = vmatmul.mubr.f32.gmra.mxu0 %v1424
        %v2032 = vpop.f32.mrf.mxu0
        %v2033 = vadd.f32 %v1808, %v2032
        %v2034 = vpop.f32.mrf.mxu0
        %2035 = vmatprep.mubr.f32.mxu0 0.0
        %2036 = vmatmul.mubr.f32.gmra.mxu0 %v1425
        %v2037 = vpop.f32.mrf.mxu0
        %v2038 = vadd.f32 %v1813, %v2037
        %v2039 = vpop.f32.mrf.mxu0
        %2040 = vmatprep.mubr.f32.mxu0 0.0
        %2041 = vmatmul.mubr.f32.gmra.mxu0 %v1426
        %v2042 = vpop.f32.mrf.mxu0
        %v2043 = vadd.f32 %v1818, %v2042
        %v2044 = vpop.f32.mrf.mxu0
        %2045 = vmatprep.mubr.f32.mxu0 0.0
        %2046 = vmatmul.mubr.f32.gmra.mxu0 %v1427
        %v2047 = vpop.f32.mrf.mxu0
        %v2048 = vadd.f32 %v1823, %v2047
        %v2049 = vpop.f32.mrf.mxu0
        %2050 = vmatprep.mubr.f32.mxu0 0.0
        %2051 = vmatmul.mubr.f32.gmra.mxu0 %v1428
        %v2052 = vpop.f32.mrf.mxu0
        %v2053 = vadd.f32 %v1828, %v2052
        %v2054 = vpop.f32.mrf.mxu0
        %2055 = vmatprep.mubr.f32.mxu0 0.0
        %2056 = vmatmul.mubr.f32.gmra.mxu0 %v1429
        %v2057 = vpop.f32.mrf.mxu0
        %v2058 = vadd.f32 %v1833, %v2057
        %v2059 = vpop.f32.mrf.mxu0
        %2060 = vmatprep.mubr.f32.mxu0 0.0
        %2061 = vmatmul.mubr.f32.gmra.mxu0 %v1430
        %v2062 = vpop.f32.mrf.mxu0
        %v2063 = vadd.f32 %v1838, %v2062
        %v2064 = vpop.f32.mrf.mxu0
        %2065 = vmatprep.mubr.f32.mxu0 0.0
        %2066 = vmatmul.mubr.f32.gmra.mxu0 %v1431
        %v2067 = vpop.f32.mrf.mxu0
        %v2068 = vadd.f32 %v1843, %v2067
        %v2069 = vpop.f32.mrf.mxu0
        %2070 = vmatprep.mubr.f32.mxu0 0.0
        %2071 = vmatmul.mubr.f32.gmra.mxu0 %v1432
        %v2072 = vpop.f32.mrf.mxu0
        %v2073 = vadd.f32 %v1848, %v2072
        %v2074 = vpop.f32.mrf.mxu0
        %2075 = vdwg.mxu0
        %v2076 = vld [vmem:[#allocation7 + $0x100] sm:$0xff]
        %v2077 = vld [vmem:[#allocation7 + $0x108] sm:$0xff]
        %v2078 = vld [vmem:[#allocation7 + $0x110] sm:$0xff]
        %v2079 = vld [vmem:[#allocation7 + $0x118] sm:$0xff]
        %v2080 = vld [vmem:[#allocation7 + $0x120] sm:$0xff]
        %v2081 = vld [vmem:[#allocation7 + $0x128] sm:$0xff]
        %v2082 = vld [vmem:[#allocation7 + $0x130] sm:$0xff]
        %v2083 = vld [vmem:[#allocation7 + $0x138] sm:$0xff]
        %v2084 = vld [vmem:[#allocation7 + $0x140] sm:$0xff]
        %v2085 = vld [vmem:[#allocation7 + $0x148] sm:$0xff]
        %v2086 = vld [vmem:[#allocation7 + $0x150] sm:$0xff]
        %v2087 = vld [vmem:[#allocation7 + $0x158] sm:$0xff]
        %v2088 = vld [vmem:[#allocation7 + $0x160] sm:$0xff]
        %v2089 = vld [vmem:[#allocation7 + $0x168] sm:$0xff]
        %v2090 = vld [vmem:[#allocation7 + $0x170] sm:$0xff]
        %v2091 = vld [vmem:[#allocation7 + $0x178] sm:$0xff]
        %2092 = vmatprep.subr.mxu0 0.0
        %2093 = vmatpush1.msra.mxu0 %v2091
        %2094 = vmatprep.subr.mxu0 0.0
        %2095 = vmatpush1.msra.mxu0 %v2090
        %2096 = vmatprep.subr.mxu0 0.0
        %2097 = vmatpush1.msra.mxu0 %v2089
        %2098 = vmatprep.subr.mxu0 0.0
        %2099 = vmatpush1.msra.mxu0 %v2088
        %2100 = vmatprep.subr.mxu0 0.0
        %2101 = vmatpush1.msra.mxu0 %v2087
        %2102 = vmatprep.subr.mxu0 0.0
        %2103 = vmatpush1.msra.mxu0 %v2086
        %2104 = vmatprep.subr.mxu0 0.0
        %2105 = vmatpush1.msra.mxu0 %v2085
        %2106 = vmatprep.subr.mxu0 0.0
        %2107 = vmatpush1.msra.mxu0 %v2084
        %2108 = vmatprep.subr.mxu0 0.0
        %2109 = vmatpush1.msra.mxu0 %v2083
        %2110 = vmatprep.subr.mxu0 0.0
        %2111 = vmatpush1.msra.mxu0 %v2082
        %2112 = vmatprep.subr.mxu0 0.0
        %2113 = vmatpush1.msra.mxu0 %v2081
        %2114 = vmatprep.subr.mxu0 0.0
        %2115 = vmatpush1.msra.mxu0 %v2080
        %2116 = vmatprep.subr.mxu0 0.0
        %2117 = vmatpush1.msra.mxu0 %v2079
        %2118 = vmatprep.subr.mxu0 0.0
        %2119 = vmatpush1.msra.mxu0 %v2078
        %2120 = vmatprep.subr.mxu0 0.0
        %2121 = vmatpush1.msra.mxu0 %v2077
        %2122 = vmatprep.subr.mxu0 0.0
        %2123 = vmatpush1.msra.mxu0 %v2076
        %2124 = vmatprep.subr.mxu0 0.0
        %2125 = vmatpush2.msra.mxu0 0.0
        %2126 = vmatprep.subr.mxu0 0.0
        %2127 = vmatpush2.msra.mxu0 0.0
        %2128 = vmatprep.subr.mxu0 0.0
        %2129 = vmatpush2.msra.mxu0 0.0
        %2130 = vmatprep.subr.mxu0 0.0
        %2131 = vmatpush2.msra.mxu0 0.0
        %2132 = vmatprep.subr.mxu0 0.0
        %2133 = vmatpush2.msra.mxu0 0.0
        %2134 = vmatprep.subr.mxu0 0.0
        %2135 = vmatpush2.msra.mxu0 0.0
        %2136 = vmatprep.subr.mxu0 0.0
        %2137 = vmatpush2.msra.mxu0 0.0
        %2138 = vmatprep.subr.mxu0 0.0
        %2139 = vmatpush2.msra.mxu0 0.0
        %2140 = vmatprep.subr.mxu0 0.0
        %2141 = vmatpush2.msra.mxu0 0.0
        %2142 = vmatprep.subr.mxu0 0.0
        %2143 = vmatpush2.msra.mxu0 0.0
        %2144 = vmatprep.subr.mxu0 0.0
        %2145 = vmatpush2.msra.mxu0 0.0
        %2146 = vmatprep.subr.mxu0 0.0
        %2147 = vmatpush2.msra.mxu0 0.0
        %2148 = vmatprep.subr.mxu0 0.0
        %2149 = vmatpush2.msra.mxu0 0.0
        %2150 = vmatprep.subr.mxu0 0.0
        %2151 = vmatpush2.msra.mxu0 0.0
        %2152 = vmatprep.subr.mxu0 0.0
        %2153 = vmatpush2.msra.mxu0 0.0
        %2154 = vmatprep.subr.mxu0 0.0
        %2155 = vmatpush2.msra.mxu0 0.0
        %2156 = vmatprep.mubr.f32.mxu0 0.0
        %2157 = vmatmul.mubr.f32.gmra.mxu0 %v1562
        %v2158 = vpop.f32.mrf.mxu0
        %v2159 = vadd.f32 0.0, %v2158
        %v2160 = vpop.f32.mrf.mxu0
        %2161 = vmatprep.mubr.f32.mxu0 0.0
        %2162 = vmatmul.mubr.f32.gmra.mxu0 %v1563
        %v2163 = vpop.f32.mrf.mxu0
        %v2164 = vadd.f32 0.0, %v2163
        %v2165 = vpop.f32.mrf.mxu0
        %2166 = vmatprep.mubr.f32.mxu0 0.0
        %2167 = vmatmul.mubr.f32.gmra.mxu0 %v1564
        %v2168 = vpop.f32.mrf.mxu0
        %v2169 = vadd.f32 0.0, %v2168
        %v2170 = vpop.f32.mrf.mxu0
        %2171 = vmatprep.mubr.f32.mxu0 0.0
        %2172 = vmatmul.mubr.f32.gmra.mxu0 %v1565
        %v2173 = vpop.f32.mrf.mxu0
        %v2174 = vadd.f32 0.0, %v2173
        %v2175 = vpop.f32.mrf.mxu0
        %2176 = vmatprep.mubr.f32.mxu0 0.0
        %2177 = vmatmul.mubr.f32.gmra.mxu0 %v1566
        %v2178 = vpop.f32.mrf.mxu0
        %v2179 = vadd.f32 0.0, %v2178
        %v2180 = vpop.f32.mrf.mxu0
        %2181 = vmatprep.mubr.f32.mxu0 0.0
        %2182 = vmatmul.mubr.f32.gmra.mxu0 %v1567
        %v2183 = vpop.f32.mrf.mxu0
        %v2184 = vadd.f32 0.0, %v2183
        %v2185 = vpop.f32.mrf.mxu0
        %2186 = vmatprep.mubr.f32.mxu0 0.0
        %2187 = vmatmul.mubr.f32.gmra.mxu0 %v1568
        %v2188 = vpop.f32.mrf.mxu0
        %v2189 = vadd.f32 0.0, %v2188
        %v2190 = vpop.f32.mrf.mxu0
        %2191 = vmatprep.mubr.f32.mxu0 0.0
        %2192 = vmatmul.mubr.f32.gmra.mxu0 %v1569
        %v2193 = vpop.f32.mrf.mxu0
        %v2194 = vadd.f32 0.0, %v2193
        %v2195 = vpop.f32.mrf.mxu0
        %2196 = vmatprep.mubr.f32.mxu0 0.0
        %2197 = vmatmul.mubr.f32.gmra.mxu0 %v1570
        %v2198 = vpop.f32.mrf.mxu0
        %v2199 = vadd.f32 0.0, %v2198
        %v2200 = vpop.f32.mrf.mxu0
        %2201 = vmatprep.mubr.f32.mxu0 0.0
        %2202 = vmatmul.mubr.f32.gmra.mxu0 %v1571
        %v2203 = vpop.f32.mrf.mxu0
        %v2204 = vadd.f32 0.0, %v2203
        %v2205 = vpop.f32.mrf.mxu0
        %2206 = vmatprep.mubr.f32.mxu0 0.0
        %2207 = vmatmul.mubr.f32.gmra.mxu0 %v1572
        %v2208 = vpop.f32.mrf.mxu0
        %v2209 = vadd.f32 0.0, %v2208
        %v2210 = vpop.f32.mrf.mxu0
        %2211 = vmatprep.mubr.f32.mxu0 0.0
        %2212 = vmatmul.mubr.f32.gmra.mxu0 %v1573
        %v2213 = vpop.f32.mrf.mxu0
        %v2214 = vadd.f32 0.0, %v2213
        %v2215 = vpop.f32.mrf.mxu0
        %2216 = vmatprep.mubr.f32.mxu0 0.0
        %2217 = vmatmul.mubr.f32.gmra.mxu0 %v1574
        %v2218 = vpop.f32.mrf.mxu0
        %v2219 = vadd.f32 0.0, %v2218
        %v2220 = vpop.f32.mrf.mxu0
        %2221 = vmatprep.mubr.f32.mxu0 0.0
        %2222 = vmatmul.mubr.f32.gmra.mxu0 %v1575
        %v2223 = vpop.f32.mrf.mxu0
        %v2224 = vadd.f32 0.0, %v2223
        %v2225 = vpop.f32.mrf.mxu0
        %2226 = vmatprep.mubr.f32.mxu0 0.0
        %2227 = vmatmul.mubr.f32.gmra.mxu0 %v1576
        %v2228 = vpop.f32.mrf.mxu0
        %v2229 = vadd.f32 0.0, %v2228
        %v2230 = vpop.f32.mrf.mxu0
        %2231 = vmatprep.mubr.f32.mxu0 0.0
        %2232 = vmatmul.mubr.f32.gmra.mxu0 %v1577
        %v2233 = vpop.f32.mrf.mxu0
        %v2234 = vadd.f32 0.0, %v2233
        %v2235 = vpop.f32.mrf.mxu0
        %2236 = vmatprep.mubr.f32.mxu0 0.0
        %2237 = vmatmul.mubr.f32.gmra.mxu0 %v1578
        %v2238 = vpop.f32.mrf.mxu0
        %v2239 = vadd.f32 0.0, %v2238
        %v2240 = vpop.f32.mrf.mxu0
        %2241 = vmatprep.mubr.f32.mxu0 0.0
        %2242 = vmatmul.mubr.f32.gmra.mxu0 %v1579
        %v2243 = vpop.f32.mrf.mxu0
        %v2244 = vadd.f32 0.0, %v2243
        %v2245 = vpop.f32.mrf.mxu0
        %2246 = vmatprep.mubr.f32.mxu0 0.0
        %2247 = vmatmul.mubr.f32.gmra.mxu0 %v1580
        %v2248 = vpop.f32.mrf.mxu0
        %v2249 = vadd.f32 0.0, %v2248
        %v2250 = vpop.f32.mrf.mxu0
        %2251 = vmatprep.mubr.f32.mxu0 0.0
        %2252 = vmatmul.mubr.f32.gmra.mxu0 %v1581
        %v2253 = vpop.f32.mrf.mxu0
        %v2254 = vadd.f32 0.0, %v2253
        %v2255 = vpop.f32.mrf.mxu0
        %2256 = vmatprep.mubr.f32.mxu0 0.0
        %2257 = vmatmul.mubr.f32.gmra.mxu0 %v1582
        %v2258 = vpop.f32.mrf.mxu0
        %v2259 = vadd.f32 0.0, %v2258
        %v2260 = vpop.f32.mrf.mxu0
        %2261 = vmatprep.mubr.f32.mxu0 0.0
        %2262 = vmatmul.mubr.f32.gmra.mxu0 %v1583
        %v2263 = vpop.f32.mrf.mxu0
        %v2264 = vadd.f32 0.0, %v2263
        %v2265 = vpop.f32.mrf.mxu0
        %2266 = vmatprep.mubr.f32.mxu0 0.0
        %2267 = vmatmul.mubr.f32.gmra.mxu0 %v1584
        %v2268 = vpop.f32.mrf.mxu0
        %v2269 = vadd.f32 0.0, %v2268
        %v2270 = vpop.f32.mrf.mxu0
        %2271 = vmatprep.mubr.f32.mxu0 0.0
        %2272 = vmatmul.mubr.f32.gmra.mxu0 %v1585
        %v2273 = vpop.f32.mrf.mxu0
        %v2274 = vadd.f32 0.0, %v2273
        %v2275 = vpop.f32.mrf.mxu0
        %2276 = vmatprep.mubr.f32.mxu0 0.0
        %2277 = vmatmul.mubr.f32.gmra.mxu0 %v1586
        %v2278 = vpop.f32.mrf.mxu0
        %v2279 = vadd.f32 0.0, %v2278
        %v2280 = vpop.f32.mrf.mxu0
        %2281 = vmatprep.mubr.f32.mxu0 0.0
        %2282 = vmatmul.mubr.f32.gmra.mxu0 %v1587
        %v2283 = vpop.f32.mrf.mxu0
        %v2284 = vadd.f32 0.0, %v2283
        %v2285 = vpop.f32.mrf.mxu0
        %2286 = vmatprep.mubr.f32.mxu0 0.0
        %2287 = vmatmul.mubr.f32.gmra.mxu0 %v1588
        %v2288 = vpop.f32.mrf.mxu0
        %v2289 = vadd.f32 0.0, %v2288
        %v2290 = vpop.f32.mrf.mxu0
        %2291 = vmatprep.mubr.f32.mxu0 0.0
        %2292 = vmatmul.mubr.f32.gmra.mxu0 %v1589
        %v2293 = vpop.f32.mrf.mxu0
        %v2294 = vadd.f32 0.0, %v2293
        %v2295 = vpop.f32.mrf.mxu0
        %2296 = vmatprep.mubr.f32.mxu0 0.0
        %2297 = vmatmul.mubr.f32.gmra.mxu0 %v1590
        %v2298 = vpop.f32.mrf.mxu0
        %v2299 = vadd.f32 0.0, %v2298
        %v2300 = vpop.f32.mrf.mxu0
        %2301 = vmatprep.mubr.f32.mxu0 0.0
        %2302 = vmatmul.mubr.f32.gmra.mxu0 %v1591
        %v2303 = vpop.f32.mrf.mxu0
        %v2304 = vadd.f32 0.0, %v2303
        %v2305 = vpop.f32.mrf.mxu0
        %2306 = vmatprep.mubr.f32.mxu0 0.0
        %2307 = vmatmul.mubr.f32.gmra.mxu0 %v1592
        %v2308 = vpop.f32.mrf.mxu0
        %v2309 = vadd.f32 0.0, %v2308
        %v2310 = vpop.f32.mrf.mxu0
        %2311 = vmatprep.mubr.f32.mxu0 0.0
        %2312 = vmatmul.mubr.f32.gmra.mxu0 %v1593
        %v2313 = vpop.f32.mrf.mxu0
        %v2314 = vadd.f32 0.0, %v2313
        %v2315 = vpop.f32.mrf.mxu0
        %2316 = vdwg.mxu0
        %v2317 = vadd.f32 %v1918, %v2159
        %v2318 = vadd.f32 %v1923, %v2164
        %v2319 = vadd.f32 %v1928, %v2169
        %v2320 = vadd.f32 %v1933, %v2174
        %v2321 = vadd.f32 %v1938, %v2179
        %v2322 = vadd.f32 %v1943, %v2184
        %v2323 = vadd.f32 %v1948, %v2189
        %v2324 = vadd.f32 %v1953, %v2194
        %v2325 = vadd.f32 %v1958, %v2199
        %v2326 = vadd.f32 %v1963, %v2204
        %v2327 = vadd.f32 %v1968, %v2209
        %v2328 = vadd.f32 %v1973, %v2214
        %v2329 = vadd.f32 %v1978, %v2219
        %v2330 = vadd.f32 %v1983, %v2224
        %v2331 = vadd.f32 %v1988, %v2229
        %v2332 = vadd.f32 %v1993, %v2234
        %v2333 = vadd.f32 %v1998, %v2239
        %v2334 = vadd.f32 %v2003, %v2244
        %v2335 = vadd.f32 %v2008, %v2249
        %v2336 = vadd.f32 %v2013, %v2254
        %v2337 = vadd.f32 %v2018, %v2259
        %v2338 = vadd.f32 %v2023, %v2264
        %v2339 = vadd.f32 %v2028, %v2269
        %v2340 = vadd.f32 %v2033, %v2274
        %v2341 = vadd.f32 %v2038, %v2279
        %v2342 = vadd.f32 %v2043, %v2284
        %v2343 = vadd.f32 %v2048, %v2289
        %v2344 = vadd.f32 %v2053, %v2294
        %v2345 = vadd.f32 %v2058, %v2299
        %v2346 = vadd.f32 %v2063, %v2304
        %v2347 = vadd.f32 %v2068, %v2309
        %v2348 = vadd.f32 %v2073, %v2314
        %v2349 = vld [vmem:[#allocation7 + $0x180] sm:$0xff]
        %v2350 = vld [vmem:[#allocation7 + $0x188] sm:$0xff]
        %v2351 = vld [vmem:[#allocation7 + $0x190] sm:$0xff]
        %v2352 = vld [vmem:[#allocation7 + $0x198] sm:$0xff]
        %v2353 = vld [vmem:[#allocation7 + $0x1a0] sm:$0xff]
        %v2354 = vld [vmem:[#allocation7 + $0x1a8] sm:$0xff]
        %v2355 = vld [vmem:[#allocation7 + $0x1b0] sm:$0xff]
        %v2356 = vld [vmem:[#allocation7 + $0x1b8] sm:$0xff]
        %v2357 = vld [vmem:[#allocation7 + $0x1c0] sm:$0xff]
        %v2358 = vld [vmem:[#allocation7 + $0x1c8] sm:$0xff]
        %v2359 = vld [vmem:[#allocation7 + $0x1d0] sm:$0xff]
        %v2360 = vld [vmem:[#allocation7 + $0x1d8] sm:$0xff]
        %v2361 = vld [vmem:[#allocation7 + $0x1e0] sm:$0xff]
        %v2362 = vld [vmem:[#allocation7 + $0x1e8] sm:$0xff]
        %v2363 = vld [vmem:[#allocation7 + $0x1f0] sm:$0xff]
        %v2364 = vld [vmem:[#allocation7 + $0x1f8] sm:$0xff]
        %v2365 = vld [vmem:[#allocation7 + $0x200] sm:$0xff]
        %v2366 = vld [vmem:[#allocation7 + $0x208] sm:$0xff]
        %v2367 = vld [vmem:[#allocation7 + $0x210] sm:$0xff]
        %v2368 = vld [vmem:[#allocation7 + $0x218] sm:$0xff]
        %v2369 = vld [vmem:[#allocation7 + $0x220] sm:$0xff]
        %v2370 = vld [vmem:[#allocation7 + $0x228] sm:$0xff]
        %v2371 = vld [vmem:[#allocation7 + $0x230] sm:$0xff]
        %v2372 = vld [vmem:[#allocation7 + $0x238] sm:$0xff]
        %v2373 = vld [vmem:[#allocation7 + $0x240] sm:$0xff]
        %v2374 = vld [vmem:[#allocation7 + $0x248] sm:$0xff]
        %v2375 = vld [vmem:[#allocation7 + $0x250] sm:$0xff]
        %v2376 = vld [vmem:[#allocation7 + $0x258] sm:$0xff]
        %v2377 = vld [vmem:[#allocation7 + $0x260] sm:$0xff]
        %v2378 = vld [vmem:[#allocation7 + $0x268] sm:$0xff]
        %v2379 = vld [vmem:[#allocation7 + $0x270] sm:$0xff]
        %v2380 = vld [vmem:[#allocation7 + $0x278] sm:$0xff]
        %2381 = vmatprep.subr.mxu0 0.0
        %2382 = vmatpush1.msra.mxu0 %v2380
        %2383 = vmatprep.subr.mxu0 0.0
        %2384 = vmatpush1.msra.mxu0 %v2379
        %2385 = vmatprep.subr.mxu0 0.0
        %2386 = vmatpush1.msra.mxu0 %v2378
        %2387 = vmatprep.subr.mxu0 0.0
        %2388 = vmatpush1.msra.mxu0 %v2377
        %2389 = vmatprep.subr.mxu0 0.0
        %2390 = vmatpush1.msra.mxu0 %v2376
        %2391 = vmatprep.subr.mxu0 0.0
        %2392 = vmatpush1.msra.mxu0 %v2375
        %2393 = vmatprep.subr.mxu0 0.0
        %2394 = vmatpush1.msra.mxu0 %v2374
        %2395 = vmatprep.subr.mxu0 0.0
        %2396 = vmatpush1.msra.mxu0 %v2373
        %2397 = vmatprep.subr.mxu0 0.0
        %2398 = vmatpush1.msra.mxu0 %v2372
        %2399 = vmatprep.subr.mxu0 0.0
        %2400 = vmatpush1.msra.mxu0 %v2371
        %2401 = vmatprep.subr.mxu0 0.0
        %2402 = vmatpush1.msra.mxu0 %v2370
        %2403 = vmatprep.subr.mxu0 0.0
        %2404 = vmatpush1.msra.mxu0 %v2369
        %2405 = vmatprep.subr.mxu0 0.0
        %2406 = vmatpush1.msra.mxu0 %v2368
        %2407 = vmatprep.subr.mxu0 0.0
        %2408 = vmatpush1.msra.mxu0 %v2367
        %2409 = vmatprep.subr.mxu0 0.0
        %2410 = vmatpush1.msra.mxu0 %v2366
        %2411 = vmatprep.subr.mxu0 0.0
        %2412 = vmatpush1.msra.mxu0 %v2365
        %2413 = vmatprep.subr.mxu0 0.0
        %2414 = vmatpush2.msra.mxu0 0.0
        %2415 = vmatprep.subr.mxu0 0.0
        %2416 = vmatpush2.msra.mxu0 0.0
        %2417 = vmatprep.subr.mxu0 0.0
        %2418 = vmatpush2.msra.mxu0 0.0
        %2419 = vmatprep.subr.mxu0 0.0
        %2420 = vmatpush2.msra.mxu0 0.0
        %2421 = vmatprep.subr.mxu0 0.0
        %2422 = vmatpush2.msra.mxu0 0.0
        %2423 = vmatprep.subr.mxu0 0.0
        %2424 = vmatpush2.msra.mxu0 0.0
        %2425 = vmatprep.subr.mxu0 0.0
        %2426 = vmatpush2.msra.mxu0 0.0
        %2427 = vmatprep.subr.mxu0 0.0
        %2428 = vmatpush2.msra.mxu0 0.0
        %2429 = vmatprep.subr.mxu0 0.0
        %2430 = vmatpush2.msra.mxu0 0.0
        %2431 = vmatprep.subr.mxu0 0.0
        %2432 = vmatpush2.msra.mxu0 0.0
        %2433 = vmatprep.subr.mxu0 0.0
        %2434 = vmatpush2.msra.mxu0 0.0
        %2435 = vmatprep.subr.mxu0 0.0
        %2436 = vmatpush2.msra.mxu0 0.0
        %2437 = vmatprep.subr.mxu0 0.0
        %2438 = vmatpush2.msra.mxu0 0.0
        %2439 = vmatprep.subr.mxu0 0.0
        %2440 = vmatpush2.msra.mxu0 0.0
        %2441 = vmatprep.subr.mxu0 0.0
        %2442 = vmatpush2.msra.mxu0 0.0
        %2443 = vmatprep.subr.mxu0 0.0
        %2444 = vmatpush2.msra.mxu0 0.0
        %2445 = vmatprep.mubr.f32.mxu0 0.0
        %2446 = vmatmul.mubr.f32.gmra.mxu0 %v1240
        %v2447 = vpop.f32.mrf.mxu0
        %v2448 = vadd.f32 0.0, %v2447
        %v2449 = vpop.f32.mrf.mxu0
        %2450 = vmatprep.mubr.f32.mxu0 0.0
        %2451 = vmatmul.mubr.f32.gmra.mxu0 %v1241
        %v2452 = vpop.f32.mrf.mxu0
        %v2453 = vadd.f32 0.0, %v2452
        %v2454 = vpop.f32.mrf.mxu0
        %2455 = vmatprep.mubr.f32.mxu0 0.0
        %2456 = vmatmul.mubr.f32.gmra.mxu0 %v1242
        %v2457 = vpop.f32.mrf.mxu0
        %v2458 = vadd.f32 0.0, %v2457
        %v2459 = vpop.f32.mrf.mxu0
        %2460 = vmatprep.mubr.f32.mxu0 0.0
        %2461 = vmatmul.mubr.f32.gmra.mxu0 %v1243
        %v2462 = vpop.f32.mrf.mxu0
        %v2463 = vadd.f32 0.0, %v2462
        %v2464 = vpop.f32.mrf.mxu0
        %2465 = vmatprep.mubr.f32.mxu0 0.0
        %2466 = vmatmul.mubr.f32.gmra.mxu0 %v1244
        %v2467 = vpop.f32.mrf.mxu0
        %v2468 = vadd.f32 0.0, %v2467
        %v2469 = vpop.f32.mrf.mxu0
        %2470 = vmatprep.mubr.f32.mxu0 0.0
        %2471 = vmatmul.mubr.f32.gmra.mxu0 %v1245
        %v2472 = vpop.f32.mrf.mxu0
        %v2473 = vadd.f32 0.0, %v2472
        %v2474 = vpop.f32.mrf.mxu0
        %2475 = vmatprep.mubr.f32.mxu0 0.0
        %2476 = vmatmul.mubr.f32.gmra.mxu0 %v1246
        %v2477 = vpop.f32.mrf.mxu0
        %v2478 = vadd.f32 0.0, %v2477
        %v2479 = vpop.f32.mrf.mxu0
        %2480 = vmatprep.mubr.f32.mxu0 0.0
        %2481 = vmatmul.mubr.f32.gmra.mxu0 %v1247
        %v2482 = vpop.f32.mrf.mxu0
        %v2483 = vadd.f32 0.0, %v2482
        %v2484 = vpop.f32.mrf.mxu0
        %2485 = vmatprep.mubr.f32.mxu0 0.0
        %2486 = vmatmul.mubr.f32.gmra.mxu0 %v1248
        %v2487 = vpop.f32.mrf.mxu0
        %v2488 = vadd.f32 0.0, %v2487
        %v2489 = vpop.f32.mrf.mxu0
        %2490 = vmatprep.mubr.f32.mxu0 0.0
        %2491 = vmatmul.mubr.f32.gmra.mxu0 %v1249
        %v2492 = vpop.f32.mrf.mxu0
        %v2493 = vadd.f32 0.0, %v2492
        %v2494 = vpop.f32.mrf.mxu0
        %2495 = vmatprep.mubr.f32.mxu0 0.0
        %2496 = vmatmul.mubr.f32.gmra.mxu0 %v1250
        %v2497 = vpop.f32.mrf.mxu0
        %v2498 = vadd.f32 0.0, %v2497
        %v2499 = vpop.f32.mrf.mxu0
        %2500 = vmatprep.mubr.f32.mxu0 0.0
        %2501 = vmatmul.mubr.f32.gmra.mxu0 %v1251
        %v2502 = vpop.f32.mrf.mxu0
        %v2503 = vadd.f32 0.0, %v2502
        %v2504 = vpop.f32.mrf.mxu0
        %2505 = vmatprep.mubr.f32.mxu0 0.0
        %2506 = vmatmul.mubr.f32.gmra.mxu0 %v1252
        %v2507 = vpop.f32.mrf.mxu0
        %v2508 = vadd.f32 0.0, %v2507
        %v2509 = vpop.f32.mrf.mxu0
        %2510 = vmatprep.mubr.f32.mxu0 0.0
        %2511 = vmatmul.mubr.f32.gmra.mxu0 %v1253
        %v2512 = vpop.f32.mrf.mxu0
        %v2513 = vadd.f32 0.0, %v2512
        %v2514 = vpop.f32.mrf.mxu0
        %2515 = vmatprep.mubr.f32.mxu0 0.0
        %2516 = vmatmul.mubr.f32.gmra.mxu0 %v1254
        %v2517 = vpop.f32.mrf.mxu0
        %v2518 = vadd.f32 0.0, %v2517
        %v2519 = vpop.f32.mrf.mxu0
        %2520 = vmatprep.mubr.f32.mxu0 0.0
        %2521 = vmatmul.mubr.f32.gmra.mxu0 %v1255
        %v2522 = vpop.f32.mrf.mxu0
        %v2523 = vadd.f32 0.0, %v2522
        %v2524 = vpop.f32.mrf.mxu0
        %2525 = vmatprep.mubr.f32.mxu0 0.0
        %2526 = vmatmul.mubr.f32.gmra.mxu0 %v1256
        %v2527 = vpop.f32.mrf.mxu0
        %v2528 = vadd.f32 0.0, %v2527
        %v2529 = vpop.f32.mrf.mxu0
        %2530 = vmatprep.mubr.f32.mxu0 0.0
        %2531 = vmatmul.mubr.f32.gmra.mxu0 %v1257
        %v2532 = vpop.f32.mrf.mxu0
        %v2533 = vadd.f32 0.0, %v2532
        %v2534 = vpop.f32.mrf.mxu0
        %2535 = vmatprep.mubr.f32.mxu0 0.0
        %2536 = vmatmul.mubr.f32.gmra.mxu0 %v1258
        %v2537 = vpop.f32.mrf.mxu0
        %v2538 = vadd.f32 0.0, %v2537
        %v2539 = vpop.f32.mrf.mxu0
        %2540 = vmatprep.mubr.f32.mxu0 0.0
        %2541 = vmatmul.mubr.f32.gmra.mxu0 %v1259
        %v2542 = vpop.f32.mrf.mxu0
        %v2543 = vadd.f32 0.0, %v2542
        %v2544 = vpop.f32.mrf.mxu0
        %2545 = vmatprep.mubr.f32.mxu0 0.0
        %2546 = vmatmul.mubr.f32.gmra.mxu0 %v1260
        %v2547 = vpop.f32.mrf.mxu0
        %v2548 = vadd.f32 0.0, %v2547
        %v2549 = vpop.f32.mrf.mxu0
        %2550 = vmatprep.mubr.f32.mxu0 0.0
        %2551 = vmatmul.mubr.f32.gmra.mxu0 %v1261
        %v2552 = vpop.f32.mrf.mxu0
        %v2553 = vadd.f32 0.0, %v2552
        %v2554 = vpop.f32.mrf.mxu0
        %2555 = vmatprep.mubr.f32.mxu0 0.0
        %2556 = vmatmul.mubr.f32.gmra.mxu0 %v1262
        %v2557 = vpop.f32.mrf.mxu0
        %v2558 = vadd.f32 0.0, %v2557
        %v2559 = vpop.f32.mrf.mxu0
        %2560 = vmatprep.mubr.f32.mxu0 0.0
        %2561 = vmatmul.mubr.f32.gmra.mxu0 %v1263
        %v2562 = vpop.f32.mrf.mxu0
        %v2563 = vadd.f32 0.0, %v2562
        %v2564 = vpop.f32.mrf.mxu0
        %2565 = vmatprep.mubr.f32.mxu0 0.0
        %2566 = vmatmul.mubr.f32.gmra.mxu0 %v1264
        %v2567 = vpop.f32.mrf.mxu0
        %v2568 = vadd.f32 0.0, %v2567
        %v2569 = vpop.f32.mrf.mxu0
        %2570 = vmatprep.mubr.f32.mxu0 0.0
        %2571 = vmatmul.mubr.f32.gmra.mxu0 %v1265
        %v2572 = vpop.f32.mrf.mxu0
        %v2573 = vadd.f32 0.0, %v2572
        %v2574 = vpop.f32.mrf.mxu0
        %2575 = vmatprep.mubr.f32.mxu0 0.0
        %2576 = vmatmul.mubr.f32.gmra.mxu0 %v1266
        %v2577 = vpop.f32.mrf.mxu0
        %v2578 = vadd.f32 0.0, %v2577
        %v2579 = vpop.f32.mrf.mxu0
        %2580 = vmatprep.mubr.f32.mxu0 0.0
        %2581 = vmatmul.mubr.f32.gmra.mxu0 %v1267
        %v2582 = vpop.f32.mrf.mxu0
        %v2583 = vadd.f32 0.0, %v2582
        %v2584 = vpop.f32.mrf.mxu0
        %2585 = vmatprep.mubr.f32.mxu0 0.0
        %2586 = vmatmul.mubr.f32.gmra.mxu0 %v1268
        %v2587 = vpop.f32.mrf.mxu0
        %v2588 = vadd.f32 0.0, %v2587
        %v2589 = vpop.f32.mrf.mxu0
        %2590 = vmatprep.mubr.f32.mxu0 0.0
        %2591 = vmatmul.mubr.f32.gmra.mxu0 %v1269
        %v2592 = vpop.f32.mrf.mxu0
        %v2593 = vadd.f32 0.0, %v2592
        %v2594 = vpop.f32.mrf.mxu0
        %2595 = vmatprep.mubr.f32.mxu0 0.0
        %2596 = vmatmul.mubr.f32.gmra.mxu0 %v1270
        %v2597 = vpop.f32.mrf.mxu0
        %v2598 = vadd.f32 0.0, %v2597
        %v2599 = vpop.f32.mrf.mxu0
        %2600 = vmatprep.mubr.f32.mxu0 0.0
        %2601 = vmatmul.mubr.f32.gmra.mxu0 %v1271
        %v2602 = vpop.f32.mrf.mxu0
        %v2603 = vadd.f32 0.0, %v2602
        %v2604 = vpop.f32.mrf.mxu0
        %2605 = vdwg.mxu0
        %2606 = vmatprep.subr.mxu0 0.0
        %2607 = vmatpush1.msra.mxu0 %v2364
        %2608 = vmatprep.subr.mxu0 0.0
        %2609 = vmatpush1.msra.mxu0 %v2363
        %2610 = vmatprep.subr.mxu0 0.0
        %2611 = vmatpush1.msra.mxu0 %v2362
        %2612 = vmatprep.subr.mxu0 0.0
        %2613 = vmatpush1.msra.mxu0 %v2361
        %2614 = vmatprep.subr.mxu0 0.0
        %2615 = vmatpush1.msra.mxu0 %v2360
        %2616 = vmatprep.subr.mxu0 0.0
        %2617 = vmatpush1.msra.mxu0 %v2359
        %2618 = vmatprep.subr.mxu0 0.0
        %2619 = vmatpush1.msra.mxu0 %v2358
        %2620 = vmatprep.subr.mxu0 0.0
        %2621 = vmatpush1.msra.mxu0 %v2357
        %2622 = vmatprep.subr.mxu0 0.0
        %2623 = vmatpush1.msra.mxu0 %v2356
        %2624 = vmatprep.subr.mxu0 0.0
        %2625 = vmatpush1.msra.mxu0 %v2355
        %2626 = vmatprep.subr.mxu0 0.0
        %2627 = vmatpush1.msra.mxu0 %v2354
        %2628 = vmatprep.subr.mxu0 0.0
        %2629 = vmatpush1.msra.mxu0 %v2353
        %2630 = vmatprep.subr.mxu0 0.0
        %2631 = vmatpush1.msra.mxu0 %v2352
        %2632 = vmatprep.subr.mxu0 0.0
        %2633 = vmatpush1.msra.mxu0 %v2351
        %2634 = vmatprep.subr.mxu0 0.0
        %2635 = vmatpush1.msra.mxu0 %v2350
        %2636 = vmatprep.subr.mxu0 0.0
        %2637 = vmatpush1.msra.mxu0 %v2349
        %2638 = vmatprep.subr.mxu0 0.0
        %2639 = vmatpush2.msra.mxu0 0.0
        %2640 = vmatprep.subr.mxu0 0.0
        %2641 = vmatpush2.msra.mxu0 0.0
        %2642 = vmatprep.subr.mxu0 0.0
        %2643 = vmatpush2.msra.mxu0 0.0
        %2644 = vmatprep.subr.mxu0 0.0
        %2645 = vmatpush2.msra.mxu0 0.0
        %2646 = vmatprep.subr.mxu0 0.0
        %2647 = vmatpush2.msra.mxu0 0.0
        %2648 = vmatprep.subr.mxu0 0.0
        %2649 = vmatpush2.msra.mxu0 0.0
        %2650 = vmatprep.subr.mxu0 0.0
        %2651 = vmatpush2.msra.mxu0 0.0
        %2652 = vmatprep.subr.mxu0 0.0
        %2653 = vmatpush2.msra.mxu0 0.0
        %2654 = vmatprep.subr.mxu0 0.0
        %2655 = vmatpush2.msra.mxu0 0.0
        %2656 = vmatprep.subr.mxu0 0.0
        %2657 = vmatpush2.msra.mxu0 0.0
        %2658 = vmatprep.subr.mxu0 0.0
        %2659 = vmatpush2.msra.mxu0 0.0
        %2660 = vmatprep.subr.mxu0 0.0
        %2661 = vmatpush2.msra.mxu0 0.0
        %2662 = vmatprep.subr.mxu0 0.0
        %2663 = vmatpush2.msra.mxu0 0.0
        %2664 = vmatprep.subr.mxu0 0.0
        %2665 = vmatpush2.msra.mxu0 0.0
        %2666 = vmatprep.subr.mxu0 0.0
        %2667 = vmatpush2.msra.mxu0 0.0
        %2668 = vmatprep.subr.mxu0 0.0
        %2669 = vmatpush2.msra.mxu0 0.0
        %2670 = vmatprep.mubr.f32.mxu0 0.0
        %2671 = vmatmul.mubr.f32.gmra.mxu0 %v1401
        %v2672 = vpop.f32.mrf.mxu0
        %v2673 = vadd.f32 %v2448, %v2672
        %v2674 = vpop.f32.mrf.mxu0
        %2675 = vmatprep.mubr.f32.mxu0 0.0
        %2676 = vmatmul.mubr.f32.gmra.mxu0 %v1402
        %v2677 = vpop.f32.mrf.mxu0
        %v2678 = vadd.f32 %v2453, %v2677
        %v2679 = vpop.f32.mrf.mxu0
        %2680 = vmatprep.mubr.f32.mxu0 0.0
        %2681 = vmatmul.mubr.f32.gmra.mxu0 %v1403
        %v2682 = vpop.f32.mrf.mxu0
        %v2683 = vadd.f32 %v2458, %v2682
        %v2684 = vpop.f32.mrf.mxu0
        %2685 = vmatprep.mubr.f32.mxu0 0.0
        %2686 = vmatmul.mubr.f32.gmra.mxu0 %v1404
        %v2687 = vpop.f32.mrf.mxu0
        %v2688 = vadd.f32 %v2463, %v2687
        %v2689 = vpop.f32.mrf.mxu0
        %2690 = vmatprep.mubr.f32.mxu0 0.0
        %2691 = vmatmul.mubr.f32.gmra.mxu0 %v1405
        %v2692 = vpop.f32.mrf.mxu0
        %v2693 = vadd.f32 %v2468, %v2692
        %v2694 = vpop.f32.mrf.mxu0
        %2695 = vmatprep.mubr.f32.mxu0 0.0
        %2696 = vmatmul.mubr.f32.gmra.mxu0 %v1406
        %v2697 = vpop.f32.mrf.mxu0
        %v2698 = vadd.f32 %v2473, %v2697
        %v2699 = vpop.f32.mrf.mxu0
        %2700 = vmatprep.mubr.f32.mxu0 0.0
        %2701 = vmatmul.mubr.f32.gmra.mxu0 %v1407
        %v2702 = vpop.f32.mrf.mxu0
        %v2703 = vadd.f32 %v2478, %v2702
        %v2704 = vpop.f32.mrf.mxu0
        %2705 = vmatprep.mubr.f32.mxu0 0.0
        %2706 = vmatmul.mubr.f32.gmra.mxu0 %v1408
        %v2707 = vpop.f32.mrf.mxu0
        %v2708 = vadd.f32 %v2483, %v2707
        %v2709 = vpop.f32.mrf.mxu0
        %2710 = vmatprep.mubr.f32.mxu0 0.0
        %2711 = vmatmul.mubr.f32.gmra.mxu0 %v1409
        %v2712 = vpop.f32.mrf.mxu0
        %v2713 = vadd.f32 %v2488, %v2712
        %v2714 = vpop.f32.mrf.mxu0
        %2715 = vmatprep.mubr.f32.mxu0 0.0
        %2716 = vmatmul.mubr.f32.gmra.mxu0 %v1410
        %v2717 = vpop.f32.mrf.mxu0
        %v2718 = vadd.f32 %v2493, %v2717
        %v2719 = vpop.f32.mrf.mxu0
        %2720 = vmatprep.mubr.f32.mxu0 0.0
        %2721 = vmatmul.mubr.f32.gmra.mxu0 %v1411
        %v2722 = vpop.f32.mrf.mxu0
        %v2723 = vadd.f32 %v2498, %v2722
        %v2724 = vpop.f32.mrf.mxu0
        %2725 = vmatprep.mubr.f32.mxu0 0.0
        %2726 = vmatmul.mubr.f32.gmra.mxu0 %v1412
        %v2727 = vpop.f32.mrf.mxu0
        %v2728 = vadd.f32 %v2503, %v2727
        %v2729 = vpop.f32.mrf.mxu0
        %2730 = vmatprep.mubr.f32.mxu0 0.0
        %2731 = vmatmul.mubr.f32.gmra.mxu0 %v1413
        %v2732 = vpop.f32.mrf.mxu0
        %v2733 = vadd.f32 %v2508, %v2732
        %v2734 = vpop.f32.mrf.mxu0
        %2735 = vmatprep.mubr.f32.mxu0 0.0
        %2736 = vmatmul.mubr.f32.gmra.mxu0 %v1414
        %v2737 = vpop.f32.mrf.mxu0
        %v2738 = vadd.f32 %v2513, %v2737
        %v2739 = vpop.f32.mrf.mxu0
        %2740 = vmatprep.mubr.f32.mxu0 0.0
        %2741 = vmatmul.mubr.f32.gmra.mxu0 %v1415
        %v2742 = vpop.f32.mrf.mxu0
        %v2743 = vadd.f32 %v2518, %v2742
        %v2744 = vpop.f32.mrf.mxu0
        %2745 = vmatprep.mubr.f32.mxu0 0.0
        %2746 = vmatmul.mubr.f32.gmra.mxu0 %v1416
        %v2747 = vpop.f32.mrf.mxu0
        %v2748 = vadd.f32 %v2523, %v2747
        %v2749 = vpop.f32.mrf.mxu0
        %2750 = vmatprep.mubr.f32.mxu0 0.0
        %2751 = vmatmul.mubr.f32.gmra.mxu0 %v1417
        %v2752 = vpop.f32.mrf.mxu0
        %v2753 = vadd.f32 %v2528, %v2752
        %v2754 = vpop.f32.mrf.mxu0
        %2755 = vmatprep.mubr.f32.mxu0 0.0
        %2756 = vmatmul.mubr.f32.gmra.mxu0 %v1418
        %v2757 = vpop.f32.mrf.mxu0
        %v2758 = vadd.f32 %v2533, %v2757
        %v2759 = vpop.f32.mrf.mxu0
        %2760 = vmatprep.mubr.f32.mxu0 0.0
        %2761 = vmatmul.mubr.f32.gmra.mxu0 %v1419
        %v2762 = vpop.f32.mrf.mxu0
        %v2763 = vadd.f32 %v2538, %v2762
        %v2764 = vpop.f32.mrf.mxu0
        %2765 = vmatprep.mubr.f32.mxu0 0.0
        %2766 = vmatmul.mubr.f32.gmra.mxu0 %v1420
        %v2767 = vpop.f32.mrf.mxu0
        %v2768 = vadd.f32 %v2543, %v2767
        %v2769 = vpop.f32.mrf.mxu0
        %2770 = vmatprep.mubr.f32.mxu0 0.0
        %2771 = vmatmul.mubr.f32.gmra.mxu0 %v1421
        %v2772 = vpop.f32.mrf.mxu0
        %v2773 = vadd.f32 %v2548, %v2772
        %v2774 = vpop.f32.mrf.mxu0
        %2775 = vmatprep.mubr.f32.mxu0 0.0
        %2776 = vmatmul.mubr.f32.gmra.mxu0 %v1422
        %v2777 = vpop.f32.mrf.mxu0
        %v2778 = vadd.f32 %v2553, %v2777
        %v2779 = vpop.f32.mrf.mxu0
        %2780 = vmatprep.mubr.f32.mxu0 0.0
        %2781 = vmatmul.mubr.f32.gmra.mxu0 %v1423
        %v2782 = vpop.f32.mrf.mxu0
        %v2783 = vadd.f32 %v2558, %v2782
        %v2784 = vpop.f32.mrf.mxu0
        %2785 = vmatprep.mubr.f32.mxu0 0.0
        %2786 = vmatmul.mubr.f32.gmra.mxu0 %v1424
        %v2787 = vpop.f32.mrf.mxu0
        %v2788 = vadd.f32 %v2563, %v2787
        %v2789 = vpop.f32.mrf.mxu0
        %2790 = vmatprep.mubr.f32.mxu0 0.0
        %2791 = vmatmul.mubr.f32.gmra.mxu0 %v1425
        %v2792 = vpop.f32.mrf.mxu0
        %v2793 = vadd.f32 %v2568, %v2792
        %v2794 = vpop.f32.mrf.mxu0
        %2795 = vmatprep.mubr.f32.mxu0 0.0
        %2796 = vmatmul.mubr.f32.gmra.mxu0 %v1426
        %v2797 = vpop.f32.mrf.mxu0
        %v2798 = vadd.f32 %v2573, %v2797
        %v2799 = vpop.f32.mrf.mxu0
        %2800 = vmatprep.mubr.f32.mxu0 0.0
        %2801 = vmatmul.mubr.f32.gmra.mxu0 %v1427
        %v2802 = vpop.f32.mrf.mxu0
        %v2803 = vadd.f32 %v2578, %v2802
        %v2804 = vpop.f32.mrf.mxu0
        %2805 = vmatprep.mubr.f32.mxu0 0.0
        %2806 = vmatmul.mubr.f32.gmra.mxu0 %v1428
        %v2807 = vpop.f32.mrf.mxu0
        %v2808 = vadd.f32 %v2583, %v2807
        %v2809 = vpop.f32.mrf.mxu0
        %2810 = vmatprep.mubr.f32.mxu0 0.0
        %2811 = vmatmul.mubr.f32.gmra.mxu0 %v1429
        %v2812 = vpop.f32.mrf.mxu0
        %v2813 = vadd.f32 %v2588, %v2812
        %v2814 = vpop.f32.mrf.mxu0
        %2815 = vmatprep.mubr.f32.mxu0 0.0
        %2816 = vmatmul.mubr.f32.gmra.mxu0 %v1430
        %v2817 = vpop.f32.mrf.mxu0
        %v2818 = vadd.f32 %v2593, %v2817
        %v2819 = vpop.f32.mrf.mxu0
        %2820 = vmatprep.mubr.f32.mxu0 0.0
        %2821 = vmatmul.mubr.f32.gmra.mxu0 %v1431
        %v2822 = vpop.f32.mrf.mxu0
        %v2823 = vadd.f32 %v2598, %v2822
        %v2824 = vpop.f32.mrf.mxu0
        %2825 = vmatprep.mubr.f32.mxu0 0.0
        %2826 = vmatmul.mubr.f32.gmra.mxu0 %v1432
        %v2827 = vpop.f32.mrf.mxu0
        %v2828 = vadd.f32 %v2603, %v2827
        %v2829 = vpop.f32.mrf.mxu0
        %2830 = vdwg.mxu0
        %v2831 = vld [vmem:[#allocation7 + $0x280] sm:$0xff]
        %v2832 = vld [vmem:[#allocation7 + $0x288] sm:$0xff]
        %v2833 = vld [vmem:[#allocation7 + $0x290] sm:$0xff]
        %v2834 = vld [vmem:[#allocation7 + $0x298] sm:$0xff]
        %v2835 = vld [vmem:[#allocation7 + $0x2a0] sm:$0xff]
        %v2836 = vld [vmem:[#allocation7 + $0x2a8] sm:$0xff]
        %v2837 = vld [vmem:[#allocation7 + $0x2b0] sm:$0xff]
        %v2838 = vld [vmem:[#allocation7 + $0x2b8] sm:$0xff]
        %v2839 = vld [vmem:[#allocation7 + $0x2c0] sm:$0xff]
        %v2840 = vld [vmem:[#allocation7 + $0x2c8] sm:$0xff]
        %v2841 = vld [vmem:[#allocation7 + $0x2d0] sm:$0xff]
        %v2842 = vld [vmem:[#allocation7 + $0x2d8] sm:$0xff]
        %v2843 = vld [vmem:[#allocation7 + $0x2e0] sm:$0xff]
        %v2844 = vld [vmem:[#allocation7 + $0x2e8] sm:$0xff]
        %v2845 = vld [vmem:[#allocation7 + $0x2f0] sm:$0xff]
        %v2846 = vld [vmem:[#allocation7 + $0x2f8] sm:$0xff]
        %2847 = vmatprep.subr.mxu0 0.0
        %2848 = vmatpush1.msra.mxu0 %v2846
        %2849 = vmatprep.subr.mxu0 0.0
        %2850 = vmatpush1.msra.mxu0 %v2845
        %2851 = vmatprep.subr.mxu0 0.0
        %2852 = vmatpush1.msra.mxu0 %v2844
        %2853 = vmatprep.subr.mxu0 0.0
        %2854 = vmatpush1.msra.mxu0 %v2843
        %2855 = vmatprep.subr.mxu0 0.0
        %2856 = vmatpush1.msra.mxu0 %v2842
        %2857 = vmatprep.subr.mxu0 0.0
        %2858 = vmatpush1.msra.mxu0 %v2841
        %2859 = vmatprep.subr.mxu0 0.0
        %2860 = vmatpush1.msra.mxu0 %v2840
        %2861 = vmatprep.subr.mxu0 0.0
        %2862 = vmatpush1.msra.mxu0 %v2839
        %2863 = vmatprep.subr.mxu0 0.0
        %2864 = vmatpush1.msra.mxu0 %v2838
        %2865 = vmatprep.subr.mxu0 0.0
        %2866 = vmatpush1.msra.mxu0 %v2837
        %2867 = vmatprep.subr.mxu0 0.0
        %2868 = vmatpush1.msra.mxu0 %v2836
        %2869 = vmatprep.subr.mxu0 0.0
        %2870 = vmatpush1.msra.mxu0 %v2835
        %2871 = vmatprep.subr.mxu0 0.0
        %2872 = vmatpush1.msra.mxu0 %v2834
        %2873 = vmatprep.subr.mxu0 0.0
        %2874 = vmatpush1.msra.mxu0 %v2833
        %2875 = vmatprep.subr.mxu0 0.0
        %2876 = vmatpush1.msra.mxu0 %v2832
        %2877 = vmatprep.subr.mxu0 0.0
        %2878 = vmatpush1.msra.mxu0 %v2831
        %2879 = vmatprep.subr.mxu0 0.0
        %2880 = vmatpush2.msra.mxu0 0.0
        %2881 = vmatprep.subr.mxu0 0.0
        %2882 = vmatpush2.msra.mxu0 0.0
        %2883 = vmatprep.subr.mxu0 0.0
        %2884 = vmatpush2.msra.mxu0 0.0
        %2885 = vmatprep.subr.mxu0 0.0
        %2886 = vmatpush2.msra.mxu0 0.0
        %2887 = vmatprep.subr.mxu0 0.0
        %2888 = vmatpush2.msra.mxu0 0.0
        %2889 = vmatprep.subr.mxu0 0.0
        %2890 = vmatpush2.msra.mxu0 0.0
        %2891 = vmatprep.subr.mxu0 0.0
        %2892 = vmatpush2.msra.mxu0 0.0
        %2893 = vmatprep.subr.mxu0 0.0
        %2894 = vmatpush2.msra.mxu0 0.0
        %2895 = vmatprep.subr.mxu0 0.0
        %2896 = vmatpush2.msra.mxu0 0.0
        %2897 = vmatprep.subr.mxu0 0.0
        %2898 = vmatpush2.msra.mxu0 0.0
        %2899 = vmatprep.subr.mxu0 0.0
        %2900 = vmatpush2.msra.mxu0 0.0
        %2901 = vmatprep.subr.mxu0 0.0
        %2902 = vmatpush2.msra.mxu0 0.0
        %2903 = vmatprep.subr.mxu0 0.0
        %2904 = vmatpush2.msra.mxu0 0.0
        %2905 = vmatprep.subr.mxu0 0.0
        %2906 = vmatpush2.msra.mxu0 0.0
        %2907 = vmatprep.subr.mxu0 0.0
        %2908 = vmatpush2.msra.mxu0 0.0
        %2909 = vmatprep.subr.mxu0 0.0
        %2910 = vmatpush2.msra.mxu0 0.0
        %2911 = vmatprep.mubr.f32.mxu0 0.0
        %2912 = vmatmul.mubr.f32.gmra.mxu0 %v1562
        %v2913 = vpop.f32.mrf.mxu0
        %v2914 = vadd.f32 0.0, %v2913
        %v2915 = vpop.f32.mrf.mxu0
        %2916 = vmatprep.mubr.f32.mxu0 0.0
        %2917 = vmatmul.mubr.f32.gmra.mxu0 %v1563
        %v2918 = vpop.f32.mrf.mxu0
        %v2919 = vadd.f32 0.0, %v2918
        %v2920 = vpop.f32.mrf.mxu0
        %2921 = vmatprep.mubr.f32.mxu0 0.0
        %2922 = vmatmul.mubr.f32.gmra.mxu0 %v1564
        %v2923 = vpop.f32.mrf.mxu0
        %v2924 = vadd.f32 0.0, %v2923
        %v2925 = vpop.f32.mrf.mxu0
        %2926 = vmatprep.mubr.f32.mxu0 0.0
        %2927 = vmatmul.mubr.f32.gmra.mxu0 %v1565
        %v2928 = vpop.f32.mrf.mxu0
        %v2929 = vadd.f32 0.0, %v2928
        %v2930 = vpop.f32.mrf.mxu0
        %2931 = vmatprep.mubr.f32.mxu0 0.0
        %2932 = vmatmul.mubr.f32.gmra.mxu0 %v1566
        %v2933 = vpop.f32.mrf.mxu0
        %v2934 = vadd.f32 0.0, %v2933
        %v2935 = vpop.f32.mrf.mxu0
        %2936 = vmatprep.mubr.f32.mxu0 0.0
        %2937 = vmatmul.mubr.f32.gmra.mxu0 %v1567
        %v2938 = vpop.f32.mrf.mxu0
        %v2939 = vadd.f32 0.0, %v2938
        %v2940 = vpop.f32.mrf.mxu0
        %2941 = vmatprep.mubr.f32.mxu0 0.0
        %2942 = vmatmul.mubr.f32.gmra.mxu0 %v1568
        %v2943 = vpop.f32.mrf.mxu0
        %v2944 = vadd.f32 0.0, %v2943
        %v2945 = vpop.f32.mrf.mxu0
        %2946 = vmatprep.mubr.f32.mxu0 0.0
        %2947 = vmatmul.mubr.f32.gmra.mxu0 %v1569
        %v2948 = vpop.f32.mrf.mxu0
        %v2949 = vadd.f32 0.0, %v2948
        %v2950 = vpop.f32.mrf.mxu0
        %2951 = vmatprep.mubr.f32.mxu0 0.0
        %2952 = vmatmul.mubr.f32.gmra.mxu0 %v1570
        %v2953 = vpop.f32.mrf.mxu0
        %v2954 = vadd.f32 0.0, %v2953
        %v2955 = vpop.f32.mrf.mxu0
        %2956 = vmatprep.mubr.f32.mxu0 0.0
        %2957 = vmatmul.mubr.f32.gmra.mxu0 %v1571
        %v2958 = vpop.f32.mrf.mxu0
        %v2959 = vadd.f32 0.0, %v2958
        %v2960 = vpop.f32.mrf.mxu0
        %2961 = vmatprep.mubr.f32.mxu0 0.0
        %2962 = vmatmul.mubr.f32.gmra.mxu0 %v1572
        %v2963 = vpop.f32.mrf.mxu0
        %v2964 = vadd.f32 0.0, %v2963
        %v2965 = vpop.f32.mrf.mxu0
        %2966 = vmatprep.mubr.f32.mxu0 0.0
        %2967 = vmatmul.mubr.f32.gmra.mxu0 %v1573
        %v2968 = vpop.f32.mrf.mxu0
        %v2969 = vadd.f32 0.0, %v2968
        %v2970 = vpop.f32.mrf.mxu0
        %2971 = vmatprep.mubr.f32.mxu0 0.0
        %2972 = vmatmul.mubr.f32.gmra.mxu0 %v1574
        %v2973 = vpop.f32.mrf.mxu0
        %v2974 = vadd.f32 0.0, %v2973
        %v2975 = vpop.f32.mrf.mxu0
        %2976 = vmatprep.mubr.f32.mxu0 0.0
        %2977 = vmatmul.mubr.f32.gmra.mxu0 %v1575
        %v2978 = vpop.f32.mrf.mxu0
        %v2979 = vadd.f32 0.0, %v2978
        %v2980 = vpop.f32.mrf.mxu0
        %2981 = vmatprep.mubr.f32.mxu0 0.0
        %2982 = vmatmul.mubr.f32.gmra.mxu0 %v1576
        %v2983 = vpop.f32.mrf.mxu0
        %v2984 = vadd.f32 0.0, %v2983
        %v2985 = vpop.f32.mrf.mxu0
        %2986 = vmatprep.mubr.f32.mxu0 0.0
        %2987 = vmatmul.mubr.f32.gmra.mxu0 %v1577
        %v2988 = vpop.f32.mrf.mxu0
        %v2989 = vadd.f32 0.0, %v2988
        %v2990 = vpop.f32.mrf.mxu0
        %2991 = vmatprep.mubr.f32.mxu0 0.0
        %2992 = vmatmul.mubr.f32.gmra.mxu0 %v1578
        %v2993 = vpop.f32.mrf.mxu0
        %v2994 = vadd.f32 0.0, %v2993
        %v2995 = vpop.f32.mrf.mxu0
        %2996 = vmatprep.mubr.f32.mxu0 0.0
        %2997 = vmatmul.mubr.f32.gmra.mxu0 %v1579
        %v2998 = vpop.f32.mrf.mxu0
        %v2999 = vadd.f32 0.0, %v2998
        %v3000 = vpop.f32.mrf.mxu0
        %3001 = vmatprep.mubr.f32.mxu0 0.0
        %3002 = vmatmul.mubr.f32.gmra.mxu0 %v1580
        %v3003 = vpop.f32.mrf.mxu0
        %v3004 = vadd.f32 0.0, %v3003
        %v3005 = vpop.f32.mrf.mxu0
        %3006 = vmatprep.mubr.f32.mxu0 0.0
        %3007 = vmatmul.mubr.f32.gmra.mxu0 %v1581
        %v3008 = vpop.f32.mrf.mxu0
        %v3009 = vadd.f32 0.0, %v3008
        %v3010 = vpop.f32.mrf.mxu0
        %3011 = vmatprep.mubr.f32.mxu0 0.0
        %3012 = vmatmul.mubr.f32.gmra.mxu0 %v1582
        %v3013 = vpop.f32.mrf.mxu0
        %v3014 = vadd.f32 0.0, %v3013
        %v3015 = vpop.f32.mrf.mxu0
        %3016 = vmatprep.mubr.f32.mxu0 0.0
        %3017 = vmatmul.mubr.f32.gmra.mxu0 %v1583
        %v3018 = vpop.f32.mrf.mxu0
        %v3019 = vadd.f32 0.0, %v3018
        %v3020 = vpop.f32.mrf.mxu0
        %3021 = vmatprep.mubr.f32.mxu0 0.0
        %3022 = vmatmul.mubr.f32.gmra.mxu0 %v1584
        %v3023 = vpop.f32.mrf.mxu0
        %v3024 = vadd.f32 0.0, %v3023
        %v3025 = vpop.f32.mrf.mxu0
        %3026 = vmatprep.mubr.f32.mxu0 0.0
        %3027 = vmatmul.mubr.f32.gmra.mxu0 %v1585
        %v3028 = vpop.f32.mrf.mxu0
        %v3029 = vadd.f32 0.0, %v3028
        %v3030 = vpop.f32.mrf.mxu0
        %3031 = vmatprep.mubr.f32.mxu0 0.0
        %3032 = vmatmul.mubr.f32.gmra.mxu0 %v1586
        %v3033 = vpop.f32.mrf.mxu0
        %v3034 = vadd.f32 0.0, %v3033
        %v3035 = vpop.f32.mrf.mxu0
        %3036 = vmatprep.mubr.f32.mxu0 0.0
        %3037 = vmatmul.mubr.f32.gmra.mxu0 %v1587
        %v3038 = vpop.f32.mrf.mxu0
        %v3039 = vadd.f32 0.0, %v3038
        %v3040 = vpop.f32.mrf.mxu0
        %3041 = vmatprep.mubr.f32.mxu0 0.0
        %3042 = vmatmul.mubr.f32.gmra.mxu0 %v1588
        %v3043 = vpop.f32.mrf.mxu0
        %v3044 = vadd.f32 0.0, %v3043
        %v3045 = vpop.f32.mrf.mxu0
        %3046 = vmatprep.mubr.f32.mxu0 0.0
        %3047 = vmatmul.mubr.f32.gmra.mxu0 %v1589
        %v3048 = vpop.f32.mrf.mxu0
        %v3049 = vadd.f32 0.0, %v3048
        %v3050 = vpop.f32.mrf.mxu0
        %3051 = vmatprep.mubr.f32.mxu0 0.0
        %3052 = vmatmul.mubr.f32.gmra.mxu0 %v1590
        %v3053 = vpop.f32.mrf.mxu0
        %v3054 = vadd.f32 0.0, %v3053
        %v3055 = vpop.f32.mrf.mxu0
        %3056 = vmatprep.mubr.f32.mxu0 0.0
        %3057 = vmatmul.mubr.f32.gmra.mxu0 %v1591
        %v3058 = vpop.f32.mrf.mxu0
        %v3059 = vadd.f32 0.0, %v3058
        %v3060 = vpop.f32.mrf.mxu0
        %3061 = vmatprep.mubr.f32.mxu0 0.0
        %3062 = vmatmul.mubr.f32.gmra.mxu0 %v1592
        %v3063 = vpop.f32.mrf.mxu0
        %v3064 = vadd.f32 0.0, %v3063
        %v3065 = vpop.f32.mrf.mxu0
        %3066 = vmatprep.mubr.f32.mxu0 0.0
        %3067 = vmatmul.mubr.f32.gmra.mxu0 %v1593
        %v3068 = vpop.f32.mrf.mxu0
        %v3069 = vadd.f32 0.0, %v3068
        %v3070 = vpop.f32.mrf.mxu0
        %3071 = vdwg.mxu0
        %v3072 = vadd.f32 %v2673, %v2914
        %v3073 = vadd.f32 %v2678, %v2919
        %v3074 = vadd.f32 %v2683, %v2924
        %v3075 = vadd.f32 %v2688, %v2929
        %v3076 = vadd.f32 %v2693, %v2934
        %v3077 = vadd.f32 %v2698, %v2939
        %v3078 = vadd.f32 %v2703, %v2944
        %v3079 = vadd.f32 %v2708, %v2949
        %v3080 = vadd.f32 %v2713, %v2954
        %v3081 = vadd.f32 %v2718, %v2959
        %v3082 = vadd.f32 %v2723, %v2964
        %v3083 = vadd.f32 %v2728, %v2969
        %v3084 = vadd.f32 %v2733, %v2974
        %v3085 = vadd.f32 %v2738, %v2979
        %v3086 = vadd.f32 %v2743, %v2984
        %v3087 = vadd.f32 %v2748, %v2989
        %v3088 = vadd.f32 %v2753, %v2994
        %v3089 = vadd.f32 %v2758, %v2999
        %v3090 = vadd.f32 %v2763, %v3004
        %v3091 = vadd.f32 %v2768, %v3009
        %v3092 = vadd.f32 %v2773, %v3014
        %v3093 = vadd.f32 %v2778, %v3019
        %v3094 = vadd.f32 %v2783, %v3024
        %v3095 = vadd.f32 %v2788, %v3029
        %v3096 = vadd.f32 %v2793, %v3034
        %v3097 = vadd.f32 %v2798, %v3039
        %v3098 = vadd.f32 %v2803, %v3044
        %v3099 = vadd.f32 %v2808, %v3049
        %v3100 = vadd.f32 %v2813, %v3054
        %v3101 = vadd.f32 %v2818, %v3059
        %v3102 = vadd.f32 %v2823, %v3064
        %v3103 = vadd.f32 %v2828, %v3069
        %v3104 = vld [vmem:[#allocation7 + $0x300] sm:$0xff]
        %v3105 = vld [vmem:[#allocation7 + $0x308] sm:$0xff]
        %v3106 = vld [vmem:[#allocation7 + $0x310] sm:$0xff]
        %v3107 = vld [vmem:[#allocation7 + $0x318] sm:$0xff]
        %v3108 = vld [vmem:[#allocation7 + $0x320] sm:$0xff]
        %v3109 = vld [vmem:[#allocation7 + $0x328] sm:$0xff]
        %v3110 = vld [vmem:[#allocation7 + $0x330] sm:$0xff]
        %v3111 = vld [vmem:[#allocation7 + $0x338] sm:$0xff]
        %v3112 = vld [vmem:[#allocation7 + $0x340] sm:$0xff]
        %v3113 = vld [vmem:[#allocation7 + $0x348] sm:$0xff]
        %v3114 = vld [vmem:[#allocation7 + $0x350] sm:$0xff]
        %v3115 = vld [vmem:[#allocation7 + $0x358] sm:$0xff]
        %v3116 = vld [vmem:[#allocation7 + $0x360] sm:$0xff]
        %v3117 = vld [vmem:[#allocation7 + $0x368] sm:$0xff]
        %v3118 = vld [vmem:[#allocation7 + $0x370] sm:$0xff]
        %v3119 = vld [vmem:[#allocation7 + $0x378] sm:$0xff]
        %v3120 = vld [vmem:[#allocation7 + $0x380] sm:$0xff]
        %v3121 = vld [vmem:[#allocation7 + $0x388] sm:$0xff]
        %v3122 = vld [vmem:[#allocation7 + $0x390] sm:$0xff]
        %v3123 = vld [vmem:[#allocation7 + $0x398] sm:$0xff]
        %v3124 = vld [vmem:[#allocation7 + $0x3a0] sm:$0xff]
        %v3125 = vld [vmem:[#allocation7 + $0x3a8] sm:$0xff]
        %v3126 = vld [vmem:[#allocation7 + $0x3b0] sm:$0xff]
        %v3127 = vld [vmem:[#allocation7 + $0x3b8] sm:$0xff]
        %v3128 = vld [vmem:[#allocation7 + $0x3c0] sm:$0xff]
        %v3129 = vld [vmem:[#allocation7 + $0x3c8] sm:$0xff]
        %v3130 = vld [vmem:[#allocation7 + $0x3d0] sm:$0xff]
        %v3131 = vld [vmem:[#allocation7 + $0x3d8] sm:$0xff]
        %v3132 = vld [vmem:[#allocation7 + $0x3e0] sm:$0xff]
        %v3133 = vld [vmem:[#allocation7 + $0x3e8] sm:$0xff]
        %v3134 = vld [vmem:[#allocation7 + $0x3f0] sm:$0xff]
        %v3135 = vld [vmem:[#allocation7 + $0x3f8] sm:$0xff]
        %3136 = vmatprep.subr.mxu0 0.0
        %3137 = vmatpush1.msra.mxu0 %v3135
        %3138 = vmatprep.subr.mxu0 0.0
        %3139 = vmatpush1.msra.mxu0 %v3134
        %3140 = vmatprep.subr.mxu0 0.0
        %3141 = vmatpush1.msra.mxu0 %v3133
        %3142 = vmatprep.subr.mxu0 0.0
        %3143 = vmatpush1.msra.mxu0 %v3132
        %3144 = vmatprep.subr.mxu0 0.0
        %3145 = vmatpush1.msra.mxu0 %v3131
        %3146 = vmatprep.subr.mxu0 0.0
        %3147 = vmatpush1.msra.mxu0 %v3130
        %3148 = vmatprep.subr.mxu0 0.0
        %3149 = vmatpush1.msra.mxu0 %v3129
        %3150 = vmatprep.subr.mxu0 0.0
        %3151 = vmatpush1.msra.mxu0 %v3128
        %3152 = vmatprep.subr.mxu0 0.0
        %3153 = vmatpush1.msra.mxu0 %v3127
        %3154 = vmatprep.subr.mxu0 0.0
        %3155 = vmatpush1.msra.mxu0 %v3126
        %3156 = vmatprep.subr.mxu0 0.0
        %3157 = vmatpush1.msra.mxu0 %v3125
        %3158 = vmatprep.subr.mxu0 0.0
        %3159 = vmatpush1.msra.mxu0 %v3124
        %3160 = vmatprep.subr.mxu0 0.0
        %3161 = vmatpush1.msra.mxu0 %v3123
        %3162 = vmatprep.subr.mxu0 0.0
        %3163 = vmatpush1.msra.mxu0 %v3122
        %3164 = vmatprep.subr.mxu0 0.0
        %3165 = vmatpush1.msra.mxu0 %v3121
        %3166 = vmatprep.subr.mxu0 0.0
        %3167 = vmatpush1.msra.mxu0 %v3120
        %3168 = vmatprep.subr.mxu0 0.0
        %3169 = vmatpush2.msra.mxu0 0.0
        %3170 = vmatprep.subr.mxu0 0.0
        %3171 = vmatpush2.msra.mxu0 0.0
        %3172 = vmatprep.subr.mxu0 0.0
        %3173 = vmatpush2.msra.mxu0 0.0
        %3174 = vmatprep.subr.mxu0 0.0
        %3175 = vmatpush2.msra.mxu0 0.0
        %3176 = vmatprep.subr.mxu0 0.0
        %3177 = vmatpush2.msra.mxu0 0.0
        %3178 = vmatprep.subr.mxu0 0.0
        %3179 = vmatpush2.msra.mxu0 0.0
        %3180 = vmatprep.subr.mxu0 0.0
        %3181 = vmatpush2.msra.mxu0 0.0
        %3182 = vmatprep.subr.mxu0 0.0
        %3183 = vmatpush2.msra.mxu0 0.0
        %3184 = vmatprep.subr.mxu0 0.0
        %3185 = vmatpush2.msra.mxu0 0.0
        %3186 = vmatprep.subr.mxu0 0.0
        %3187 = vmatpush2.msra.mxu0 0.0
        %3188 = vmatprep.subr.mxu0 0.0
        %3189 = vmatpush2.msra.mxu0 0.0
        %3190 = vmatprep.subr.mxu0 0.0
        %3191 = vmatpush2.msra.mxu0 0.0
        %3192 = vmatprep.subr.mxu0 0.0
        %3193 = vmatpush2.msra.mxu0 0.0
        %3194 = vmatprep.subr.mxu0 0.0
        %3195 = vmatpush2.msra.mxu0 0.0
        %3196 = vmatprep.subr.mxu0 0.0
        %3197 = vmatpush2.msra.mxu0 0.0
        %3198 = vmatprep.subr.mxu0 0.0
        %3199 = vmatpush2.msra.mxu0 0.0
        %3200 = vmatprep.mubr.f32.mxu0 0.0
        %3201 = vmatmul.mubr.f32.gmra.mxu0 %v1240
        %v3202 = vpop.f32.mrf.mxu0
        %v3203 = vadd.f32 0.0, %v3202
        %v3204 = vpop.f32.mrf.mxu0
        %3205 = vmatprep.mubr.f32.mxu0 0.0
        %3206 = vmatmul.mubr.f32.gmra.mxu0 %v1241
        %v3207 = vpop.f32.mrf.mxu0
        %v3208 = vadd.f32 0.0, %v3207
        %v3209 = vpop.f32.mrf.mxu0
        %3210 = vmatprep.mubr.f32.mxu0 0.0
        %3211 = vmatmul.mubr.f32.gmra.mxu0 %v1242
        %v3212 = vpop.f32.mrf.mxu0
        %v3213 = vadd.f32 0.0, %v3212
        %v3214 = vpop.f32.mrf.mxu0
        %3215 = vmatprep.mubr.f32.mxu0 0.0
        %3216 = vmatmul.mubr.f32.gmra.mxu0 %v1243
        %v3217 = vpop.f32.mrf.mxu0
        %v3218 = vadd.f32 0.0, %v3217
        %v3219 = vpop.f32.mrf.mxu0
        %3220 = vmatprep.mubr.f32.mxu0 0.0
        %3221 = vmatmul.mubr.f32.gmra.mxu0 %v1244
        %v3222 = vpop.f32.mrf.mxu0
        %v3223 = vadd.f32 0.0, %v3222
        %v3224 = vpop.f32.mrf.mxu0
        %3225 = vmatprep.mubr.f32.mxu0 0.0
        %3226 = vmatmul.mubr.f32.gmra.mxu0 %v1245
        %v3227 = vpop.f32.mrf.mxu0
        %v3228 = vadd.f32 0.0, %v3227
        %v3229 = vpop.f32.mrf.mxu0
        %3230 = vmatprep.mubr.f32.mxu0 0.0
        %3231 = vmatmul.mubr.f32.gmra.mxu0 %v1246
        %v3232 = vpop.f32.mrf.mxu0
        %v3233 = vadd.f32 0.0, %v3232
        %v3234 = vpop.f32.mrf.mxu0
        %3235 = vmatprep.mubr.f32.mxu0 0.0
        %3236 = vmatmul.mubr.f32.gmra.mxu0 %v1247
        %v3237 = vpop.f32.mrf.mxu0
        %v3238 = vadd.f32 0.0, %v3237
        %v3239 = vpop.f32.mrf.mxu0
        %3240 = vmatprep.mubr.f32.mxu0 0.0
        %3241 = vmatmul.mubr.f32.gmra.mxu0 %v1248
        %v3242 = vpop.f32.mrf.mxu0
        %v3243 = vadd.f32 0.0, %v3242
        %v3244 = vpop.f32.mrf.mxu0
        %3245 = vmatprep.mubr.f32.mxu0 0.0
        %3246 = vmatmul.mubr.f32.gmra.mxu0 %v1249
        %v3247 = vpop.f32.mrf.mxu0
        %v3248 = vadd.f32 0.0, %v3247
        %v3249 = vpop.f32.mrf.mxu0
        %3250 = vmatprep.mubr.f32.mxu0 0.0
        %3251 = vmatmul.mubr.f32.gmra.mxu0 %v1250
        %v3252 = vpop.f32.mrf.mxu0
        %v3253 = vadd.f32 0.0, %v3252
        %v3254 = vpop.f32.mrf.mxu0
        %3255 = vmatprep.mubr.f32.mxu0 0.0
        %3256 = vmatmul.mubr.f32.gmra.mxu0 %v1251
        %v3257 = vpop.f32.mrf.mxu0
        %v3258 = vadd.f32 0.0, %v3257
        %v3259 = vpop.f32.mrf.mxu0
        %3260 = vmatprep.mubr.f32.mxu0 0.0
        %3261 = vmatmul.mubr.f32.gmra.mxu0 %v1252
        %v3262 = vpop.f32.mrf.mxu0
        %v3263 = vadd.f32 0.0, %v3262
        %v3264 = vpop.f32.mrf.mxu0
        %3265 = vmatprep.mubr.f32.mxu0 0.0
        %3266 = vmatmul.mubr.f32.gmra.mxu0 %v1253
        %v3267 = vpop.f32.mrf.mxu0
        %v3268 = vadd.f32 0.0, %v3267
        %v3269 = vpop.f32.mrf.mxu0
        %3270 = vmatprep.mubr.f32.mxu0 0.0
        %3271 = vmatmul.mubr.f32.gmra.mxu0 %v1254
        %v3272 = vpop.f32.mrf.mxu0
        %v3273 = vadd.f32 0.0, %v3272
        %v3274 = vpop.f32.mrf.mxu0
        %3275 = vmatprep.mubr.f32.mxu0 0.0
        %3276 = vmatmul.mubr.f32.gmra.mxu0 %v1255
        %v3277 = vpop.f32.mrf.mxu0
        %v3278 = vadd.f32 0.0, %v3277
        %v3279 = vpop.f32.mrf.mxu0
        %3280 = vmatprep.mubr.f32.mxu0 0.0
        %3281 = vmatmul.mubr.f32.gmra.mxu0 %v1256
        %v3282 = vpop.f32.mrf.mxu0
        %v3283 = vadd.f32 0.0, %v3282
        %v3284 = vpop.f32.mrf.mxu0
        %3285 = vmatprep.mubr.f32.mxu0 0.0
        %3286 = vmatmul.mubr.f32.gmra.mxu0 %v1257
        %v3287 = vpop.f32.mrf.mxu0
        %v3288 = vadd.f32 0.0, %v3287
        %v3289 = vpop.f32.mrf.mxu0
        %3290 = vmatprep.mubr.f32.mxu0 0.0
        %3291 = vmatmul.mubr.f32.gmra.mxu0 %v1258
        %v3292 = vpop.f32.mrf.mxu0
        %v3293 = vadd.f32 0.0, %v3292
        %v3294 = vpop.f32.mrf.mxu0
        %3295 = vmatprep.mubr.f32.mxu0 0.0
        %3296 = vmatmul.mubr.f32.gmra.mxu0 %v1259
        %v3297 = vpop.f32.mrf.mxu0
        %v3298 = vadd.f32 0.0, %v3297
        %v3299 = vpop.f32.mrf.mxu0
        %3300 = vmatprep.mubr.f32.mxu0 0.0
        %3301 = vmatmul.mubr.f32.gmra.mxu0 %v1260
        %v3302 = vpop.f32.mrf.mxu0
        %v3303 = vadd.f32 0.0, %v3302
        %v3304 = vpop.f32.mrf.mxu0
        %3305 = vmatprep.mubr.f32.mxu0 0.0
        %3306 = vmatmul.mubr.f32.gmra.mxu0 %v1261
        %v3307 = vpop.f32.mrf.mxu0
        %v3308 = vadd.f32 0.0, %v3307
        %v3309 = vpop.f32.mrf.mxu0
        %3310 = vmatprep.mubr.f32.mxu0 0.0
        %3311 = vmatmul.mubr.f32.gmra.mxu0 %v1262
        %v3312 = vpop.f32.mrf.mxu0
        %v3313 = vadd.f32 0.0, %v3312
        %v3314 = vpop.f32.mrf.mxu0
        %3315 = vmatprep.mubr.f32.mxu0 0.0
        %3316 = vmatmul.mubr.f32.gmra.mxu0 %v1263
        %v3317 = vpop.f32.mrf.mxu0
        %v3318 = vadd.f32 0.0, %v3317
        %v3319 = vpop.f32.mrf.mxu0
        %3320 = vmatprep.mubr.f32.mxu0 0.0
        %3321 = vmatmul.mubr.f32.gmra.mxu0 %v1264
        %v3322 = vpop.f32.mrf.mxu0
        %v3323 = vadd.f32 0.0, %v3322
        %v3324 = vpop.f32.mrf.mxu0
        %3325 = vmatprep.mubr.f32.mxu0 0.0
        %3326 = vmatmul.mubr.f32.gmra.mxu0 %v1265
        %v3327 = vpop.f32.mrf.mxu0
        %v3328 = vadd.f32 0.0, %v3327
        %v3329 = vpop.f32.mrf.mxu0
        %3330 = vmatprep.mubr.f32.mxu0 0.0
        %3331 = vmatmul.mubr.f32.gmra.mxu0 %v1266
        %v3332 = vpop.f32.mrf.mxu0
        %v3333 = vadd.f32 0.0, %v3332
        %v3334 = vpop.f32.mrf.mxu0
        %3335 = vmatprep.mubr.f32.mxu0 0.0
        %3336 = vmatmul.mubr.f32.gmra.mxu0 %v1267
        %v3337 = vpop.f32.mrf.mxu0
        %v3338 = vadd.f32 0.0, %v3337
        %v3339 = vpop.f32.mrf.mxu0
        %3340 = vmatprep.mubr.f32.mxu0 0.0
        %3341 = vmatmul.mubr.f32.gmra.mxu0 %v1268
        %v3342 = vpop.f32.mrf.mxu0
        %v3343 = vadd.f32 0.0, %v3342
        %v3344 = vpop.f32.mrf.mxu0
        %3345 = vmatprep.mubr.f32.mxu0 0.0
        %3346 = vmatmul.mubr.f32.gmra.mxu0 %v1269
        %v3347 = vpop.f32.mrf.mxu0
        %v3348 = vadd.f32 0.0, %v3347
        %v3349 = vpop.f32.mrf.mxu0
        %3350 = vmatprep.mubr.f32.mxu0 0.0
        %3351 = vmatmul.mubr.f32.gmra.mxu0 %v1270
        %v3352 = vpop.f32.mrf.mxu0
        %v3353 = vadd.f32 0.0, %v3352
        %v3354 = vpop.f32.mrf.mxu0
        %3355 = vmatprep.mubr.f32.mxu0 0.0
        %3356 = vmatmul.mubr.f32.gmra.mxu0 %v1271
        %v3357 = vpop.f32.mrf.mxu0
        %v3358 = vadd.f32 0.0, %v3357
        %v3359 = vpop.f32.mrf.mxu0
        %3360 = vdwg.mxu0
        %3361 = vmatprep.subr.mxu0 0.0
        %3362 = vmatpush1.msra.mxu0 %v3119
        %3363 = vmatprep.subr.mxu0 0.0
        %3364 = vmatpush1.msra.mxu0 %v3118
        %3365 = vmatprep.subr.mxu0 0.0
        %3366 = vmatpush1.msra.mxu0 %v3117
        %3367 = vmatprep.subr.mxu0 0.0
        %3368 = vmatpush1.msra.mxu0 %v3116
        %3369 = vmatprep.subr.mxu0 0.0
        %3370 = vmatpush1.msra.mxu0 %v3115
        %3371 = vmatprep.subr.mxu0 0.0
        %3372 = vmatpush1.msra.mxu0 %v3114
        %3373 = vmatprep.subr.mxu0 0.0
        %3374 = vmatpush1.msra.mxu0 %v3113
        %3375 = vmatprep.subr.mxu0 0.0
        %3376 = vmatpush1.msra.mxu0 %v3112
        %3377 = vmatprep.subr.mxu0 0.0
        %3378 = vmatpush1.msra.mxu0 %v3111
        %3379 = vmatprep.subr.mxu0 0.0
        %3380 = vmatpush1.msra.mxu0 %v3110
        %3381 = vmatprep.subr.mxu0 0.0
        %3382 = vmatpush1.msra.mxu0 %v3109
        %3383 = vmatprep.subr.mxu0 0.0
        %3384 = vmatpush1.msra.mxu0 %v3108
        %3385 = vmatprep.subr.mxu0 0.0
        %3386 = vmatpush1.msra.mxu0 %v3107
        %3387 = vmatprep.subr.mxu0 0.0
        %3388 = vmatpush1.msra.mxu0 %v3106
        %3389 = vmatprep.subr.mxu0 0.0
        %3390 = vmatpush1.msra.mxu0 %v3105
        %3391 = vmatprep.subr.mxu0 0.0
        %3392 = vmatpush1.msra.mxu0 %v3104
        %3393 = vmatprep.subr.mxu0 0.0
        %3394 = vmatpush2.msra.mxu0 0.0
        %3395 = vmatprep.subr.mxu0 0.0
        %3396 = vmatpush2.msra.mxu0 0.0
        %3397 = vmatprep.subr.mxu0 0.0
        %3398 = vmatpush2.msra.mxu0 0.0
        %3399 = vmatprep.subr.mxu0 0.0
        %3400 = vmatpush2.msra.mxu0 0.0
        %3401 = vmatprep.subr.mxu0 0.0
        %3402 = vmatpush2.msra.mxu0 0.0
        %3403 = vmatprep.subr.mxu0 0.0
        %3404 = vmatpush2.msra.mxu0 0.0
        %3405 = vmatprep.subr.mxu0 0.0
        %3406 = vmatpush2.msra.mxu0 0.0
        %3407 = vmatprep.subr.mxu0 0.0
        %3408 = vmatpush2.msra.mxu0 0.0
        %3409 = vmatprep.subr.mxu0 0.0
        %3410 = vmatpush2.msra.mxu0 0.0
        %3411 = vmatprep.subr.mxu0 0.0
        %3412 = vmatpush2.msra.mxu0 0.0
        %3413 = vmatprep.subr.mxu0 0.0
        %3414 = vmatpush2.msra.mxu0 0.0
        %3415 = vmatprep.subr.mxu0 0.0
        %3416 = vmatpush2.msra.mxu0 0.0
        %3417 = vmatprep.subr.mxu0 0.0
        %3418 = vmatpush2.msra.mxu0 0.0
        %3419 = vmatprep.subr.mxu0 0.0
        %3420 = vmatpush2.msra.mxu0 0.0
        %3421 = vmatprep.subr.mxu0 0.0
        %3422 = vmatpush2.msra.mxu0 0.0
        %3423 = vmatprep.subr.mxu0 0.0
        %3424 = vmatpush2.msra.mxu0 0.0
        %3425 = vmatprep.mubr.f32.mxu0 0.0
        %3426 = vmatmul.mubr.f32.gmra.mxu0 %v1401
        %v3427 = vpop.f32.mrf.mxu0
        %v3428 = vadd.f32 %v3203, %v3427
        %v3429 = vpop.f32.mrf.mxu0
        %3430 = vmatprep.mubr.f32.mxu0 0.0
        %3431 = vmatmul.mubr.f32.gmra.mxu0 %v1402
        %v3432 = vpop.f32.mrf.mxu0
        %v3433 = vadd.f32 %v3208, %v3432
        %v3434 = vpop.f32.mrf.mxu0
        %3435 = vmatprep.mubr.f32.mxu0 0.0
        %3436 = vmatmul.mubr.f32.gmra.mxu0 %v1403
        %v3437 = vpop.f32.mrf.mxu0
        %v3438 = vadd.f32 %v3213, %v3437
        %v3439 = vpop.f32.mrf.mxu0
        %3440 = vmatprep.mubr.f32.mxu0 0.0
        %3441 = vmatmul.mubr.f32.gmra.mxu0 %v1404
        %v3442 = vpop.f32.mrf.mxu0
        %v3443 = vadd.f32 %v3218, %v3442
        %v3444 = vpop.f32.mrf.mxu0
        %3445 = vmatprep.mubr.f32.mxu0 0.0
        %3446 = vmatmul.mubr.f32.gmra.mxu0 %v1405
        %v3447 = vpop.f32.mrf.mxu0
        %v3448 = vadd.f32 %v3223, %v3447
        %v3449 = vpop.f32.mrf.mxu0
        %3450 = vmatprep.mubr.f32.mxu0 0.0
        %3451 = vmatmul.mubr.f32.gmra.mxu0 %v1406
        %v3452 = vpop.f32.mrf.mxu0
        %v3453 = vadd.f32 %v3228, %v3452
        %v3454 = vpop.f32.mrf.mxu0
        %3455 = vmatprep.mubr.f32.mxu0 0.0
        %3456 = vmatmul.mubr.f32.gmra.mxu0 %v1407
        %v3457 = vpop.f32.mrf.mxu0
        %v3458 = vadd.f32 %v3233, %v3457
        %v3459 = vpop.f32.mrf.mxu0
        %3460 = vmatprep.mubr.f32.mxu0 0.0
        %3461 = vmatmul.mubr.f32.gmra.mxu0 %v1408
        %v3462 = vpop.f32.mrf.mxu0
        %v3463 = vadd.f32 %v3238, %v3462
        %v3464 = vpop.f32.mrf.mxu0
        %3465 = vmatprep.mubr.f32.mxu0 0.0
        %3466 = vmatmul.mubr.f32.gmra.mxu0 %v1409
        %v3467 = vpop.f32.mrf.mxu0
        %v3468 = vadd.f32 %v3243, %v3467
        %v3469 = vpop.f32.mrf.mxu0
        %3470 = vmatprep.mubr.f32.mxu0 0.0
        %3471 = vmatmul.mubr.f32.gmra.mxu0 %v1410
        %v3472 = vpop.f32.mrf.mxu0
        %v3473 = vadd.f32 %v3248, %v3472
        %v3474 = vpop.f32.mrf.mxu0
        %3475 = vmatprep.mubr.f32.mxu0 0.0
        %3476 = vmatmul.mubr.f32.gmra.mxu0 %v1411
        %v3477 = vpop.f32.mrf.mxu0
        %v3478 = vadd.f32 %v3253, %v3477
        %v3479 = vpop.f32.mrf.mxu0
        %3480 = vmatprep.mubr.f32.mxu0 0.0
        %3481 = vmatmul.mubr.f32.gmra.mxu0 %v1412
        %v3482 = vpop.f32.mrf.mxu0
        %v3483 = vadd.f32 %v3258, %v3482
        %v3484 = vpop.f32.mrf.mxu0
        %3485 = vmatprep.mubr.f32.mxu0 0.0
        %3486 = vmatmul.mubr.f32.gmra.mxu0 %v1413
        %v3487 = vpop.f32.mrf.mxu0
        %v3488 = vadd.f32 %v3263, %v3487
        %v3489 = vpop.f32.mrf.mxu0
        %3490 = vmatprep.mubr.f32.mxu0 0.0
        %3491 = vmatmul.mubr.f32.gmra.mxu0 %v1414
        %v3492 = vpop.f32.mrf.mxu0
        %v3493 = vadd.f32 %v3268, %v3492
        %v3494 = vpop.f32.mrf.mxu0
        %3495 = vmatprep.mubr.f32.mxu0 0.0
        %3496 = vmatmul.mubr.f32.gmra.mxu0 %v1415
        %v3497 = vpop.f32.mrf.mxu0
        %v3498 = vadd.f32 %v3273, %v3497
        %v3499 = vpop.f32.mrf.mxu0
        %3500 = vmatprep.mubr.f32.mxu0 0.0
        %3501 = vmatmul.mubr.f32.gmra.mxu0 %v1416
        %v3502 = vpop.f32.mrf.mxu0
        %v3503 = vadd.f32 %v3278, %v3502
        %v3504 = vpop.f32.mrf.mxu0
        %3505 = vmatprep.mubr.f32.mxu0 0.0
        %3506 = vmatmul.mubr.f32.gmra.mxu0 %v1417
        %v3507 = vpop.f32.mrf.mxu0
        %v3508 = vadd.f32 %v3283, %v3507
        %v3509 = vpop.f32.mrf.mxu0
        %3510 = vmatprep.mubr.f32.mxu0 0.0
        %3511 = vmatmul.mubr.f32.gmra.mxu0 %v1418
        %v3512 = vpop.f32.mrf.mxu0
        %v3513 = vadd.f32 %v3288, %v3512
        %v3514 = vpop.f32.mrf.mxu0
        %3515 = vmatprep.mubr.f32.mxu0 0.0
        %3516 = vmatmul.mubr.f32.gmra.mxu0 %v1419
        %v3517 = vpop.f32.mrf.mxu0
        %v3518 = vadd.f32 %v3293, %v3517
        %v3519 = vpop.f32.mrf.mxu0
        %3520 = vmatprep.mubr.f32.mxu0 0.0
        %3521 = vmatmul.mubr.f32.gmra.mxu0 %v1420
        %v3522 = vpop.f32.mrf.mxu0
        %v3523 = vadd.f32 %v3298, %v3522
        %v3524 = vpop.f32.mrf.mxu0
        %3525 = vmatprep.mubr.f32.mxu0 0.0
        %3526 = vmatmul.mubr.f32.gmra.mxu0 %v1421
        %v3527 = vpop.f32.mrf.mxu0
        %v3528 = vadd.f32 %v3303, %v3527
        %v3529 = vpop.f32.mrf.mxu0
        %3530 = vmatprep.mubr.f32.mxu0 0.0
        %3531 = vmatmul.mubr.f32.gmra.mxu0 %v1422
        %v3532 = vpop.f32.mrf.mxu0
        %v3533 = vadd.f32 %v3308, %v3532
        %v3534 = vpop.f32.mrf.mxu0
        %3535 = vmatprep.mubr.f32.mxu0 0.0
        %3536 = vmatmul.mubr.f32.gmra.mxu0 %v1423
        %v3537 = vpop.f32.mrf.mxu0
        %v3538 = vadd.f32 %v3313, %v3537
        %v3539 = vpop.f32.mrf.mxu0
        %3540 = vmatprep.mubr.f32.mxu0 0.0
        %3541 = vmatmul.mubr.f32.gmra.mxu0 %v1424
        %v3542 = vpop.f32.mrf.mxu0
        %v3543 = vadd.f32 %v3318, %v3542
        %v3544 = vpop.f32.mrf.mxu0
        %3545 = vmatprep.mubr.f32.mxu0 0.0
        %3546 = vmatmul.mubr.f32.gmra.mxu0 %v1425
        %v3547 = vpop.f32.mrf.mxu0
        %v3548 = vadd.f32 %v3323, %v3547
        %v3549 = vpop.f32.mrf.mxu0
        %3550 = vmatprep.mubr.f32.mxu0 0.0
        %3551 = vmatmul.mubr.f32.gmra.mxu0 %v1426
        %v3552 = vpop.f32.mrf.mxu0
        %v3553 = vadd.f32 %v3328, %v3552
        %v3554 = vpop.f32.mrf.mxu0
        %3555 = vmatprep.mubr.f32.mxu0 0.0
        %3556 = vmatmul.mubr.f32.gmra.mxu0 %v1427
        %v3557 = vpop.f32.mrf.mxu0
        %v3558 = vadd.f32 %v3333, %v3557
        %v3559 = vpop.f32.mrf.mxu0
        %3560 = vmatprep.mubr.f32.mxu0 0.0
        %3561 = vmatmul.mubr.f32.gmra.mxu0 %v1428
        %v3562 = vpop.f32.mrf.mxu0
        %v3563 = vadd.f32 %v3338, %v3562
        %v3564 = vpop.f32.mrf.mxu0
        %3565 = vmatprep.mubr.f32.mxu0 0.0
        %3566 = vmatmul.mubr.f32.gmra.mxu0 %v1429
        %v3567 = vpop.f32.mrf.mxu0
        %v3568 = vadd.f32 %v3343, %v3567
        %v3569 = vpop.f32.mrf.mxu0
        %3570 = vmatprep.mubr.f32.mxu0 0.0
        %3571 = vmatmul.mubr.f32.gmra.mxu0 %v1430
        %v3572 = vpop.f32.mrf.mxu0
        %v3573 = vadd.f32 %v3348, %v3572
        %v3574 = vpop.f32.mrf.mxu0
        %3575 = vmatprep.mubr.f32.mxu0 0.0
        %3576 = vmatmul.mubr.f32.gmra.mxu0 %v1431
        %v3577 = vpop.f32.mrf.mxu0
        %v3578 = vadd.f32 %v3353, %v3577
        %v3579 = vpop.f32.mrf.mxu0
        %3580 = vmatprep.mubr.f32.mxu0 0.0
        %3581 = vmatmul.mubr.f32.gmra.mxu0 %v1432
        %v3582 = vpop.f32.mrf.mxu0
        %v3583 = vadd.f32 %v3358, %v3582
        %v3584 = vpop.f32.mrf.mxu0
        %3585 = vdwg.mxu0
        %v3586 = vld [vmem:[#allocation7 + $0x400] sm:$0xff]
        %v3587 = vld [vmem:[#allocation7 + $0x408] sm:$0xff]
        %v3588 = vld [vmem:[#allocation7 + $0x410] sm:$0xff]
        %v3589 = vld [vmem:[#allocation7 + $0x418] sm:$0xff]
        %v3590 = vld [vmem:[#allocation7 + $0x420] sm:$0xff]
        %v3591 = vld [vmem:[#allocation7 + $0x428] sm:$0xff]
        %v3592 = vld [vmem:[#allocation7 + $0x430] sm:$0xff]
        %v3593 = vld [vmem:[#allocation7 + $0x438] sm:$0xff]
        %v3594 = vld [vmem:[#allocation7 + $0x440] sm:$0xff]
        %v3595 = vld [vmem:[#allocation7 + $0x448] sm:$0xff]
        %v3596 = vld [vmem:[#allocation7 + $0x450] sm:$0xff]
        %v3597 = vld [vmem:[#allocation7 + $0x458] sm:$0xff]
        %v3598 = vld [vmem:[#allocation7 + $0x460] sm:$0xff]
        %v3599 = vld [vmem:[#allocation7 + $0x468] sm:$0xff]
        %v3600 = vld [vmem:[#allocation7 + $0x470] sm:$0xff]
        %v3601 = vld [vmem:[#allocation7 + $0x478] sm:$0xff]
        %3602 = vmatprep.subr.mxu0 0.0
        %3603 = vmatpush1.msra.mxu0 %v3601
        %3604 = vmatprep.subr.mxu0 0.0
        %3605 = vmatpush1.msra.mxu0 %v3600
        %3606 = vmatprep.subr.mxu0 0.0
        %3607 = vmatpush1.msra.mxu0 %v3599
        %3608 = vmatprep.subr.mxu0 0.0
        %3609 = vmatpush1.msra.mxu0 %v3598
        %3610 = vmatprep.subr.mxu0 0.0
        %3611 = vmatpush1.msra.mxu0 %v3597
        %3612 = vmatprep.subr.mxu0 0.0
        %3613 = vmatpush1.msra.mxu0 %v3596
        %3614 = vmatprep.subr.mxu0 0.0
        %3615 = vmatpush1.msra.mxu0 %v3595
        %3616 = vmatprep.subr.mxu0 0.0
        %3617 = vmatpush1.msra.mxu0 %v3594
        %3618 = vmatprep.subr.mxu0 0.0
        %3619 = vmatpush1.msra.mxu0 %v3593
        %3620 = vmatprep.subr.mxu0 0.0
        %3621 = vmatpush1.msra.mxu0 %v3592
        %3622 = vmatprep.subr.mxu0 0.0
        %3623 = vmatpush1.msra.mxu0 %v3591
        %3624 = vmatprep.subr.mxu0 0.0
        %3625 = vmatpush1.msra.mxu0 %v3590
        %3626 = vmatprep.subr.mxu0 0.0
        %3627 = vmatpush1.msra.mxu0 %v3589
        %3628 = vmatprep.subr.mxu0 0.0
        %3629 = vmatpush1.msra.mxu0 %v3588
        %3630 = vmatprep.subr.mxu0 0.0
        %3631 = vmatpush1.msra.mxu0 %v3587
        %3632 = vmatprep.subr.mxu0 0.0
        %3633 = vmatpush1.msra.mxu0 %v3586
        %3634 = vmatprep.subr.mxu0 0.0
        %3635 = vmatpush2.msra.mxu0 0.0
        %3636 = vmatprep.subr.mxu0 0.0
        %3637 = vmatpush2.msra.mxu0 0.0
        %3638 = vmatprep.subr.mxu0 0.0
        %3639 = vmatpush2.msra.mxu0 0.0
        %3640 = vmatprep.subr.mxu0 0.0
        %3641 = vmatpush2.msra.mxu0 0.0
        %3642 = vmatprep.subr.mxu0 0.0
        %3643 = vmatpush2.msra.mxu0 0.0
        %3644 = vmatprep.subr.mxu0 0.0
        %3645 = vmatpush2.msra.mxu0 0.0
        %3646 = vmatprep.subr.mxu0 0.0
        %3647 = vmatpush2.msra.mxu0 0.0
        %3648 = vmatprep.subr.mxu0 0.0
        %3649 = vmatpush2.msra.mxu0 0.0
        %3650 = vmatprep.subr.mxu0 0.0
        %3651 = vmatpush2.msra.mxu0 0.0
        %3652 = vmatprep.subr.mxu0 0.0
        %3653 = vmatpush2.msra.mxu0 0.0
        %3654 = vmatprep.subr.mxu0 0.0
        %3655 = vmatpush2.msra.mxu0 0.0
        %3656 = vmatprep.subr.mxu0 0.0
        %3657 = vmatpush2.msra.mxu0 0.0
        %3658 = vmatprep.subr.mxu0 0.0
        %3659 = vmatpush2.msra.mxu0 0.0
        %3660 = vmatprep.subr.mxu0 0.0
        %3661 = vmatpush2.msra.mxu0 0.0
        %3662 = vmatprep.subr.mxu0 0.0
        %3663 = vmatpush2.msra.mxu0 0.0
        %3664 = vmatprep.subr.mxu0 0.0
        %3665 = vmatpush2.msra.mxu0 0.0
        %3666 = vmatprep.mubr.f32.mxu0 0.0
        %3667 = vmatmul.mubr.f32.gmra.mxu0 %v1562
        %v3668 = vpop.f32.mrf.mxu0
        %v3669 = vadd.f32 0.0, %v3668
        %v3670 = vpop.f32.mrf.mxu0
        %3671 = vmatprep.mubr.f32.mxu0 0.0
        %3672 = vmatmul.mubr.f32.gmra.mxu0 %v1563
        %v3673 = vpop.f32.mrf.mxu0
        %v3674 = vadd.f32 0.0, %v3673
        %v3675 = vpop.f32.mrf.mxu0
        %3676 = vmatprep.mubr.f32.mxu0 0.0
        %3677 = vmatmul.mubr.f32.gmra.mxu0 %v1564
        %v3678 = vpop.f32.mrf.mxu0
        %v3679 = vadd.f32 0.0, %v3678
        %v3680 = vpop.f32.mrf.mxu0
        %3681 = vmatprep.mubr.f32.mxu0 0.0
        %3682 = vmatmul.mubr.f32.gmra.mxu0 %v1565
        %v3683 = vpop.f32.mrf.mxu0
        %v3684 = vadd.f32 0.0, %v3683
        %v3685 = vpop.f32.mrf.mxu0
        %3686 = vmatprep.mubr.f32.mxu0 0.0
        %3687 = vmatmul.mubr.f32.gmra.mxu0 %v1566
        %v3688 = vpop.f32.mrf.mxu0
        %v3689 = vadd.f32 0.0, %v3688
        %v3690 = vpop.f32.mrf.mxu0
        %3691 = vmatprep.mubr.f32.mxu0 0.0
        %3692 = vmatmul.mubr.f32.gmra.mxu0 %v1567
        %v3693 = vpop.f32.mrf.mxu0
        %v3694 = vadd.f32 0.0, %v3693
        %v3695 = vpop.f32.mrf.mxu0
        %3696 = vmatprep.mubr.f32.mxu0 0.0
        %3697 = vmatmul.mubr.f32.gmra.mxu0 %v1568
        %v3698 = vpop.f32.mrf.mxu0
        %v3699 = vadd.f32 0.0, %v3698
        %v3700 = vpop.f32.mrf.mxu0
        %3701 = vmatprep.mubr.f32.mxu0 0.0
        %3702 = vmatmul.mubr.f32.gmra.mxu0 %v1569
        %v3703 = vpop.f32.mrf.mxu0
        %v3704 = vadd.f32 0.0, %v3703
        %v3705 = vpop.f32.mrf.mxu0
        %3706 = vmatprep.mubr.f32.mxu0 0.0
        %3707 = vmatmul.mubr.f32.gmra.mxu0 %v1570
        %v3708 = vpop.f32.mrf.mxu0
        %v3709 = vadd.f32 0.0, %v3708
        %v3710 = vpop.f32.mrf.mxu0
        %3711 = vmatprep.mubr.f32.mxu0 0.0
        %3712 = vmatmul.mubr.f32.gmra.mxu0 %v1571
        %v3713 = vpop.f32.mrf.mxu0
        %v3714 = vadd.f32 0.0, %v3713
        %v3715 = vpop.f32.mrf.mxu0
        %3716 = vmatprep.mubr.f32.mxu0 0.0
        %3717 = vmatmul.mubr.f32.gmra.mxu0 %v1572
        %v3718 = vpop.f32.mrf.mxu0
        %v3719 = vadd.f32 0.0, %v3718
        %v3720 = vpop.f32.mrf.mxu0
        %3721 = vmatprep.mubr.f32.mxu0 0.0
        %3722 = vmatmul.mubr.f32.gmra.mxu0 %v1573
        %v3723 = vpop.f32.mrf.mxu0
        %v3724 = vadd.f32 0.0, %v3723
        %v3725 = vpop.f32.mrf.mxu0
        %3726 = vmatprep.mubr.f32.mxu0 0.0
        %3727 = vmatmul.mubr.f32.gmra.mxu0 %v1574
        %v3728 = vpop.f32.mrf.mxu0
        %v3729 = vadd.f32 0.0, %v3728
        %v3730 = vpop.f32.mrf.mxu0
        %3731 = vmatprep.mubr.f32.mxu0 0.0
        %3732 = vmatmul.mubr.f32.gmra.mxu0 %v1575
        %v3733 = vpop.f32.mrf.mxu0
        %v3734 = vadd.f32 0.0, %v3733
        %v3735 = vpop.f32.mrf.mxu0
        %3736 = vmatprep.mubr.f32.mxu0 0.0
        %3737 = vmatmul.mubr.f32.gmra.mxu0 %v1576
        %v3738 = vpop.f32.mrf.mxu0
        %v3739 = vadd.f32 0.0, %v3738
        %v3740 = vpop.f32.mrf.mxu0
        %3741 = vmatprep.mubr.f32.mxu0 0.0
        %3742 = vmatmul.mubr.f32.gmra.mxu0 %v1577
        %v3743 = vpop.f32.mrf.mxu0
        %v3744 = vadd.f32 0.0, %v3743
        %v3745 = vpop.f32.mrf.mxu0
        %3746 = vmatprep.mubr.f32.mxu0 0.0
        %3747 = vmatmul.mubr.f32.gmra.mxu0 %v1578
        %v3748 = vpop.f32.mrf.mxu0
        %v3749 = vadd.f32 0.0, %v3748
        %v3750 = vpop.f32.mrf.mxu0
        %3751 = vmatprep.mubr.f32.mxu0 0.0
        %3752 = vmatmul.mubr.f32.gmra.mxu0 %v1579
        %v3753 = vpop.f32.mrf.mxu0
        %v3754 = vadd.f32 0.0, %v3753
        %v3755 = vpop.f32.mrf.mxu0
        %3756 = vmatprep.mubr.f32.mxu0 0.0
        %3757 = vmatmul.mubr.f32.gmra.mxu0 %v1580
        %v3758 = vpop.f32.mrf.mxu0
        %v3759 = vadd.f32 0.0, %v3758
        %v3760 = vpop.f32.mrf.mxu0
        %3761 = vmatprep.mubr.f32.mxu0 0.0
        %3762 = vmatmul.mubr.f32.gmra.mxu0 %v1581
        %v3763 = vpop.f32.mrf.mxu0
        %v3764 = vadd.f32 0.0, %v3763
        %v3765 = vpop.f32.mrf.mxu0
        %3766 = vmatprep.mubr.f32.mxu0 0.0
        %3767 = vmatmul.mubr.f32.gmra.mxu0 %v1582
        %v3768 = vpop.f32.mrf.mxu0
        %v3769 = vadd.f32 0.0, %v3768
        %v3770 = vpop.f32.mrf.mxu0
        %3771 = vmatprep.mubr.f32.mxu0 0.0
        %3772 = vmatmul.mubr.f32.gmra.mxu0 %v1583
        %v3773 = vpop.f32.mrf.mxu0
        %v3774 = vadd.f32 0.0, %v3773
        %v3775 = vpop.f32.mrf.mxu0
        %3776 = vmatprep.mubr.f32.mxu0 0.0
        %3777 = vmatmul.mubr.f32.gmra.mxu0 %v1584
        %v3778 = vpop.f32.mrf.mxu0
        %v3779 = vadd.f32 0.0, %v3778
        %v3780 = vpop.f32.mrf.mxu0
        %3781 = vmatprep.mubr.f32.mxu0 0.0
        %3782 = vmatmul.mubr.f32.gmra.mxu0 %v1585
        %v3783 = vpop.f32.mrf.mxu0
        %v3784 = vadd.f32 0.0, %v3783
        %v3785 = vpop.f32.mrf.mxu0
        %3786 = vmatprep.mubr.f32.mxu0 0.0
        %3787 = vmatmul.mubr.f32.gmra.mxu0 %v1586
        %v3788 = vpop.f32.mrf.mxu0
        %v3789 = vadd.f32 0.0, %v3788
        %v3790 = vpop.f32.mrf.mxu0
        %3791 = vmatprep.mubr.f32.mxu0 0.0
        %3792 = vmatmul.mubr.f32.gmra.mxu0 %v1587
        %v3793 = vpop.f32.mrf.mxu0
        %v3794 = vadd.f32 0.0, %v3793
        %v3795 = vpop.f32.mrf.mxu0
        %3796 = vmatprep.mubr.f32.mxu0 0.0
        %3797 = vmatmul.mubr.f32.gmra.mxu0 %v1588
        %v3798 = vpop.f32.mrf.mxu0
        %v3799 = vadd.f32 0.0, %v3798
        %v3800 = vpop.f32.mrf.mxu0
        %3801 = vmatprep.mubr.f32.mxu0 0.0
        %3802 = vmatmul.mubr.f32.gmra.mxu0 %v1589
        %v3803 = vpop.f32.mrf.mxu0
        %v3804 = vadd.f32 0.0, %v3803
        %v3805 = vpop.f32.mrf.mxu0
        %3806 = vmatprep.mubr.f32.mxu0 0.0
        %3807 = vmatmul.mubr.f32.gmra.mxu0 %v1590
        %v3808 = vpop.f32.mrf.mxu0
        %v3809 = vadd.f32 0.0, %v3808
        %v3810 = vpop.f32.mrf.mxu0
        %3811 = vmatprep.mubr.f32.mxu0 0.0
        %3812 = vmatmul.mubr.f32.gmra.mxu0 %v1591
        %v3813 = vpop.f32.mrf.mxu0
        %v3814 = vadd.f32 0.0, %v3813
        %v3815 = vpop.f32.mrf.mxu0
        %3816 = vmatprep.mubr.f32.mxu0 0.0
        %3817 = vmatmul.mubr.f32.gmra.mxu0 %v1592
        %v3818 = vpop.f32.mrf.mxu0
        %v3819 = vadd.f32 0.0, %v3818
        %v3820 = vpop.f32.mrf.mxu0
        %3821 = vmatprep.mubr.f32.mxu0 0.0
        %3822 = vmatmul.mubr.f32.gmra.mxu0 %v1593
        %v3823 = vpop.f32.mrf.mxu0
        %v3824 = vadd.f32 0.0, %v3823
        %v3825 = vpop.f32.mrf.mxu0
        %3826 = vdwg.mxu0
        %v3827 = vadd.f32 %v3428, %v3669
        %v3828 = vadd.f32 %v3433, %v3674
        %v3829 = vadd.f32 %v3438, %v3679
        %v3830 = vadd.f32 %v3443, %v3684
        %v3831 = vadd.f32 %v3448, %v3689
        %v3832 = vadd.f32 %v3453, %v3694
        %v3833 = vadd.f32 %v3458, %v3699
        %v3834 = vadd.f32 %v3463, %v3704
        %v3835 = vadd.f32 %v3468, %v3709
        %v3836 = vadd.f32 %v3473, %v3714
        %v3837 = vadd.f32 %v3478, %v3719
        %v3838 = vadd.f32 %v3483, %v3724
        %v3839 = vadd.f32 %v3488, %v3729
        %v3840 = vadd.f32 %v3493, %v3734
        %v3841 = vadd.f32 %v3498, %v3739
        %v3842 = vadd.f32 %v3503, %v3744
        %v3843 = vadd.f32 %v3508, %v3749
        %v3844 = vadd.f32 %v3513, %v3754
        %v3845 = vadd.f32 %v3518, %v3759
        %v3846 = vadd.f32 %v3523, %v3764
        %v3847 = vadd.f32 %v3528, %v3769
        %v3848 = vadd.f32 %v3533, %v3774
        %v3849 = vadd.f32 %v3538, %v3779
        %v3850 = vadd.f32 %v3543, %v3784
        %v3851 = vadd.f32 %v3548, %v3789
        %v3852 = vadd.f32 %v3553, %v3794
        %v3853 = vadd.f32 %v3558, %v3799
        %v3854 = vadd.f32 %v3563, %v3804
        %v3855 = vadd.f32 %v3568, %v3809
        %v3856 = vadd.f32 %v3573, %v3814
        %v3857 = vadd.f32 %v3578, %v3819
        %v3858 = vadd.f32 %v3583, %v3824
        %v3859 = vsel %vm888, 1, 0
        %v3860 = vsel %vm889, 1, 0
        %v3861 = vsel %vm890, 1, 0
        %v3862 = vsel %vm891, 1, 0
        %v3863 = vsel %vm892, 1, 0
        %v3864 = vsel %vm893, 1, 0
        %v3865 = vsel %vm894, 1, 0
        %v3866 = vsel %vm895, 1, 0
        %v3867 = vsel %vm896, 1, 0
        %v3868 = vsel %vm897, 1, 0
        %v3869 = vsel %vm898, 1, 0
        %v3870 = vsel %vm899, 1, 0
        %v3871 = vsel %vm900, 1, 0
        %v3872 = vsel %vm901, 1, 0
        %v3873 = vsel %vm902, 1, 0
        %v3874 = vsel %vm903, 1, 0
        %v3875 = vsel %vm904, 1, 0
        %v3876 = vsel %vm905, 1, 0
        %v3877 = vsel %vm906, 1, 0
        %v3878 = vsel %vm907, 1, 0
        %v3879 = vsel %vm908, 1, 0
        %v3880 = vsel %vm909, 1, 0
        %v3881 = vsel %vm910, 1, 0
        %v3882 = vsel %vm911, 1, 0
        %v3883 = vsel %vm912, 1, 0
        %v3884 = vsel %vm913, 1, 0
        %v3885 = vsel %vm914, 1, 0
        %v3886 = vsel %vm915, 1, 0
        %v3887 = vsel %vm916, 1, 0
        %v3888 = vsel %vm917, 1, 0
        %v3889 = vsel %vm918, 1, 0
        %v3890 = vsel %vm919, 1, 0
        %vm3891 = vcmp.eq.s32.totalorder %v3859, 1
        %vm3892 = vcmp.eq.s32.totalorder %v3860, 1
        %vm3893 = vcmp.eq.s32.totalorder %v3861, 1
        %vm3894 = vcmp.eq.s32.totalorder %v3862, 1
        %vm3895 = vcmp.eq.s32.totalorder %v3863, 1
        %vm3896 = vcmp.eq.s32.totalorder %v3864, 1
        %vm3897 = vcmp.eq.s32.totalorder %v3865, 1
        %vm3898 = vcmp.eq.s32.totalorder %v3866, 1
        %vm3899 = vcmp.eq.s32.totalorder %v3867, 1
        %vm3900 = vcmp.eq.s32.totalorder %v3868, 1
        %vm3901 = vcmp.eq.s32.totalorder %v3869, 1
        %vm3902 = vcmp.eq.s32.totalorder %v3870, 1
        %vm3903 = vcmp.eq.s32.totalorder %v3871, 1
        %vm3904 = vcmp.eq.s32.totalorder %v3872, 1
        %vm3905 = vcmp.eq.s32.totalorder %v3873, 1
        %vm3906 = vcmp.eq.s32.totalorder %v3874, 1
        %vm3907 = vcmp.eq.s32.totalorder %v3875, 1
        %vm3908 = vcmp.eq.s32.totalorder %v3876, 1
        %vm3909 = vcmp.eq.s32.totalorder %v3877, 1
        %vm3910 = vcmp.eq.s32.totalorder %v3878, 1
        %vm3911 = vcmp.eq.s32.totalorder %v3879, 1
        %vm3912 = vcmp.eq.s32.totalorder %v3880, 1
        %vm3913 = vcmp.eq.s32.totalorder %v3881, 1
        %vm3914 = vcmp.eq.s32.totalorder %v3882, 1
        %vm3915 = vcmp.eq.s32.totalorder %v3883, 1
        %vm3916 = vcmp.eq.s32.totalorder %v3884, 1
        %vm3917 = vcmp.eq.s32.totalorder %v3885, 1
        %vm3918 = vcmp.eq.s32.totalorder %v3886, 1
        %vm3919 = vcmp.eq.s32.totalorder %v3887, 1
        %vm3920 = vcmp.eq.s32.totalorder %v3888, 1
        %vm3921 = vcmp.eq.s32.totalorder %v3889, 1
        %vm3922 = vcmp.eq.s32.totalorder %v3890, 1
        %v3923 = vsel %vm3891, 0.0, %v2347
        %v3924 = vsel %vm3892, 0.0, %v2348
        %v3925 = vsel %vm3893, 0.0, %v2317
        %v3926 = vsel %vm3894, 0.0, %v2318
        %v3927 = vsel %vm3895, 0.0, %v2319
        %v3928 = vsel %vm3896, 0.0, %v2320
        %v3929 = vsel %vm3897, 0.0, %v2321
        %v3930 = vsel %vm3898, 0.0, %v2322
        %v3931 = vsel %vm3899, 0.0, %v2323
        %v3932 = vsel %vm3900, 0.0, %v2324
        %v3933 = vsel %vm3901, 0.0, %v2325
        %v3934 = vsel %vm3902, 0.0, %v2326
        %v3935 = vsel %vm3903, 0.0, %v2327
        %v3936 = vsel %vm3904, 0.0, %v2328
        %v3937 = vsel %vm3905, 0.0, %v2329
        %v3938 = vsel %vm3906, 0.0, %v2330
        %v3939 = vsel %vm3907, 0.0, %v2331
        %v3940 = vsel %vm3908, 0.0, %v2332
        %v3941 = vsel %vm3909, 0.0, %v2333
        %v3942 = vsel %vm3910, 0.0, %v2334
        %v3943 = vsel %vm3911, 0.0, %v2335
        %v3944 = vsel %vm3912, 0.0, %v2336
        %v3945 = vsel %vm3913, 0.0, %v2337
        %v3946 = vsel %vm3914, 0.0, %v2338
        %v3947 = vsel %vm3915, 0.0, %v2339
        %v3948 = vsel %vm3916, 0.0, %v2340
        %v3949 = vsel %vm3917, 0.0, %v2341
        %v3950 = vsel %vm3918, 0.0, %v2342
        %v3951 = vsel %vm3919, 0.0, %v2343
        %v3952 = vsel %vm3920, 0.0, %v2344
        %v3953 = vsel %vm3921, 0.0, %v2345
        %v3954 = vsel %vm3922, 0.0, %v2346
        %v3955 = vadd.f32 %v3072, %v3923
        %v3956 = vadd.f32 %v3073, %v3924
        %v3957 = vadd.f32 %v3074, %v3925
        %v3958 = vadd.f32 %v3075, %v3926
        %v3959 = vadd.f32 %v3076, %v3927
        %v3960 = vadd.f32 %v3077, %v3928
        %v3961 = vadd.f32 %v3078, %v3929
        %v3962 = vadd.f32 %v3079, %v3930
        %v3963 = vadd.f32 %v3080, %v3931
        %v3964 = vadd.f32 %v3081, %v3932
        %v3965 = vadd.f32 %v3082, %v3933
        %v3966 = vadd.f32 %v3083, %v3934
        %v3967 = vadd.f32 %v3084, %v3935
        %v3968 = vadd.f32 %v3085, %v3936
        %v3969 = vadd.f32 %v3086, %v3937
        %v3970 = vadd.f32 %v3087, %v3938
        %v3971 = vadd.f32 %v3088, %v3939
        %v3972 = vadd.f32 %v3089, %v3940
        %v3973 = vadd.f32 %v3090, %v3941
        %v3974 = vadd.f32 %v3091, %v3942
        %v3975 = vadd.f32 %v3092, %v3943
        %v3976 = vadd.f32 %v3093, %v3944
        %v3977 = vadd.f32 %v3094, %v3945
        %v3978 = vadd.f32 %v3095, %v3946
        %v3979 = vadd.f32 %v3096, %v3947
        %v3980 = vadd.f32 %v3097, %v3948
        %v3981 = vadd.f32 %v3098, %v3949
        %v3982 = vadd.f32 %v3099, %v3950
        %v3983 = vadd.f32 %v3100, %v3951
        %v3984 = vadd.f32 %v3101, %v3952
        %v3985 = vadd.f32 %v3102, %v3953
        %v3986 = vadd.f32 %v3103, %v3954
        %v3987 = vsel %vm920, 1, 0
        %v3988 = vsel %vm921, 1, 0
        %v3989 = vsel %vm922, 1, 0
        %v3990 = vsel %vm923, 1, 0
        %v3991 = vsel %vm924, 1, 0
        %v3992 = vsel %vm925, 1, 0
        %v3993 = vsel %vm926, 1, 0
        %v3994 = vsel %vm927, 1, 0
        %v3995 = vsel %vm928, 1, 0
        %v3996 = vsel %vm929, 1, 0
        %v3997 = vsel %vm930, 1, 0
        %v3998 = vsel %vm931, 1, 0
        %v3999 = vsel %vm932, 1, 0
        %v4000 = vsel %vm933, 1, 0
        %v4001 = vsel %vm934, 1, 0
        %v4002 = vsel %vm935, 1, 0
        %v4003 = vsel %vm936, 1, 0
        %v4004 = vsel %vm937, 1, 0
        %v4005 = vsel %vm938, 1, 0
        %v4006 = vsel %vm939, 1, 0
        %v4007 = vsel %vm940, 1, 0
        %v4008 = vsel %vm941, 1, 0
        %v4009 = vsel %vm942, 1, 0
        %v4010 = vsel %vm943, 1, 0
        %v4011 = vsel %vm944, 1, 0
        %v4012 = vsel %vm945, 1, 0
        %v4013 = vsel %vm946, 1, 0
        %v4014 = vsel %vm947, 1, 0
        %v4015 = vsel %vm948, 1, 0
        %v4016 = vsel %vm949, 1, 0
        %v4017 = vsel %vm950, 1, 0
        %v4018 = vsel %vm951, 1, 0
        %vm4019 = vcmp.eq.s32.totalorder %v3987, 1
        %vm4020 = vcmp.eq.s32.totalorder %v3988, 1
        %vm4021 = vcmp.eq.s32.totalorder %v3989, 1
        %vm4022 = vcmp.eq.s32.totalorder %v3990, 1
        %vm4023 = vcmp.eq.s32.totalorder %v3991, 1
        %vm4024 = vcmp.eq.s32.totalorder %v3992, 1
        %vm4025 = vcmp.eq.s32.totalorder %v3993, 1
        %vm4026 = vcmp.eq.s32.totalorder %v3994, 1
        %vm4027 = vcmp.eq.s32.totalorder %v3995, 1
        %vm4028 = vcmp.eq.s32.totalorder %v3996, 1
        %vm4029 = vcmp.eq.s32.totalorder %v3997, 1
        %vm4030 = vcmp.eq.s32.totalorder %v3998, 1
        %vm4031 = vcmp.eq.s32.totalorder %v3999, 1
        %vm4032 = vcmp.eq.s32.totalorder %v4000, 1
        %vm4033 = vcmp.eq.s32.totalorder %v4001, 1
        %vm4034 = vcmp.eq.s32.totalorder %v4002, 1
        %vm4035 = vcmp.eq.s32.totalorder %v4003, 1
        %vm4036 = vcmp.eq.s32.totalorder %v4004, 1
        %vm4037 = vcmp.eq.s32.totalorder %v4005, 1
        %vm4038 = vcmp.eq.s32.totalorder %v4006, 1
        %vm4039 = vcmp.eq.s32.totalorder %v4007, 1
        %vm4040 = vcmp.eq.s32.totalorder %v4008, 1
        %vm4041 = vcmp.eq.s32.totalorder %v4009, 1
        %vm4042 = vcmp.eq.s32.totalorder %v4010, 1
        %vm4043 = vcmp.eq.s32.totalorder %v4011, 1
        %vm4044 = vcmp.eq.s32.totalorder %v4012, 1
        %vm4045 = vcmp.eq.s32.totalorder %v4013, 1
        %vm4046 = vcmp.eq.s32.totalorder %v4014, 1
        %vm4047 = vcmp.eq.s32.totalorder %v4015, 1
        %vm4048 = vcmp.eq.s32.totalorder %v4016, 1
        %vm4049 = vcmp.eq.s32.totalorder %v4017, 1
        %vm4050 = vcmp.eq.s32.totalorder %v4018, 1
        %v4051 = vsel %vm4019, 0.0, %v3829
        %v4052 = vsel %vm4020, 0.0, %v3830
        %v4053 = vsel %vm4021, 0.0, %v3831
        %v4054 = vsel %vm4022, 0.0, %v3832
        %v4055 = vsel %vm4023, 0.0, %v3833
        %v4056 = vsel %vm4024, 0.0, %v3834
        %v4057 = vsel %vm4025, 0.0, %v3835
        %v4058 = vsel %vm4026, 0.0, %v3836
        %v4059 = vsel %vm4027, 0.0, %v3837
        %v4060 = vsel %vm4028, 0.0, %v3838
        %v4061 = vsel %vm4029, 0.0, %v3839
        %v4062 = vsel %vm4030, 0.0, %v3840
        %v4063 = vsel %vm4031, 0.0, %v3841
        %v4064 = vsel %vm4032, 0.0, %v3842
        %v4065 = vsel %vm4033, 0.0, %v3843
        %v4066 = vsel %vm4034, 0.0, %v3844
        %v4067 = vsel %vm4035, 0.0, %v3845
        %v4068 = vsel %vm4036, 0.0, %v3846
        %v4069 = vsel %vm4037, 0.0, %v3847
        %v4070 = vsel %vm4038, 0.0, %v3848
        %v4071 = vsel %vm4039, 0.0, %v3849
        %v4072 = vsel %vm4040, 0.0, %v3850
        %v4073 = vsel %vm4041, 0.0, %v3851
        %v4074 = vsel %vm4042, 0.0, %v3852
        %v4075 = vsel %vm4043, 0.0, %v3853
        %v4076 = vsel %vm4044, 0.0, %v3854
        %v4077 = vsel %vm4045, 0.0, %v3855
        %v4078 = vsel %vm4046, 0.0, %v3856
        %v4079 = vsel %vm4047, 0.0, %v3857
        %v4080 = vsel %vm4048, 0.0, %v3858
        %v4081 = vsel %vm4049, 0.0, %v3827
        %v4082 = vsel %vm4050, 0.0, %v3828
        %v4083 = vadd.f32 %v3955, %v4051
        %v4084 = vadd.f32 %v3956, %v4052
        %v4085 = vadd.f32 %v3957, %v4053
        %v4086 = vadd.f32 %v3958, %v4054
        %v4087 = vadd.f32 %v3959, %v4055
        %v4088 = vadd.f32 %v3960, %v4056
        %v4089 = vadd.f32 %v3961, %v4057
        %v4090 = vadd.f32 %v3962, %v4058
        %v4091 = vadd.f32 %v3963, %v4059
        %v4092 = vadd.f32 %v3964, %v4060
        %v4093 = vadd.f32 %v3965, %v4061
        %v4094 = vadd.f32 %v3966, %v4062
        %v4095 = vadd.f32 %v3967, %v4063
        %v4096 = vadd.f32 %v3968, %v4064
        %v4097 = vadd.f32 %v3969, %v4065
        %v4098 = vadd.f32 %v3970, %v4066
        %v4099 = vadd.f32 %v3971, %v4067
        %v4100 = vadd.f32 %v3972, %v4068
        %v4101 = vadd.f32 %v3973, %v4069
        %v4102 = vadd.f32 %v3974, %v4070
        %v4103 = vadd.f32 %v3975, %v4071
        %v4104 = vadd.f32 %v3976, %v4072
        %v4105 = vadd.f32 %v3977, %v4073
        %v4106 = vadd.f32 %v3978, %v4074
        %v4107 = vadd.f32 %v3979, %v4075
        %v4108 = vadd.f32 %v3980, %v4076
        %v4109 = vadd.f32 %v3981, %v4077
        %v4110 = vadd.f32 %v3982, %v4078
        %v4111 = vadd.f32 %v3983, %v4079
        %v4112 = vadd.f32 %v3984, %v4080
        %v4113 = vadd.f32 %v3985, %v4081
        %v4114 = vadd.f32 %v3986, %v4082
        %v4115 = vld [vmem:[%s3] sm:$0x1]
        %v4117 = vlaneseq
        %v4118 = vshrl.u32 %v4117, 7
        %v4119 = vsub.s32 0, %v4118
        %v4120 = vrot.slane %v4115, %v4119
        %v4122 = vadd.f32 %v4083, %v4120
        %v4123 = vadd.f32 %v4084, %v4120
        %v4124 = vadd.f32 %v4085, %v4120
        %v4125 = vadd.f32 %v4086, %v4120
        %v4126 = vadd.f32 %v4087, %v4120
        %v4127 = vadd.f32 %v4088, %v4120
        %v4128 = vadd.f32 %v4089, %v4120
        %v4129 = vadd.f32 %v4090, %v4120
        %v4130 = vadd.f32 %v4091, %v4120
        %v4131 = vadd.f32 %v4092, %v4120
        %v4132 = vadd.f32 %v4093, %v4120
        %v4133 = vadd.f32 %v4094, %v4120
        %v4134 = vadd.f32 %v4095, %v4120
        %v4135 = vadd.f32 %v4096, %v4120
        %v4136 = vadd.f32 %v4097, %v4120
        %v4137 = vadd.f32 %v4098, %v4120
        %v4138 = vadd.f32 %v4099, %v4120
        %v4139 = vadd.f32 %v4100, %v4120
        %v4140 = vadd.f32 %v4101, %v4120
        %v4141 = vadd.f32 %v4102, %v4120
        %v4142 = vadd.f32 %v4103, %v4120
        %v4143 = vadd.f32 %v4104, %v4120
        %v4144 = vadd.f32 %v4105, %v4120
        %v4145 = vadd.f32 %v4106, %v4120
        %v4146 = vadd.f32 %v4107, %v4120
        %v4147 = vadd.f32 %v4108, %v4120
        %v4148 = vadd.f32 %v4109, %v4120
        %v4149 = vadd.f32 %v4110, %v4120
        %v4150 = vadd.f32 %v4111, %v4120
        %v4151 = vadd.f32 %v4112, %v4120
        %v4152 = vadd.f32 %v4113, %v4120
        %v4153 = vadd.f32 %v4114, %v4120
        %v4154 = vmax.f32 %v4122, 0.0
        %v4155 = vmax.f32 %v4123, 0.0
        %v4156 = vmax.f32 %v4124, 0.0
        %v4157 = vmax.f32 %v4125, 0.0
        %v4158 = vmax.f32 %v4126, 0.0
        %v4159 = vmax.f32 %v4127, 0.0
        %v4160 = vmax.f32 %v4128, 0.0
        %v4161 = vmax.f32 %v4129, 0.0
        %v4162 = vmax.f32 %v4130, 0.0
        %v4163 = vmax.f32 %v4131, 0.0
        %v4164 = vmax.f32 %v4132, 0.0
        %v4165 = vmax.f32 %v4133, 0.0
        %v4166 = vmax.f32 %v4134, 0.0
        %v4167 = vmax.f32 %v4135, 0.0
        %v4168 = vmax.f32 %v4136, 0.0
        %v4169 = vmax.f32 %v4137, 0.0
        %v4170 = vmax.f32 %v4138, 0.0
        %v4171 = vmax.f32 %v4139, 0.0
        %v4172 = vmax.f32 %v4140, 0.0
        %v4173 = vmax.f32 %v4141, 0.0
        %v4174 = vmax.f32 %v4142, 0.0
        %v4175 = vmax.f32 %v4143, 0.0
        %v4176 = vmax.f32 %v4144, 0.0
        %v4177 = vmax.f32 %v4145, 0.0
        %v4178 = vmax.f32 %v4146, 0.0
        %v4179 = vmax.f32 %v4147, 0.0
        %v4180 = vmax.f32 %v4148, 0.0
        %v4181 = vmax.f32 %v4149, 0.0
        %v4182 = vmax.f32 %v4150, 0.0
        %v4183 = vmax.f32 %v4151, 0.0
        %v4184 = vmax.f32 %v4152, 0.0
        %v4185 = vmax.f32 %v4153, 0.0
        %v4186 = vrot.slane %v4154, 7
        %v4187 = vrot.slane %v4155, 7
        %v4188 = vrot.slane %v4156, 7
        %v4189 = vrot.slane %v4157, 7
        %v4190 = vrot.slane %v4158, 7
        %v4191 = vrot.slane %v4159, 7
        %v4192 = vrot.slane %v4160, 7
        %v4193 = vrot.slane %v4161, 7
        %v4194 = vrot.slane %v4162, 7
        %v4195 = vrot.slane %v4163, 7
        %v4196 = vrot.slane %v4164, 7
        %v4197 = vrot.slane %v4165, 7
        %v4198 = vrot.slane %v4166, 7
        %v4199 = vrot.slane %v4167, 7
        %v4200 = vrot.slane %v4168, 7
        %v4201 = vrot.slane %v4169, 7
        %v4202 = vrot.slane %v4170, 7
        %v4203 = vrot.slane %v4171, 7
        %v4204 = vrot.slane %v4172, 7
        %v4205 = vrot.slane %v4173, 7
        %v4206 = vrot.slane %v4174, 7
        %v4207 = vrot.slane %v4175, 7
        %v4208 = vrot.slane %v4176, 7
        %v4209 = vrot.slane %v4177, 7
        %v4210 = vrot.slane %v4178, 7
        %v4211 = vrot.slane %v4179, 7
        %v4212 = vrot.slane %v4180, 7
        %v4213 = vrot.slane %v4181, 7
        %v4214 = vrot.slane %v4182, 7
        %v4215 = vrot.slane %v4183, 7
        %v4216 = vrot.slane %v4184, 7
        %v4217 = vrot.slane %v4185, 7
        %v4218 = vsel %vm1304, %v4216, %v4217
        %v4219 = vsel %vm1304, %v4215, %v4216
        %v4220 = vsel %vm1304, %v4214, %v4215
        %v4221 = vsel %vm1304, %v4213, %v4214
        %v4222 = vsel %vm1304, %v4212, %v4213
        %v4223 = vsel %vm1304, %v4211, %v4212
        %v4224 = vsel %vm1304, %v4210, %v4211
        %v4225 = vsel %vm1304, %v4209, %v4210
        %v4226 = vsel %vm1304, %v4208, %v4209
        %v4227 = vsel %vm1304, %v4207, %v4208
        %v4228 = vsel %vm1304, %v4206, %v4207
        %v4229 = vsel %vm1304, %v4205, %v4206
        %v4230 = vsel %vm1304, %v4204, %v4205
        %v4231 = vsel %vm1304, %v4203, %v4204
        %v4232 = vsel %vm1304, %v4202, %v4203
        %v4233 = vsel %vm1304, %v4201, %v4202
        %v4234 = vsel %vm1304, %v4200, %v4201
        %v4235 = vsel %vm1304, %v4199, %v4200
        %v4236 = vsel %vm1304, %v4198, %v4199
        %v4237 = vsel %vm1304, %v4197, %v4198
        %v4238 = vsel %vm1304, %v4196, %v4197
        %v4239 = vsel %vm1304, %v4195, %v4196
        %v4240 = vsel %vm1304, %v4194, %v4195
        %v4241 = vsel %vm1304, %v4193, %v4194
        %v4242 = vsel %vm1304, %v4192, %v4193
        %v4243 = vsel %vm1304, %v4191, %v4192
        %v4244 = vsel %vm1304, %v4190, %v4191
        %v4245 = vsel %vm1304, %v4189, %v4190
        %v4246 = vsel %vm1304, %v4188, %v4189
        %v4247 = vsel %vm1304, %v4187, %v4188
        %v4248 = vsel %vm1304, %v4186, %v4187
        %v4249 = vsel %vm1304, %v4217, %v4186
        %v4250 = vsel %vm1369, 0.0, %v4249
        %v4251 = vsel %vm1370, 0.0, %v4248
        %v4252 = vsel %vm1371, 0.0, %v4247
        %v4253 = vsel %vm1372, 0.0, %v4246
        %v4254 = vsel %vm1373, 0.0, %v4245
        %v4255 = vsel %vm1374, 0.0, %v4244
        %v4256 = vsel %vm1375, 0.0, %v4243
        %v4257 = vsel %vm1376, 0.0, %v4242
        %v4258 = vsel %vm1377, 0.0, %v4241
        %v4259 = vsel %vm1378, 0.0, %v4240
        %v4260 = vsel %vm1379, 0.0, %v4239
        %v4261 = vsel %vm1380, 0.0, %v4238
        %v4262 = vsel %vm1381, 0.0, %v4237
        %v4263 = vsel %vm1382, 0.0, %v4236
        %v4264 = vsel %vm1383, 0.0, %v4235
        %v4265 = vsel %vm1384, 0.0, %v4234
        %v4266 = vsel %vm1385, 0.0, %v4233
        %v4267 = vsel %vm1386, 0.0, %v4232
        %v4268 = vsel %vm1387, 0.0, %v4231
        %v4269 = vsel %vm1388, 0.0, %v4230
        %v4270 = vsel %vm1389, 0.0, %v4229
        %v4271 = vsel %vm1390, 0.0, %v4228
        %v4272 = vsel %vm1391, 0.0, %v4227
        %v4273 = vsel %vm1392, 0.0, %v4226
        %v4274 = vsel %vm1393, 0.0, %v4225
        %v4275 = vsel %vm1394, 0.0, %v4224
        %v4276 = vsel %vm1395, 0.0, %v4223
        %v4277 = vsel %vm1396, 0.0, %v4222
        %v4278 = vsel %vm1397, 0.0, %v4221
        %v4279 = vsel %vm1398, 0.0, %v4220
        %v4280 = vsel %vm1399, 0.0, %v4219
        %v4281 = vsel %vm1400, 0.0, %v4218
        %v4282 = vrot.slane %v4154, 1
        %v4283 = vrot.slane %v4155, 1
        %v4284 = vrot.slane %v4156, 1
        %v4285 = vrot.slane %v4157, 1
        %v4286 = vrot.slane %v4158, 1
        %v4287 = vrot.slane %v4159, 1
        %v4288 = vrot.slane %v4160, 1
        %v4289 = vrot.slane %v4161, 1
        %v4290 = vrot.slane %v4162, 1
        %v4291 = vrot.slane %v4163, 1
        %v4292 = vrot.slane %v4164, 1
        %v4293 = vrot.slane %v4165, 1
        %v4294 = vrot.slane %v4166, 1
        %v4295 = vrot.slane %v4167, 1
        %v4296 = vrot.slane %v4168, 1
        %v4297 = vrot.slane %v4169, 1
        %v4298 = vrot.slane %v4170, 1
        %v4299 = vrot.slane %v4171, 1
        %v4300 = vrot.slane %v4172, 1
        %v4301 = vrot.slane %v4173, 1
        %v4302 = vrot.slane %v4174, 1
        %v4303 = vrot.slane %v4175, 1
        %v4304 = vrot.slane %v4176, 1
        %v4305 = vrot.slane %v4177, 1
        %v4306 = vrot.slane %v4178, 1
        %v4307 = vrot.slane %v4179, 1
        %v4308 = vrot.slane %v4180, 1
        %v4309 = vrot.slane %v4181, 1
        %v4310 = vrot.slane %v4182, 1
        %v4311 = vrot.slane %v4183, 1
        %v4312 = vrot.slane %v4184, 1
        %v4313 = vrot.slane %v4185, 1
        %v4314 = vsel %vm1465, %v4312, %v4313
        %v4315 = vsel %vm1465, %v4311, %v4312
        %v4316 = vsel %vm1465, %v4310, %v4311
        %v4317 = vsel %vm1465, %v4309, %v4310
        %v4318 = vsel %vm1465, %v4308, %v4309
        %v4319 = vsel %vm1465, %v4307, %v4308
        %v4320 = vsel %vm1465, %v4306, %v4307
        %v4321 = vsel %vm1465, %v4305, %v4306
        %v4322 = vsel %vm1465, %v4304, %v4305
        %v4323 = vsel %vm1465, %v4303, %v4304
        %v4324 = vsel %vm1465, %v4302, %v4303
        %v4325 = vsel %vm1465, %v4301, %v4302
        %v4326 = vsel %vm1465, %v4300, %v4301
        %v4327 = vsel %vm1465, %v4299, %v4300
        %v4328 = vsel %vm1465, %v4298, %v4299
        %v4329 = vsel %vm1465, %v4297, %v4298
        %v4330 = vsel %vm1465, %v4296, %v4297
        %v4331 = vsel %vm1465, %v4295, %v4296
        %v4332 = vsel %vm1465, %v4294, %v4295
        %v4333 = vsel %vm1465, %v4293, %v4294
        %v4334 = vsel %vm1465, %v4292, %v4293
        %v4335 = vsel %vm1465, %v4291, %v4292
        %v4336 = vsel %vm1465, %v4290, %v4291
        %v4337 = vsel %vm1465, %v4289, %v4290
        %v4338 = vsel %vm1465, %v4288, %v4289
        %v4339 = vsel %vm1465, %v4287, %v4288
        %v4340 = vsel %vm1465, %v4286, %v4287
        %v4341 = vsel %vm1465, %v4285, %v4286
        %v4342 = vsel %vm1465, %v4284, %v4285
        %v4343 = vsel %vm1465, %v4283, %v4284
        %v4344 = vsel %vm1465, %v4282, %v4283
        %v4345 = vsel %vm1465, %v4313, %v4282
        %v4346 = vsel %vm1530, 0.0, %v4344
        %v4347 = vsel %vm1531, 0.0, %v4343
        %v4348 = vsel %vm1532, 0.0, %v4342
        %v4349 = vsel %vm1533, 0.0, %v4341
        %v4350 = vsel %vm1534, 0.0, %v4340
        %v4351 = vsel %vm1535, 0.0, %v4339
        %v4352 = vsel %vm1536, 0.0, %v4338
        %v4353 = vsel %vm1537, 0.0, %v4337
        %v4354 = vsel %vm1538, 0.0, %v4336
        %v4355 = vsel %vm1539, 0.0, %v4335
        %v4356 = vsel %vm1540, 0.0, %v4334
        %v4357 = vsel %vm1541, 0.0, %v4333
        %v4358 = vsel %vm1542, 0.0, %v4332
        %v4359 = vsel %vm1543, 0.0, %v4331
        %v4360 = vsel %vm1544, 0.0, %v4330
        %v4361 = vsel %vm1545, 0.0, %v4329
        %v4362 = vsel %vm1546, 0.0, %v4328
        %v4363 = vsel %vm1547, 0.0, %v4327
        %v4364 = vsel %vm1548, 0.0, %v4326
        %v4365 = vsel %vm1549, 0.0, %v4325
        %v4366 = vsel %vm1550, 0.0, %v4324
        %v4367 = vsel %vm1551, 0.0, %v4323
        %v4368 = vsel %vm1552, 0.0, %v4322
        %v4369 = vsel %vm1553, 0.0, %v4321
        %v4370 = vsel %vm1554, 0.0, %v4320
        %v4371 = vsel %vm1555, 0.0, %v4319
        %v4372 = vsel %vm1556, 0.0, %v4318
        %v4373 = vsel %vm1557, 0.0, %v4317
        %v4374 = vsel %vm1558, 0.0, %v4316
        %v4375 = vsel %vm1559, 0.0, %v4315
        %v4376 = vsel %vm1560, 0.0, %v4314
        %v4377 = vsel %vm1561, 0.0, %v4345
        %v4378 = vld [vmem:[#allocation8] sm:$0xff]
        %v4379 = vld [vmem:[#allocation8 + $0x8] sm:$0xff]
        %v4380 = vld [vmem:[#allocation8 + $0x10] sm:$0xff]
        %v4381 = vld [vmem:[#allocation8 + $0x18] sm:$0xff]
        %v4382 = vld [vmem:[#allocation8 + $0x20] sm:$0xff]
        %v4383 = vld [vmem:[#allocation8 + $0x28] sm:$0xff]
        %v4384 = vld [vmem:[#allocation8 + $0x30] sm:$0xff]
        %v4385 = vld [vmem:[#allocation8 + $0x38] sm:$0xff]
        %v4386 = vld [vmem:[#allocation8 + $0x40] sm:$0xff]
        %v4387 = vld [vmem:[#allocation8 + $0x48] sm:$0xff]
        %v4388 = vld [vmem:[#allocation8 + $0x50] sm:$0xff]
        %v4389 = vld [vmem:[#allocation8 + $0x58] sm:$0xff]
        %v4390 = vld [vmem:[#allocation8 + $0x60] sm:$0xff]
        %v4391 = vld [vmem:[#allocation8 + $0x68] sm:$0xff]
        %v4392 = vld [vmem:[#allocation8 + $0x70] sm:$0xff]
        %v4393 = vld [vmem:[#allocation8 + $0x78] sm:$0xff]
        %v4394 = vld [vmem:[#allocation8 + $0x80] sm:$0xff]
        %v4395 = vld [vmem:[#allocation8 + $0x88] sm:$0xff]
        %v4396 = vld [vmem:[#allocation8 + $0x90] sm:$0xff]
        %v4397 = vld [vmem:[#allocation8 + $0x98] sm:$0xff]
        %v4398 = vld [vmem:[#allocation8 + $0xa0] sm:$0xff]
        %v4399 = vld [vmem:[#allocation8 + $0xa8] sm:$0xff]
        %v4400 = vld [vmem:[#allocation8 + $0xb0] sm:$0xff]
        %v4401 = vld [vmem:[#allocation8 + $0xb8] sm:$0xff]
        %v4402 = vld [vmem:[#allocation8 + $0xc0] sm:$0xff]
        %v4403 = vld [vmem:[#allocation8 + $0xc8] sm:$0xff]
        %v4404 = vld [vmem:[#allocation8 + $0xd0] sm:$0xff]
        %v4405 = vld [vmem:[#allocation8 + $0xd8] sm:$0xff]
        %v4406 = vld [vmem:[#allocation8 + $0xe0] sm:$0xff]
        %v4407 = vld [vmem:[#allocation8 + $0xe8] sm:$0xff]
        %v4408 = vld [vmem:[#allocation8 + $0xf0] sm:$0xff]
        %v4409 = vld [vmem:[#allocation8 + $0xf8] sm:$0xff]
        %4410 = vmatprep.subr.mxu0 0.0
        %4411 = vmatpush1.msra.mxu0 %v4409
        %4412 = vmatprep.subr.mxu0 0.0
        %4413 = vmatpush1.msra.mxu0 %v4408
        %4414 = vmatprep.subr.mxu0 0.0
        %4415 = vmatpush1.msra.mxu0 %v4407
        %4416 = vmatprep.subr.mxu0 0.0
        %4417 = vmatpush1.msra.mxu0 %v4406
        %4418 = vmatprep.subr.mxu0 0.0
        %4419 = vmatpush1.msra.mxu0 %v4405
        %4420 = vmatprep.subr.mxu0 0.0
        %4421 = vmatpush1.msra.mxu0 %v4404
        %4422 = vmatprep.subr.mxu0 0.0
        %4423 = vmatpush1.msra.mxu0 %v4403
        %4424 = vmatprep.subr.mxu0 0.0
        %4425 = vmatpush1.msra.mxu0 %v4402
        %4426 = vmatprep.subr.mxu0 0.0
        %4427 = vmatpush1.msra.mxu0 %v4401
        %4428 = vmatprep.subr.mxu0 0.0
        %4429 = vmatpush1.msra.mxu0 %v4400
        %4430 = vmatprep.subr.mxu0 0.0
        %4431 = vmatpush1.msra.mxu0 %v4399
        %4432 = vmatprep.subr.mxu0 0.0
        %4433 = vmatpush1.msra.mxu0 %v4398
        %4434 = vmatprep.subr.mxu0 0.0
        %4435 = vmatpush1.msra.mxu0 %v4397
        %4436 = vmatprep.subr.mxu0 0.0
        %4437 = vmatpush1.msra.mxu0 %v4396
        %4438 = vmatprep.subr.mxu0 0.0
        %4439 = vmatpush1.msra.mxu0 %v4395
        %4440 = vmatprep.subr.mxu0 0.0
        %4441 = vmatpush1.msra.mxu0 %v4394
        %4442 = vmatprep.subr.mxu0 0.0
        %4443 = vmatpush2.msra.mxu0 0.0
        %4444 = vmatprep.subr.mxu0 0.0
        %4445 = vmatpush2.msra.mxu0 0.0
        %4446 = vmatprep.subr.mxu0 0.0
        %4447 = vmatpush2.msra.mxu0 0.0
        %4448 = vmatprep.subr.mxu0 0.0
        %4449 = vmatpush2.msra.mxu0 0.0
        %4450 = vmatprep.subr.mxu0 0.0
        %4451 = vmatpush2.msra.mxu0 0.0
        %4452 = vmatprep.subr.mxu0 0.0
        %4453 = vmatpush2.msra.mxu0 0.0
        %4454 = vmatprep.subr.mxu0 0.0
        %4455 = vmatpush2.msra.mxu0 0.0
        %4456 = vmatprep.subr.mxu0 0.0
        %4457 = vmatpush2.msra.mxu0 0.0
        %4458 = vmatprep.subr.mxu0 0.0
        %4459 = vmatpush2.msra.mxu0 0.0
        %4460 = vmatprep.subr.mxu0 0.0
        %4461 = vmatpush2.msra.mxu0 0.0
        %4462 = vmatprep.subr.mxu0 0.0
        %4463 = vmatpush2.msra.mxu0 0.0
        %4464 = vmatprep.subr.mxu0 0.0
        %4465 = vmatpush2.msra.mxu0 0.0
        %4466 = vmatprep.subr.mxu0 0.0
        %4467 = vmatpush2.msra.mxu0 0.0
        %4468 = vmatprep.subr.mxu0 0.0
        %4469 = vmatpush2.msra.mxu0 0.0
        %4470 = vmatprep.subr.mxu0 0.0
        %4471 = vmatpush2.msra.mxu0 0.0
        %4472 = vmatprep.subr.mxu0 0.0
        %4473 = vmatpush2.msra.mxu0 0.0
        %4474 = vmatprep.mubr.f32.mxu0 0.0
        %4475 = vmatmul.mubr.f32.gmra.mxu0 %v4154
        %v4476 = vpop.f32.mrf.mxu0
        %v4477 = vadd.f32 0.0, %v4476
        %v4478 = vpop.f32.mrf.mxu0
        %4479 = vmatprep.mubr.f32.mxu0 0.0
        %4480 = vmatmul.mubr.f32.gmra.mxu0 %v4155
        %v4481 = vpop.f32.mrf.mxu0
        %v4482 = vadd.f32 0.0, %v4481
        %v4483 = vpop.f32.mrf.mxu0
        %4484 = vmatprep.mubr.f32.mxu0 0.0
        %4485 = vmatmul.mubr.f32.gmra.mxu0 %v4156
        %v4486 = vpop.f32.mrf.mxu0
        %v4487 = vadd.f32 0.0, %v4486
        %v4488 = vpop.f32.mrf.mxu0
        %4489 = vmatprep.mubr.f32.mxu0 0.0
        %4490 = vmatmul.mubr.f32.gmra.mxu0 %v4157
        %v4491 = vpop.f32.mrf.mxu0
        %v4492 = vadd.f32 0.0, %v4491
        %v4493 = vpop.f32.mrf.mxu0
        %4494 = vmatprep.mubr.f32.mxu0 0.0
        %4495 = vmatmul.mubr.f32.gmra.mxu0 %v4158
        %v4496 = vpop.f32.mrf.mxu0
        %v4497 = vadd.f32 0.0, %v4496
        %v4498 = vpop.f32.mrf.mxu0
        %4499 = vmatprep.mubr.f32.mxu0 0.0
        %4500 = vmatmul.mubr.f32.gmra.mxu0 %v4159
        %v4501 = vpop.f32.mrf.mxu0
        %v4502 = vadd.f32 0.0, %v4501
        %v4503 = vpop.f32.mrf.mxu0
        %4504 = vmatprep.mubr.f32.mxu0 0.0
        %4505 = vmatmul.mubr.f32.gmra.mxu0 %v4160
        %v4506 = vpop.f32.mrf.mxu0
        %v4507 = vadd.f32 0.0, %v4506
        %v4508 = vpop.f32.mrf.mxu0
        %4509 = vmatprep.mubr.f32.mxu0 0.0
        %4510 = vmatmul.mubr.f32.gmra.mxu0 %v4161
        %v4511 = vpop.f32.mrf.mxu0
        %v4512 = vadd.f32 0.0, %v4511
        %v4513 = vpop.f32.mrf.mxu0
        %4514 = vmatprep.mubr.f32.mxu0 0.0
        %4515 = vmatmul.mubr.f32.gmra.mxu0 %v4162
        %v4516 = vpop.f32.mrf.mxu0
        %v4517 = vadd.f32 0.0, %v4516
        %v4518 = vpop.f32.mrf.mxu0
        %4519 = vmatprep.mubr.f32.mxu0 0.0
        %4520 = vmatmul.mubr.f32.gmra.mxu0 %v4163
        %v4521 = vpop.f32.mrf.mxu0
        %v4522 = vadd.f32 0.0, %v4521
        %v4523 = vpop.f32.mrf.mxu0
        %4524 = vmatprep.mubr.f32.mxu0 0.0
        %4525 = vmatmul.mubr.f32.gmra.mxu0 %v4164
        %v4526 = vpop.f32.mrf.mxu0
        %v4527 = vadd.f32 0.0, %v4526
        %v4528 = vpop.f32.mrf.mxu0
        %4529 = vmatprep.mubr.f32.mxu0 0.0
        %4530 = vmatmul.mubr.f32.gmra.mxu0 %v4165
        %v4531 = vpop.f32.mrf.mxu0
        %v4532 = vadd.f32 0.0, %v4531
        %v4533 = vpop.f32.mrf.mxu0
        %4534 = vmatprep.mubr.f32.mxu0 0.0
        %4535 = vmatmul.mubr.f32.gmra.mxu0 %v4166
        %v4536 = vpop.f32.mrf.mxu0
        %v4537 = vadd.f32 0.0, %v4536
        %v4538 = vpop.f32.mrf.mxu0
        %4539 = vmatprep.mubr.f32.mxu0 0.0
        %4540 = vmatmul.mubr.f32.gmra.mxu0 %v4167
        %v4541 = vpop.f32.mrf.mxu0
        %v4542 = vadd.f32 0.0, %v4541
        %v4543 = vpop.f32.mrf.mxu0
        %4544 = vmatprep.mubr.f32.mxu0 0.0
        %4545 = vmatmul.mubr.f32.gmra.mxu0 %v4168
        %v4546 = vpop.f32.mrf.mxu0
        %v4547 = vadd.f32 0.0, %v4546
        %v4548 = vpop.f32.mrf.mxu0
        %4549 = vmatprep.mubr.f32.mxu0 0.0
        %4550 = vmatmul.mubr.f32.gmra.mxu0 %v4169
        %v4551 = vpop.f32.mrf.mxu0
        %v4552 = vadd.f32 0.0, %v4551
        %v4553 = vpop.f32.mrf.mxu0
        %4554 = vmatprep.mubr.f32.mxu0 0.0
        %4555 = vmatmul.mubr.f32.gmra.mxu0 %v4170
        %v4556 = vpop.f32.mrf.mxu0
        %v4557 = vadd.f32 0.0, %v4556
        %v4558 = vpop.f32.mrf.mxu0
        %4559 = vmatprep.mubr.f32.mxu0 0.0
        %4560 = vmatmul.mubr.f32.gmra.mxu0 %v4171
        %v4561 = vpop.f32.mrf.mxu0
        %v4562 = vadd.f32 0.0, %v4561
        %v4563 = vpop.f32.mrf.mxu0
        %4564 = vmatprep.mubr.f32.mxu0 0.0
        %4565 = vmatmul.mubr.f32.gmra.mxu0 %v4172
        %v4566 = vpop.f32.mrf.mxu0
        %v4567 = vadd.f32 0.0, %v4566
        %v4568 = vpop.f32.mrf.mxu0
        %4569 = vmatprep.mubr.f32.mxu0 0.0
        %4570 = vmatmul.mubr.f32.gmra.mxu0 %v4173
        %v4571 = vpop.f32.mrf.mxu0
        %v4572 = vadd.f32 0.0, %v4571
        %v4573 = vpop.f32.mrf.mxu0
        %4574 = vmatprep.mubr.f32.mxu0 0.0
        %4575 = vmatmul.mubr.f32.gmra.mxu0 %v4174
        %v4576 = vpop.f32.mrf.mxu0
        %v4577 = vadd.f32 0.0, %v4576
        %v4578 = vpop.f32.mrf.mxu0
        %4579 = vmatprep.mubr.f32.mxu0 0.0
        %4580 = vmatmul.mubr.f32.gmra.mxu0 %v4175
        %v4581 = vpop.f32.mrf.mxu0
        %v4582 = vadd.f32 0.0, %v4581
        %v4583 = vpop.f32.mrf.mxu0
        %4584 = vmatprep.mubr.f32.mxu0 0.0
        %4585 = vmatmul.mubr.f32.gmra.mxu0 %v4176
        %v4586 = vpop.f32.mrf.mxu0
        %v4587 = vadd.f32 0.0, %v4586
        %v4588 = vpop.f32.mrf.mxu0
        %4589 = vmatprep.mubr.f32.mxu0 0.0
        %4590 = vmatmul.mubr.f32.gmra.mxu0 %v4177
        %v4591 = vpop.f32.mrf.mxu0
        %v4592 = vadd.f32 0.0, %v4591
        %v4593 = vpop.f32.mrf.mxu0
        %4594 = vmatprep.mubr.f32.mxu0 0.0
        %4595 = vmatmul.mubr.f32.gmra.mxu0 %v4178
        %v4596 = vpop.f32.mrf.mxu0
        %v4597 = vadd.f32 0.0, %v4596
        %v4598 = vpop.f32.mrf.mxu0
        %4599 = vmatprep.mubr.f32.mxu0 0.0
        %4600 = vmatmul.mubr.f32.gmra.mxu0 %v4179
        %v4601 = vpop.f32.mrf.mxu0
        %v4602 = vadd.f32 0.0, %v4601
        %v4603 = vpop.f32.mrf.mxu0
        %4604 = vmatprep.mubr.f32.mxu0 0.0
        %4605 = vmatmul.mubr.f32.gmra.mxu0 %v4180
        %v4606 = vpop.f32.mrf.mxu0
        %v4607 = vadd.f32 0.0, %v4606
        %v4608 = vpop.f32.mrf.mxu0
        %4609 = vmatprep.mubr.f32.mxu0 0.0
        %4610 = vmatmul.mubr.f32.gmra.mxu0 %v4181
        %v4611 = vpop.f32.mrf.mxu0
        %v4612 = vadd.f32 0.0, %v4611
        %v4613 = vpop.f32.mrf.mxu0
        %4614 = vmatprep.mubr.f32.mxu0 0.0
        %4615 = vmatmul.mubr.f32.gmra.mxu0 %v4182
        %v4616 = vpop.f32.mrf.mxu0
        %v4617 = vadd.f32 0.0, %v4616
        %v4618 = vpop.f32.mrf.mxu0
        %4619 = vmatprep.mubr.f32.mxu0 0.0
        %4620 = vmatmul.mubr.f32.gmra.mxu0 %v4183
        %v4621 = vpop.f32.mrf.mxu0
        %v4622 = vadd.f32 0.0, %v4621
        %v4623 = vpop.f32.mrf.mxu0
        %4624 = vmatprep.mubr.f32.mxu0 0.0
        %4625 = vmatmul.mubr.f32.gmra.mxu0 %v4184
        %v4626 = vpop.f32.mrf.mxu0
        %v4627 = vadd.f32 0.0, %v4626
        %v4628 = vpop.f32.mrf.mxu0
        %4629 = vmatprep.mubr.f32.mxu0 0.0
        %4630 = vmatmul.mubr.f32.gmra.mxu0 %v4185
        %v4631 = vpop.f32.mrf.mxu0
        %v4632 = vadd.f32 0.0, %v4631
        %v4633 = vpop.f32.mrf.mxu0
        %4634 = vdwg.mxu0
        %4635 = vmatprep.subr.mxu0 0.0
        %4636 = vmatpush1.msra.mxu0 %v4393
        %4637 = vmatprep.subr.mxu0 0.0
        %4638 = vmatpush1.msra.mxu0 %v4392
        %4639 = vmatprep.subr.mxu0 0.0
        %4640 = vmatpush1.msra.mxu0 %v4391
        %4641 = vmatprep.subr.mxu0 0.0
        %4642 = vmatpush1.msra.mxu0 %v4390
        %4643 = vmatprep.subr.mxu0 0.0
        %4644 = vmatpush1.msra.mxu0 %v4389
        %4645 = vmatprep.subr.mxu0 0.0
        %4646 = vmatpush1.msra.mxu0 %v4388
        %4647 = vmatprep.subr.mxu0 0.0
        %4648 = vmatpush1.msra.mxu0 %v4387
        %4649 = vmatprep.subr.mxu0 0.0
        %4650 = vmatpush1.msra.mxu0 %v4386
        %4651 = vmatprep.subr.mxu0 0.0
        %4652 = vmatpush1.msra.mxu0 %v4385
        %4653 = vmatprep.subr.mxu0 0.0
        %4654 = vmatpush1.msra.mxu0 %v4384
        %4655 = vmatprep.subr.mxu0 0.0
        %4656 = vmatpush1.msra.mxu0 %v4383
        %4657 = vmatprep.subr.mxu0 0.0
        %4658 = vmatpush1.msra.mxu0 %v4382
        %4659 = vmatprep.subr.mxu0 0.0
        %4660 = vmatpush1.msra.mxu0 %v4381
        %4661 = vmatprep.subr.mxu0 0.0
        %4662 = vmatpush1.msra.mxu0 %v4380
        %4663 = vmatprep.subr.mxu0 0.0
        %4664 = vmatpush1.msra.mxu0 %v4379
        %4665 = vmatprep.subr.mxu0 0.0
        %4666 = vmatpush1.msra.mxu0 %v4378
        %4667 = vmatprep.subr.mxu0 0.0
        %4668 = vmatpush2.msra.mxu0 0.0
        %4669 = vmatprep.subr.mxu0 0.0
        %4670 = vmatpush2.msra.mxu0 0.0
        %4671 = vmatprep.subr.mxu0 0.0
        %4672 = vmatpush2.msra.mxu0 0.0
        %4673 = vmatprep.subr.mxu0 0.0
        %4674 = vmatpush2.msra.mxu0 0.0
        %4675 = vmatprep.subr.mxu0 0.0
        %4676 = vmatpush2.msra.mxu0 0.0
        %4677 = vmatprep.subr.mxu0 0.0
        %4678 = vmatpush2.msra.mxu0 0.0
        %4679 = vmatprep.subr.mxu0 0.0
        %4680 = vmatpush2.msra.mxu0 0.0
        %4681 = vmatprep.subr.mxu0 0.0
        %4682 = vmatpush2.msra.mxu0 0.0
        %4683 = vmatprep.subr.mxu0 0.0
        %4684 = vmatpush2.msra.mxu0 0.0
        %4685 = vmatprep.subr.mxu0 0.0
        %4686 = vmatpush2.msra.mxu0 0.0
        %4687 = vmatprep.subr.mxu0 0.0
        %4688 = vmatpush2.msra.mxu0 0.0
        %4689 = vmatprep.subr.mxu0 0.0
        %4690 = vmatpush2.msra.mxu0 0.0
        %4691 = vmatprep.subr.mxu0 0.0
        %4692 = vmatpush2.msra.mxu0 0.0
        %4693 = vmatprep.subr.mxu0 0.0
        %4694 = vmatpush2.msra.mxu0 0.0
        %4695 = vmatprep.subr.mxu0 0.0
        %4696 = vmatpush2.msra.mxu0 0.0
        %4697 = vmatprep.subr.mxu0 0.0
        %4698 = vmatpush2.msra.mxu0 0.0
        %4699 = vmatprep.mubr.f32.mxu0 0.0
        %4700 = vmatmul.mubr.f32.gmra.mxu0 %v4250
        %v4701 = vpop.f32.mrf.mxu0
        %v4702 = vadd.f32 %v4477, %v4701
        %v4703 = vpop.f32.mrf.mxu0
        %4704 = vmatprep.mubr.f32.mxu0 0.0
        %4705 = vmatmul.mubr.f32.gmra.mxu0 %v4251
        %v4706 = vpop.f32.mrf.mxu0
        %v4707 = vadd.f32 %v4482, %v4706
        %v4708 = vpop.f32.mrf.mxu0
        %4709 = vmatprep.mubr.f32.mxu0 0.0
        %4710 = vmatmul.mubr.f32.gmra.mxu0 %v4252
        %v4711 = vpop.f32.mrf.mxu0
        %v4712 = vadd.f32 %v4487, %v4711
        %v4713 = vpop.f32.mrf.mxu0
        %4714 = vmatprep.mubr.f32.mxu0 0.0
        %4715 = vmatmul.mubr.f32.gmra.mxu0 %v4253
        %v4716 = vpop.f32.mrf.mxu0
        %v4717 = vadd.f32 %v4492, %v4716
        %v4718 = vpop.f32.mrf.mxu0
        %4719 = vmatprep.mubr.f32.mxu0 0.0
        %4720 = vmatmul.mubr.f32.gmra.mxu0 %v4254
        %v4721 = vpop.f32.mrf.mxu0
        %v4722 = vadd.f32 %v4497, %v4721
        %v4723 = vpop.f32.mrf.mxu0
        %4724 = vmatprep.mubr.f32.mxu0 0.0
        %4725 = vmatmul.mubr.f32.gmra.mxu0 %v4255
        %v4726 = vpop.f32.mrf.mxu0
        %v4727 = vadd.f32 %v4502, %v4726
        %v4728 = vpop.f32.mrf.mxu0
        %4729 = vmatprep.mubr.f32.mxu0 0.0
        %4730 = vmatmul.mubr.f32.gmra.mxu0 %v4256
        %v4731 = vpop.f32.mrf.mxu0
        %v4732 = vadd.f32 %v4507, %v4731
        %v4733 = vpop.f32.mrf.mxu0
        %4734 = vmatprep.mubr.f32.mxu0 0.0
        %4735 = vmatmul.mubr.f32.gmra.mxu0 %v4257
        %v4736 = vpop.f32.mrf.mxu0
        %v4737 = vadd.f32 %v4512, %v4736
        %v4738 = vpop.f32.mrf.mxu0
        %4739 = vmatprep.mubr.f32.mxu0 0.0
        %4740 = vmatmul.mubr.f32.gmra.mxu0 %v4258
        %v4741 = vpop.f32.mrf.mxu0
        %v4742 = vadd.f32 %v4517, %v4741
        %v4743 = vpop.f32.mrf.mxu0
        %4744 = vmatprep.mubr.f32.mxu0 0.0
        %4745 = vmatmul.mubr.f32.gmra.mxu0 %v4259
        %v4746 = vpop.f32.mrf.mxu0
        %v4747 = vadd.f32 %v4522, %v4746
        %v4748 = vpop.f32.mrf.mxu0
        %4749 = vmatprep.mubr.f32.mxu0 0.0
        %4750 = vmatmul.mubr.f32.gmra.mxu0 %v4260
        %v4751 = vpop.f32.mrf.mxu0
        %v4752 = vadd.f32 %v4527, %v4751
        %v4753 = vpop.f32.mrf.mxu0
        %4754 = vmatprep.mubr.f32.mxu0 0.0
        %4755 = vmatmul.mubr.f32.gmra.mxu0 %v4261
        %v4756 = vpop.f32.mrf.mxu0
        %v4757 = vadd.f32 %v4532, %v4756
        %v4758 = vpop.f32.mrf.mxu0
        %4759 = vmatprep.mubr.f32.mxu0 0.0
        %4760 = vmatmul.mubr.f32.gmra.mxu0 %v4262
        %v4761 = vpop.f32.mrf.mxu0
        %v4762 = vadd.f32 %v4537, %v4761
        %v4763 = vpop.f32.mrf.mxu0
        %4764 = vmatprep.mubr.f32.mxu0 0.0
        %4765 = vmatmul.mubr.f32.gmra.mxu0 %v4263
        %v4766 = vpop.f32.mrf.mxu0
        %v4767 = vadd.f32 %v4542, %v4766
        %v4768 = vpop.f32.mrf.mxu0
        %4769 = vmatprep.mubr.f32.mxu0 0.0
        %4770 = vmatmul.mubr.f32.gmra.mxu0 %v4264
        %v4771 = vpop.f32.mrf.mxu0
        %v4772 = vadd.f32 %v4547, %v4771
        %v4773 = vpop.f32.mrf.mxu0
        %4774 = vmatprep.mubr.f32.mxu0 0.0
        %4775 = vmatmul.mubr.f32.gmra.mxu0 %v4265
        %v4776 = vpop.f32.mrf.mxu0
        %v4777 = vadd.f32 %v4552, %v4776
        %v4778 = vpop.f32.mrf.mxu0
        %4779 = vmatprep.mubr.f32.mxu0 0.0
        %4780 = vmatmul.mubr.f32.gmra.mxu0 %v4266
        %v4781 = vpop.f32.mrf.mxu0
        %v4782 = vadd.f32 %v4557, %v4781
        %v4783 = vpop.f32.mrf.mxu0
        %4784 = vmatprep.mubr.f32.mxu0 0.0
        %4785 = vmatmul.mubr.f32.gmra.mxu0 %v4267
        %v4786 = vpop.f32.mrf.mxu0
        %v4787 = vadd.f32 %v4562, %v4786
        %v4788 = vpop.f32.mrf.mxu0
        %4789 = vmatprep.mubr.f32.mxu0 0.0
        %4790 = vmatmul.mubr.f32.gmra.mxu0 %v4268
        %v4791 = vpop.f32.mrf.mxu0
        %v4792 = vadd.f32 %v4567, %v4791
        %v4793 = vpop.f32.mrf.mxu0
        %4794 = vmatprep.mubr.f32.mxu0 0.0
        %4795 = vmatmul.mubr.f32.gmra.mxu0 %v4269
        %v4796 = vpop.f32.mrf.mxu0
        %v4797 = vadd.f32 %v4572, %v4796
        %v4798 = vpop.f32.mrf.mxu0
        %4799 = vmatprep.mubr.f32.mxu0 0.0
        %4800 = vmatmul.mubr.f32.gmra.mxu0 %v4270
        %v4801 = vpop.f32.mrf.mxu0
        %v4802 = vadd.f32 %v4577, %v4801
        %v4803 = vpop.f32.mrf.mxu0
        %4804 = vmatprep.mubr.f32.mxu0 0.0
        %4805 = vmatmul.mubr.f32.gmra.mxu0 %v4271
        %v4806 = vpop.f32.mrf.mxu0
        %v4807 = vadd.f32 %v4582, %v4806
        %v4808 = vpop.f32.mrf.mxu0
        %4809 = vmatprep.mubr.f32.mxu0 0.0
        %4810 = vmatmul.mubr.f32.gmra.mxu0 %v4272
        %v4811 = vpop.f32.mrf.mxu0
        %v4812 = vadd.f32 %v4587, %v4811
        %v4813 = vpop.f32.mrf.mxu0
        %4814 = vmatprep.mubr.f32.mxu0 0.0
        %4815 = vmatmul.mubr.f32.gmra.mxu0 %v4273
        %v4816 = vpop.f32.mrf.mxu0
        %v4817 = vadd.f32 %v4592, %v4816
        %v4818 = vpop.f32.mrf.mxu0
        %4819 = vmatprep.mubr.f32.mxu0 0.0
        %4820 = vmatmul.mubr.f32.gmra.mxu0 %v4274
        %v4821 = vpop.f32.mrf.mxu0
        %v4822 = vadd.f32 %v4597, %v4821
        %v4823 = vpop.f32.mrf.mxu0
        %4824 = vmatprep.mubr.f32.mxu0 0.0
        %4825 = vmatmul.mubr.f32.gmra.mxu0 %v4275
        %v4826 = vpop.f32.mrf.mxu0
        %v4827 = vadd.f32 %v4602, %v4826
        %v4828 = vpop.f32.mrf.mxu0
        %4829 = vmatprep.mubr.f32.mxu0 0.0
        %4830 = vmatmul.mubr.f32.gmra.mxu0 %v4276
        %v4831 = vpop.f32.mrf.mxu0
        %v4832 = vadd.f32 %v4607, %v4831
        %v4833 = vpop.f32.mrf.mxu0
        %4834 = vmatprep.mubr.f32.mxu0 0.0
        %4835 = vmatmul.mubr.f32.gmra.mxu0 %v4277
        %v4836 = vpop.f32.mrf.mxu0
        %v4837 = vadd.f32 %v4612, %v4836
        %v4838 = vpop.f32.mrf.mxu0
        %4839 = vmatprep.mubr.f32.mxu0 0.0
        %4840 = vmatmul.mubr.f32.gmra.mxu0 %v4278
        %v4841 = vpop.f32.mrf.mxu0
        %v4842 = vadd.f32 %v4617, %v4841
        %v4843 = vpop.f32.mrf.mxu0
        %4844 = vmatprep.mubr.f32.mxu0 0.0
        %4845 = vmatmul.mubr.f32.gmra.mxu0 %v4279
        %v4846 = vpop.f32.mrf.mxu0
        %v4847 = vadd.f32 %v4622, %v4846
        %v4848 = vpop.f32.mrf.mxu0
        %4849 = vmatprep.mubr.f32.mxu0 0.0
        %4850 = vmatmul.mubr.f32.gmra.mxu0 %v4280
        %v4851 = vpop.f32.mrf.mxu0
        %v4852 = vadd.f32 %v4627, %v4851
        %v4853 = vpop.f32.mrf.mxu0
        %4854 = vmatprep.mubr.f32.mxu0 0.0
        %4855 = vmatmul.mubr.f32.gmra.mxu0 %v4281
        %v4856 = vpop.f32.mrf.mxu0
        %v4857 = vadd.f32 %v4632, %v4856
        %v4858 = vpop.f32.mrf.mxu0
        %4859 = vdwg.mxu0
        %v4860 = vld [vmem:[#allocation8 + $0x100] sm:$0xff]
        %v4861 = vld [vmem:[#allocation8 + $0x108] sm:$0xff]
        %v4862 = vld [vmem:[#allocation8 + $0x110] sm:$0xff]
        %v4863 = vld [vmem:[#allocation8 + $0x118] sm:$0xff]
        %v4864 = vld [vmem:[#allocation8 + $0x120] sm:$0xff]
        %v4865 = vld [vmem:[#allocation8 + $0x128] sm:$0xff]
        %v4866 = vld [vmem:[#allocation8 + $0x130] sm:$0xff]
        %v4867 = vld [vmem:[#allocation8 + $0x138] sm:$0xff]
        %v4868 = vld [vmem:[#allocation8 + $0x140] sm:$0xff]
        %v4869 = vld [vmem:[#allocation8 + $0x148] sm:$0xff]
        %v4870 = vld [vmem:[#allocation8 + $0x150] sm:$0xff]
        %v4871 = vld [vmem:[#allocation8 + $0x158] sm:$0xff]
        %v4872 = vld [vmem:[#allocation8 + $0x160] sm:$0xff]
        %v4873 = vld [vmem:[#allocation8 + $0x168] sm:$0xff]
        %v4874 = vld [vmem:[#allocation8 + $0x170] sm:$0xff]
        %v4875 = vld [vmem:[#allocation8 + $0x178] sm:$0xff]
        %4876 = vmatprep.subr.mxu0 0.0
        %4877 = vmatpush1.msra.mxu0 %v4875
        %4878 = vmatprep.subr.mxu0 0.0
        %4879 = vmatpush1.msra.mxu0 %v4874
        %4880 = vmatprep.subr.mxu0 0.0
        %4881 = vmatpush1.msra.mxu0 %v4873
        %4882 = vmatprep.subr.mxu0 0.0
        %4883 = vmatpush1.msra.mxu0 %v4872
        %4884 = vmatprep.subr.mxu0 0.0
        %4885 = vmatpush1.msra.mxu0 %v4871
        %4886 = vmatprep.subr.mxu0 0.0
        %4887 = vmatpush1.msra.mxu0 %v4870
        %4888 = vmatprep.subr.mxu0 0.0
        %4889 = vmatpush1.msra.mxu0 %v4869
        %4890 = vmatprep.subr.mxu0 0.0
        %4891 = vmatpush1.msra.mxu0 %v4868
        %4892 = vmatprep.subr.mxu0 0.0
        %4893 = vmatpush1.msra.mxu0 %v4867
        %4894 = vmatprep.subr.mxu0 0.0
        %4895 = vmatpush1.msra.mxu0 %v4866
        %4896 = vmatprep.subr.mxu0 0.0
        %4897 = vmatpush1.msra.mxu0 %v4865
        %4898 = vmatprep.subr.mxu0 0.0
        %4899 = vmatpush1.msra.mxu0 %v4864
        %4900 = vmatprep.subr.mxu0 0.0
        %4901 = vmatpush1.msra.mxu0 %v4863
        %4902 = vmatprep.subr.mxu0 0.0
        %4903 = vmatpush1.msra.mxu0 %v4862
        %4904 = vmatprep.subr.mxu0 0.0
        %4905 = vmatpush1.msra.mxu0 %v4861
        %4906 = vmatprep.subr.mxu0 0.0
        %4907 = vmatpush1.msra.mxu0 %v4860
        %4908 = vmatprep.subr.mxu0 0.0
        %4909 = vmatpush2.msra.mxu0 0.0
        %4910 = vmatprep.subr.mxu0 0.0
        %4911 = vmatpush2.msra.mxu0 0.0
        %4912 = vmatprep.subr.mxu0 0.0
        %4913 = vmatpush2.msra.mxu0 0.0
        %4914 = vmatprep.subr.mxu0 0.0
        %4915 = vmatpush2.msra.mxu0 0.0
        %4916 = vmatprep.subr.mxu0 0.0
        %4917 = vmatpush2.msra.mxu0 0.0
        %4918 = vmatprep.subr.mxu0 0.0
        %4919 = vmatpush2.msra.mxu0 0.0
        %4920 = vmatprep.subr.mxu0 0.0
        %4921 = vmatpush2.msra.mxu0 0.0
        %4922 = vmatprep.subr.mxu0 0.0
        %4923 = vmatpush2.msra.mxu0 0.0
        %4924 = vmatprep.subr.mxu0 0.0
        %4925 = vmatpush2.msra.mxu0 0.0
        %4926 = vmatprep.subr.mxu0 0.0
        %4927 = vmatpush2.msra.mxu0 0.0
        %4928 = vmatprep.subr.mxu0 0.0
        %4929 = vmatpush2.msra.mxu0 0.0
        %4930 = vmatprep.subr.mxu0 0.0
        %4931 = vmatpush2.msra.mxu0 0.0
        %4932 = vmatprep.subr.mxu0 0.0
        %4933 = vmatpush2.msra.mxu0 0.0
        %4934 = vmatprep.subr.mxu0 0.0
        %4935 = vmatpush2.msra.mxu0 0.0
        %4936 = vmatprep.subr.mxu0 0.0
        %4937 = vmatpush2.msra.mxu0 0.0
        %4938 = vmatprep.subr.mxu0 0.0
        %4939 = vmatpush2.msra.mxu0 0.0
        %4940 = vmatprep.mubr.f32.mxu0 0.0
        %4941 = vmatmul.mubr.f32.gmra.mxu0 %v4346
        %v4942 = vpop.f32.mrf.mxu0
        %v4943 = vadd.f32 0.0, %v4942
        %v4944 = vpop.f32.mrf.mxu0
        %4945 = vmatprep.mubr.f32.mxu0 0.0
        %4946 = vmatmul.mubr.f32.gmra.mxu0 %v4347
        %v4947 = vpop.f32.mrf.mxu0
        %v4948 = vadd.f32 0.0, %v4947
        %v4949 = vpop.f32.mrf.mxu0
        %4950 = vmatprep.mubr.f32.mxu0 0.0
        %4951 = vmatmul.mubr.f32.gmra.mxu0 %v4348
        %v4952 = vpop.f32.mrf.mxu0
        %v4953 = vadd.f32 0.0, %v4952
        %v4954 = vpop.f32.mrf.mxu0
        %4955 = vmatprep.mubr.f32.mxu0 0.0
        %4956 = vmatmul.mubr.f32.gmra.mxu0 %v4349
        %v4957 = vpop.f32.mrf.mxu0
        %v4958 = vadd.f32 0.0, %v4957
        %v4959 = vpop.f32.mrf.mxu0
        %4960 = vmatprep.mubr.f32.mxu0 0.0
        %4961 = vmatmul.mubr.f32.gmra.mxu0 %v4350
        %v4962 = vpop.f32.mrf.mxu0
        %v4963 = vadd.f32 0.0, %v4962
        %v4964 = vpop.f32.mrf.mxu0
        %4965 = vmatprep.mubr.f32.mxu0 0.0
        %4966 = vmatmul.mubr.f32.gmra.mxu0 %v4351
        %v4967 = vpop.f32.mrf.mxu0
        %v4968 = vadd.f32 0.0, %v4967
        %v4969 = vpop.f32.mrf.mxu0
        %4970 = vmatprep.mubr.f32.mxu0 0.0
        %4971 = vmatmul.mubr.f32.gmra.mxu0 %v4352
        %v4972 = vpop.f32.mrf.mxu0
        %v4973 = vadd.f32 0.0, %v4972
        %v4974 = vpop.f32.mrf.mxu0
        %4975 = vmatprep.mubr.f32.mxu0 0.0
        %4976 = vmatmul.mubr.f32.gmra.mxu0 %v4353
        %v4977 = vpop.f32.mrf.mxu0
        %v4978 = vadd.f32 0.0, %v4977
        %v4979 = vpop.f32.mrf.mxu0
        %4980 = vmatprep.mubr.f32.mxu0 0.0
        %4981 = vmatmul.mubr.f32.gmra.mxu0 %v4354
        %v4982 = vpop.f32.mrf.mxu0
        %v4983 = vadd.f32 0.0, %v4982
        %v4984 = vpop.f32.mrf.mxu0
        %4985 = vmatprep.mubr.f32.mxu0 0.0
        %4986 = vmatmul.mubr.f32.gmra.mxu0 %v4355
        %v4987 = vpop.f32.mrf.mxu0
        %v4988 = vadd.f32 0.0, %v4987
        %v4989 = vpop.f32.mrf.mxu0
        %4990 = vmatprep.mubr.f32.mxu0 0.0
        %4991 = vmatmul.mubr.f32.gmra.mxu0 %v4356
        %v4992 = vpop.f32.mrf.mxu0
        %v4993 = vadd.f32 0.0, %v4992
        %v4994 = vpop.f32.mrf.mxu0
        %4995 = vmatprep.mubr.f32.mxu0 0.0
        %4996 = vmatmul.mubr.f32.gmra.mxu0 %v4357
        %v4997 = vpop.f32.mrf.mxu0
        %v4998 = vadd.f32 0.0, %v4997
        %v4999 = vpop.f32.mrf.mxu0
        %5000 = vmatprep.mubr.f32.mxu0 0.0
        %5001 = vmatmul.mubr.f32.gmra.mxu0 %v4358
        %v5002 = vpop.f32.mrf.mxu0
        %v5003 = vadd.f32 0.0, %v5002
        %v5004 = vpop.f32.mrf.mxu0
        %5005 = vmatprep.mubr.f32.mxu0 0.0
        %5006 = vmatmul.mubr.f32.gmra.mxu0 %v4359
        %v5007 = vpop.f32.mrf.mxu0
        %v5008 = vadd.f32 0.0, %v5007
        %v5009 = vpop.f32.mrf.mxu0
        %5010 = vmatprep.mubr.f32.mxu0 0.0
        %5011 = vmatmul.mubr.f32.gmra.mxu0 %v4360
        %v5012 = vpop.f32.mrf.mxu0
        %v5013 = vadd.f32 0.0, %v5012
        %v5014 = vpop.f32.mrf.mxu0
        %5015 = vmatprep.mubr.f32.mxu0 0.0
        %5016 = vmatmul.mubr.f32.gmra.mxu0 %v4361
        %v5017 = vpop.f32.mrf.mxu0
        %v5018 = vadd.f32 0.0, %v5017
        %v5019 = vpop.f32.mrf.mxu0
        %5020 = vmatprep.mubr.f32.mxu0 0.0
        %5021 = vmatmul.mubr.f32.gmra.mxu0 %v4362
        %v5022 = vpop.f32.mrf.mxu0
        %v5023 = vadd.f32 0.0, %v5022
        %v5024 = vpop.f32.mrf.mxu0
        %5025 = vmatprep.mubr.f32.mxu0 0.0
        %5026 = vmatmul.mubr.f32.gmra.mxu0 %v4363
        %v5027 = vpop.f32.mrf.mxu0
        %v5028 = vadd.f32 0.0, %v5027
        %v5029 = vpop.f32.mrf.mxu0
        %5030 = vmatprep.mubr.f32.mxu0 0.0
        %5031 = vmatmul.mubr.f32.gmra.mxu0 %v4364
        %v5032 = vpop.f32.mrf.mxu0
        %v5033 = vadd.f32 0.0, %v5032
        %v5034 = vpop.f32.mrf.mxu0
        %5035 = vmatprep.mubr.f32.mxu0 0.0
        %5036 = vmatmul.mubr.f32.gmra.mxu0 %v4365
        %v5037 = vpop.f32.mrf.mxu0
        %v5038 = vadd.f32 0.0, %v5037
        %v5039 = vpop.f32.mrf.mxu0
        %5040 = vmatprep.mubr.f32.mxu0 0.0
        %5041 = vmatmul.mubr.f32.gmra.mxu0 %v4366
        %v5042 = vpop.f32.mrf.mxu0
        %v5043 = vadd.f32 0.0, %v5042
        %v5044 = vpop.f32.mrf.mxu0
        %5045 = vmatprep.mubr.f32.mxu0 0.0
        %5046 = vmatmul.mubr.f32.gmra.mxu0 %v4367
        %v5047 = vpop.f32.mrf.mxu0
        %v5048 = vadd.f32 0.0, %v5047
        %v5049 = vpop.f32.mrf.mxu0
        %5050 = vmatprep.mubr.f32.mxu0 0.0
        %5051 = vmatmul.mubr.f32.gmra.mxu0 %v4368
        %v5052 = vpop.f32.mrf.mxu0
        %v5053 = vadd.f32 0.0, %v5052
        %v5054 = vpop.f32.mrf.mxu0
        %5055 = vmatprep.mubr.f32.mxu0 0.0
        %5056 = vmatmul.mubr.f32.gmra.mxu0 %v4369
        %v5057 = vpop.f32.mrf.mxu0
        %v5058 = vadd.f32 0.0, %v5057
        %v5059 = vpop.f32.mrf.mxu0
        %5060 = vmatprep.mubr.f32.mxu0 0.0
        %5061 = vmatmul.mubr.f32.gmra.mxu0 %v4370
        %v5062 = vpop.f32.mrf.mxu0
        %v5063 = vadd.f32 0.0, %v5062
        %v5064 = vpop.f32.mrf.mxu0
        %5065 = vmatprep.mubr.f32.mxu0 0.0
        %5066 = vmatmul.mubr.f32.gmra.mxu0 %v4371
        %v5067 = vpop.f32.mrf.mxu0
        %v5068 = vadd.f32 0.0, %v5067
        %v5069 = vpop.f32.mrf.mxu0
        %5070 = vmatprep.mubr.f32.mxu0 0.0
        %5071 = vmatmul.mubr.f32.gmra.mxu0 %v4372
        %v5072 = vpop.f32.mrf.mxu0
        %v5073 = vadd.f32 0.0, %v5072
        %v5074 = vpop.f32.mrf.mxu0
        %5075 = vmatprep.mubr.f32.mxu0 0.0
        %5076 = vmatmul.mubr.f32.gmra.mxu0 %v4373
        %v5077 = vpop.f32.mrf.mxu0
        %v5078 = vadd.f32 0.0, %v5077
        %v5079 = vpop.f32.mrf.mxu0
        %5080 = vmatprep.mubr.f32.mxu0 0.0
        %5081 = vmatmul.mubr.f32.gmra.mxu0 %v4374
        %v5082 = vpop.f32.mrf.mxu0
        %v5083 = vadd.f32 0.0, %v5082
        %v5084 = vpop.f32.mrf.mxu0
        %5085 = vmatprep.mubr.f32.mxu0 0.0
        %5086 = vmatmul.mubr.f32.gmra.mxu0 %v4375
        %v5087 = vpop.f32.mrf.mxu0
        %v5088 = vadd.f32 0.0, %v5087
        %v5089 = vpop.f32.mrf.mxu0
        %5090 = vmatprep.mubr.f32.mxu0 0.0
        %5091 = vmatmul.mubr.f32.gmra.mxu0 %v4376
        %v5092 = vpop.f32.mrf.mxu0
        %v5093 = vadd.f32 0.0, %v5092
        %v5094 = vpop.f32.mrf.mxu0
        %5095 = vmatprep.mubr.f32.mxu0 0.0
        %5096 = vmatmul.mubr.f32.gmra.mxu0 %v4377
        %v5097 = vpop.f32.mrf.mxu0
        %v5098 = vadd.f32 0.0, %v5097
        %v5099 = vpop.f32.mrf.mxu0
        %5100 = vdwg.mxu0
        %v5101 = vadd.f32 %v4702, %v4943
        %v5102 = vadd.f32 %v4707, %v4948
        %v5103 = vadd.f32 %v4712, %v4953
        %v5104 = vadd.f32 %v4717, %v4958
        %v5105 = vadd.f32 %v4722, %v4963
        %v5106 = vadd.f32 %v4727, %v4968
        %v5107 = vadd.f32 %v4732, %v4973
        %v5108 = vadd.f32 %v4737, %v4978
        %v5109 = vadd.f32 %v4742, %v4983
        %v5110 = vadd.f32 %v4747, %v4988
        %v5111 = vadd.f32 %v4752, %v4993
        %v5112 = vadd.f32 %v4757, %v4998
        %v5113 = vadd.f32 %v4762, %v5003
        %v5114 = vadd.f32 %v4767, %v5008
        %v5115 = vadd.f32 %v4772, %v5013
        %v5116 = vadd.f32 %v4777, %v5018
        %v5117 = vadd.f32 %v4782, %v5023
        %v5118 = vadd.f32 %v4787, %v5028
        %v5119 = vadd.f32 %v4792, %v5033
        %v5120 = vadd.f32 %v4797, %v5038
        %v5121 = vadd.f32 %v4802, %v5043
        %v5122 = vadd.f32 %v4807, %v5048
        %v5123 = vadd.f32 %v4812, %v5053
        %v5124 = vadd.f32 %v4817, %v5058
        %v5125 = vadd.f32 %v4822, %v5063
        %v5126 = vadd.f32 %v4827, %v5068
        %v5127 = vadd.f32 %v4832, %v5073
        %v5128 = vadd.f32 %v4837, %v5078
        %v5129 = vadd.f32 %v4842, %v5083
        %v5130 = vadd.f32 %v4847, %v5088
        %v5131 = vadd.f32 %v4852, %v5093
        %v5132 = vadd.f32 %v4857, %v5098
        %v5133 = vld [vmem:[#allocation8 + $0x180] sm:$0xff]
        %v5134 = vld [vmem:[#allocation8 + $0x188] sm:$0xff]
        %v5135 = vld [vmem:[#allocation8 + $0x190] sm:$0xff]
        %v5136 = vld [vmem:[#allocation8 + $0x198] sm:$0xff]
        %v5137 = vld [vmem:[#allocation8 + $0x1a0] sm:$0xff]
        %v5138 = vld [vmem:[#allocation8 + $0x1a8] sm:$0xff]
        %v5139 = vld [vmem:[#allocation8 + $0x1b0] sm:$0xff]
        %v5140 = vld [vmem:[#allocation8 + $0x1b8] sm:$0xff]
        %v5141 = vld [vmem:[#allocation8 + $0x1c0] sm:$0xff]
        %v5142 = vld [vmem:[#allocation8 + $0x1c8] sm:$0xff]
        %v5143 = vld [vmem:[#allocation8 + $0x1d0] sm:$0xff]
        %v5144 = vld [vmem:[#allocation8 + $0x1d8] sm:$0xff]
        %v5145 = vld [vmem:[#allocation8 + $0x1e0] sm:$0xff]
        %v5146 = vld [vmem:[#allocation8 + $0x1e8] sm:$0xff]
        %v5147 = vld [vmem:[#allocation8 + $0x1f0] sm:$0xff]
        %v5148 = vld [vmem:[#allocation8 + $0x1f8] sm:$0xff]
        %v5149 = vld [vmem:[#allocation8 + $0x200] sm:$0xff]
        %v5150 = vld [vmem:[#allocation8 + $0x208] sm:$0xff]
        %v5151 = vld [vmem:[#allocation8 + $0x210] sm:$0xff]
        %v5152 = vld [vmem:[#allocation8 + $0x218] sm:$0xff]
        %v5153 = vld [vmem:[#allocation8 + $0x220] sm:$0xff]
        %v5154 = vld [vmem:[#allocation8 + $0x228] sm:$0xff]
        %v5155 = vld [vmem:[#allocation8 + $0x230] sm:$0xff]
        %v5156 = vld [vmem:[#allocation8 + $0x238] sm:$0xff]
        %v5157 = vld [vmem:[#allocation8 + $0x240] sm:$0xff]
        %v5158 = vld [vmem:[#allocation8 + $0x248] sm:$0xff]
        %v5159 = vld [vmem:[#allocation8 + $0x250] sm:$0xff]
        %v5160 = vld [vmem:[#allocation8 + $0x258] sm:$0xff]
        %v5161 = vld [vmem:[#allocation8 + $0x260] sm:$0xff]
        %v5162 = vld [vmem:[#allocation8 + $0x268] sm:$0xff]
        %v5163 = vld [vmem:[#allocation8 + $0x270] sm:$0xff]
        %v5164 = vld [vmem:[#allocation8 + $0x278] sm:$0xff]
        %5165 = vmatprep.subr.mxu0 0.0
        %5166 = vmatpush1.msra.mxu0 %v5164
        %5167 = vmatprep.subr.mxu0 0.0
        %5168 = vmatpush1.msra.mxu0 %v5163
        %5169 = vmatprep.subr.mxu0 0.0
        %5170 = vmatpush1.msra.mxu0 %v5162
        %5171 = vmatprep.subr.mxu0 0.0
        %5172 = vmatpush1.msra.mxu0 %v5161
        %5173 = vmatprep.subr.mxu0 0.0
        %5174 = vmatpush1.msra.mxu0 %v5160
        %5175 = vmatprep.subr.mxu0 0.0
        %5176 = vmatpush1.msra.mxu0 %v5159
        %5177 = vmatprep.subr.mxu0 0.0
        %5178 = vmatpush1.msra.mxu0 %v5158
        %5179 = vmatprep.subr.mxu0 0.0
        %5180 = vmatpush1.msra.mxu0 %v5157
        %5181 = vmatprep.subr.mxu0 0.0
        %5182 = vmatpush1.msra.mxu0 %v5156
        %5183 = vmatprep.subr.mxu0 0.0
        %5184 = vmatpush1.msra.mxu0 %v5155
        %5185 = vmatprep.subr.mxu0 0.0
        %5186 = vmatpush1.msra.mxu0 %v5154
        %5187 = vmatprep.subr.mxu0 0.0
        %5188 = vmatpush1.msra.mxu0 %v5153
        %5189 = vmatprep.subr.mxu0 0.0
        %5190 = vmatpush1.msra.mxu0 %v5152
        %5191 = vmatprep.subr.mxu0 0.0
        %5192 = vmatpush1.msra.mxu0 %v5151
        %5193 = vmatprep.subr.mxu0 0.0
        %5194 = vmatpush1.msra.mxu0 %v5150
        %5195 = vmatprep.subr.mxu0 0.0
        %5196 = vmatpush1.msra.mxu0 %v5149
        %5197 = vmatprep.subr.mxu0 0.0
        %5198 = vmatpush2.msra.mxu0 0.0
        %5199 = vmatprep.subr.mxu0 0.0
        %5200 = vmatpush2.msra.mxu0 0.0
        %5201 = vmatprep.subr.mxu0 0.0
        %5202 = vmatpush2.msra.mxu0 0.0
        %5203 = vmatprep.subr.mxu0 0.0
        %5204 = vmatpush2.msra.mxu0 0.0
        %5205 = vmatprep.subr.mxu0 0.0
        %5206 = vmatpush2.msra.mxu0 0.0
        %5207 = vmatprep.subr.mxu0 0.0
        %5208 = vmatpush2.msra.mxu0 0.0
        %5209 = vmatprep.subr.mxu0 0.0
        %5210 = vmatpush2.msra.mxu0 0.0
        %5211 = vmatprep.subr.mxu0 0.0
        %5212 = vmatpush2.msra.mxu0 0.0
        %5213 = vmatprep.subr.mxu0 0.0
        %5214 = vmatpush2.msra.mxu0 0.0
        %5215 = vmatprep.subr.mxu0 0.0
        %5216 = vmatpush2.msra.mxu0 0.0
        %5217 = vmatprep.subr.mxu0 0.0
        %5218 = vmatpush2.msra.mxu0 0.0
        %5219 = vmatprep.subr.mxu0 0.0
        %5220 = vmatpush2.msra.mxu0 0.0
        %5221 = vmatprep.subr.mxu0 0.0
        %5222 = vmatpush2.msra.mxu0 0.0
        %5223 = vmatprep.subr.mxu0 0.0
        %5224 = vmatpush2.msra.mxu0 0.0
        %5225 = vmatprep.subr.mxu0 0.0
        %5226 = vmatpush2.msra.mxu0 0.0
        %5227 = vmatprep.subr.mxu0 0.0
        %5228 = vmatpush2.msra.mxu0 0.0
        %5229 = vmatprep.mubr.f32.mxu0 0.0
        %5230 = vmatmul.mubr.f32.gmra.mxu0 %v4154
        %v5231 = vpop.f32.mrf.mxu0
        %v5232 = vadd.f32 0.0, %v5231
        %v5233 = vpop.f32.mrf.mxu0
        %5234 = vmatprep.mubr.f32.mxu0 0.0
        %5235 = vmatmul.mubr.f32.gmra.mxu0 %v4155
        %v5236 = vpop.f32.mrf.mxu0
        %v5237 = vadd.f32 0.0, %v5236
        %v5238 = vpop.f32.mrf.mxu0
        %5239 = vmatprep.mubr.f32.mxu0 0.0
        %5240 = vmatmul.mubr.f32.gmra.mxu0 %v4156
        %v5241 = vpop.f32.mrf.mxu0
        %v5242 = vadd.f32 0.0, %v5241
        %v5243 = vpop.f32.mrf.mxu0
        %5244 = vmatprep.mubr.f32.mxu0 0.0
        %5245 = vmatmul.mubr.f32.gmra.mxu0 %v4157
        %v5246 = vpop.f32.mrf.mxu0
        %v5247 = vadd.f32 0.0, %v5246
        %v5248 = vpop.f32.mrf.mxu0
        %5249 = vmatprep.mubr.f32.mxu0 0.0
        %5250 = vmatmul.mubr.f32.gmra.mxu0 %v4158
        %v5251 = vpop.f32.mrf.mxu0
        %v5252 = vadd.f32 0.0, %v5251
        %v5253 = vpop.f32.mrf.mxu0
        %5254 = vmatprep.mubr.f32.mxu0 0.0
        %5255 = vmatmul.mubr.f32.gmra.mxu0 %v4159
        %v5256 = vpop.f32.mrf.mxu0
        %v5257 = vadd.f32 0.0, %v5256
        %v5258 = vpop.f32.mrf.mxu0
        %5259 = vmatprep.mubr.f32.mxu0 0.0
        %5260 = vmatmul.mubr.f32.gmra.mxu0 %v4160
        %v5261 = vpop.f32.mrf.mxu0
        %v5262 = vadd.f32 0.0, %v5261
        %v5263 = vpop.f32.mrf.mxu0
        %5264 = vmatprep.mubr.f32.mxu0 0.0
        %5265 = vmatmul.mubr.f32.gmra.mxu0 %v4161
        %v5266 = vpop.f32.mrf.mxu0
        %v5267 = vadd.f32 0.0, %v5266
        %v5268 = vpop.f32.mrf.mxu0
        %5269 = vmatprep.mubr.f32.mxu0 0.0
        %5270 = vmatmul.mubr.f32.gmra.mxu0 %v4162
        %v5271 = vpop.f32.mrf.mxu0
        %v5272 = vadd.f32 0.0, %v5271
        %v5273 = vpop.f32.mrf.mxu0
        %5274 = vmatprep.mubr.f32.mxu0 0.0
        %5275 = vmatmul.mubr.f32.gmra.mxu0 %v4163
        %v5276 = vpop.f32.mrf.mxu0
        %v5277 = vadd.f32 0.0, %v5276
        %v5278 = vpop.f32.mrf.mxu0
        %5279 = vmatprep.mubr.f32.mxu0 0.0
        %5280 = vmatmul.mubr.f32.gmra.mxu0 %v4164
        %v5281 = vpop.f32.mrf.mxu0
        %v5282 = vadd.f32 0.0, %v5281
        %v5283 = vpop.f32.mrf.mxu0
        %5284 = vmatprep.mubr.f32.mxu0 0.0
        %5285 = vmatmul.mubr.f32.gmra.mxu0 %v4165
        %v5286 = vpop.f32.mrf.mxu0
        %v5287 = vadd.f32 0.0, %v5286
        %v5288 = vpop.f32.mrf.mxu0
        %5289 = vmatprep.mubr.f32.mxu0 0.0
        %5290 = vmatmul.mubr.f32.gmra.mxu0 %v4166
        %v5291 = vpop.f32.mrf.mxu0
        %v5292 = vadd.f32 0.0, %v5291
        %v5293 = vpop.f32.mrf.mxu0
        %5294 = vmatprep.mubr.f32.mxu0 0.0
        %5295 = vmatmul.mubr.f32.gmra.mxu0 %v4167
        %v5296 = vpop.f32.mrf.mxu0
        %v5297 = vadd.f32 0.0, %v5296
        %v5298 = vpop.f32.mrf.mxu0
        %5299 = vmatprep.mubr.f32.mxu0 0.0
        %5300 = vmatmul.mubr.f32.gmra.mxu0 %v4168
        %v5301 = vpop.f32.mrf.mxu0
        %v5302 = vadd.f32 0.0, %v5301
        %v5303 = vpop.f32.mrf.mxu0
        %5304 = vmatprep.mubr.f32.mxu0 0.0
        %5305 = vmatmul.mubr.f32.gmra.mxu0 %v4169
        %v5306 = vpop.f32.mrf.mxu0
        %v5307 = vadd.f32 0.0, %v5306
        %v5308 = vpop.f32.mrf.mxu0
        %5309 = vmatprep.mubr.f32.mxu0 0.0
        %5310 = vmatmul.mubr.f32.gmra.mxu0 %v4170
        %v5311 = vpop.f32.mrf.mxu0
        %v5312 = vadd.f32 0.0, %v5311
        %v5313 = vpop.f32.mrf.mxu0
        %5314 = vmatprep.mubr.f32.mxu0 0.0
        %5315 = vmatmul.mubr.f32.gmra.mxu0 %v4171
        %v5316 = vpop.f32.mrf.mxu0
        %v5317 = vadd.f32 0.0, %v5316
        %v5318 = vpop.f32.mrf.mxu0
        %5319 = vmatprep.mubr.f32.mxu0 0.0
        %5320 = vmatmul.mubr.f32.gmra.mxu0 %v4172
        %v5321 = vpop.f32.mrf.mxu0
        %v5322 = vadd.f32 0.0, %v5321
        %v5323 = vpop.f32.mrf.mxu0
        %5324 = vmatprep.mubr.f32.mxu0 0.0
        %5325 = vmatmul.mubr.f32.gmra.mxu0 %v4173
        %v5326 = vpop.f32.mrf.mxu0
        %v5327 = vadd.f32 0.0, %v5326
        %v5328 = vpop.f32.mrf.mxu0
        %5329 = vmatprep.mubr.f32.mxu0 0.0
        %5330 = vmatmul.mubr.f32.gmra.mxu0 %v4174
        %v5331 = vpop.f32.mrf.mxu0
        %v5332 = vadd.f32 0.0, %v5331
        %v5333 = vpop.f32.mrf.mxu0
        %5334 = vmatprep.mubr.f32.mxu0 0.0
        %5335 = vmatmul.mubr.f32.gmra.mxu0 %v4175
        %v5336 = vpop.f32.mrf.mxu0
        %v5337 = vadd.f32 0.0, %v5336
        %v5338 = vpop.f32.mrf.mxu0
        %5339 = vmatprep.mubr.f32.mxu0 0.0
        %5340 = vmatmul.mubr.f32.gmra.mxu0 %v4176
        %v5341 = vpop.f32.mrf.mxu0
        %v5342 = vadd.f32 0.0, %v5341
        %v5343 = vpop.f32.mrf.mxu0
        %5344 = vmatprep.mubr.f32.mxu0 0.0
        %5345 = vmatmul.mubr.f32.gmra.mxu0 %v4177
        %v5346 = vpop.f32.mrf.mxu0
        %v5347 = vadd.f32 0.0, %v5346
        %v5348 = vpop.f32.mrf.mxu0
        %5349 = vmatprep.mubr.f32.mxu0 0.0
        %5350 = vmatmul.mubr.f32.gmra.mxu0 %v4178
        %v5351 = vpop.f32.mrf.mxu0
        %v5352 = vadd.f32 0.0, %v5351
        %v5353 = vpop.f32.mrf.mxu0
        %5354 = vmatprep.mubr.f32.mxu0 0.0
        %5355 = vmatmul.mubr.f32.gmra.mxu0 %v4179
        %v5356 = vpop.f32.mrf.mxu0
        %v5357 = vadd.f32 0.0, %v5356
        %v5358 = vpop.f32.mrf.mxu0
        %5359 = vmatprep.mubr.f32.mxu0 0.0
        %5360 = vmatmul.mubr.f32.gmra.mxu0 %v4180
        %v5361 = vpop.f32.mrf.mxu0
        %v5362 = vadd.f32 0.0, %v5361
        %v5363 = vpop.f32.mrf.mxu0
        %5364 = vmatprep.mubr.f32.mxu0 0.0
        %5365 = vmatmul.mubr.f32.gmra.mxu0 %v4181
        %v5366 = vpop.f32.mrf.mxu0
        %v5367 = vadd.f32 0.0, %v5366
        %v5368 = vpop.f32.mrf.mxu0
        %5369 = vmatprep.mubr.f32.mxu0 0.0
        %5370 = vmatmul.mubr.f32.gmra.mxu0 %v4182
        %v5371 = vpop.f32.mrf.mxu0
        %v5372 = vadd.f32 0.0, %v5371
        %v5373 = vpop.f32.mrf.mxu0
        %5374 = vmatprep.mubr.f32.mxu0 0.0
        %5375 = vmatmul.mubr.f32.gmra.mxu0 %v4183
        %v5376 = vpop.f32.mrf.mxu0
        %v5377 = vadd.f32 0.0, %v5376
        %v5378 = vpop.f32.mrf.mxu0
        %5379 = vmatprep.mubr.f32.mxu0 0.0
        %5380 = vmatmul.mubr.f32.gmra.mxu0 %v4184
        %v5381 = vpop.f32.mrf.mxu0
        %v5382 = vadd.f32 0.0, %v5381
        %v5383 = vpop.f32.mrf.mxu0
        %5384 = vmatprep.mubr.f32.mxu0 0.0
        %5385 = vmatmul.mubr.f32.gmra.mxu0 %v4185
        %v5386 = vpop.f32.mrf.mxu0
        %v5387 = vadd.f32 0.0, %v5386
        %v5388 = vpop.f32.mrf.mxu0
        %5389 = vdwg.mxu0
        %5390 = vmatprep.subr.mxu0 0.0
        %5391 = vmatpush1.msra.mxu0 %v5148
        %5392 = vmatprep.subr.mxu0 0.0
        %5393 = vmatpush1.msra.mxu0 %v5147
        %5394 = vmatprep.subr.mxu0 0.0
        %5395 = vmatpush1.msra.mxu0 %v5146
        %5396 = vmatprep.subr.mxu0 0.0
        %5397 = vmatpush1.msra.mxu0 %v5145
        %5398 = vmatprep.subr.mxu0 0.0
        %5399 = vmatpush1.msra.mxu0 %v5144
        %5400 = vmatprep.subr.mxu0 0.0
        %5401 = vmatpush1.msra.mxu0 %v5143
        %5402 = vmatprep.subr.mxu0 0.0
        %5403 = vmatpush1.msra.mxu0 %v5142
        %5404 = vmatprep.subr.mxu0 0.0
        %5405 = vmatpush1.msra.mxu0 %v5141
        %5406 = vmatprep.subr.mxu0 0.0
        %5407 = vmatpush1.msra.mxu0 %v5140
        %5408 = vmatprep.subr.mxu0 0.0
        %5409 = vmatpush1.msra.mxu0 %v5139
        %5410 = vmatprep.subr.mxu0 0.0
        %5411 = vmatpush1.msra.mxu0 %v5138
        %5412 = vmatprep.subr.mxu0 0.0
        %5413 = vmatpush1.msra.mxu0 %v5137
        %5414 = vmatprep.subr.mxu0 0.0
        %5415 = vmatpush1.msra.mxu0 %v5136
        %5416 = vmatprep.subr.mxu0 0.0
        %5417 = vmatpush1.msra.mxu0 %v5135
        %5418 = vmatprep.subr.mxu0 0.0
        %5419 = vmatpush1.msra.mxu0 %v5134
        %5420 = vmatprep.subr.mxu0 0.0
        %5421 = vmatpush1.msra.mxu0 %v5133
        %5422 = vmatprep.subr.mxu0 0.0
        %5423 = vmatpush2.msra.mxu0 0.0
        %5424 = vmatprep.subr.mxu0 0.0
        %5425 = vmatpush2.msra.mxu0 0.0
        %5426 = vmatprep.subr.mxu0 0.0
        %5427 = vmatpush2.msra.mxu0 0.0
        %5428 = vmatprep.subr.mxu0 0.0
        %5429 = vmatpush2.msra.mxu0 0.0
        %5430 = vmatprep.subr.mxu0 0.0
        %5431 = vmatpush2.msra.mxu0 0.0
        %5432 = vmatprep.subr.mxu0 0.0
        %5433 = vmatpush2.msra.mxu0 0.0
        %5434 = vmatprep.subr.mxu0 0.0
        %5435 = vmatpush2.msra.mxu0 0.0
        %5436 = vmatprep.subr.mxu0 0.0
        %5437 = vmatpush2.msra.mxu0 0.0
        %5438 = vmatprep.subr.mxu0 0.0
        %5439 = vmatpush2.msra.mxu0 0.0
        %5440 = vmatprep.subr.mxu0 0.0
        %5441 = vmatpush2.msra.mxu0 0.0
        %5442 = vmatprep.subr.mxu0 0.0
        %5443 = vmatpush2.msra.mxu0 0.0
        %5444 = vmatprep.subr.mxu0 0.0
        %5445 = vmatpush2.msra.mxu0 0.0
        %5446 = vmatprep.subr.mxu0 0.0
        %5447 = vmatpush2.msra.mxu0 0.0
        %5448 = vmatprep.subr.mxu0 0.0
        %5449 = vmatpush2.msra.mxu0 0.0
        %5450 = vmatprep.subr.mxu0 0.0
        %5451 = vmatpush2.msra.mxu0 0.0
        %5452 = vmatprep.subr.mxu0 0.0
        %5453 = vmatpush2.msra.mxu0 0.0
        %5454 = vmatprep.mubr.f32.mxu0 0.0
        %5455 = vmatmul.mubr.f32.gmra.mxu0 %v4250
        %v5456 = vpop.f32.mrf.mxu0
        %v5457 = vadd.f32 %v5232, %v5456
        %v5458 = vpop.f32.mrf.mxu0
        %5459 = vmatprep.mubr.f32.mxu0 0.0
        %5460 = vmatmul.mubr.f32.gmra.mxu0 %v4251
        %v5461 = vpop.f32.mrf.mxu0
        %v5462 = vadd.f32 %v5237, %v5461
        %v5463 = vpop.f32.mrf.mxu0
        %5464 = vmatprep.mubr.f32.mxu0 0.0
        %5465 = vmatmul.mubr.f32.gmra.mxu0 %v4252
        %v5466 = vpop.f32.mrf.mxu0
        %v5467 = vadd.f32 %v5242, %v5466
        %v5468 = vpop.f32.mrf.mxu0
        %5469 = vmatprep.mubr.f32.mxu0 0.0
        %5470 = vmatmul.mubr.f32.gmra.mxu0 %v4253
        %v5471 = vpop.f32.mrf.mxu0
        %v5472 = vadd.f32 %v5247, %v5471
        %v5473 = vpop.f32.mrf.mxu0
        %5474 = vmatprep.mubr.f32.mxu0 0.0
        %5475 = vmatmul.mubr.f32.gmra.mxu0 %v4254
        %v5476 = vpop.f32.mrf.mxu0
        %v5477 = vadd.f32 %v5252, %v5476
        %v5478 = vpop.f32.mrf.mxu0
        %5479 = vmatprep.mubr.f32.mxu0 0.0
        %5480 = vmatmul.mubr.f32.gmra.mxu0 %v4255
        %v5481 = vpop.f32.mrf.mxu0
        %v5482 = vadd.f32 %v5257, %v5481
        %v5483 = vpop.f32.mrf.mxu0
        %5484 = vmatprep.mubr.f32.mxu0 0.0
        %5485 = vmatmul.mubr.f32.gmra.mxu0 %v4256
        %v5486 = vpop.f32.mrf.mxu0
        %v5487 = vadd.f32 %v5262, %v5486
        %v5488 = vpop.f32.mrf.mxu0
        %5489 = vmatprep.mubr.f32.mxu0 0.0
        %5490 = vmatmul.mubr.f32.gmra.mxu0 %v4257
        %v5491 = vpop.f32.mrf.mxu0
        %v5492 = vadd.f32 %v5267, %v5491
        %v5493 = vpop.f32.mrf.mxu0
        %5494 = vmatprep.mubr.f32.mxu0 0.0
        %5495 = vmatmul.mubr.f32.gmra.mxu0 %v4258
        %v5496 = vpop.f32.mrf.mxu0
        %v5497 = vadd.f32 %v5272, %v5496
        %v5498 = vpop.f32.mrf.mxu0
        %5499 = vmatprep.mubr.f32.mxu0 0.0
        %5500 = vmatmul.mubr.f32.gmra.mxu0 %v4259
        %v5501 = vpop.f32.mrf.mxu0
        %v5502 = vadd.f32 %v5277, %v5501
        %v5503 = vpop.f32.mrf.mxu0
        %5504 = vmatprep.mubr.f32.mxu0 0.0
        %5505 = vmatmul.mubr.f32.gmra.mxu0 %v4260
        %v5506 = vpop.f32.mrf.mxu0
        %v5507 = vadd.f32 %v5282, %v5506
        %v5508 = vpop.f32.mrf.mxu0
        %5509 = vmatprep.mubr.f32.mxu0 0.0
        %5510 = vmatmul.mubr.f32.gmra.mxu0 %v4261
        %v5511 = vpop.f32.mrf.mxu0
        %v5512 = vadd.f32 %v5287, %v5511
        %v5513 = vpop.f32.mrf.mxu0
        %5514 = vmatprep.mubr.f32.mxu0 0.0
        %5515 = vmatmul.mubr.f32.gmra.mxu0 %v4262
        %v5516 = vpop.f32.mrf.mxu0
        %v5517 = vadd.f32 %v5292, %v5516
        %v5518 = vpop.f32.mrf.mxu0
        %5519 = vmatprep.mubr.f32.mxu0 0.0
        %5520 = vmatmul.mubr.f32.gmra.mxu0 %v4263
        %v5521 = vpop.f32.mrf.mxu0
        %v5522 = vadd.f32 %v5297, %v5521
        %v5523 = vpop.f32.mrf.mxu0
        %5524 = vmatprep.mubr.f32.mxu0 0.0
        %5525 = vmatmul.mubr.f32.gmra.mxu0 %v4264
        %v5526 = vpop.f32.mrf.mxu0
        %v5527 = vadd.f32 %v5302, %v5526
        %v5528 = vpop.f32.mrf.mxu0
        %5529 = vmatprep.mubr.f32.mxu0 0.0
        %5530 = vmatmul.mubr.f32.gmra.mxu0 %v4265
        %v5531 = vpop.f32.mrf.mxu0
        %v5532 = vadd.f32 %v5307, %v5531
        %v5533 = vpop.f32.mrf.mxu0
        %5534 = vmatprep.mubr.f32.mxu0 0.0
        %5535 = vmatmul.mubr.f32.gmra.mxu0 %v4266
        %v5536 = vpop.f32.mrf.mxu0
        %v5537 = vadd.f32 %v5312, %v5536
        %v5538 = vpop.f32.mrf.mxu0
        %5539 = vmatprep.mubr.f32.mxu0 0.0
        %5540 = vmatmul.mubr.f32.gmra.mxu0 %v4267
        %v5541 = vpop.f32.mrf.mxu0
        %v5542 = vadd.f32 %v5317, %v5541
        %v5543 = vpop.f32.mrf.mxu0
        %5544 = vmatprep.mubr.f32.mxu0 0.0
        %5545 = vmatmul.mubr.f32.gmra.mxu0 %v4268
        %v5546 = vpop.f32.mrf.mxu0
        %v5547 = vadd.f32 %v5322, %v5546
        %v5548 = vpop.f32.mrf.mxu0
        %5549 = vmatprep.mubr.f32.mxu0 0.0
        %5550 = vmatmul.mubr.f32.gmra.mxu0 %v4269
        %v5551 = vpop.f32.mrf.mxu0
        %v5552 = vadd.f32 %v5327, %v5551
        %v5553 = vpop.f32.mrf.mxu0
        %5554 = vmatprep.mubr.f32.mxu0 0.0
        %5555 = vmatmul.mubr.f32.gmra.mxu0 %v4270
        %v5556 = vpop.f32.mrf.mxu0
        %v5557 = vadd.f32 %v5332, %v5556
        %v5558 = vpop.f32.mrf.mxu0
        %5559 = vmatprep.mubr.f32.mxu0 0.0
        %5560 = vmatmul.mubr.f32.gmra.mxu0 %v4271
        %v5561 = vpop.f32.mrf.mxu0
        %v5562 = vadd.f32 %v5337, %v5561
        %v5563 = vpop.f32.mrf.mxu0
        %5564 = vmatprep.mubr.f32.mxu0 0.0
        %5565 = vmatmul.mubr.f32.gmra.mxu0 %v4272
        %v5566 = vpop.f32.mrf.mxu0
        %v5567 = vadd.f32 %v5342, %v5566
        %v5568 = vpop.f32.mrf.mxu0
        %5569 = vmatprep.mubr.f32.mxu0 0.0
        %5570 = vmatmul.mubr.f32.gmra.mxu0 %v4273
        %v5571 = vpop.f32.mrf.mxu0
        %v5572 = vadd.f32 %v5347, %v5571
        %v5573 = vpop.f32.mrf.mxu0
        %5574 = vmatprep.mubr.f32.mxu0 0.0
        %5575 = vmatmul.mubr.f32.gmra.mxu0 %v4274
        %v5576 = vpop.f32.mrf.mxu0
        %v5577 = vadd.f32 %v5352, %v5576
        %v5578 = vpop.f32.mrf.mxu0
        %5579 = vmatprep.mubr.f32.mxu0 0.0
        %5580 = vmatmul.mubr.f32.gmra.mxu0 %v4275
        %v5581 = vpop.f32.mrf.mxu0
        %v5582 = vadd.f32 %v5357, %v5581
        %v5583 = vpop.f32.mrf.mxu0
        %5584 = vmatprep.mubr.f32.mxu0 0.0
        %5585 = vmatmul.mubr.f32.gmra.mxu0 %v4276
        %v5586 = vpop.f32.mrf.mxu0
        %v5587 = vadd.f32 %v5362, %v5586
        %v5588 = vpop.f32.mrf.mxu0
        %5589 = vmatprep.mubr.f32.mxu0 0.0
        %5590 = vmatmul.mubr.f32.gmra.mxu0 %v4277
        %v5591 = vpop.f32.mrf.mxu0
        %v5592 = vadd.f32 %v5367, %v5591
        %v5593 = vpop.f32.mrf.mxu0
        %5594 = vmatprep.mubr.f32.mxu0 0.0
        %5595 = vmatmul.mubr.f32.gmra.mxu0 %v4278
        %v5596 = vpop.f32.mrf.mxu0
        %v5597 = vadd.f32 %v5372, %v5596
        %v5598 = vpop.f32.mrf.mxu0
        %5599 = vmatprep.mubr.f32.mxu0 0.0
        %5600 = vmatmul.mubr.f32.gmra.mxu0 %v4279
        %v5601 = vpop.f32.mrf.mxu0
        %v5602 = vadd.f32 %v5377, %v5601
        %v5603 = vpop.f32.mrf.mxu0
        %5604 = vmatprep.mubr.f32.mxu0 0.0
        %5605 = vmatmul.mubr.f32.gmra.mxu0 %v4280
        %v5606 = vpop.f32.mrf.mxu0
        %v5607 = vadd.f32 %v5382, %v5606
        %v5608 = vpop.f32.mrf.mxu0
        %5609 = vmatprep.mubr.f32.mxu0 0.0
        %5610 = vmatmul.mubr.f32.gmra.mxu0 %v4281
        %v5611 = vpop.f32.mrf.mxu0
        %v5612 = vadd.f32 %v5387, %v5611
        %v5613 = vpop.f32.mrf.mxu0
        %5614 = vdwg.mxu0
        %v5615 = vld [vmem:[#allocation8 + $0x280] sm:$0xff]
        %v5616 = vld [vmem:[#allocation8 + $0x288] sm:$0xff]
        %v5617 = vld [vmem:[#allocation8 + $0x290] sm:$0xff]
        %v5618 = vld [vmem:[#allocation8 + $0x298] sm:$0xff]
        %v5619 = vld [vmem:[#allocation8 + $0x2a0] sm:$0xff]
        %v5620 = vld [vmem:[#allocation8 + $0x2a8] sm:$0xff]
        %v5621 = vld [vmem:[#allocation8 + $0x2b0] sm:$0xff]
        %v5622 = vld [vmem:[#allocation8 + $0x2b8] sm:$0xff]
        %v5623 = vld [vmem:[#allocation8 + $0x2c0] sm:$0xff]
        %v5624 = vld [vmem:[#allocation8 + $0x2c8] sm:$0xff]
        %v5625 = vld [vmem:[#allocation8 + $0x2d0] sm:$0xff]
        %v5626 = vld [vmem:[#allocation8 + $0x2d8] sm:$0xff]
        %v5627 = vld [vmem:[#allocation8 + $0x2e0] sm:$0xff]
        %v5628 = vld [vmem:[#allocation8 + $0x2e8] sm:$0xff]
        %v5629 = vld [vmem:[#allocation8 + $0x2f0] sm:$0xff]
        %v5630 = vld [vmem:[#allocation8 + $0x2f8] sm:$0xff]
        %5631 = vmatprep.subr.mxu0 0.0
        %5632 = vmatpush1.msra.mxu0 %v5630
        %5633 = vmatprep.subr.mxu0 0.0
        %5634 = vmatpush1.msra.mxu0 %v5629
        %5635 = vmatprep.subr.mxu0 0.0
        %5636 = vmatpush1.msra.mxu0 %v5628
        %5637 = vmatprep.subr.mxu0 0.0
        %5638 = vmatpush1.msra.mxu0 %v5627
        %5639 = vmatprep.subr.mxu0 0.0
        %5640 = vmatpush1.msra.mxu0 %v5626
        %5641 = vmatprep.subr.mxu0 0.0
        %5642 = vmatpush1.msra.mxu0 %v5625
        %5643 = vmatprep.subr.mxu0 0.0
        %5644 = vmatpush1.msra.mxu0 %v5624
        %5645 = vmatprep.subr.mxu0 0.0
        %5646 = vmatpush1.msra.mxu0 %v5623
        %5647 = vmatprep.subr.mxu0 0.0
        %5648 = vmatpush1.msra.mxu0 %v5622
        %5649 = vmatprep.subr.mxu0 0.0
        %5650 = vmatpush1.msra.mxu0 %v5621
        %5651 = vmatprep.subr.mxu0 0.0
        %5652 = vmatpush1.msra.mxu0 %v5620
        %5653 = vmatprep.subr.mxu0 0.0
        %5654 = vmatpush1.msra.mxu0 %v5619
        %5655 = vmatprep.subr.mxu0 0.0
        %5656 = vmatpush1.msra.mxu0 %v5618
        %5657 = vmatprep.subr.mxu0 0.0
        %5658 = vmatpush1.msra.mxu0 %v5617
        %5659 = vmatprep.subr.mxu0 0.0
        %5660 = vmatpush1.msra.mxu0 %v5616
        %5661 = vmatprep.subr.mxu0 0.0
        %5662 = vmatpush1.msra.mxu0 %v5615
        %5663 = vmatprep.subr.mxu0 0.0
        %5664 = vmatpush2.msra.mxu0 0.0
        %5665 = vmatprep.subr.mxu0 0.0
        %5666 = vmatpush2.msra.mxu0 0.0
        %5667 = vmatprep.subr.mxu0 0.0
        %5668 = vmatpush2.msra.mxu0 0.0
        %5669 = vmatprep.subr.mxu0 0.0
        %5670 = vmatpush2.msra.mxu0 0.0
        %5671 = vmatprep.subr.mxu0 0.0
        %5672 = vmatpush2.msra.mxu0 0.0
        %5673 = vmatprep.subr.mxu0 0.0
        %5674 = vmatpush2.msra.mxu0 0.0
        %5675 = vmatprep.subr.mxu0 0.0
        %5676 = vmatpush2.msra.mxu0 0.0
        %5677 = vmatprep.subr.mxu0 0.0
        %5678 = vmatpush2.msra.mxu0 0.0
        %5679 = vmatprep.subr.mxu0 0.0
        %5680 = vmatpush2.msra.mxu0 0.0
        %5681 = vmatprep.subr.mxu0 0.0
        %5682 = vmatpush2.msra.mxu0 0.0
        %5683 = vmatprep.subr.mxu0 0.0
        %5684 = vmatpush2.msra.mxu0 0.0
        %5685 = vmatprep.subr.mxu0 0.0
        %5686 = vmatpush2.msra.mxu0 0.0
        %5687 = vmatprep.subr.mxu0 0.0
        %5688 = vmatpush2.msra.mxu0 0.0
        %5689 = vmatprep.subr.mxu0 0.0
        %5690 = vmatpush2.msra.mxu0 0.0
        %5691 = vmatprep.subr.mxu0 0.0
        %5692 = vmatpush2.msra.mxu0 0.0
        %5693 = vmatprep.subr.mxu0 0.0
        %5694 = vmatpush2.msra.mxu0 0.0
        %5695 = vmatprep.mubr.f32.mxu0 0.0
        %5696 = vmatmul.mubr.f32.gmra.mxu0 %v4346
        %v5697 = vpop.f32.mrf.mxu0
        %v5698 = vadd.f32 0.0, %v5697
        %v5699 = vpop.f32.mrf.mxu0
        %5700 = vmatprep.mubr.f32.mxu0 0.0
        %5701 = vmatmul.mubr.f32.gmra.mxu0 %v4347
        %v5702 = vpop.f32.mrf.mxu0
        %v5703 = vadd.f32 0.0, %v5702
        %v5704 = vpop.f32.mrf.mxu0
        %5705 = vmatprep.mubr.f32.mxu0 0.0
        %5706 = vmatmul.mubr.f32.gmra.mxu0 %v4348
        %v5707 = vpop.f32.mrf.mxu0
        %v5708 = vadd.f32 0.0, %v5707
        %v5709 = vpop.f32.mrf.mxu0
        %5710 = vmatprep.mubr.f32.mxu0 0.0
        %5711 = vmatmul.mubr.f32.gmra.mxu0 %v4349
        %v5712 = vpop.f32.mrf.mxu0
        %v5713 = vadd.f32 0.0, %v5712
        %v5714 = vpop.f32.mrf.mxu0
        %5715 = vmatprep.mubr.f32.mxu0 0.0
        %5716 = vmatmul.mubr.f32.gmra.mxu0 %v4350
        %v5717 = vpop.f32.mrf.mxu0
        %v5718 = vadd.f32 0.0, %v5717
        %v5719 = vpop.f32.mrf.mxu0
        %5720 = vmatprep.mubr.f32.mxu0 0.0
        %5721 = vmatmul.mubr.f32.gmra.mxu0 %v4351
        %v5722 = vpop.f32.mrf.mxu0
        %v5723 = vadd.f32 0.0, %v5722
        %v5724 = vpop.f32.mrf.mxu0
        %5725 = vmatprep.mubr.f32.mxu0 0.0
        %5726 = vmatmul.mubr.f32.gmra.mxu0 %v4352
        %v5727 = vpop.f32.mrf.mxu0
        %v5728 = vadd.f32 0.0, %v5727
        %v5729 = vpop.f32.mrf.mxu0
        %5730 = vmatprep.mubr.f32.mxu0 0.0
        %5731 = vmatmul.mubr.f32.gmra.mxu0 %v4353
        %v5732 = vpop.f32.mrf.mxu0
        %v5733 = vadd.f32 0.0, %v5732
        %v5734 = vpop.f32.mrf.mxu0
        %5735 = vmatprep.mubr.f32.mxu0 0.0
        %5736 = vmatmul.mubr.f32.gmra.mxu0 %v4354
        %v5737 = vpop.f32.mrf.mxu0
        %v5738 = vadd.f32 0.0, %v5737
        %v5739 = vpop.f32.mrf.mxu0
        %5740 = vmatprep.mubr.f32.mxu0 0.0
        %5741 = vmatmul.mubr.f32.gmra.mxu0 %v4355
        %v5742 = vpop.f32.mrf.mxu0
        %v5743 = vadd.f32 0.0, %v5742
        %v5744 = vpop.f32.mrf.mxu0
        %5745 = vmatprep.mubr.f32.mxu0 0.0
        %5746 = vmatmul.mubr.f32.gmra.mxu0 %v4356
        %v5747 = vpop.f32.mrf.mxu0
        %v5748 = vadd.f32 0.0, %v5747
        %v5749 = vpop.f32.mrf.mxu0
        %5750 = vmatprep.mubr.f32.mxu0 0.0
        %5751 = vmatmul.mubr.f32.gmra.mxu0 %v4357
        %v5752 = vpop.f32.mrf.mxu0
        %v5753 = vadd.f32 0.0, %v5752
        %v5754 = vpop.f32.mrf.mxu0
        %5755 = vmatprep.mubr.f32.mxu0 0.0
        %5756 = vmatmul.mubr.f32.gmra.mxu0 %v4358
        %v5757 = vpop.f32.mrf.mxu0
        %v5758 = vadd.f32 0.0, %v5757
        %v5759 = vpop.f32.mrf.mxu0
        %5760 = vmatprep.mubr.f32.mxu0 0.0
        %5761 = vmatmul.mubr.f32.gmra.mxu0 %v4359
        %v5762 = vpop.f32.mrf.mxu0
        %v5763 = vadd.f32 0.0, %v5762
        %v5764 = vpop.f32.mrf.mxu0
        %5765 = vmatprep.mubr.f32.mxu0 0.0
        %5766 = vmatmul.mubr.f32.gmra.mxu0 %v4360
        %v5767 = vpop.f32.mrf.mxu0
        %v5768 = vadd.f32 0.0, %v5767
        %v5769 = vpop.f32.mrf.mxu0
        %5770 = vmatprep.mubr.f32.mxu0 0.0
        %5771 = vmatmul.mubr.f32.gmra.mxu0 %v4361
        %v5772 = vpop.f32.mrf.mxu0
        %v5773 = vadd.f32 0.0, %v5772
        %v5774 = vpop.f32.mrf.mxu0
        %5775 = vmatprep.mubr.f32.mxu0 0.0
        %5776 = vmatmul.mubr.f32.gmra.mxu0 %v4362
        %v5777 = vpop.f32.mrf.mxu0
        %v5778 = vadd.f32 0.0, %v5777
        %v5779 = vpop.f32.mrf.mxu0
        %5780 = vmatprep.mubr.f32.mxu0 0.0
        %5781 = vmatmul.mubr.f32.gmra.mxu0 %v4363
        %v5782 = vpop.f32.mrf.mxu0
        %v5783 = vadd.f32 0.0, %v5782
        %v5784 = vpop.f32.mrf.mxu0
        %5785 = vmatprep.mubr.f32.mxu0 0.0
        %5786 = vmatmul.mubr.f32.gmra.mxu0 %v4364
        %v5787 = vpop.f32.mrf.mxu0
        %v5788 = vadd.f32 0.0, %v5787
        %v5789 = vpop.f32.mrf.mxu0
        %5790 = vmatprep.mubr.f32.mxu0 0.0
        %5791 = vmatmul.mubr.f32.gmra.mxu0 %v4365
        %v5792 = vpop.f32.mrf.mxu0
        %v5793 = vadd.f32 0.0, %v5792
        %v5794 = vpop.f32.mrf.mxu0
        %5795 = vmatprep.mubr.f32.mxu0 0.0
        %5796 = vmatmul.mubr.f32.gmra.mxu0 %v4366
        %v5797 = vpop.f32.mrf.mxu0
        %v5798 = vadd.f32 0.0, %v5797
        %v5799 = vpop.f32.mrf.mxu0
        %5800 = vmatprep.mubr.f32.mxu0 0.0
        %5801 = vmatmul.mubr.f32.gmra.mxu0 %v4367
        %v5802 = vpop.f32.mrf.mxu0
        %v5803 = vadd.f32 0.0, %v5802
        %v5804 = vpop.f32.mrf.mxu0
        %5805 = vmatprep.mubr.f32.mxu0 0.0
        %5806 = vmatmul.mubr.f32.gmra.mxu0 %v4368
        %v5807 = vpop.f32.mrf.mxu0
        %v5808 = vadd.f32 0.0, %v5807
        %v5809 = vpop.f32.mrf.mxu0
        %5810 = vmatprep.mubr.f32.mxu0 0.0
        %5811 = vmatmul.mubr.f32.gmra.mxu0 %v4369
        %v5812 = vpop.f32.mrf.mxu0
        %v5813 = vadd.f32 0.0, %v5812
        %v5814 = vpop.f32.mrf.mxu0
        %5815 = vmatprep.mubr.f32.mxu0 0.0
        %5816 = vmatmul.mubr.f32.gmra.mxu0 %v4370
        %v5817 = vpop.f32.mrf.mxu0
        %v5818 = vadd.f32 0.0, %v5817
        %v5819 = vpop.f32.mrf.mxu0
        %5820 = vmatprep.mubr.f32.mxu0 0.0
        %5821 = vmatmul.mubr.f32.gmra.mxu0 %v4371
        %v5822 = vpop.f32.mrf.mxu0
        %v5823 = vadd.f32 0.0, %v5822
        %v5824 = vpop.f32.mrf.mxu0
        %5825 = vmatprep.mubr.f32.mxu0 0.0
        %5826 = vmatmul.mubr.f32.gmra.mxu0 %v4372
        %v5827 = vpop.f32.mrf.mxu0
        %v5828 = vadd.f32 0.0, %v5827
        %v5829 = vpop.f32.mrf.mxu0
        %5830 = vmatprep.mubr.f32.mxu0 0.0
        %5831 = vmatmul.mubr.f32.gmra.mxu0 %v4373
        %v5832 = vpop.f32.mrf.mxu0
        %v5833 = vadd.f32 0.0, %v5832
        %v5834 = vpop.f32.mrf.mxu0
        %5835 = vmatprep.mubr.f32.mxu0 0.0
        %5836 = vmatmul.mubr.f32.gmra.mxu0 %v4374
        %v5837 = vpop.f32.mrf.mxu0
        %v5838 = vadd.f32 0.0, %v5837
        %v5839 = vpop.f32.mrf.mxu0
        %5840 = vmatprep.mubr.f32.mxu0 0.0
        %5841 = vmatmul.mubr.f32.gmra.mxu0 %v4375
        %v5842 = vpop.f32.mrf.mxu0
        %v5843 = vadd.f32 0.0, %v5842
        %v5844 = vpop.f32.mrf.mxu0
        %5845 = vmatprep.mubr.f32.mxu0 0.0
        %5846 = vmatmul.mubr.f32.gmra.mxu0 %v4376
        %v5847 = vpop.f32.mrf.mxu0
        %v5848 = vadd.f32 0.0, %v5847
        %v5849 = vpop.f32.mrf.mxu0
        %5850 = vmatprep.mubr.f32.mxu0 0.0
        %5851 = vmatmul.mubr.f32.gmra.mxu0 %v4377
        %v5852 = vpop.f32.mrf.mxu0
        %v5853 = vadd.f32 0.0, %v5852
        %v5854 = vpop.f32.mrf.mxu0
        %5855 = vdwg.mxu0
        %v5856 = vadd.f32 %v5457, %v5698
        %v5857 = vadd.f32 %v5462, %v5703
        %v5858 = vadd.f32 %v5467, %v5708
        %v5859 = vadd.f32 %v5472, %v5713
        %v5860 = vadd.f32 %v5477, %v5718
        %v5861 = vadd.f32 %v5482, %v5723
        %v5862 = vadd.f32 %v5487, %v5728
        %v5863 = vadd.f32 %v5492, %v5733
        %v5864 = vadd.f32 %v5497, %v5738
        %v5865 = vadd.f32 %v5502, %v5743
        %v5866 = vadd.f32 %v5507, %v5748
        %v5867 = vadd.f32 %v5512, %v5753
        %v5868 = vadd.f32 %v5517, %v5758
        %v5869 = vadd.f32 %v5522, %v5763
        %v5870 = vadd.f32 %v5527, %v5768
        %v5871 = vadd.f32 %v5532, %v5773
        %v5872 = vadd.f32 %v5537, %v5778
        %v5873 = vadd.f32 %v5542, %v5783
        %v5874 = vadd.f32 %v5547, %v5788
        %v5875 = vadd.f32 %v5552, %v5793
        %v5876 = vadd.f32 %v5557, %v5798
        %v5877 = vadd.f32 %v5562, %v5803
        %v5878 = vadd.f32 %v5567, %v5808
        %v5879 = vadd.f32 %v5572, %v5813
        %v5880 = vadd.f32 %v5577, %v5818
        %v5881 = vadd.f32 %v5582, %v5823
        %v5882 = vadd.f32 %v5587, %v5828
        %v5883 = vadd.f32 %v5592, %v5833
        %v5884 = vadd.f32 %v5597, %v5838
        %v5885 = vadd.f32 %v5602, %v5843
        %v5886 = vadd.f32 %v5607, %v5848
        %v5887 = vadd.f32 %v5612, %v5853
        %v5888 = vld [vmem:[#allocation8 + $0x300] sm:$0xff]
        %v5889 = vld [vmem:[#allocation8 + $0x308] sm:$0xff]
        %v5890 = vld [vmem:[#allocation8 + $0x310] sm:$0xff]
        %v5891 = vld [vmem:[#allocation8 + $0x318] sm:$0xff]
        %v5892 = vld [vmem:[#allocation8 + $0x320] sm:$0xff]
        %v5893 = vld [vmem:[#allocation8 + $0x328] sm:$0xff]
        %v5894 = vld [vmem:[#allocation8 + $0x330] sm:$0xff]
        %v5895 = vld [vmem:[#allocation8 + $0x338] sm:$0xff]
        %v5896 = vld [vmem:[#allocation8 + $0x340] sm:$0xff]
        %v5897 = vld [vmem:[#allocation8 + $0x348] sm:$0xff]
        %v5898 = vld [vmem:[#allocation8 + $0x350] sm:$0xff]
        %v5899 = vld [vmem:[#allocation8 + $0x358] sm:$0xff]
        %v5900 = vld [vmem:[#allocation8 + $0x360] sm:$0xff]
        %v5901 = vld [vmem:[#allocation8 + $0x368] sm:$0xff]
        %v5902 = vld [vmem:[#allocation8 + $0x370] sm:$0xff]
        %v5903 = vld [vmem:[#allocation8 + $0x378] sm:$0xff]
        %v5904 = vld [vmem:[#allocation8 + $0x380] sm:$0xff]
        %v5905 = vld [vmem:[#allocation8 + $0x388] sm:$0xff]
        %v5906 = vld [vmem:[#allocation8 + $0x390] sm:$0xff]
        %v5907 = vld [vmem:[#allocation8 + $0x398] sm:$0xff]
        %v5908 = vld [vmem:[#allocation8 + $0x3a0] sm:$0xff]
        %v5909 = vld [vmem:[#allocation8 + $0x3a8] sm:$0xff]
        %v5910 = vld [vmem:[#allocation8 + $0x3b0] sm:$0xff]
        %v5911 = vld [vmem:[#allocation8 + $0x3b8] sm:$0xff]
        %v5912 = vld [vmem:[#allocation8 + $0x3c0] sm:$0xff]
        %v5913 = vld [vmem:[#allocation8 + $0x3c8] sm:$0xff]
        %v5914 = vld [vmem:[#allocation8 + $0x3d0] sm:$0xff]
        %v5915 = vld [vmem:[#allocation8 + $0x3d8] sm:$0xff]
        %v5916 = vld [vmem:[#allocation8 + $0x3e0] sm:$0xff]
        %v5917 = vld [vmem:[#allocation8 + $0x3e8] sm:$0xff]
        %v5918 = vld [vmem:[#allocation8 + $0x3f0] sm:$0xff]
        %v5919 = vld [vmem:[#allocation8 + $0x3f8] sm:$0xff]
        %5920 = vmatprep.subr.mxu0 0.0
        %5921 = vmatpush1.msra.mxu0 %v5919
        %5922 = vmatprep.subr.mxu0 0.0
        %5923 = vmatpush1.msra.mxu0 %v5918
        %5924 = vmatprep.subr.mxu0 0.0
        %5925 = vmatpush1.msra.mxu0 %v5917
        %5926 = vmatprep.subr.mxu0 0.0
        %5927 = vmatpush1.msra.mxu0 %v5916
        %5928 = vmatprep.subr.mxu0 0.0
        %5929 = vmatpush1.msra.mxu0 %v5915
        %5930 = vmatprep.subr.mxu0 0.0
        %5931 = vmatpush1.msra.mxu0 %v5914
        %5932 = vmatprep.subr.mxu0 0.0
        %5933 = vmatpush1.msra.mxu0 %v5913
        %5934 = vmatprep.subr.mxu0 0.0
        %5935 = vmatpush1.msra.mxu0 %v5912
        %5936 = vmatprep.subr.mxu0 0.0
        %5937 = vmatpush1.msra.mxu0 %v5911
        %5938 = vmatprep.subr.mxu0 0.0
        %5939 = vmatpush1.msra.mxu0 %v5910
        %5940 = vmatprep.subr.mxu0 0.0
        %5941 = vmatpush1.msra.mxu0 %v5909
        %5942 = vmatprep.subr.mxu0 0.0
        %5943 = vmatpush1.msra.mxu0 %v5908
        %5944 = vmatprep.subr.mxu0 0.0
        %5945 = vmatpush1.msra.mxu0 %v5907
        %5946 = vmatprep.subr.mxu0 0.0
        %5947 = vmatpush1.msra.mxu0 %v5906
        %5948 = vmatprep.subr.mxu0 0.0
        %5949 = vmatpush1.msra.mxu0 %v5905
        %5950 = vmatprep.subr.mxu0 0.0
        %5951 = vmatpush1.msra.mxu0 %v5904
        %5952 = vmatprep.subr.mxu0 0.0
        %5953 = vmatpush2.msra.mxu0 0.0
        %5954 = vmatprep.subr.mxu0 0.0
        %5955 = vmatpush2.msra.mxu0 0.0
        %5956 = vmatprep.subr.mxu0 0.0
        %5957 = vmatpush2.msra.mxu0 0.0
        %5958 = vmatprep.subr.mxu0 0.0
        %5959 = vmatpush2.msra.mxu0 0.0
        %5960 = vmatprep.subr.mxu0 0.0
        %5961 = vmatpush2.msra.mxu0 0.0
        %5962 = vmatprep.subr.mxu0 0.0
        %5963 = vmatpush2.msra.mxu0 0.0
        %5964 = vmatprep.subr.mxu0 0.0
        %5965 = vmatpush2.msra.mxu0 0.0
        %5966 = vmatprep.subr.mxu0 0.0
        %5967 = vmatpush2.msra.mxu0 0.0
        %5968 = vmatprep.subr.mxu0 0.0
        %5969 = vmatpush2.msra.mxu0 0.0
        %5970 = vmatprep.subr.mxu0 0.0
        %5971 = vmatpush2.msra.mxu0 0.0
        %5972 = vmatprep.subr.mxu0 0.0
        %5973 = vmatpush2.msra.mxu0 0.0
        %5974 = vmatprep.subr.mxu0 0.0
        %5975 = vmatpush2.msra.mxu0 0.0
        %5976 = vmatprep.subr.mxu0 0.0
        %5977 = vmatpush2.msra.mxu0 0.0
        %5978 = vmatprep.subr.mxu0 0.0
        %5979 = vmatpush2.msra.mxu0 0.0
        %5980 = vmatprep.subr.mxu0 0.0
        %5981 = vmatpush2.msra.mxu0 0.0
        %5982 = vmatprep.subr.mxu0 0.0
        %5983 = vmatpush2.msra.mxu0 0.0
        %5984 = vmatprep.mubr.f32.mxu0 0.0
        %5985 = vmatmul.mubr.f32.gmra.mxu0 %v4154
        %v5986 = vpop.f32.mrf.mxu0
        %v5987 = vadd.f32 0.0, %v5986
        %v5988 = vpop.f32.mrf.mxu0
        %5989 = vmatprep.mubr.f32.mxu0 0.0
        %5990 = vmatmul.mubr.f32.gmra.mxu0 %v4155
        %v5991 = vpop.f32.mrf.mxu0
        %v5992 = vadd.f32 0.0, %v5991
        %v5993 = vpop.f32.mrf.mxu0
        %5994 = vmatprep.mubr.f32.mxu0 0.0
        %5995 = vmatmul.mubr.f32.gmra.mxu0 %v4156
        %v5996 = vpop.f32.mrf.mxu0
        %v5997 = vadd.f32 0.0, %v5996
        %v5998 = vpop.f32.mrf.mxu0
        %5999 = vmatprep.mubr.f32.mxu0 0.0
        %6000 = vmatmul.mubr.f32.gmra.mxu0 %v4157
        %v6001 = vpop.f32.mrf.mxu0
        %v6002 = vadd.f32 0.0, %v6001
        %v6003 = vpop.f32.mrf.mxu0
        %6004 = vmatprep.mubr.f32.mxu0 0.0
        %6005 = vmatmul.mubr.f32.gmra.mxu0 %v4158
        %v6006 = vpop.f32.mrf.mxu0
        %v6007 = vadd.f32 0.0, %v6006
        %v6008 = vpop.f32.mrf.mxu0
        %6009 = vmatprep.mubr.f32.mxu0 0.0
        %6010 = vmatmul.mubr.f32.gmra.mxu0 %v4159
        %v6011 = vpop.f32.mrf.mxu0
        %v6012 = vadd.f32 0.0, %v6011
        %v6013 = vpop.f32.mrf.mxu0
        %6014 = vmatprep.mubr.f32.mxu0 0.0
        %6015 = vmatmul.mubr.f32.gmra.mxu0 %v4160
        %v6016 = vpop.f32.mrf.mxu0
        %v6017 = vadd.f32 0.0, %v6016
        %v6018 = vpop.f32.mrf.mxu0
        %6019 = vmatprep.mubr.f32.mxu0 0.0
        %6020 = vmatmul.mubr.f32.gmra.mxu0 %v4161
        %v6021 = vpop.f32.mrf.mxu0
        %v6022 = vadd.f32 0.0, %v6021
        %v6023 = vpop.f32.mrf.mxu0
        %6024 = vmatprep.mubr.f32.mxu0 0.0
        %6025 = vmatmul.mubr.f32.gmra.mxu0 %v4162
        %v6026 = vpop.f32.mrf.mxu0
        %v6027 = vadd.f32 0.0, %v6026
        %v6028 = vpop.f32.mrf.mxu0
        %6029 = vmatprep.mubr.f32.mxu0 0.0
        %6030 = vmatmul.mubr.f32.gmra.mxu0 %v4163
        %v6031 = vpop.f32.mrf.mxu0
        %v6032 = vadd.f32 0.0, %v6031
        %v6033 = vpop.f32.mrf.mxu0
        %6034 = vmatprep.mubr.f32.mxu0 0.0
        %6035 = vmatmul.mubr.f32.gmra.mxu0 %v4164
        %v6036 = vpop.f32.mrf.mxu0
        %v6037 = vadd.f32 0.0, %v6036
        %v6038 = vpop.f32.mrf.mxu0
        %6039 = vmatprep.mubr.f32.mxu0 0.0
        %6040 = vmatmul.mubr.f32.gmra.mxu0 %v4165
        %v6041 = vpop.f32.mrf.mxu0
        %v6042 = vadd.f32 0.0, %v6041
        %v6043 = vpop.f32.mrf.mxu0
        %6044 = vmatprep.mubr.f32.mxu0 0.0
        %6045 = vmatmul.mubr.f32.gmra.mxu0 %v4166
        %v6046 = vpop.f32.mrf.mxu0
        %v6047 = vadd.f32 0.0, %v6046
        %v6048 = vpop.f32.mrf.mxu0
        %6049 = vmatprep.mubr.f32.mxu0 0.0
        %6050 = vmatmul.mubr.f32.gmra.mxu0 %v4167
        %v6051 = vpop.f32.mrf.mxu0
        %v6052 = vadd.f32 0.0, %v6051
        %v6053 = vpop.f32.mrf.mxu0
        %6054 = vmatprep.mubr.f32.mxu0 0.0
        %6055 = vmatmul.mubr.f32.gmra.mxu0 %v4168
        %v6056 = vpop.f32.mrf.mxu0
        %v6057 = vadd.f32 0.0, %v6056
        %v6058 = vpop.f32.mrf.mxu0
        %6059 = vmatprep.mubr.f32.mxu0 0.0
        %6060 = vmatmul.mubr.f32.gmra.mxu0 %v4169
        %v6061 = vpop.f32.mrf.mxu0
        %v6062 = vadd.f32 0.0, %v6061
        %v6063 = vpop.f32.mrf.mxu0
        %6064 = vmatprep.mubr.f32.mxu0 0.0
        %6065 = vmatmul.mubr.f32.gmra.mxu0 %v4170
        %v6066 = vpop.f32.mrf.mxu0
        %v6067 = vadd.f32 0.0, %v6066
        %v6068 = vpop.f32.mrf.mxu0
        %6069 = vmatprep.mubr.f32.mxu0 0.0
        %6070 = vmatmul.mubr.f32.gmra.mxu0 %v4171
        %v6071 = vpop.f32.mrf.mxu0
        %v6072 = vadd.f32 0.0, %v6071
        %v6073 = vpop.f32.mrf.mxu0
        %6074 = vmatprep.mubr.f32.mxu0 0.0
        %6075 = vmatmul.mubr.f32.gmra.mxu0 %v4172
        %v6076 = vpop.f32.mrf.mxu0
        %v6077 = vadd.f32 0.0, %v6076
        %v6078 = vpop.f32.mrf.mxu0
        %6079 = vmatprep.mubr.f32.mxu0 0.0
        %6080 = vmatmul.mubr.f32.gmra.mxu0 %v4173
        %v6081 = vpop.f32.mrf.mxu0
        %v6082 = vadd.f32 0.0, %v6081
        %v6083 = vpop.f32.mrf.mxu0
        %6084 = vmatprep.mubr.f32.mxu0 0.0
        %6085 = vmatmul.mubr.f32.gmra.mxu0 %v4174
        %v6086 = vpop.f32.mrf.mxu0
        %v6087 = vadd.f32 0.0, %v6086
        %v6088 = vpop.f32.mrf.mxu0
        %6089 = vmatprep.mubr.f32.mxu0 0.0
        %6090 = vmatmul.mubr.f32.gmra.mxu0 %v4175
        %v6091 = vpop.f32.mrf.mxu0
        %v6092 = vadd.f32 0.0, %v6091
        %v6093 = vpop.f32.mrf.mxu0
        %6094 = vmatprep.mubr.f32.mxu0 0.0
        %6095 = vmatmul.mubr.f32.gmra.mxu0 %v4176
        %v6096 = vpop.f32.mrf.mxu0
        %v6097 = vadd.f32 0.0, %v6096
        %v6098 = vpop.f32.mrf.mxu0
        %6099 = vmatprep.mubr.f32.mxu0 0.0
        %6100 = vmatmul.mubr.f32.gmra.mxu0 %v4177
        %v6101 = vpop.f32.mrf.mxu0
        %v6102 = vadd.f32 0.0, %v6101
        %v6103 = vpop.f32.mrf.mxu0
        %6104 = vmatprep.mubr.f32.mxu0 0.0
        %6105 = vmatmul.mubr.f32.gmra.mxu0 %v4178
        %v6106 = vpop.f32.mrf.mxu0
        %v6107 = vadd.f32 0.0, %v6106
        %v6108 = vpop.f32.mrf.mxu0
        %6109 = vmatprep.mubr.f32.mxu0 0.0
        %6110 = vmatmul.mubr.f32.gmra.mxu0 %v4179
        %v6111 = vpop.f32.mrf.mxu0
        %v6112 = vadd.f32 0.0, %v6111
        %v6113 = vpop.f32.mrf.mxu0
        %6114 = vmatprep.mubr.f32.mxu0 0.0
        %6115 = vmatmul.mubr.f32.gmra.mxu0 %v4180
        %v6116 = vpop.f32.mrf.mxu0
        %v6117 = vadd.f32 0.0, %v6116
        %v6118 = vpop.f32.mrf.mxu0
        %6119 = vmatprep.mubr.f32.mxu0 0.0
        %6120 = vmatmul.mubr.f32.gmra.mxu0 %v4181
        %v6121 = vpop.f32.mrf.mxu0
        %v6122 = vadd.f32 0.0, %v6121
        %v6123 = vpop.f32.mrf.mxu0
        %6124 = vmatprep.mubr.f32.mxu0 0.0
        %6125 = vmatmul.mubr.f32.gmra.mxu0 %v4182
        %v6126 = vpop.f32.mrf.mxu0
        %v6127 = vadd.f32 0.0, %v6126
        %v6128 = vpop.f32.mrf.mxu0
        %6129 = vmatprep.mubr.f32.mxu0 0.0
        %6130 = vmatmul.mubr.f32.gmra.mxu0 %v4183
        %v6131 = vpop.f32.mrf.mxu0
        %v6132 = vadd.f32 0.0, %v6131
        %v6133 = vpop.f32.mrf.mxu0
        %6134 = vmatprep.mubr.f32.mxu0 0.0
        %6135 = vmatmul.mubr.f32.gmra.mxu0 %v4184
        %v6136 = vpop.f32.mrf.mxu0
        %v6137 = vadd.f32 0.0, %v6136
        %v6138 = vpop.f32.mrf.mxu0
        %6139 = vmatprep.mubr.f32.mxu0 0.0
        %6140 = vmatmul.mubr.f32.gmra.mxu0 %v4185
        %v6141 = vpop.f32.mrf.mxu0
        %v6142 = vadd.f32 0.0, %v6141
        %v6143 = vpop.f32.mrf.mxu0
        %6144 = vdwg.mxu0
        %6145 = vmatprep.subr.mxu0 0.0
        %6146 = vmatpush1.msra.mxu0 %v5903
        %6147 = vmatprep.subr.mxu0 0.0
        %6148 = vmatpush1.msra.mxu0 %v5902
        %6149 = vmatprep.subr.mxu0 0.0
        %6150 = vmatpush1.msra.mxu0 %v5901
        %6151 = vmatprep.subr.mxu0 0.0
        %6152 = vmatpush1.msra.mxu0 %v5900
        %6153 = vmatprep.subr.mxu0 0.0
        %6154 = vmatpush1.msra.mxu0 %v5899
        %6155 = vmatprep.subr.mxu0 0.0
        %6156 = vmatpush1.msra.mxu0 %v5898
        %6157 = vmatprep.subr.mxu0 0.0
        %6158 = vmatpush1.msra.mxu0 %v5897
        %6159 = vmatprep.subr.mxu0 0.0
        %6160 = vmatpush1.msra.mxu0 %v5896
        %6161 = vmatprep.subr.mxu0 0.0
        %6162 = vmatpush1.msra.mxu0 %v5895
        %6163 = vmatprep.subr.mxu0 0.0
        %6164 = vmatpush1.msra.mxu0 %v5894
        %6165 = vmatprep.subr.mxu0 0.0
        %6166 = vmatpush1.msra.mxu0 %v5893
        %6167 = vmatprep.subr.mxu0 0.0
        %6168 = vmatpush1.msra.mxu0 %v5892
        %6169 = vmatprep.subr.mxu0 0.0
        %6170 = vmatpush1.msra.mxu0 %v5891
        %6171 = vmatprep.subr.mxu0 0.0
        %6172 = vmatpush1.msra.mxu0 %v5890
        %6173 = vmatprep.subr.mxu0 0.0
        %6174 = vmatpush1.msra.mxu0 %v5889
        %6175 = vmatprep.subr.mxu0 0.0
        %6176 = vmatpush1.msra.mxu0 %v5888
        %6177 = vmatprep.subr.mxu0 0.0
        %6178 = vmatpush2.msra.mxu0 0.0
        %6179 = vmatprep.subr.mxu0 0.0
        %6180 = vmatpush2.msra.mxu0 0.0
        %6181 = vmatprep.subr.mxu0 0.0
        %6182 = vmatpush2.msra.mxu0 0.0
        %6183 = vmatprep.subr.mxu0 0.0
        %6184 = vmatpush2.msra.mxu0 0.0
        %6185 = vmatprep.subr.mxu0 0.0
        %6186 = vmatpush2.msra.mxu0 0.0
        %6187 = vmatprep.subr.mxu0 0.0
        %6188 = vmatpush2.msra.mxu0 0.0
        %6189 = vmatprep.subr.mxu0 0.0
        %6190 = vmatpush2.msra.mxu0 0.0
        %6191 = vmatprep.subr.mxu0 0.0
        %6192 = vmatpush2.msra.mxu0 0.0
        %6193 = vmatprep.subr.mxu0 0.0
        %6194 = vmatpush2.msra.mxu0 0.0
        %6195 = vmatprep.subr.mxu0 0.0
        %6196 = vmatpush2.msra.mxu0 0.0
        %6197 = vmatprep.subr.mxu0 0.0
        %6198 = vmatpush2.msra.mxu0 0.0
        %6199 = vmatprep.subr.mxu0 0.0
        %6200 = vmatpush2.msra.mxu0 0.0
        %6201 = vmatprep.subr.mxu0 0.0
        %6202 = vmatpush2.msra.mxu0 0.0
        %6203 = vmatprep.subr.mxu0 0.0
        %6204 = vmatpush2.msra.mxu0 0.0
        %6205 = vmatprep.subr.mxu0 0.0
        %6206 = vmatpush2.msra.mxu0 0.0
        %6207 = vmatprep.subr.mxu0 0.0
        %6208 = vmatpush2.msra.mxu0 0.0
        %6209 = vmatprep.mubr.f32.mxu0 0.0
        %6210 = vmatmul.mubr.f32.gmra.mxu0 %v4250
        %v6211 = vpop.f32.mrf.mxu0
        %v6212 = vadd.f32 %v5987, %v6211
        %v6213 = vpop.f32.mrf.mxu0
        %6214 = vmatprep.mubr.f32.mxu0 0.0
        %6215 = vmatmul.mubr.f32.gmra.mxu0 %v4251
        %v6216 = vpop.f32.mrf.mxu0
        %v6217 = vadd.f32 %v5992, %v6216
        %v6218 = vpop.f32.mrf.mxu0
        %6219 = vmatprep.mubr.f32.mxu0 0.0
        %6220 = vmatmul.mubr.f32.gmra.mxu0 %v4252
        %v6221 = vpop.f32.mrf.mxu0
        %v6222 = vadd.f32 %v5997, %v6221
        %v6223 = vpop.f32.mrf.mxu0
        %6224 = vmatprep.mubr.f32.mxu0 0.0
        %6225 = vmatmul.mubr.f32.gmra.mxu0 %v4253
        %v6226 = vpop.f32.mrf.mxu0
        %v6227 = vadd.f32 %v6002, %v6226
        %v6228 = vpop.f32.mrf.mxu0
        %6229 = vmatprep.mubr.f32.mxu0 0.0
        %6230 = vmatmul.mubr.f32.gmra.mxu0 %v4254
        %v6231 = vpop.f32.mrf.mxu0
        %v6232 = vadd.f32 %v6007, %v6231
        %v6233 = vpop.f32.mrf.mxu0
        %6234 = vmatprep.mubr.f32.mxu0 0.0
        %6235 = vmatmul.mubr.f32.gmra.mxu0 %v4255
        %v6236 = vpop.f32.mrf.mxu0
        %v6237 = vadd.f32 %v6012, %v6236
        %v6238 = vpop.f32.mrf.mxu0
        %6239 = vmatprep.mubr.f32.mxu0 0.0
        %6240 = vmatmul.mubr.f32.gmra.mxu0 %v4256
        %v6241 = vpop.f32.mrf.mxu0
        %v6242 = vadd.f32 %v6017, %v6241
        %v6243 = vpop.f32.mrf.mxu0
        %6244 = vmatprep.mubr.f32.mxu0 0.0
        %6245 = vmatmul.mubr.f32.gmra.mxu0 %v4257
        %v6246 = vpop.f32.mrf.mxu0
        %v6247 = vadd.f32 %v6022, %v6246
        %v6248 = vpop.f32.mrf.mxu0
        %6249 = vmatprep.mubr.f32.mxu0 0.0
        %6250 = vmatmul.mubr.f32.gmra.mxu0 %v4258
        %v6251 = vpop.f32.mrf.mxu0
        %v6252 = vadd.f32 %v6027, %v6251
        %v6253 = vpop.f32.mrf.mxu0
        %6254 = vmatprep.mubr.f32.mxu0 0.0
        %6255 = vmatmul.mubr.f32.gmra.mxu0 %v4259
        %v6256 = vpop.f32.mrf.mxu0
        %v6257 = vadd.f32 %v6032, %v6256
        %v6258 = vpop.f32.mrf.mxu0
        %6259 = vmatprep.mubr.f32.mxu0 0.0
        %6260 = vmatmul.mubr.f32.gmra.mxu0 %v4260
        %v6261 = vpop.f32.mrf.mxu0
        %v6262 = vadd.f32 %v6037, %v6261
        %v6263 = vpop.f32.mrf.mxu0
        %6264 = vmatprep.mubr.f32.mxu0 0.0
        %6265 = vmatmul.mubr.f32.gmra.mxu0 %v4261
        %v6266 = vpop.f32.mrf.mxu0
        %v6267 = vadd.f32 %v6042, %v6266
        %v6268 = vpop.f32.mrf.mxu0
        %6269 = vmatprep.mubr.f32.mxu0 0.0
        %6270 = vmatmul.mubr.f32.gmra.mxu0 %v4262
        %v6271 = vpop.f32.mrf.mxu0
        %v6272 = vadd.f32 %v6047, %v6271
        %v6273 = vpop.f32.mrf.mxu0
        %6274 = vmatprep.mubr.f32.mxu0 0.0
        %6275 = vmatmul.mubr.f32.gmra.mxu0 %v4263
        %v6276 = vpop.f32.mrf.mxu0
        %v6277 = vadd.f32 %v6052, %v6276
        %v6278 = vpop.f32.mrf.mxu0
        %6279 = vmatprep.mubr.f32.mxu0 0.0
        %6280 = vmatmul.mubr.f32.gmra.mxu0 %v4264
        %v6281 = vpop.f32.mrf.mxu0
        %v6282 = vadd.f32 %v6057, %v6281
        %v6283 = vpop.f32.mrf.mxu0
        %6284 = vmatprep.mubr.f32.mxu0 0.0
        %6285 = vmatmul.mubr.f32.gmra.mxu0 %v4265
        %v6286 = vpop.f32.mrf.mxu0
        %v6287 = vadd.f32 %v6062, %v6286
        %v6288 = vpop.f32.mrf.mxu0
        %6289 = vmatprep.mubr.f32.mxu0 0.0
        %6290 = vmatmul.mubr.f32.gmra.mxu0 %v4266
        %v6291 = vpop.f32.mrf.mxu0
        %v6292 = vadd.f32 %v6067, %v6291
        %v6293 = vpop.f32.mrf.mxu0
        %6294 = vmatprep.mubr.f32.mxu0 0.0
        %6295 = vmatmul.mubr.f32.gmra.mxu0 %v4267
        %v6296 = vpop.f32.mrf.mxu0
        %v6297 = vadd.f32 %v6072, %v6296
        %v6298 = vpop.f32.mrf.mxu0
        %6299 = vmatprep.mubr.f32.mxu0 0.0
        %6300 = vmatmul.mubr.f32.gmra.mxu0 %v4268
        %v6301 = vpop.f32.mrf.mxu0
        %v6302 = vadd.f32 %v6077, %v6301
        %v6303 = vpop.f32.mrf.mxu0
        %6304 = vmatprep.mubr.f32.mxu0 0.0
        %6305 = vmatmul.mubr.f32.gmra.mxu0 %v4269
        %v6306 = vpop.f32.mrf.mxu0
        %v6307 = vadd.f32 %v6082, %v6306
        %v6308 = vpop.f32.mrf.mxu0
        %6309 = vmatprep.mubr.f32.mxu0 0.0
        %6310 = vmatmul.mubr.f32.gmra.mxu0 %v4270
        %v6311 = vpop.f32.mrf.mxu0
        %v6312 = vadd.f32 %v6087, %v6311
        %v6313 = vpop.f32.mrf.mxu0
        %6314 = vmatprep.mubr.f32.mxu0 0.0
        %6315 = vmatmul.mubr.f32.gmra.mxu0 %v4271
        %v6316 = vpop.f32.mrf.mxu0
        %v6317 = vadd.f32 %v6092, %v6316
        %v6318 = vpop.f32.mrf.mxu0
        %6319 = vmatprep.mubr.f32.mxu0 0.0
        %6320 = vmatmul.mubr.f32.gmra.mxu0 %v4272
        %v6321 = vpop.f32.mrf.mxu0
        %v6322 = vadd.f32 %v6097, %v6321
        %v6323 = vpop.f32.mrf.mxu0
        %6324 = vmatprep.mubr.f32.mxu0 0.0
        %6325 = vmatmul.mubr.f32.gmra.mxu0 %v4273
        %v6326 = vpop.f32.mrf.mxu0
        %v6327 = vadd.f32 %v6102, %v6326
        %v6328 = vpop.f32.mrf.mxu0
        %6329 = vmatprep.mubr.f32.mxu0 0.0
        %6330 = vmatmul.mubr.f32.gmra.mxu0 %v4274
        %v6331 = vpop.f32.mrf.mxu0
        %v6332 = vadd.f32 %v6107, %v6331
        %v6333 = vpop.f32.mrf.mxu0
        %6334 = vmatprep.mubr.f32.mxu0 0.0
        %6335 = vmatmul.mubr.f32.gmra.mxu0 %v4275
        %v6336 = vpop.f32.mrf.mxu0
        %v6337 = vadd.f32 %v6112, %v6336
        %v6338 = vpop.f32.mrf.mxu0
        %6339 = vmatprep.mubr.f32.mxu0 0.0
        %6340 = vmatmul.mubr.f32.gmra.mxu0 %v4276
        %v6341 = vpop.f32.mrf.mxu0
        %v6342 = vadd.f32 %v6117, %v6341
        %v6343 = vpop.f32.mrf.mxu0
        %6344 = vmatprep.mubr.f32.mxu0 0.0
        %6345 = vmatmul.mubr.f32.gmra.mxu0 %v4277
        %v6346 = vpop.f32.mrf.mxu0
        %v6347 = vadd.f32 %v6122, %v6346
        %v6348 = vpop.f32.mrf.mxu0
        %6349 = vmatprep.mubr.f32.mxu0 0.0
        %6350 = vmatmul.mubr.f32.gmra.mxu0 %v4278
        %v6351 = vpop.f32.mrf.mxu0
        %v6352 = vadd.f32 %v6127, %v6351
        %v6353 = vpop.f32.mrf.mxu0
        %6354 = vmatprep.mubr.f32.mxu0 0.0
        %6355 = vmatmul.mubr.f32.gmra.mxu0 %v4279
        %v6356 = vpop.f32.mrf.mxu0
        %v6357 = vadd.f32 %v6132, %v6356
        %v6358 = vpop.f32.mrf.mxu0
        %6359 = vmatprep.mubr.f32.mxu0 0.0
        %6360 = vmatmul.mubr.f32.gmra.mxu0 %v4280
        %v6361 = vpop.f32.mrf.mxu0
        %v6362 = vadd.f32 %v6137, %v6361
        %v6363 = vpop.f32.mrf.mxu0
        %6364 = vmatprep.mubr.f32.mxu0 0.0
        %6365 = vmatmul.mubr.f32.gmra.mxu0 %v4281
        %v6366 = vpop.f32.mrf.mxu0
        %v6367 = vadd.f32 %v6142, %v6366
        %v6368 = vpop.f32.mrf.mxu0
        %6369 = vdwg.mxu0
        %v6370 = vld [vmem:[#allocation8 + $0x400] sm:$0xff]
        %v6371 = vld [vmem:[#allocation8 + $0x408] sm:$0xff]
        %v6372 = vld [vmem:[#allocation8 + $0x410] sm:$0xff]
        %v6373 = vld [vmem:[#allocation8 + $0x418] sm:$0xff]
        %v6374 = vld [vmem:[#allocation8 + $0x420] sm:$0xff]
        %v6375 = vld [vmem:[#allocation8 + $0x428] sm:$0xff]
        %v6376 = vld [vmem:[#allocation8 + $0x430] sm:$0xff]
        %v6377 = vld [vmem:[#allocation8 + $0x438] sm:$0xff]
        %v6378 = vld [vmem:[#allocation8 + $0x440] sm:$0xff]
        %v6379 = vld [vmem:[#allocation8 + $0x448] sm:$0xff]
        %v6380 = vld [vmem:[#allocation8 + $0x450] sm:$0xff]
        %v6381 = vld [vmem:[#allocation8 + $0x458] sm:$0xff]
        %v6382 = vld [vmem:[#allocation8 + $0x460] sm:$0xff]
        %v6383 = vld [vmem:[#allocation8 + $0x468] sm:$0xff]
        %v6384 = vld [vmem:[#allocation8 + $0x470] sm:$0xff]
        %v6385 = vld [vmem:[#allocation8 + $0x478] sm:$0xff]
        %6386 = vmatprep.subr.mxu0 0.0
        %6387 = vmatpush1.msra.mxu0 %v6385
        %6388 = vmatprep.subr.mxu0 0.0
        %6389 = vmatpush1.msra.mxu0 %v6384
        %6390 = vmatprep.subr.mxu0 0.0
        %6391 = vmatpush1.msra.mxu0 %v6383
        %6392 = vmatprep.subr.mxu0 0.0
        %6393 = vmatpush1.msra.mxu0 %v6382
        %6394 = vmatprep.subr.mxu0 0.0
        %6395 = vmatpush1.msra.mxu0 %v6381
        %6396 = vmatprep.subr.mxu0 0.0
        %6397 = vmatpush1.msra.mxu0 %v6380
        %6398 = vmatprep.subr.mxu0 0.0
        %6399 = vmatpush1.msra.mxu0 %v6379
        %6400 = vmatprep.subr.mxu0 0.0
        %6401 = vmatpush1.msra.mxu0 %v6378
        %6402 = vmatprep.subr.mxu0 0.0
        %6403 = vmatpush1.msra.mxu0 %v6377
        %6404 = vmatprep.subr.mxu0 0.0
        %6405 = vmatpush1.msra.mxu0 %v6376
        %6406 = vmatprep.subr.mxu0 0.0
        %6407 = vmatpush1.msra.mxu0 %v6375
        %6408 = vmatprep.subr.mxu0 0.0
        %6409 = vmatpush1.msra.mxu0 %v6374
        %6410 = vmatprep.subr.mxu0 0.0
        %6411 = vmatpush1.msra.mxu0 %v6373
        %6412 = vmatprep.subr.mxu0 0.0
        %6413 = vmatpush1.msra.mxu0 %v6372
        %6414 = vmatprep.subr.mxu0 0.0
        %6415 = vmatpush1.msra.mxu0 %v6371
        %6416 = vmatprep.subr.mxu0 0.0
        %6417 = vmatpush1.msra.mxu0 %v6370
        %6418 = vmatprep.subr.mxu0 0.0
        %6419 = vmatpush2.msra.mxu0 0.0
        %6420 = vmatprep.subr.mxu0 0.0
        %6421 = vmatpush2.msra.mxu0 0.0
        %6422 = vmatprep.subr.mxu0 0.0
        %6423 = vmatpush2.msra.mxu0 0.0
        %6424 = vmatprep.subr.mxu0 0.0
        %6425 = vmatpush2.msra.mxu0 0.0
        %6426 = vmatprep.subr.mxu0 0.0
        %6427 = vmatpush2.msra.mxu0 0.0
        %6428 = vmatprep.subr.mxu0 0.0
        %6429 = vmatpush2.msra.mxu0 0.0
        %6430 = vmatprep.subr.mxu0 0.0
        %6431 = vmatpush2.msra.mxu0 0.0
        %6432 = vmatprep.subr.mxu0 0.0
        %6433 = vmatpush2.msra.mxu0 0.0
        %6434 = vmatprep.subr.mxu0 0.0
        %6435 = vmatpush2.msra.mxu0 0.0
        %6436 = vmatprep.subr.mxu0 0.0
        %6437 = vmatpush2.msra.mxu0 0.0
        %6438 = vmatprep.subr.mxu0 0.0
        %6439 = vmatpush2.msra.mxu0 0.0
        %6440 = vmatprep.subr.mxu0 0.0
        %6441 = vmatpush2.msra.mxu0 0.0
        %6442 = vmatprep.subr.mxu0 0.0
        %6443 = vmatpush2.msra.mxu0 0.0
        %6444 = vmatprep.subr.mxu0 0.0
        %6445 = vmatpush2.msra.mxu0 0.0
        %6446 = vmatprep.subr.mxu0 0.0
        %6447 = vmatpush2.msra.mxu0 0.0
        %6448 = vmatprep.subr.mxu0 0.0
        %6449 = vmatpush2.msra.mxu0 0.0
        %6450 = vmatprep.mubr.f32.mxu0 0.0
        %6451 = vmatmul.mubr.f32.gmra.mxu0 %v4346
        %v6452 = vpop.f32.mrf.mxu0
        %v6453 = vadd.f32 0.0, %v6452
        %v6454 = vpop.f32.mrf.mxu0
        %6455 = vmatprep.mubr.f32.mxu0 0.0
        %6456 = vmatmul.mubr.f32.gmra.mxu0 %v4347
        %v6457 = vpop.f32.mrf.mxu0
        %v6458 = vadd.f32 0.0, %v6457
        %v6459 = vpop.f32.mrf.mxu0
        %6460 = vmatprep.mubr.f32.mxu0 0.0
        %6461 = vmatmul.mubr.f32.gmra.mxu0 %v4348
        %v6462 = vpop.f32.mrf.mxu0
        %v6463 = vadd.f32 0.0, %v6462
        %v6464 = vpop.f32.mrf.mxu0
        %6465 = vmatprep.mubr.f32.mxu0 0.0
        %6466 = vmatmul.mubr.f32.gmra.mxu0 %v4349
        %v6467 = vpop.f32.mrf.mxu0
        %v6468 = vadd.f32 0.0, %v6467
        %v6469 = vpop.f32.mrf.mxu0
        %6470 = vmatprep.mubr.f32.mxu0 0.0
        %6471 = vmatmul.mubr.f32.gmra.mxu0 %v4350
        %v6472 = vpop.f32.mrf.mxu0
        %v6473 = vadd.f32 0.0, %v6472
        %v6474 = vpop.f32.mrf.mxu0
        %6475 = vmatprep.mubr.f32.mxu0 0.0
        %6476 = vmatmul.mubr.f32.gmra.mxu0 %v4351
        %v6477 = vpop.f32.mrf.mxu0
        %v6478 = vadd.f32 0.0, %v6477
        %v6479 = vpop.f32.mrf.mxu0
        %6480 = vmatprep.mubr.f32.mxu0 0.0
        %6481 = vmatmul.mubr.f32.gmra.mxu0 %v4352
        %v6482 = vpop.f32.mrf.mxu0
        %v6483 = vadd.f32 0.0, %v6482
        %v6484 = vpop.f32.mrf.mxu0
        %6485 = vmatprep.mubr.f32.mxu0 0.0
        %6486 = vmatmul.mubr.f32.gmra.mxu0 %v4353
        %v6487 = vpop.f32.mrf.mxu0
        %v6488 = vadd.f32 0.0, %v6487
        %v6489 = vpop.f32.mrf.mxu0
        %6490 = vmatprep.mubr.f32.mxu0 0.0
        %6491 = vmatmul.mubr.f32.gmra.mxu0 %v4354
        %v6492 = vpop.f32.mrf.mxu0
        %v6493 = vadd.f32 0.0, %v6492
        %v6494 = vpop.f32.mrf.mxu0
        %6495 = vmatprep.mubr.f32.mxu0 0.0
        %6496 = vmatmul.mubr.f32.gmra.mxu0 %v4355
        %v6497 = vpop.f32.mrf.mxu0
        %v6498 = vadd.f32 0.0, %v6497
        %v6499 = vpop.f32.mrf.mxu0
        %6500 = vmatprep.mubr.f32.mxu0 0.0
        %6501 = vmatmul.mubr.f32.gmra.mxu0 %v4356
        %v6502 = vpop.f32.mrf.mxu0
        %v6503 = vadd.f32 0.0, %v6502
        %v6504 = vpop.f32.mrf.mxu0
        %6505 = vmatprep.mubr.f32.mxu0 0.0
        %6506 = vmatmul.mubr.f32.gmra.mxu0 %v4357
        %v6507 = vpop.f32.mrf.mxu0
        %v6508 = vadd.f32 0.0, %v6507
        %v6509 = vpop.f32.mrf.mxu0
        %6510 = vmatprep.mubr.f32.mxu0 0.0
        %6511 = vmatmul.mubr.f32.gmra.mxu0 %v4358
        %v6512 = vpop.f32.mrf.mxu0
        %v6513 = vadd.f32 0.0, %v6512
        %v6514 = vpop.f32.mrf.mxu0
        %6515 = vmatprep.mubr.f32.mxu0 0.0
        %6516 = vmatmul.mubr.f32.gmra.mxu0 %v4359
        %v6517 = vpop.f32.mrf.mxu0
        %v6518 = vadd.f32 0.0, %v6517
        %v6519 = vpop.f32.mrf.mxu0
        %6520 = vmatprep.mubr.f32.mxu0 0.0
        %6521 = vmatmul.mubr.f32.gmra.mxu0 %v4360
        %v6522 = vpop.f32.mrf.mxu0
        %v6523 = vadd.f32 0.0, %v6522
        %v6524 = vpop.f32.mrf.mxu0
        %6525 = vmatprep.mubr.f32.mxu0 0.0
        %6526 = vmatmul.mubr.f32.gmra.mxu0 %v4361
        %v6527 = vpop.f32.mrf.mxu0
        %v6528 = vadd.f32 0.0, %v6527
        %v6529 = vpop.f32.mrf.mxu0
        %6530 = vmatprep.mubr.f32.mxu0 0.0
        %6531 = vmatmul.mubr.f32.gmra.mxu0 %v4362
        %v6532 = vpop.f32.mrf.mxu0
        %v6533 = vadd.f32 0.0, %v6532
        %v6534 = vpop.f32.mrf.mxu0
        %6535 = vmatprep.mubr.f32.mxu0 0.0
        %6536 = vmatmul.mubr.f32.gmra.mxu0 %v4363
        %v6537 = vpop.f32.mrf.mxu0
        %v6538 = vadd.f32 0.0, %v6537
        %v6539 = vpop.f32.mrf.mxu0
        %6540 = vmatprep.mubr.f32.mxu0 0.0
        %6541 = vmatmul.mubr.f32.gmra.mxu0 %v4364
        %v6542 = vpop.f32.mrf.mxu0
        %v6543 = vadd.f32 0.0, %v6542
        %v6544 = vpop.f32.mrf.mxu0
        %6545 = vmatprep.mubr.f32.mxu0 0.0
        %6546 = vmatmul.mubr.f32.gmra.mxu0 %v4365
        %v6547 = vpop.f32.mrf.mxu0
        %v6548 = vadd.f32 0.0, %v6547
        %v6549 = vpop.f32.mrf.mxu0
        %6550 = vmatprep.mubr.f32.mxu0 0.0
        %6551 = vmatmul.mubr.f32.gmra.mxu0 %v4366
        %v6552 = vpop.f32.mrf.mxu0
        %v6553 = vadd.f32 0.0, %v6552
        %v6554 = vpop.f32.mrf.mxu0
        %6555 = vmatprep.mubr.f32.mxu0 0.0
        %6556 = vmatmul.mubr.f32.gmra.mxu0 %v4367
        %v6557 = vpop.f32.mrf.mxu0
        %v6558 = vadd.f32 0.0, %v6557
        %v6559 = vpop.f32.mrf.mxu0
        %6560 = vmatprep.mubr.f32.mxu0 0.0
        %6561 = vmatmul.mubr.f32.gmra.mxu0 %v4368
        %v6562 = vpop.f32.mrf.mxu0
        %v6563 = vadd.f32 0.0, %v6562
        %v6564 = vpop.f32.mrf.mxu0
        %6565 = vmatprep.mubr.f32.mxu0 0.0
        %6566 = vmatmul.mubr.f32.gmra.mxu0 %v4369
        %v6567 = vpop.f32.mrf.mxu0
        %v6568 = vadd.f32 0.0, %v6567
        %v6569 = vpop.f32.mrf.mxu0
        %6570 = vmatprep.mubr.f32.mxu0 0.0
        %6571 = vmatmul.mubr.f32.gmra.mxu0 %v4370
        %v6572 = vpop.f32.mrf.mxu0
        %v6573 = vadd.f32 0.0, %v6572
        %v6574 = vpop.f32.mrf.mxu0
        %6575 = vmatprep.mubr.f32.mxu0 0.0
        %6576 = vmatmul.mubr.f32.gmra.mxu0 %v4371
        %v6577 = vpop.f32.mrf.mxu0
        %v6578 = vadd.f32 0.0, %v6577
        %v6579 = vpop.f32.mrf.mxu0
        %6580 = vmatprep.mubr.f32.mxu0 0.0
        %6581 = vmatmul.mubr.f32.gmra.mxu0 %v4372
        %v6582 = vpop.f32.mrf.mxu0
        %v6583 = vadd.f32 0.0, %v6582
        %v6584 = vpop.f32.mrf.mxu0
        %6585 = vmatprep.mubr.f32.mxu0 0.0
        %6586 = vmatmul.mubr.f32.gmra.mxu0 %v4373
        %v6587 = vpop.f32.mrf.mxu0
        %v6588 = vadd.f32 0.0, %v6587
        %v6589 = vpop.f32.mrf.mxu0
        %6590 = vmatprep.mubr.f32.mxu0 0.0
        %6591 = vmatmul.mubr.f32.gmra.mxu0 %v4374
        %v6592 = vpop.f32.mrf.mxu0
        %v6593 = vadd.f32 0.0, %v6592
        %v6594 = vpop.f32.mrf.mxu0
        %6595 = vmatprep.mubr.f32.mxu0 0.0
        %6596 = vmatmul.mubr.f32.gmra.mxu0 %v4375
        %v6597 = vpop.f32.mrf.mxu0
        %v6598 = vadd.f32 0.0, %v6597
        %v6599 = vpop.f32.mrf.mxu0
        %6600 = vmatprep.mubr.f32.mxu0 0.0
        %6601 = vmatmul.mubr.f32.gmra.mxu0 %v4376
        %v6602 = vpop.f32.mrf.mxu0
        %v6603 = vadd.f32 0.0, %v6602
        %v6604 = vpop.f32.mrf.mxu0
        %6605 = vmatprep.mubr.f32.mxu0 0.0
        %6606 = vmatmul.mubr.f32.gmra.mxu0 %v4377
        %v6607 = vpop.f32.mrf.mxu0
        %v6608 = vadd.f32 0.0, %v6607
        %v6609 = vpop.f32.mrf.mxu0
        %6610 = vdwg.mxu0
        %v6611 = vadd.f32 %v6212, %v6453
        %v6612 = vadd.f32 %v6217, %v6458
        %v6613 = vadd.f32 %v6222, %v6463
        %v6614 = vadd.f32 %v6227, %v6468
        %v6615 = vadd.f32 %v6232, %v6473
        %v6616 = vadd.f32 %v6237, %v6478
        %v6617 = vadd.f32 %v6242, %v6483
        %v6618 = vadd.f32 %v6247, %v6488
        %v6619 = vadd.f32 %v6252, %v6493
        %v6620 = vadd.f32 %v6257, %v6498
        %v6621 = vadd.f32 %v6262, %v6503
        %v6622 = vadd.f32 %v6267, %v6508
        %v6623 = vadd.f32 %v6272, %v6513
        %v6624 = vadd.f32 %v6277, %v6518
        %v6625 = vadd.f32 %v6282, %v6523
        %v6626 = vadd.f32 %v6287, %v6528
        %v6627 = vadd.f32 %v6292, %v6533
        %v6628 = vadd.f32 %v6297, %v6538
        %v6629 = vadd.f32 %v6302, %v6543
        %v6630 = vadd.f32 %v6307, %v6548
        %v6631 = vadd.f32 %v6312, %v6553
        %v6632 = vadd.f32 %v6317, %v6558
        %v6633 = vadd.f32 %v6322, %v6563
        %v6634 = vadd.f32 %v6327, %v6568
        %v6635 = vadd.f32 %v6332, %v6573
        %v6636 = vadd.f32 %v6337, %v6578
        %v6637 = vadd.f32 %v6342, %v6583
        %v6638 = vadd.f32 %v6347, %v6588
        %v6639 = vadd.f32 %v6352, %v6593
        %v6640 = vadd.f32 %v6357, %v6598
        %v6641 = vadd.f32 %v6362, %v6603
        %v6642 = vadd.f32 %v6367, %v6608
        %v6643 = vsel %vm3891, 0.0, %v5131
        %v6644 = vsel %vm3892, 0.0, %v5132
        %v6645 = vsel %vm3893, 0.0, %v5101
        %v6646 = vsel %vm3894, 0.0, %v5102
        %v6647 = vsel %vm3895, 0.0, %v5103
        %v6648 = vsel %vm3896, 0.0, %v5104
        %v6649 = vsel %vm3897, 0.0, %v5105
        %v6650 = vsel %vm3898, 0.0, %v5106
        %v6651 = vsel %vm3899, 0.0, %v5107
        %v6652 = vsel %vm3900, 0.0, %v5108
        %v6653 = vsel %vm3901, 0.0, %v5109
        %v6654 = vsel %vm3902, 0.0, %v5110
        %v6655 = vsel %vm3903, 0.0, %v5111
        %v6656 = vsel %vm3904, 0.0, %v5112
        %v6657 = vsel %vm3905, 0.0, %v5113
        %v6658 = vsel %vm3906, 0.0, %v5114
        %v6659 = vsel %vm3907, 0.0, %v5115
        %v6660 = vsel %vm3908, 0.0, %v5116
        %v6661 = vsel %vm3909, 0.0, %v5117
        %v6662 = vsel %vm3910, 0.0, %v5118
        %v6663 = vsel %vm3911, 0.0, %v5119
        %v6664 = vsel %vm3912, 0.0, %v5120
        %v6665 = vsel %vm3913, 0.0, %v5121
        %v6666 = vsel %vm3914, 0.0, %v5122
        %v6667 = vsel %vm3915, 0.0, %v5123
        %v6668 = vsel %vm3916, 0.0, %v5124
        %v6669 = vsel %vm3917, 0.0, %v5125
        %v6670 = vsel %vm3918, 0.0, %v5126
        %v6671 = vsel %vm3919, 0.0, %v5127
        %v6672 = vsel %vm3920, 0.0, %v5128
        %v6673 = vsel %vm3921, 0.0, %v5129
        %v6674 = vsel %vm3922, 0.0, %v5130
        %v6675 = vadd.f32 %v5856, %v6643
        %v6676 = vadd.f32 %v5857, %v6644
        %v6677 = vadd.f32 %v5858, %v6645
        %v6678 = vadd.f32 %v5859, %v6646
        %v6679 = vadd.f32 %v5860, %v6647
        %v6680 = vadd.f32 %v5861, %v6648
        %v6681 = vadd.f32 %v5862, %v6649
        %v6682 = vadd.f32 %v5863, %v6650
        %v6683 = vadd.f32 %v5864, %v6651
        %v6684 = vadd.f32 %v5865, %v6652
        %v6685 = vadd.f32 %v5866, %v6653
        %v6686 = vadd.f32 %v5867, %v6654
        %v6687 = vadd.f32 %v5868, %v6655
        %v6688 = vadd.f32 %v5869, %v6656
        %v6689 = vadd.f32 %v5870, %v6657
        %v6690 = vadd.f32 %v5871, %v6658
        %v6691 = vadd.f32 %v5872, %v6659
        %v6692 = vadd.f32 %v5873, %v6660
        %v6693 = vadd.f32 %v5874, %v6661
        %v6694 = vadd.f32 %v5875, %v6662
        %v6695 = vadd.f32 %v5876, %v6663
        %v6696 = vadd.f32 %v5877, %v6664
        %v6697 = vadd.f32 %v5878, %v6665
        %v6698 = vadd.f32 %v5879, %v6666
        %v6699 = vadd.f32 %v5880, %v6667
        %v6700 = vadd.f32 %v5881, %v6668
        %v6701 = vadd.f32 %v5882, %v6669
        %v6702 = vadd.f32 %v5883, %v6670
        %v6703 = vadd.f32 %v5884, %v6671
        %v6704 = vadd.f32 %v5885, %v6672
        %v6705 = vadd.f32 %v5886, %v6673
        %v6706 = vadd.f32 %v5887, %v6674
        %v6707 = vsel %vm4019, 0.0, %v6613
        %v6708 = vsel %vm4020, 0.0, %v6614
        %v6709 = vsel %vm4021, 0.0, %v6615
        %v6710 = vsel %vm4022, 0.0, %v6616
        %v6711 = vsel %vm4023, 0.0, %v6617
        %v6712 = vsel %vm4024, 0.0, %v6618
        %v6713 = vsel %vm4025, 0.0, %v6619
        %v6714 = vsel %vm4026, 0.0, %v6620
        %v6715 = vsel %vm4027, 0.0, %v6621
        %v6716 = vsel %vm4028, 0.0, %v6622
        %v6717 = vsel %vm4029, 0.0, %v6623
        %v6718 = vsel %vm4030, 0.0, %v6624
        %v6719 = vsel %vm4031, 0.0, %v6625
        %v6720 = vsel %vm4032, 0.0, %v6626
        %v6721 = vsel %vm4033, 0.0, %v6627
        %v6722 = vsel %vm4034, 0.0, %v6628
        %v6723 = vsel %vm4035, 0.0, %v6629
        %v6724 = vsel %vm4036, 0.0, %v6630
        %v6725 = vsel %vm4037, 0.0, %v6631
        %v6726 = vsel %vm4038, 0.0, %v6632
        %v6727 = vsel %vm4039, 0.0, %v6633
        %v6728 = vsel %vm4040, 0.0, %v6634
        %v6729 = vsel %vm4041, 0.0, %v6635
        %v6730 = vsel %vm4042, 0.0, %v6636
        %v6731 = vsel %vm4043, 0.0, %v6637
        %v6732 = vsel %vm4044, 0.0, %v6638
        %v6733 = vsel %vm4045, 0.0, %v6639
        %v6734 = vsel %vm4046, 0.0, %v6640
        %v6735 = vsel %vm4047, 0.0, %v6641
        %v6736 = vsel %vm4048, 0.0, %v6642
        %v6737 = vsel %vm4049, 0.0, %v6611
        %v6738 = vsel %vm4050, 0.0, %v6612
        %v6739 = vadd.f32 %v6675, %v6707
        %v6740 = vadd.f32 %v6676, %v6708
        %v6741 = vadd.f32 %v6677, %v6709
        %v6742 = vadd.f32 %v6678, %v6710
        %v6743 = vadd.f32 %v6679, %v6711
        %v6744 = vadd.f32 %v6680, %v6712
        %v6745 = vadd.f32 %v6681, %v6713
        %v6746 = vadd.f32 %v6682, %v6714
        %v6747 = vadd.f32 %v6683, %v6715
        %v6748 = vadd.f32 %v6684, %v6716
        %v6749 = vadd.f32 %v6685, %v6717
        %v6750 = vadd.f32 %v6686, %v6718
        %v6751 = vadd.f32 %v6687, %v6719
        %v6752 = vadd.f32 %v6688, %v6720
        %v6753 = vadd.f32 %v6689, %v6721
        %v6754 = vadd.f32 %v6690, %v6722
        %v6755 = vadd.f32 %v6691, %v6723
        %v6756 = vadd.f32 %v6692, %v6724
        %v6757 = vadd.f32 %v6693, %v6725
        %v6758 = vadd.f32 %v6694, %v6726
        %v6759 = vadd.f32 %v6695, %v6727
        %v6760 = vadd.f32 %v6696, %v6728
        %v6761 = vadd.f32 %v6697, %v6729
        %v6762 = vadd.f32 %v6698, %v6730
        %v6763 = vadd.f32 %v6699, %v6731
        %v6764 = vadd.f32 %v6700, %v6732
        %v6765 = vadd.f32 %v6701, %v6733
        %v6766 = vadd.f32 %v6702, %v6734
        %v6767 = vadd.f32 %v6703, %v6735
        %v6768 = vadd.f32 %v6704, %v6736
        %v6769 = vadd.f32 %v6705, %v6737
        %v6770 = vadd.f32 %v6706, %v6738
        %v6771 = vld [vmem:[%s5] sm:$0x1]
        %v6773 = vlaneseq
        %v6774 = vshrl.u32 %v6773, 7
        %v6775 = vsub.s32 0, %v6774
        %v6776 = vrot.slane %v6771, %v6775
        %v6778 = vadd.f32 %v6739, %v6776
        %v6779 = vadd.f32 %v6740, %v6776
        %v6780 = vadd.f32 %v6741, %v6776
        %v6781 = vadd.f32 %v6742, %v6776
        %v6782 = vadd.f32 %v6743, %v6776
        %v6783 = vadd.f32 %v6744, %v6776
        %v6784 = vadd.f32 %v6745, %v6776
        %v6785 = vadd.f32 %v6746, %v6776
        %v6786 = vadd.f32 %v6747, %v6776
        %v6787 = vadd.f32 %v6748, %v6776
        %v6788 = vadd.f32 %v6749, %v6776
        %v6789 = vadd.f32 %v6750, %v6776
        %v6790 = vadd.f32 %v6751, %v6776
        %v6791 = vadd.f32 %v6752, %v6776
        %v6792 = vadd.f32 %v6753, %v6776
        %v6793 = vadd.f32 %v6754, %v6776
        %v6794 = vadd.f32 %v6755, %v6776
        %v6795 = vadd.f32 %v6756, %v6776
        %v6796 = vadd.f32 %v6757, %v6776
        %v6797 = vadd.f32 %v6758, %v6776
        %v6798 = vadd.f32 %v6759, %v6776
        %v6799 = vadd.f32 %v6760, %v6776
        %v6800 = vadd.f32 %v6761, %v6776
        %v6801 = vadd.f32 %v6762, %v6776
        %v6802 = vadd.f32 %v6763, %v6776
        %v6803 = vadd.f32 %v6764, %v6776
        %v6804 = vadd.f32 %v6765, %v6776
        %v6805 = vadd.f32 %v6766, %v6776
        %v6806 = vadd.f32 %v6767, %v6776
        %v6807 = vadd.f32 %v6768, %v6776
        %v6808 = vadd.f32 %v6769, %v6776
        %v6809 = vadd.f32 %v6770, %v6776
        %v6810 = vmax.f32 %v6778, 0.0
        %v6811 = vmax.f32 %v6779, 0.0
        %v6812 = vmax.f32 %v6780, 0.0
        %v6813 = vmax.f32 %v6781, 0.0
        %v6814 = vmax.f32 %v6782, 0.0
        %v6815 = vmax.f32 %v6783, 0.0
        %v6816 = vmax.f32 %v6784, 0.0
        %v6817 = vmax.f32 %v6785, 0.0
        %v6818 = vmax.f32 %v6786, 0.0
        %v6819 = vmax.f32 %v6787, 0.0
        %v6820 = vmax.f32 %v6788, 0.0
        %v6821 = vmax.f32 %v6789, 0.0
        %v6822 = vmax.f32 %v6790, 0.0
        %v6823 = vmax.f32 %v6791, 0.0
        %v6824 = vmax.f32 %v6792, 0.0
        %v6825 = vmax.f32 %v6793, 0.0
        %v6826 = vmax.f32 %v6794, 0.0
        %v6827 = vmax.f32 %v6795, 0.0
        %v6828 = vmax.f32 %v6796, 0.0
        %v6829 = vmax.f32 %v6797, 0.0
        %v6830 = vmax.f32 %v6798, 0.0
        %v6831 = vmax.f32 %v6799, 0.0
        %v6832 = vmax.f32 %v6800, 0.0
        %v6833 = vmax.f32 %v6801, 0.0
        %v6834 = vmax.f32 %v6802, 0.0
        %v6835 = vmax.f32 %v6803, 0.0
        %v6836 = vmax.f32 %v6804, 0.0
        %v6837 = vmax.f32 %v6805, 0.0
        %v6838 = vmax.f32 %v6806, 0.0
        %v6839 = vmax.f32 %v6807, 0.0
        %v6840 = vmax.f32 %v6808, 0.0
        %v6841 = vmax.f32 %v6809, 0.0
        %v6842 = vrot.slane %v6810, 7
        %v6843 = vrot.slane %v6811, 7
        %v6844 = vrot.slane %v6812, 7
        %v6845 = vrot.slane %v6813, 7
        %v6846 = vrot.slane %v6814, 7
        %v6847 = vrot.slane %v6815, 7
        %v6848 = vrot.slane %v6816, 7
        %v6849 = vrot.slane %v6817, 7
        %v6850 = vrot.slane %v6818, 7
        %v6851 = vrot.slane %v6819, 7
        %v6852 = vrot.slane %v6820, 7
        %v6853 = vrot.slane %v6821, 7
        %v6854 = vrot.slane %v6822, 7
        %v6855 = vrot.slane %v6823, 7
        %v6856 = vrot.slane %v6824, 7
        %v6857 = vrot.slane %v6825, 7
        %v6858 = vrot.slane %v6826, 7
        %v6859 = vrot.slane %v6827, 7
        %v6860 = vrot.slane %v6828, 7
        %v6861 = vrot.slane %v6829, 7
        %v6862 = vrot.slane %v6830, 7
        %v6863 = vrot.slane %v6831, 7
        %v6864 = vrot.slane %v6832, 7
        %v6865 = vrot.slane %v6833, 7
        %v6866 = vrot.slane %v6834, 7
        %v6867 = vrot.slane %v6835, 7
        %v6868 = vrot.slane %v6836, 7
        %v6869 = vrot.slane %v6837, 7
        %v6870 = vrot.slane %v6838, 7
        %v6871 = vrot.slane %v6839, 7
        %v6872 = vrot.slane %v6840, 7
        %v6873 = vrot.slane %v6841, 7
        %v6874 = vsel %vm1304, %v6872, %v6873
        %v6875 = vsel %vm1304, %v6871, %v6872
        %v6876 = vsel %vm1304, %v6870, %v6871
        %v6877 = vsel %vm1304, %v6869, %v6870
        %v6878 = vsel %vm1304, %v6868, %v6869
        %v6879 = vsel %vm1304, %v6867, %v6868
        %v6880 = vsel %vm1304, %v6866, %v6867
        %v6881 = vsel %vm1304, %v6865, %v6866
        %v6882 = vsel %vm1304, %v6864, %v6865
        %v6883 = vsel %vm1304, %v6863, %v6864
        %v6884 = vsel %vm1304, %v6862, %v6863
        %v6885 = vsel %vm1304, %v6861, %v6862
        %v6886 = vsel %vm1304, %v6860, %v6861
        %v6887 = vsel %vm1304, %v6859, %v6860
        %v6888 = vsel %vm1304, %v6858, %v6859
        %v6889 = vsel %vm1304, %v6857, %v6858
        %v6890 = vsel %vm1304, %v6856, %v6857
        %v6891 = vsel %vm1304, %v6855, %v6856
        %v6892 = vsel %vm1304, %v6854, %v6855
        %v6893 = vsel %vm1304, %v6853, %v6854
        %v6894 = vsel %vm1304, %v6852, %v6853
        %v6895 = vsel %vm1304, %v6851, %v6852
        %v6896 = vsel %vm1304, %v6850, %v6851
        %v6897 = vsel %vm1304, %v6849, %v6850
        %v6898 = vsel %vm1304, %v6848, %v6849
        %v6899 = vsel %vm1304, %v6847, %v6848
        %v6900 = vsel %vm1304, %v6846, %v6847
        %v6901 = vsel %vm1304, %v6845, %v6846
        %v6902 = vsel %vm1304, %v6844, %v6845
        %v6903 = vsel %vm1304, %v6843, %v6844
        %v6904 = vsel %vm1304, %v6842, %v6843
        %v6905 = vsel %vm1304, %v6873, %v6842
        %v6906 = vsel %vm1369, 0.0, %v6905
        %v6907 = vsel %vm1370, 0.0, %v6904
        %v6908 = vsel %vm1371, 0.0, %v6903
        %v6909 = vsel %vm1372, 0.0, %v6902
        %v6910 = vsel %vm1373, 0.0, %v6901
        %v6911 = vsel %vm1374, 0.0, %v6900
        %v6912 = vsel %vm1375, 0.0, %v6899
        %v6913 = vsel %vm1376, 0.0, %v6898
        %v6914 = vsel %vm1377, 0.0, %v6897
        %v6915 = vsel %vm1378, 0.0, %v6896
        %v6916 = vsel %vm1379, 0.0, %v6895
        %v6917 = vsel %vm1380, 0.0, %v6894
        %v6918 = vsel %vm1381, 0.0, %v6893
        %v6919 = vsel %vm1382, 0.0, %v6892
        %v6920 = vsel %vm1383, 0.0, %v6891
        %v6921 = vsel %vm1384, 0.0, %v6890
        %v6922 = vsel %vm1385, 0.0, %v6889
        %v6923 = vsel %vm1386, 0.0, %v6888
        %v6924 = vsel %vm1387, 0.0, %v6887
        %v6925 = vsel %vm1388, 0.0, %v6886
        %v6926 = vsel %vm1389, 0.0, %v6885
        %v6927 = vsel %vm1390, 0.0, %v6884
        %v6928 = vsel %vm1391, 0.0, %v6883
        %v6929 = vsel %vm1392, 0.0, %v6882
        %v6930 = vsel %vm1393, 0.0, %v6881
        %v6931 = vsel %vm1394, 0.0, %v6880
        %v6932 = vsel %vm1395, 0.0, %v6879
        %v6933 = vsel %vm1396, 0.0, %v6878
        %v6934 = vsel %vm1397, 0.0, %v6877
        %v6935 = vsel %vm1398, 0.0, %v6876
        %v6936 = vsel %vm1399, 0.0, %v6875
        %v6937 = vsel %vm1400, 0.0, %v6874
        %v6938 = vrot.slane %v6810, 1
        %v6939 = vrot.slane %v6811, 1
        %v6940 = vrot.slane %v6812, 1
        %v6941 = vrot.slane %v6813, 1
        %v6942 = vrot.slane %v6814, 1
        %v6943 = vrot.slane %v6815, 1
        %v6944 = vrot.slane %v6816, 1
        %v6945 = vrot.slane %v6817, 1
        %v6946 = vrot.slane %v6818, 1
        %v6947 = vrot.slane %v6819, 1
        %v6948 = vrot.slane %v6820, 1
        %v6949 = vrot.slane %v6821, 1
        %v6950 = vrot.slane %v6822, 1
        %v6951 = vrot.slane %v6823, 1
        %v6952 = vrot.slane %v6824, 1
        %v6953 = vrot.slane %v6825, 1
        %v6954 = vrot.slane %v6826, 1
        %v6955 = vrot.slane %v6827, 1
        %v6956 = vrot.slane %v6828, 1
        %v6957 = vrot.slane %v6829, 1
        %v6958 = vrot.slane %v6830, 1
        %v6959 = vrot.slane %v6831, 1
        %v6960 = vrot.slane %v6832, 1
        %v6961 = vrot.slane %v6833, 1
        %v6962 = vrot.slane %v6834, 1
        %v6963 = vrot.slane %v6835, 1
        %v6964 = vrot.slane %v6836, 1
        %v6965 = vrot.slane %v6837, 1
        %v6966 = vrot.slane %v6838, 1
        %v6967 = vrot.slane %v6839, 1
        %v6968 = vrot.slane %v6840, 1
        %v6969 = vrot.slane %v6841, 1
        %v6970 = vsel %vm1465, %v6968, %v6969
        %v6971 = vsel %vm1465, %v6967, %v6968
        %v6972 = vsel %vm1465, %v6966, %v6967
        %v6973 = vsel %vm1465, %v6965, %v6966
        %v6974 = vsel %vm1465, %v6964, %v6965
        %v6975 = vsel %vm1465, %v6963, %v6964
        %v6976 = vsel %vm1465, %v6962, %v6963
        %v6977 = vsel %vm1465, %v6961, %v6962
        %v6978 = vsel %vm1465, %v6960, %v6961
        %v6979 = vsel %vm1465, %v6959, %v6960
        %v6980 = vsel %vm1465, %v6958, %v6959
        %v6981 = vsel %vm1465, %v6957, %v6958
        %v6982 = vsel %vm1465, %v6956, %v6957
        %v6983 = vsel %vm1465, %v6955, %v6956
        %v6984 = vsel %vm1465, %v6954, %v6955
        %v6985 = vsel %vm1465, %v6953, %v6954
        %v6986 = vsel %vm1465, %v6952, %v6953
        %v6987 = vsel %vm1465, %v6951, %v6952
        %v6988 = vsel %vm1465, %v6950, %v6951
        %v6989 = vsel %vm1465, %v6949, %v6950
        %v6990 = vsel %vm1465, %v6948, %v6949
        %v6991 = vsel %vm1465, %v6947, %v6948
        %v6992 = vsel %vm1465, %v6946, %v6947
        %v6993 = vsel %vm1465, %v6945, %v6946
        %v6994 = vsel %vm1465, %v6944, %v6945
        %v6995 = vsel %vm1465, %v6943, %v6944
        %v6996 = vsel %vm1465, %v6942, %v6943
        %v6997 = vsel %vm1465, %v6941, %v6942
        %v6998 = vsel %vm1465, %v6940, %v6941
        %v6999 = vsel %vm1465, %v6939, %v6940
        %v7000 = vsel %vm1465, %v6938, %v6939
        %v7001 = vsel %vm1465, %v6969, %v6938
        %v7002 = vsel %vm1530, 0.0, %v7000
        %v7003 = vsel %vm1531, 0.0, %v6999
        %v7004 = vsel %vm1532, 0.0, %v6998
        %v7005 = vsel %vm1533, 0.0, %v6997
        %v7006 = vsel %vm1534, 0.0, %v6996
        %v7007 = vsel %vm1535, 0.0, %v6995
        %v7008 = vsel %vm1536, 0.0, %v6994
        %v7009 = vsel %vm1537, 0.0, %v6993
        %v7010 = vsel %vm1538, 0.0, %v6992
        %v7011 = vsel %vm1539, 0.0, %v6991
        %v7012 = vsel %vm1540, 0.0, %v6990
        %v7013 = vsel %vm1541, 0.0, %v6989
        %v7014 = vsel %vm1542, 0.0, %v6988
        %v7015 = vsel %vm1543, 0.0, %v6987
        %v7016 = vsel %vm1544, 0.0, %v6986
        %v7017 = vsel %vm1545, 0.0, %v6985
        %v7018 = vsel %vm1546, 0.0, %v6984
        %v7019 = vsel %vm1547, 0.0, %v6983
        %v7020 = vsel %vm1548, 0.0, %v6982
        %v7021 = vsel %vm1549, 0.0, %v6981
        %v7022 = vsel %vm1550, 0.0, %v6980
        %v7023 = vsel %vm1551, 0.0, %v6979
        %v7024 = vsel %vm1552, 0.0, %v6978
        %v7025 = vsel %vm1553, 0.0, %v6977
        %v7026 = vsel %vm1554, 0.0, %v6976
        %v7027 = vsel %vm1555, 0.0, %v6975
        %v7028 = vsel %vm1556, 0.0, %v6974
        %v7029 = vsel %vm1557, 0.0, %v6973
        %v7030 = vsel %vm1558, 0.0, %v6972
        %v7031 = vsel %vm1559, 0.0, %v6971
        %v7032 = vsel %vm1560, 0.0, %v6970
        %v7033 = vsel %vm1561, 0.0, %v7001
        %v7034 = vld [vmem:[#allocation10] sm:$0xff]
        %v7035 = vld [vmem:[#allocation10 + $0x8] sm:$0xff]
        %v7036 = vld [vmem:[#allocation10 + $0x10] sm:$0xff]
        %v7037 = vld [vmem:[#allocation10 + $0x18] sm:$0xff]
        %v7038 = vld [vmem:[#allocation10 + $0x20] sm:$0xff]
        %v7039 = vld [vmem:[#allocation10 + $0x28] sm:$0xff]
        %v7040 = vld [vmem:[#allocation10 + $0x30] sm:$0xff]
        %v7041 = vld [vmem:[#allocation10 + $0x38] sm:$0xff]
        %v7042 = vld [vmem:[#allocation10 + $0x40] sm:$0xff]
        %v7043 = vld [vmem:[#allocation10 + $0x48] sm:$0xff]
        %v7044 = vld [vmem:[#allocation10 + $0x50] sm:$0xff]
        %v7045 = vld [vmem:[#allocation10 + $0x58] sm:$0xff]
        %v7046 = vld [vmem:[#allocation10 + $0x60] sm:$0xff]
        %v7047 = vld [vmem:[#allocation10 + $0x68] sm:$0xff]
        %v7048 = vld [vmem:[#allocation10 + $0x70] sm:$0xff]
        %v7049 = vld [vmem:[#allocation10 + $0x78] sm:$0xff]
        %v7050 = vld [vmem:[#allocation10 + $0x80] sm:$0xff]
        %v7051 = vld [vmem:[#allocation10 + $0x88] sm:$0xff]
        %v7052 = vld [vmem:[#allocation10 + $0x90] sm:$0xff]
        %v7053 = vld [vmem:[#allocation10 + $0x98] sm:$0xff]
        %v7054 = vld [vmem:[#allocation10 + $0xa0] sm:$0xff]
        %v7055 = vld [vmem:[#allocation10 + $0xa8] sm:$0xff]
        %v7056 = vld [vmem:[#allocation10 + $0xb0] sm:$0xff]
        %v7057 = vld [vmem:[#allocation10 + $0xb8] sm:$0xff]
        %v7058 = vld [vmem:[#allocation10 + $0xc0] sm:$0xff]
        %v7059 = vld [vmem:[#allocation10 + $0xc8] sm:$0xff]
        %v7060 = vld [vmem:[#allocation10 + $0xd0] sm:$0xff]
        %v7061 = vld [vmem:[#allocation10 + $0xd8] sm:$0xff]
        %v7062 = vld [vmem:[#allocation10 + $0xe0] sm:$0xff]
        %v7063 = vld [vmem:[#allocation10 + $0xe8] sm:$0xff]
        %v7064 = vld [vmem:[#allocation10 + $0xf0] sm:$0xff]
        %v7065 = vld [vmem:[#allocation10 + $0xf8] sm:$0xff]
        %7066 = vmatprep.subr.mxu0 0.0
        %7067 = vmatpush1.msra.mxu0 %v7065
        %7068 = vmatprep.subr.mxu0 0.0
        %7069 = vmatpush1.msra.mxu0 %v7064
        %7070 = vmatprep.subr.mxu0 0.0
        %7071 = vmatpush1.msra.mxu0 %v7063
        %7072 = vmatprep.subr.mxu0 0.0
        %7073 = vmatpush1.msra.mxu0 %v7062
        %7074 = vmatprep.subr.mxu0 0.0
        %7075 = vmatpush1.msra.mxu0 %v7061
        %7076 = vmatprep.subr.mxu0 0.0
        %7077 = vmatpush1.msra.mxu0 %v7060
        %7078 = vmatprep.subr.mxu0 0.0
        %7079 = vmatpush1.msra.mxu0 %v7059
        %7080 = vmatprep.subr.mxu0 0.0
        %7081 = vmatpush1.msra.mxu0 %v7058
        %7082 = vmatprep.subr.mxu0 0.0
        %7083 = vmatpush1.msra.mxu0 %v7057
        %7084 = vmatprep.subr.mxu0 0.0
        %7085 = vmatpush1.msra.mxu0 %v7056
        %7086 = vmatprep.subr.mxu0 0.0
        %7087 = vmatpush1.msra.mxu0 %v7055
        %7088 = vmatprep.subr.mxu0 0.0
        %7089 = vmatpush1.msra.mxu0 %v7054
        %7090 = vmatprep.subr.mxu0 0.0
        %7091 = vmatpush1.msra.mxu0 %v7053
        %7092 = vmatprep.subr.mxu0 0.0
        %7093 = vmatpush1.msra.mxu0 %v7052
        %7094 = vmatprep.subr.mxu0 0.0
        %7095 = vmatpush1.msra.mxu0 %v7051
        %7096 = vmatprep.subr.mxu0 0.0
        %7097 = vmatpush1.msra.mxu0 %v7050
        %7098 = vmatprep.subr.mxu0 0.0
        %7099 = vmatpush2.msra.mxu0 0.0
        %7100 = vmatprep.subr.mxu0 0.0
        %7101 = vmatpush2.msra.mxu0 0.0
        %7102 = vmatprep.subr.mxu0 0.0
        %7103 = vmatpush2.msra.mxu0 0.0
        %7104 = vmatprep.subr.mxu0 0.0
        %7105 = vmatpush2.msra.mxu0 0.0
        %7106 = vmatprep.subr.mxu0 0.0
        %7107 = vmatpush2.msra.mxu0 0.0
        %7108 = vmatprep.subr.mxu0 0.0
        %7109 = vmatpush2.msra.mxu0 0.0
        %7110 = vmatprep.subr.mxu0 0.0
        %7111 = vmatpush2.msra.mxu0 0.0
        %7112 = vmatprep.subr.mxu0 0.0
        %7113 = vmatpush2.msra.mxu0 0.0
        %7114 = vmatprep.subr.mxu0 0.0
        %7115 = vmatpush2.msra.mxu0 0.0
        %7116 = vmatprep.subr.mxu0 0.0
        %7117 = vmatpush2.msra.mxu0 0.0
        %7118 = vmatprep.subr.mxu0 0.0
        %7119 = vmatpush2.msra.mxu0 0.0
        %7120 = vmatprep.subr.mxu0 0.0
        %7121 = vmatpush2.msra.mxu0 0.0
        %7122 = vmatprep.subr.mxu0 0.0
        %7123 = vmatpush2.msra.mxu0 0.0
        %7124 = vmatprep.subr.mxu0 0.0
        %7125 = vmatpush2.msra.mxu0 0.0
        %7126 = vmatprep.subr.mxu0 0.0
        %7127 = vmatpush2.msra.mxu0 0.0
        %7128 = vmatprep.subr.mxu0 0.0
        %7129 = vmatpush2.msra.mxu0 0.0
        %7130 = vmatprep.mubr.f32.mxu0 0.0
        %7131 = vmatmul.mubr.f32.gmra.mxu0 %v6810
        %v7132 = vpop.f32.mrf.mxu0
        %v7133 = vadd.f32 0.0, %v7132
        %v7134 = vpop.f32.mrf.mxu0
        %7135 = vmatprep.mubr.f32.mxu0 0.0
        %7136 = vmatmul.mubr.f32.gmra.mxu0 %v6811
        %v7137 = vpop.f32.mrf.mxu0
        %v7138 = vadd.f32 0.0, %v7137
        %v7139 = vpop.f32.mrf.mxu0
        %7140 = vmatprep.mubr.f32.mxu0 0.0
        %7141 = vmatmul.mubr.f32.gmra.mxu0 %v6812
        %v7142 = vpop.f32.mrf.mxu0
        %v7143 = vadd.f32 0.0, %v7142
        %v7144 = vpop.f32.mrf.mxu0
        %7145 = vmatprep.mubr.f32.mxu0 0.0
        %7146 = vmatmul.mubr.f32.gmra.mxu0 %v6813
        %v7147 = vpop.f32.mrf.mxu0
        %v7148 = vadd.f32 0.0, %v7147
        %v7149 = vpop.f32.mrf.mxu0
        %7150 = vmatprep.mubr.f32.mxu0 0.0
        %7151 = vmatmul.mubr.f32.gmra.mxu0 %v6814
        %v7152 = vpop.f32.mrf.mxu0
        %v7153 = vadd.f32 0.0, %v7152
        %v7154 = vpop.f32.mrf.mxu0
        %7155 = vmatprep.mubr.f32.mxu0 0.0
        %7156 = vmatmul.mubr.f32.gmra.mxu0 %v6815
        %v7157 = vpop.f32.mrf.mxu0
        %v7158 = vadd.f32 0.0, %v7157
        %v7159 = vpop.f32.mrf.mxu0
        %7160 = vmatprep.mubr.f32.mxu0 0.0
        %7161 = vmatmul.mubr.f32.gmra.mxu0 %v6816
        %v7162 = vpop.f32.mrf.mxu0
        %v7163 = vadd.f32 0.0, %v7162
        %v7164 = vpop.f32.mrf.mxu0
        %7165 = vmatprep.mubr.f32.mxu0 0.0
        %7166 = vmatmul.mubr.f32.gmra.mxu0 %v6817
        %v7167 = vpop.f32.mrf.mxu0
        %v7168 = vadd.f32 0.0, %v7167
        %v7169 = vpop.f32.mrf.mxu0
        %7170 = vmatprep.mubr.f32.mxu0 0.0
        %7171 = vmatmul.mubr.f32.gmra.mxu0 %v6818
        %v7172 = vpop.f32.mrf.mxu0
        %v7173 = vadd.f32 0.0, %v7172
        %v7174 = vpop.f32.mrf.mxu0
        %7175 = vmatprep.mubr.f32.mxu0 0.0
        %7176 = vmatmul.mubr.f32.gmra.mxu0 %v6819
        %v7177 = vpop.f32.mrf.mxu0
        %v7178 = vadd.f32 0.0, %v7177
        %v7179 = vpop.f32.mrf.mxu0
        %7180 = vmatprep.mubr.f32.mxu0 0.0
        %7181 = vmatmul.mubr.f32.gmra.mxu0 %v6820
        %v7182 = vpop.f32.mrf.mxu0
        %v7183 = vadd.f32 0.0, %v7182
        %v7184 = vpop.f32.mrf.mxu0
        %7185 = vmatprep.mubr.f32.mxu0 0.0
        %7186 = vmatmul.mubr.f32.gmra.mxu0 %v6821
        %v7187 = vpop.f32.mrf.mxu0
        %v7188 = vadd.f32 0.0, %v7187
        %v7189 = vpop.f32.mrf.mxu0
        %7190 = vmatprep.mubr.f32.mxu0 0.0
        %7191 = vmatmul.mubr.f32.gmra.mxu0 %v6822
        %v7192 = vpop.f32.mrf.mxu0
        %v7193 = vadd.f32 0.0, %v7192
        %v7194 = vpop.f32.mrf.mxu0
        %7195 = vmatprep.mubr.f32.mxu0 0.0
        %7196 = vmatmul.mubr.f32.gmra.mxu0 %v6823
        %v7197 = vpop.f32.mrf.mxu0
        %v7198 = vadd.f32 0.0, %v7197
        %v7199 = vpop.f32.mrf.mxu0
        %7200 = vmatprep.mubr.f32.mxu0 0.0
        %7201 = vmatmul.mubr.f32.gmra.mxu0 %v6824
        %v7202 = vpop.f32.mrf.mxu0
        %v7203 = vadd.f32 0.0, %v7202
        %v7204 = vpop.f32.mrf.mxu0
        %7205 = vmatprep.mubr.f32.mxu0 0.0
        %7206 = vmatmul.mubr.f32.gmra.mxu0 %v6825
        %v7207 = vpop.f32.mrf.mxu0
        %v7208 = vadd.f32 0.0, %v7207
        %v7209 = vpop.f32.mrf.mxu0
        %7210 = vmatprep.mubr.f32.mxu0 0.0
        %7211 = vmatmul.mubr.f32.gmra.mxu0 %v6826
        %v7212 = vpop.f32.mrf.mxu0
        %v7213 = vadd.f32 0.0, %v7212
        %v7214 = vpop.f32.mrf.mxu0
        %7215 = vmatprep.mubr.f32.mxu0 0.0
        %7216 = vmatmul.mubr.f32.gmra.mxu0 %v6827
        %v7217 = vpop.f32.mrf.mxu0
        %v7218 = vadd.f32 0.0, %v7217
        %v7219 = vpop.f32.mrf.mxu0
        %7220 = vmatprep.mubr.f32.mxu0 0.0
        %7221 = vmatmul.mubr.f32.gmra.mxu0 %v6828
        %v7222 = vpop.f32.mrf.mxu0
        %v7223 = vadd.f32 0.0, %v7222
        %v7224 = vpop.f32.mrf.mxu0
        %7225 = vmatprep.mubr.f32.mxu0 0.0
        %7226 = vmatmul.mubr.f32.gmra.mxu0 %v6829
        %v7227 = vpop.f32.mrf.mxu0
        %v7228 = vadd.f32 0.0, %v7227
        %v7229 = vpop.f32.mrf.mxu0
        %7230 = vmatprep.mubr.f32.mxu0 0.0
        %7231 = vmatmul.mubr.f32.gmra.mxu0 %v6830
        %v7232 = vpop.f32.mrf.mxu0
        %v7233 = vadd.f32 0.0, %v7232
        %v7234 = vpop.f32.mrf.mxu0
        %7235 = vmatprep.mubr.f32.mxu0 0.0
        %7236 = vmatmul.mubr.f32.gmra.mxu0 %v6831
        %v7237 = vpop.f32.mrf.mxu0
        %v7238 = vadd.f32 0.0, %v7237
        %v7239 = vpop.f32.mrf.mxu0
        %7240 = vmatprep.mubr.f32.mxu0 0.0
        %7241 = vmatmul.mubr.f32.gmra.mxu0 %v6832
        %v7242 = vpop.f32.mrf.mxu0
        %v7243 = vadd.f32 0.0, %v7242
        %v7244 = vpop.f32.mrf.mxu0
        %7245 = vmatprep.mubr.f32.mxu0 0.0
        %7246 = vmatmul.mubr.f32.gmra.mxu0 %v6833
        %v7247 = vpop.f32.mrf.mxu0
        %v7248 = vadd.f32 0.0, %v7247
        %v7249 = vpop.f32.mrf.mxu0
        %7250 = vmatprep.mubr.f32.mxu0 0.0
        %7251 = vmatmul.mubr.f32.gmra.mxu0 %v6834
        %v7252 = vpop.f32.mrf.mxu0
        %v7253 = vadd.f32 0.0, %v7252
        %v7254 = vpop.f32.mrf.mxu0
        %7255 = vmatprep.mubr.f32.mxu0 0.0
        %7256 = vmatmul.mubr.f32.gmra.mxu0 %v6835
        %v7257 = vpop.f32.mrf.mxu0
        %v7258 = vadd.f32 0.0, %v7257
        %v7259 = vpop.f32.mrf.mxu0
        %7260 = vmatprep.mubr.f32.mxu0 0.0
        %7261 = vmatmul.mubr.f32.gmra.mxu0 %v6836
        %v7262 = vpop.f32.mrf.mxu0
        %v7263 = vadd.f32 0.0, %v7262
        %v7264 = vpop.f32.mrf.mxu0
        %7265 = vmatprep.mubr.f32.mxu0 0.0
        %7266 = vmatmul.mubr.f32.gmra.mxu0 %v6837
        %v7267 = vpop.f32.mrf.mxu0
        %v7268 = vadd.f32 0.0, %v7267
        %v7269 = vpop.f32.mrf.mxu0
        %7270 = vmatprep.mubr.f32.mxu0 0.0
        %7271 = vmatmul.mubr.f32.gmra.mxu0 %v6838
        %v7272 = vpop.f32.mrf.mxu0
        %v7273 = vadd.f32 0.0, %v7272
        %v7274 = vpop.f32.mrf.mxu0
        %7275 = vmatprep.mubr.f32.mxu0 0.0
        %7276 = vmatmul.mubr.f32.gmra.mxu0 %v6839
        %v7277 = vpop.f32.mrf.mxu0
        %v7278 = vadd.f32 0.0, %v7277
        %v7279 = vpop.f32.mrf.mxu0
        %7280 = vmatprep.mubr.f32.mxu0 0.0
        %7281 = vmatmul.mubr.f32.gmra.mxu0 %v6840
        %v7282 = vpop.f32.mrf.mxu0
        %v7283 = vadd.f32 0.0, %v7282
        %v7284 = vpop.f32.mrf.mxu0
        %7285 = vmatprep.mubr.f32.mxu0 0.0
        %7286 = vmatmul.mubr.f32.gmra.mxu0 %v6841
        %v7287 = vpop.f32.mrf.mxu0
        %v7288 = vadd.f32 0.0, %v7287
        %v7289 = vpop.f32.mrf.mxu0
        %7290 = vdwg.mxu0
        %7291 = vmatprep.subr.mxu0 0.0
        %7292 = vmatpush1.msra.mxu0 %v7049
        %7293 = vmatprep.subr.mxu0 0.0
        %7294 = vmatpush1.msra.mxu0 %v7048
        %7295 = vmatprep.subr.mxu0 0.0
        %7296 = vmatpush1.msra.mxu0 %v7047
        %7297 = vmatprep.subr.mxu0 0.0
        %7298 = vmatpush1.msra.mxu0 %v7046
        %7299 = vmatprep.subr.mxu0 0.0
        %7300 = vmatpush1.msra.mxu0 %v7045
        %7301 = vmatprep.subr.mxu0 0.0
        %7302 = vmatpush1.msra.mxu0 %v7044
        %7303 = vmatprep.subr.mxu0 0.0
        %7304 = vmatpush1.msra.mxu0 %v7043
        %7305 = vmatprep.subr.mxu0 0.0
        %7306 = vmatpush1.msra.mxu0 %v7042
        %7307 = vmatprep.subr.mxu0 0.0
        %7308 = vmatpush1.msra.mxu0 %v7041
        %7309 = vmatprep.subr.mxu0 0.0
        %7310 = vmatpush1.msra.mxu0 %v7040
        %7311 = vmatprep.subr.mxu0 0.0
        %7312 = vmatpush1.msra.mxu0 %v7039
        %7313 = vmatprep.subr.mxu0 0.0
        %7314 = vmatpush1.msra.mxu0 %v7038
        %7315 = vmatprep.subr.mxu0 0.0
        %7316 = vmatpush1.msra.mxu0 %v7037
        %7317 = vmatprep.subr.mxu0 0.0
        %7318 = vmatpush1.msra.mxu0 %v7036
        %7319 = vmatprep.subr.mxu0 0.0
        %7320 = vmatpush1.msra.mxu0 %v7035
        %7321 = vmatprep.subr.mxu0 0.0
        %7322 = vmatpush1.msra.mxu0 %v7034
        %7323 = vmatprep.subr.mxu0 0.0
        %7324 = vmatpush2.msra.mxu0 0.0
        %7325 = vmatprep.subr.mxu0 0.0
        %7326 = vmatpush2.msra.mxu0 0.0
        %7327 = vmatprep.subr.mxu0 0.0
        %7328 = vmatpush2.msra.mxu0 0.0
        %7329 = vmatprep.subr.mxu0 0.0
        %7330 = vmatpush2.msra.mxu0 0.0
        %7331 = vmatprep.subr.mxu0 0.0
        %7332 = vmatpush2.msra.mxu0 0.0
        %7333 = vmatprep.subr.mxu0 0.0
        %7334 = vmatpush2.msra.mxu0 0.0
        %7335 = vmatprep.subr.mxu0 0.0
        %7336 = vmatpush2.msra.mxu0 0.0
        %7337 = vmatprep.subr.mxu0 0.0
        %7338 = vmatpush2.msra.mxu0 0.0
        %7339 = vmatprep.subr.mxu0 0.0
        %7340 = vmatpush2.msra.mxu0 0.0
        %7341 = vmatprep.subr.mxu0 0.0
        %7342 = vmatpush2.msra.mxu0 0.0
        %7343 = vmatprep.subr.mxu0 0.0
        %7344 = vmatpush2.msra.mxu0 0.0
        %7345 = vmatprep.subr.mxu0 0.0
        %7346 = vmatpush2.msra.mxu0 0.0
        %7347 = vmatprep.subr.mxu0 0.0
        %7348 = vmatpush2.msra.mxu0 0.0
        %7349 = vmatprep.subr.mxu0 0.0
        %7350 = vmatpush2.msra.mxu0 0.0
        %7351 = vmatprep.subr.mxu0 0.0
        %7352 = vmatpush2.msra.mxu0 0.0
        %7353 = vmatprep.subr.mxu0 0.0
        %7354 = vmatpush2.msra.mxu0 0.0
        %7355 = vmatprep.mubr.f32.mxu0 0.0
        %7356 = vmatmul.mubr.f32.gmra.mxu0 %v6906
        %v7357 = vpop.f32.mrf.mxu0
        %v7358 = vadd.f32 %v7133, %v7357
        %v7359 = vpop.f32.mrf.mxu0
        %7360 = vmatprep.mubr.f32.mxu0 0.0
        %7361 = vmatmul.mubr.f32.gmra.mxu0 %v6907
        %v7362 = vpop.f32.mrf.mxu0
        %v7363 = vadd.f32 %v7138, %v7362
        %v7364 = vpop.f32.mrf.mxu0
        %7365 = vmatprep.mubr.f32.mxu0 0.0
        %7366 = vmatmul.mubr.f32.gmra.mxu0 %v6908
        %v7367 = vpop.f32.mrf.mxu0
        %v7368 = vadd.f32 %v7143, %v7367
        %v7369 = vpop.f32.mrf.mxu0
        %7370 = vmatprep.mubr.f32.mxu0 0.0
        %7371 = vmatmul.mubr.f32.gmra.mxu0 %v6909
        %v7372 = vpop.f32.mrf.mxu0
        %v7373 = vadd.f32 %v7148, %v7372
        %v7374 = vpop.f32.mrf.mxu0
        %7375 = vmatprep.mubr.f32.mxu0 0.0
        %7376 = vmatmul.mubr.f32.gmra.mxu0 %v6910
        %v7377 = vpop.f32.mrf.mxu0
        %v7378 = vadd.f32 %v7153, %v7377
        %v7379 = vpop.f32.mrf.mxu0
        %7380 = vmatprep.mubr.f32.mxu0 0.0
        %7381 = vmatmul.mubr.f32.gmra.mxu0 %v6911
        %v7382 = vpop.f32.mrf.mxu0
        %v7383 = vadd.f32 %v7158, %v7382
        %v7384 = vpop.f32.mrf.mxu0
        %7385 = vmatprep.mubr.f32.mxu0 0.0
        %7386 = vmatmul.mubr.f32.gmra.mxu0 %v6912
        %v7387 = vpop.f32.mrf.mxu0
        %v7388 = vadd.f32 %v7163, %v7387
        %v7389 = vpop.f32.mrf.mxu0
        %7390 = vmatprep.mubr.f32.mxu0 0.0
        %7391 = vmatmul.mubr.f32.gmra.mxu0 %v6913
        %v7392 = vpop.f32.mrf.mxu0
        %v7393 = vadd.f32 %v7168, %v7392
        %v7394 = vpop.f32.mrf.mxu0
        %7395 = vmatprep.mubr.f32.mxu0 0.0
        %7396 = vmatmul.mubr.f32.gmra.mxu0 %v6914
        %v7397 = vpop.f32.mrf.mxu0
        %v7398 = vadd.f32 %v7173, %v7397
        %v7399 = vpop.f32.mrf.mxu0
        %7400 = vmatprep.mubr.f32.mxu0 0.0
        %7401 = vmatmul.mubr.f32.gmra.mxu0 %v6915
        %v7402 = vpop.f32.mrf.mxu0
        %v7403 = vadd.f32 %v7178, %v7402
        %v7404 = vpop.f32.mrf.mxu0
        %7405 = vmatprep.mubr.f32.mxu0 0.0
        %7406 = vmatmul.mubr.f32.gmra.mxu0 %v6916
        %v7407 = vpop.f32.mrf.mxu0
        %v7408 = vadd.f32 %v7183, %v7407
        %v7409 = vpop.f32.mrf.mxu0
        %7410 = vmatprep.mubr.f32.mxu0 0.0
        %7411 = vmatmul.mubr.f32.gmra.mxu0 %v6917
        %v7412 = vpop.f32.mrf.mxu0
        %v7413 = vadd.f32 %v7188, %v7412
        %v7414 = vpop.f32.mrf.mxu0
        %7415 = vmatprep.mubr.f32.mxu0 0.0
        %7416 = vmatmul.mubr.f32.gmra.mxu0 %v6918
        %v7417 = vpop.f32.mrf.mxu0
        %v7418 = vadd.f32 %v7193, %v7417
        %v7419 = vpop.f32.mrf.mxu0
        %7420 = vmatprep.mubr.f32.mxu0 0.0
        %7421 = vmatmul.mubr.f32.gmra.mxu0 %v6919
        %v7422 = vpop.f32.mrf.mxu0
        %v7423 = vadd.f32 %v7198, %v7422
        %v7424 = vpop.f32.mrf.mxu0
        %7425 = vmatprep.mubr.f32.mxu0 0.0
        %7426 = vmatmul.mubr.f32.gmra.mxu0 %v6920
        %v7427 = vpop.f32.mrf.mxu0
        %v7428 = vadd.f32 %v7203, %v7427
        %v7429 = vpop.f32.mrf.mxu0
        %7430 = vmatprep.mubr.f32.mxu0 0.0
        %7431 = vmatmul.mubr.f32.gmra.mxu0 %v6921
        %v7432 = vpop.f32.mrf.mxu0
        %v7433 = vadd.f32 %v7208, %v7432
        %v7434 = vpop.f32.mrf.mxu0
        %7435 = vmatprep.mubr.f32.mxu0 0.0
        %7436 = vmatmul.mubr.f32.gmra.mxu0 %v6922
        %v7437 = vpop.f32.mrf.mxu0
        %v7438 = vadd.f32 %v7213, %v7437
        %v7439 = vpop.f32.mrf.mxu0
        %7440 = vmatprep.mubr.f32.mxu0 0.0
        %7441 = vmatmul.mubr.f32.gmra.mxu0 %v6923
        %v7442 = vpop.f32.mrf.mxu0
        %v7443 = vadd.f32 %v7218, %v7442
        %v7444 = vpop.f32.mrf.mxu0
        %7445 = vmatprep.mubr.f32.mxu0 0.0
        %7446 = vmatmul.mubr.f32.gmra.mxu0 %v6924
        %v7447 = vpop.f32.mrf.mxu0
        %v7448 = vadd.f32 %v7223, %v7447
        %v7449 = vpop.f32.mrf.mxu0
        %7450 = vmatprep.mubr.f32.mxu0 0.0
        %7451 = vmatmul.mubr.f32.gmra.mxu0 %v6925
        %v7452 = vpop.f32.mrf.mxu0
        %v7453 = vadd.f32 %v7228, %v7452
        %v7454 = vpop.f32.mrf.mxu0
        %7455 = vmatprep.mubr.f32.mxu0 0.0
        %7456 = vmatmul.mubr.f32.gmra.mxu0 %v6926
        %v7457 = vpop.f32.mrf.mxu0
        %v7458 = vadd.f32 %v7233, %v7457
        %v7459 = vpop.f32.mrf.mxu0
        %7460 = vmatprep.mubr.f32.mxu0 0.0
        %7461 = vmatmul.mubr.f32.gmra.mxu0 %v6927
        %v7462 = vpop.f32.mrf.mxu0
        %v7463 = vadd.f32 %v7238, %v7462
        %v7464 = vpop.f32.mrf.mxu0
        %7465 = vmatprep.mubr.f32.mxu0 0.0
        %7466 = vmatmul.mubr.f32.gmra.mxu0 %v6928
        %v7467 = vpop.f32.mrf.mxu0
        %v7468 = vadd.f32 %v7243, %v7467
        %v7469 = vpop.f32.mrf.mxu0
        %7470 = vmatprep.mubr.f32.mxu0 0.0
        %7471 = vmatmul.mubr.f32.gmra.mxu0 %v6929
        %v7472 = vpop.f32.mrf.mxu0
        %v7473 = vadd.f32 %v7248, %v7472
        %v7474 = vpop.f32.mrf.mxu0
        %7475 = vmatprep.mubr.f32.mxu0 0.0
        %7476 = vmatmul.mubr.f32.gmra.mxu0 %v6930
        %v7477 = vpop.f32.mrf.mxu0
        %v7478 = vadd.f32 %v7253, %v7477
        %v7479 = vpop.f32.mrf.mxu0
        %7480 = vmatprep.mubr.f32.mxu0 0.0
        %7481 = vmatmul.mubr.f32.gmra.mxu0 %v6931
        %v7482 = vpop.f32.mrf.mxu0
        %v7483 = vadd.f32 %v7258, %v7482
        %v7484 = vpop.f32.mrf.mxu0
        %7485 = vmatprep.mubr.f32.mxu0 0.0
        %7486 = vmatmul.mubr.f32.gmra.mxu0 %v6932
        %v7487 = vpop.f32.mrf.mxu0
        %v7488 = vadd.f32 %v7263, %v7487
        %v7489 = vpop.f32.mrf.mxu0
        %7490 = vmatprep.mubr.f32.mxu0 0.0
        %7491 = vmatmul.mubr.f32.gmra.mxu0 %v6933
        %v7492 = vpop.f32.mrf.mxu0
        %v7493 = vadd.f32 %v7268, %v7492
        %v7494 = vpop.f32.mrf.mxu0
        %7495 = vmatprep.mubr.f32.mxu0 0.0
        %7496 = vmatmul.mubr.f32.gmra.mxu0 %v6934
        %v7497 = vpop.f32.mrf.mxu0
        %v7498 = vadd.f32 %v7273, %v7497
        %v7499 = vpop.f32.mrf.mxu0
        %7500 = vmatprep.mubr.f32.mxu0 0.0
        %7501 = vmatmul.mubr.f32.gmra.mxu0 %v6935
        %v7502 = vpop.f32.mrf.mxu0
        %v7503 = vadd.f32 %v7278, %v7502
        %v7504 = vpop.f32.mrf.mxu0
        %7505 = vmatprep.mubr.f32.mxu0 0.0
        %7506 = vmatmul.mubr.f32.gmra.mxu0 %v6936
        %v7507 = vpop.f32.mrf.mxu0
        %v7508 = vadd.f32 %v7283, %v7507
        %v7509 = vpop.f32.mrf.mxu0
        %7510 = vmatprep.mubr.f32.mxu0 0.0
        %7511 = vmatmul.mubr.f32.gmra.mxu0 %v6937
        %v7512 = vpop.f32.mrf.mxu0
        %v7513 = vadd.f32 %v7288, %v7512
        %v7514 = vpop.f32.mrf.mxu0
        %7515 = vdwg.mxu0
        %v7516 = vld [vmem:[#allocation10 + $0x100] sm:$0xff]
        %v7517 = vld [vmem:[#allocation10 + $0x108] sm:$0xff]
        %v7518 = vld [vmem:[#allocation10 + $0x110] sm:$0xff]
        %v7519 = vld [vmem:[#allocation10 + $0x118] sm:$0xff]
        %v7520 = vld [vmem:[#allocation10 + $0x120] sm:$0xff]
        %v7521 = vld [vmem:[#allocation10 + $0x128] sm:$0xff]
        %v7522 = vld [vmem:[#allocation10 + $0x130] sm:$0xff]
        %v7523 = vld [vmem:[#allocation10 + $0x138] sm:$0xff]
        %v7524 = vld [vmem:[#allocation10 + $0x140] sm:$0xff]
        %v7525 = vld [vmem:[#allocation10 + $0x148] sm:$0xff]
        %v7526 = vld [vmem:[#allocation10 + $0x150] sm:$0xff]
        %v7527 = vld [vmem:[#allocation10 + $0x158] sm:$0xff]
        %v7528 = vld [vmem:[#allocation10 + $0x160] sm:$0xff]
        %v7529 = vld [vmem:[#allocation10 + $0x168] sm:$0xff]
        %v7530 = vld [vmem:[#allocation10 + $0x170] sm:$0xff]
        %v7531 = vld [vmem:[#allocation10 + $0x178] sm:$0xff]
        %7532 = vmatprep.subr.mxu0 0.0
        %7533 = vmatpush1.msra.mxu0 %v7531
        %7534 = vmatprep.subr.mxu0 0.0
        %7535 = vmatpush1.msra.mxu0 %v7530
        %7536 = vmatprep.subr.mxu0 0.0
        %7537 = vmatpush1.msra.mxu0 %v7529
        %7538 = vmatprep.subr.mxu0 0.0
        %7539 = vmatpush1.msra.mxu0 %v7528
        %7540 = vmatprep.subr.mxu0 0.0
        %7541 = vmatpush1.msra.mxu0 %v7527
        %7542 = vmatprep.subr.mxu0 0.0
        %7543 = vmatpush1.msra.mxu0 %v7526
        %7544 = vmatprep.subr.mxu0 0.0
        %7545 = vmatpush1.msra.mxu0 %v7525
        %7546 = vmatprep.subr.mxu0 0.0
        %7547 = vmatpush1.msra.mxu0 %v7524
        %7548 = vmatprep.subr.mxu0 0.0
        %7549 = vmatpush1.msra.mxu0 %v7523
        %7550 = vmatprep.subr.mxu0 0.0
        %7551 = vmatpush1.msra.mxu0 %v7522
        %7552 = vmatprep.subr.mxu0 0.0
        %7553 = vmatpush1.msra.mxu0 %v7521
        %7554 = vmatprep.subr.mxu0 0.0
        %7555 = vmatpush1.msra.mxu0 %v7520
        %7556 = vmatprep.subr.mxu0 0.0
        %7557 = vmatpush1.msra.mxu0 %v7519
        %7558 = vmatprep.subr.mxu0 0.0
        %7559 = vmatpush1.msra.mxu0 %v7518
        %7560 = vmatprep.subr.mxu0 0.0
        %7561 = vmatpush1.msra.mxu0 %v7517
        %7562 = vmatprep.subr.mxu0 0.0
        %7563 = vmatpush1.msra.mxu0 %v7516
        %7564 = vmatprep.subr.mxu0 0.0
        %7565 = vmatpush2.msra.mxu0 0.0
        %7566 = vmatprep.subr.mxu0 0.0
        %7567 = vmatpush2.msra.mxu0 0.0
        %7568 = vmatprep.subr.mxu0 0.0
        %7569 = vmatpush2.msra.mxu0 0.0
        %7570 = vmatprep.subr.mxu0 0.0
        %7571 = vmatpush2.msra.mxu0 0.0
        %7572 = vmatprep.subr.mxu0 0.0
        %7573 = vmatpush2.msra.mxu0 0.0
        %7574 = vmatprep.subr.mxu0 0.0
        %7575 = vmatpush2.msra.mxu0 0.0
        %7576 = vmatprep.subr.mxu0 0.0
        %7577 = vmatpush2.msra.mxu0 0.0
        %7578 = vmatprep.subr.mxu0 0.0
        %7579 = vmatpush2.msra.mxu0 0.0
        %7580 = vmatprep.subr.mxu0 0.0
        %7581 = vmatpush2.msra.mxu0 0.0
        %7582 = vmatprep.subr.mxu0 0.0
        %7583 = vmatpush2.msra.mxu0 0.0
        %7584 = vmatprep.subr.mxu0 0.0
        %7585 = vmatpush2.msra.mxu0 0.0
        %7586 = vmatprep.subr.mxu0 0.0
        %7587 = vmatpush2.msra.mxu0 0.0
        %7588 = vmatprep.subr.mxu0 0.0
        %7589 = vmatpush2.msra.mxu0 0.0
        %7590 = vmatprep.subr.mxu0 0.0
        %7591 = vmatpush2.msra.mxu0 0.0
        %7592 = vmatprep.subr.mxu0 0.0
        %7593 = vmatpush2.msra.mxu0 0.0
        %7594 = vmatprep.subr.mxu0 0.0
        %7595 = vmatpush2.msra.mxu0 0.0
        %7596 = vmatprep.mubr.f32.mxu0 0.0
        %7597 = vmatmul.mubr.f32.gmra.mxu0 %v7002
        %v7598 = vpop.f32.mrf.mxu0
        %v7599 = vadd.f32 0.0, %v7598
        %v7600 = vpop.f32.mrf.mxu0
        %7601 = vmatprep.mubr.f32.mxu0 0.0
        %7602 = vmatmul.mubr.f32.gmra.mxu0 %v7003
        %v7603 = vpop.f32.mrf.mxu0
        %v7604 = vadd.f32 0.0, %v7603
        %v7605 = vpop.f32.mrf.mxu0
        %7606 = vmatprep.mubr.f32.mxu0 0.0
        %7607 = vmatmul.mubr.f32.gmra.mxu0 %v7004
        %v7608 = vpop.f32.mrf.mxu0
        %v7609 = vadd.f32 0.0, %v7608
        %v7610 = vpop.f32.mrf.mxu0
        %7611 = vmatprep.mubr.f32.mxu0 0.0
        %7612 = vmatmul.mubr.f32.gmra.mxu0 %v7005
        %v7613 = vpop.f32.mrf.mxu0
        %v7614 = vadd.f32 0.0, %v7613
        %v7615 = vpop.f32.mrf.mxu0
        %7616 = vmatprep.mubr.f32.mxu0 0.0
        %7617 = vmatmul.mubr.f32.gmra.mxu0 %v7006
        %v7618 = vpop.f32.mrf.mxu0
        %v7619 = vadd.f32 0.0, %v7618
        %v7620 = vpop.f32.mrf.mxu0
        %7621 = vmatprep.mubr.f32.mxu0 0.0
        %7622 = vmatmul.mubr.f32.gmra.mxu0 %v7007
        %v7623 = vpop.f32.mrf.mxu0
        %v7624 = vadd.f32 0.0, %v7623
        %v7625 = vpop.f32.mrf.mxu0
        %7626 = vmatprep.mubr.f32.mxu0 0.0
        %7627 = vmatmul.mubr.f32.gmra.mxu0 %v7008
        %v7628 = vpop.f32.mrf.mxu0
        %v7629 = vadd.f32 0.0, %v7628
        %v7630 = vpop.f32.mrf.mxu0
        %7631 = vmatprep.mubr.f32.mxu0 0.0
        %7632 = vmatmul.mubr.f32.gmra.mxu0 %v7009
        %v7633 = vpop.f32.mrf.mxu0
        %v7634 = vadd.f32 0.0, %v7633
        %v7635 = vpop.f32.mrf.mxu0
        %7636 = vmatprep.mubr.f32.mxu0 0.0
        %7637 = vmatmul.mubr.f32.gmra.mxu0 %v7010
        %v7638 = vpop.f32.mrf.mxu0
        %v7639 = vadd.f32 0.0, %v7638
        %v7640 = vpop.f32.mrf.mxu0
        %7641 = vmatprep.mubr.f32.mxu0 0.0
        %7642 = vmatmul.mubr.f32.gmra.mxu0 %v7011
        %v7643 = vpop.f32.mrf.mxu0
        %v7644 = vadd.f32 0.0, %v7643
        %v7645 = vpop.f32.mrf.mxu0
        %7646 = vmatprep.mubr.f32.mxu0 0.0
        %7647 = vmatmul.mubr.f32.gmra.mxu0 %v7012
        %v7648 = vpop.f32.mrf.mxu0
        %v7649 = vadd.f32 0.0, %v7648
        %v7650 = vpop.f32.mrf.mxu0
        %7651 = vmatprep.mubr.f32.mxu0 0.0
        %7652 = vmatmul.mubr.f32.gmra.mxu0 %v7013
        %v7653 = vpop.f32.mrf.mxu0
        %v7654 = vadd.f32 0.0, %v7653
        %v7655 = vpop.f32.mrf.mxu0
        %7656 = vmatprep.mubr.f32.mxu0 0.0
        %7657 = vmatmul.mubr.f32.gmra.mxu0 %v7014
        %v7658 = vpop.f32.mrf.mxu0
        %v7659 = vadd.f32 0.0, %v7658
        %v7660 = vpop.f32.mrf.mxu0
        %7661 = vmatprep.mubr.f32.mxu0 0.0
        %7662 = vmatmul.mubr.f32.gmra.mxu0 %v7015
        %v7663 = vpop.f32.mrf.mxu0
        %v7664 = vadd.f32 0.0, %v7663
        %v7665 = vpop.f32.mrf.mxu0
        %7666 = vmatprep.mubr.f32.mxu0 0.0
        %7667 = vmatmul.mubr.f32.gmra.mxu0 %v7016
        %v7668 = vpop.f32.mrf.mxu0
        %v7669 = vadd.f32 0.0, %v7668
        %v7670 = vpop.f32.mrf.mxu0
        %7671 = vmatprep.mubr.f32.mxu0 0.0
        %7672 = vmatmul.mubr.f32.gmra.mxu0 %v7017
        %v7673 = vpop.f32.mrf.mxu0
        %v7674 = vadd.f32 0.0, %v7673
        %v7675 = vpop.f32.mrf.mxu0
        %7676 = vmatprep.mubr.f32.mxu0 0.0
        %7677 = vmatmul.mubr.f32.gmra.mxu0 %v7018
        %v7678 = vpop.f32.mrf.mxu0
        %v7679 = vadd.f32 0.0, %v7678
        %v7680 = vpop.f32.mrf.mxu0
        %7681 = vmatprep.mubr.f32.mxu0 0.0
        %7682 = vmatmul.mubr.f32.gmra.mxu0 %v7019
        %v7683 = vpop.f32.mrf.mxu0
        %v7684 = vadd.f32 0.0, %v7683
        %v7685 = vpop.f32.mrf.mxu0
        %7686 = vmatprep.mubr.f32.mxu0 0.0
        %7687 = vmatmul.mubr.f32.gmra.mxu0 %v7020
        %v7688 = vpop.f32.mrf.mxu0
        %v7689 = vadd.f32 0.0, %v7688
        %v7690 = vpop.f32.mrf.mxu0
        %7691 = vmatprep.mubr.f32.mxu0 0.0
        %7692 = vmatmul.mubr.f32.gmra.mxu0 %v7021
        %v7693 = vpop.f32.mrf.mxu0
        %v7694 = vadd.f32 0.0, %v7693
        %v7695 = vpop.f32.mrf.mxu0
        %7696 = vmatprep.mubr.f32.mxu0 0.0
        %7697 = vmatmul.mubr.f32.gmra.mxu0 %v7022
        %v7698 = vpop.f32.mrf.mxu0
        %v7699 = vadd.f32 0.0, %v7698
        %v7700 = vpop.f32.mrf.mxu0
        %7701 = vmatprep.mubr.f32.mxu0 0.0
        %7702 = vmatmul.mubr.f32.gmra.mxu0 %v7023
        %v7703 = vpop.f32.mrf.mxu0
        %v7704 = vadd.f32 0.0, %v7703
        %v7705 = vpop.f32.mrf.mxu0
        %7706 = vmatprep.mubr.f32.mxu0 0.0
        %7707 = vmatmul.mubr.f32.gmra.mxu0 %v7024
        %v7708 = vpop.f32.mrf.mxu0
        %v7709 = vadd.f32 0.0, %v7708
        %v7710 = vpop.f32.mrf.mxu0
        %7711 = vmatprep.mubr.f32.mxu0 0.0
        %7712 = vmatmul.mubr.f32.gmra.mxu0 %v7025
        %v7713 = vpop.f32.mrf.mxu0
        %v7714 = vadd.f32 0.0, %v7713
        %v7715 = vpop.f32.mrf.mxu0
        %7716 = vmatprep.mubr.f32.mxu0 0.0
        %7717 = vmatmul.mubr.f32.gmra.mxu0 %v7026
        %v7718 = vpop.f32.mrf.mxu0
        %v7719 = vadd.f32 0.0, %v7718
        %v7720 = vpop.f32.mrf.mxu0
        %7721 = vmatprep.mubr.f32.mxu0 0.0
        %7722 = vmatmul.mubr.f32.gmra.mxu0 %v7027
        %v7723 = vpop.f32.mrf.mxu0
        %v7724 = vadd.f32 0.0, %v7723
        %v7725 = vpop.f32.mrf.mxu0
        %7726 = vmatprep.mubr.f32.mxu0 0.0
        %7727 = vmatmul.mubr.f32.gmra.mxu0 %v7028
        %v7728 = vpop.f32.mrf.mxu0
        %v7729 = vadd.f32 0.0, %v7728
        %v7730 = vpop.f32.mrf.mxu0
        %7731 = vmatprep.mubr.f32.mxu0 0.0
        %7732 = vmatmul.mubr.f32.gmra.mxu0 %v7029
        %v7733 = vpop.f32.mrf.mxu0
        %v7734 = vadd.f32 0.0, %v7733
        %v7735 = vpop.f32.mrf.mxu0
        %7736 = vmatprep.mubr.f32.mxu0 0.0
        %7737 = vmatmul.mubr.f32.gmra.mxu0 %v7030
        %v7738 = vpop.f32.mrf.mxu0
        %v7739 = vadd.f32 0.0, %v7738
        %v7740 = vpop.f32.mrf.mxu0
        %7741 = vmatprep.mubr.f32.mxu0 0.0
        %7742 = vmatmul.mubr.f32.gmra.mxu0 %v7031
        %v7743 = vpop.f32.mrf.mxu0
        %v7744 = vadd.f32 0.0, %v7743
        %v7745 = vpop.f32.mrf.mxu0
        %7746 = vmatprep.mubr.f32.mxu0 0.0
        %7747 = vmatmul.mubr.f32.gmra.mxu0 %v7032
        %v7748 = vpop.f32.mrf.mxu0
        %v7749 = vadd.f32 0.0, %v7748
        %v7750 = vpop.f32.mrf.mxu0
        %7751 = vmatprep.mubr.f32.mxu0 0.0
        %7752 = vmatmul.mubr.f32.gmra.mxu0 %v7033
        %v7753 = vpop.f32.mrf.mxu0
        %v7754 = vadd.f32 0.0, %v7753
        %v7755 = vpop.f32.mrf.mxu0
        %7756 = vdwg.mxu0
        %v7757 = vadd.f32 %v7358, %v7599
        %v7758 = vadd.f32 %v7363, %v7604
        %v7759 = vadd.f32 %v7368, %v7609
        %v7760 = vadd.f32 %v7373, %v7614
        %v7761 = vadd.f32 %v7378, %v7619
        %v7762 = vadd.f32 %v7383, %v7624
        %v7763 = vadd.f32 %v7388, %v7629
        %v7764 = vadd.f32 %v7393, %v7634
        %v7765 = vadd.f32 %v7398, %v7639
        %v7766 = vadd.f32 %v7403, %v7644
        %v7767 = vadd.f32 %v7408, %v7649
        %v7768 = vadd.f32 %v7413, %v7654
        %v7769 = vadd.f32 %v7418, %v7659
        %v7770 = vadd.f32 %v7423, %v7664
        %v7771 = vadd.f32 %v7428, %v7669
        %v7772 = vadd.f32 %v7433, %v7674
        %v7773 = vadd.f32 %v7438, %v7679
        %v7774 = vadd.f32 %v7443, %v7684
        %v7775 = vadd.f32 %v7448, %v7689
        %v7776 = vadd.f32 %v7453, %v7694
        %v7777 = vadd.f32 %v7458, %v7699
        %v7778 = vadd.f32 %v7463, %v7704
        %v7779 = vadd.f32 %v7468, %v7709
        %v7780 = vadd.f32 %v7473, %v7714
        %v7781 = vadd.f32 %v7478, %v7719
        %v7782 = vadd.f32 %v7483, %v7724
        %v7783 = vadd.f32 %v7488, %v7729
        %v7784 = vadd.f32 %v7493, %v7734
        %v7785 = vadd.f32 %v7498, %v7739
        %v7786 = vadd.f32 %v7503, %v7744
        %v7787 = vadd.f32 %v7508, %v7749
        %v7788 = vadd.f32 %v7513, %v7754
        %v7789 = vld [vmem:[#allocation10 + $0x180] sm:$0xff]
        %v7790 = vld [vmem:[#allocation10 + $0x188] sm:$0xff]
        %v7791 = vld [vmem:[#allocation10 + $0x190] sm:$0xff]
        %v7792 = vld [vmem:[#allocation10 + $0x198] sm:$0xff]
        %v7793 = vld [vmem:[#allocation10 + $0x1a0] sm:$0xff]
        %v7794 = vld [vmem:[#allocation10 + $0x1a8] sm:$0xff]
        %v7795 = vld [vmem:[#allocation10 + $0x1b0] sm:$0xff]
        %v7796 = vld [vmem:[#allocation10 + $0x1b8] sm:$0xff]
        %v7797 = vld [vmem:[#allocation10 + $0x1c0] sm:$0xff]
        %v7798 = vld [vmem:[#allocation10 + $0x1c8] sm:$0xff]
        %v7799 = vld [vmem:[#allocation10 + $0x1d0] sm:$0xff]
        %v7800 = vld [vmem:[#allocation10 + $0x1d8] sm:$0xff]
        %v7801 = vld [vmem:[#allocation10 + $0x1e0] sm:$0xff]
        %v7802 = vld [vmem:[#allocation10 + $0x1e8] sm:$0xff]
        %v7803 = vld [vmem:[#allocation10 + $0x1f0] sm:$0xff]
        %v7804 = vld [vmem:[#allocation10 + $0x1f8] sm:$0xff]
        %v7805 = vld [vmem:[#allocation10 + $0x200] sm:$0xff]
        %v7806 = vld [vmem:[#allocation10 + $0x208] sm:$0xff]
        %v7807 = vld [vmem:[#allocation10 + $0x210] sm:$0xff]
        %v7808 = vld [vmem:[#allocation10 + $0x218] sm:$0xff]
        %v7809 = vld [vmem:[#allocation10 + $0x220] sm:$0xff]
        %v7810 = vld [vmem:[#allocation10 + $0x228] sm:$0xff]
        %v7811 = vld [vmem:[#allocation10 + $0x230] sm:$0xff]
        %v7812 = vld [vmem:[#allocation10 + $0x238] sm:$0xff]
        %v7813 = vld [vmem:[#allocation10 + $0x240] sm:$0xff]
        %v7814 = vld [vmem:[#allocation10 + $0x248] sm:$0xff]
        %v7815 = vld [vmem:[#allocation10 + $0x250] sm:$0xff]
        %v7816 = vld [vmem:[#allocation10 + $0x258] sm:$0xff]
        %v7817 = vld [vmem:[#allocation10 + $0x260] sm:$0xff]
        %v7818 = vld [vmem:[#allocation10 + $0x268] sm:$0xff]
        %v7819 = vld [vmem:[#allocation10 + $0x270] sm:$0xff]
        %v7820 = vld [vmem:[#allocation10 + $0x278] sm:$0xff]
        %7821 = vmatprep.subr.mxu0 0.0
        %7822 = vmatpush1.msra.mxu0 %v7820
        %7823 = vmatprep.subr.mxu0 0.0
        %7824 = vmatpush1.msra.mxu0 %v7819
        %7825 = vmatprep.subr.mxu0 0.0
        %7826 = vmatpush1.msra.mxu0 %v7818
        %7827 = vmatprep.subr.mxu0 0.0
        %7828 = vmatpush1.msra.mxu0 %v7817
        %7829 = vmatprep.subr.mxu0 0.0
        %7830 = vmatpush1.msra.mxu0 %v7816
        %7831 = vmatprep.subr.mxu0 0.0
        %7832 = vmatpush1.msra.mxu0 %v7815
        %7833 = vmatprep.subr.mxu0 0.0
        %7834 = vmatpush1.msra.mxu0 %v7814
        %7835 = vmatprep.subr.mxu0 0.0
        %7836 = vmatpush1.msra.mxu0 %v7813
        %7837 = vmatprep.subr.mxu0 0.0
        %7838 = vmatpush1.msra.mxu0 %v7812
        %7839 = vmatprep.subr.mxu0 0.0
        %7840 = vmatpush1.msra.mxu0 %v7811
        %7841 = vmatprep.subr.mxu0 0.0
        %7842 = vmatpush1.msra.mxu0 %v7810
        %7843 = vmatprep.subr.mxu0 0.0
        %7844 = vmatpush1.msra.mxu0 %v7809
        %7845 = vmatprep.subr.mxu0 0.0
        %7846 = vmatpush1.msra.mxu0 %v7808
        %7847 = vmatprep.subr.mxu0 0.0
        %7848 = vmatpush1.msra.mxu0 %v7807
        %7849 = vmatprep.subr.mxu0 0.0
        %7850 = vmatpush1.msra.mxu0 %v7806
        %7851 = vmatprep.subr.mxu0 0.0
        %7852 = vmatpush1.msra.mxu0 %v7805
        %7853 = vmatprep.subr.mxu0 0.0
        %7854 = vmatpush2.msra.mxu0 0.0
        %7855 = vmatprep.subr.mxu0 0.0
        %7856 = vmatpush2.msra.mxu0 0.0
        %7857 = vmatprep.subr.mxu0 0.0
        %7858 = vmatpush2.msra.mxu0 0.0
        %7859 = vmatprep.subr.mxu0 0.0
        %7860 = vmatpush2.msra.mxu0 0.0
        %7861 = vmatprep.subr.mxu0 0.0
        %7862 = vmatpush2.msra.mxu0 0.0
        %7863 = vmatprep.subr.mxu0 0.0
        %7864 = vmatpush2.msra.mxu0 0.0
        %7865 = vmatprep.subr.mxu0 0.0
        %7866 = vmatpush2.msra.mxu0 0.0
        %7867 = vmatprep.subr.mxu0 0.0
        %7868 = vmatpush2.msra.mxu0 0.0
        %7869 = vmatprep.subr.mxu0 0.0
        %7870 = vmatpush2.msra.mxu0 0.0
        %7871 = vmatprep.subr.mxu0 0.0
        %7872 = vmatpush2.msra.mxu0 0.0
        %7873 = vmatprep.subr.mxu0 0.0
        %7874 = vmatpush2.msra.mxu0 0.0
        %7875 = vmatprep.subr.mxu0 0.0
        %7876 = vmatpush2.msra.mxu0 0.0
        %7877 = vmatprep.subr.mxu0 0.0
        %7878 = vmatpush2.msra.mxu0 0.0
        %7879 = vmatprep.subr.mxu0 0.0
        %7880 = vmatpush2.msra.mxu0 0.0
        %7881 = vmatprep.subr.mxu0 0.0
        %7882 = vmatpush2.msra.mxu0 0.0
        %7883 = vmatprep.subr.mxu0 0.0
        %7884 = vmatpush2.msra.mxu0 0.0
        %7885 = vmatprep.mubr.f32.mxu0 0.0
        %7886 = vmatmul.mubr.f32.gmra.mxu0 %v6810
        %v7887 = vpop.f32.mrf.mxu0
        %v7888 = vadd.f32 0.0, %v7887
        %v7889 = vpop.f32.mrf.mxu0
        %7890 = vmatprep.mubr.f32.mxu0 0.0
        %7891 = vmatmul.mubr.f32.gmra.mxu0 %v6811
        %v7892 = vpop.f32.mrf.mxu0
        %v7893 = vadd.f32 0.0, %v7892
        %v7894 = vpop.f32.mrf.mxu0
        %7895 = vmatprep.mubr.f32.mxu0 0.0
        %7896 = vmatmul.mubr.f32.gmra.mxu0 %v6812
        %v7897 = vpop.f32.mrf.mxu0
        %v7898 = vadd.f32 0.0, %v7897
        %v7899 = vpop.f32.mrf.mxu0
        %7900 = vmatprep.mubr.f32.mxu0 0.0
        %7901 = vmatmul.mubr.f32.gmra.mxu0 %v6813
        %v7902 = vpop.f32.mrf.mxu0
        %v7903 = vadd.f32 0.0, %v7902
        %v7904 = vpop.f32.mrf.mxu0
        %7905 = vmatprep.mubr.f32.mxu0 0.0
        %7906 = vmatmul.mubr.f32.gmra.mxu0 %v6814
        %v7907 = vpop.f32.mrf.mxu0
        %v7908 = vadd.f32 0.0, %v7907
        %v7909 = vpop.f32.mrf.mxu0
        %7910 = vmatprep.mubr.f32.mxu0 0.0
        %7911 = vmatmul.mubr.f32.gmra.mxu0 %v6815
        %v7912 = vpop.f32.mrf.mxu0
        %v7913 = vadd.f32 0.0, %v7912
        %v7914 = vpop.f32.mrf.mxu0
        %7915 = vmatprep.mubr.f32.mxu0 0.0
        %7916 = vmatmul.mubr.f32.gmra.mxu0 %v6816
        %v7917 = vpop.f32.mrf.mxu0
        %v7918 = vadd.f32 0.0, %v7917
        %v7919 = vpop.f32.mrf.mxu0
        %7920 = vmatprep.mubr.f32.mxu0 0.0
        %7921 = vmatmul.mubr.f32.gmra.mxu0 %v6817
        %v7922 = vpop.f32.mrf.mxu0
        %v7923 = vadd.f32 0.0, %v7922
        %v7924 = vpop.f32.mrf.mxu0
        %7925 = vmatprep.mubr.f32.mxu0 0.0
        %7926 = vmatmul.mubr.f32.gmra.mxu0 %v6818
        %v7927 = vpop.f32.mrf.mxu0
        %v7928 = vadd.f32 0.0, %v7927
        %v7929 = vpop.f32.mrf.mxu0
        %7930 = vmatprep.mubr.f32.mxu0 0.0
        %7931 = vmatmul.mubr.f32.gmra.mxu0 %v6819
        %v7932 = vpop.f32.mrf.mxu0
        %v7933 = vadd.f32 0.0, %v7932
        %v7934 = vpop.f32.mrf.mxu0
        %7935 = vmatprep.mubr.f32.mxu0 0.0
        %7936 = vmatmul.mubr.f32.gmra.mxu0 %v6820
        %v7937 = vpop.f32.mrf.mxu0
        %v7938 = vadd.f32 0.0, %v7937
        %v7939 = vpop.f32.mrf.mxu0
        %7940 = vmatprep.mubr.f32.mxu0 0.0
        %7941 = vmatmul.mubr.f32.gmra.mxu0 %v6821
        %v7942 = vpop.f32.mrf.mxu0
        %v7943 = vadd.f32 0.0, %v7942
        %v7944 = vpop.f32.mrf.mxu0
        %7945 = vmatprep.mubr.f32.mxu0 0.0
        %7946 = vmatmul.mubr.f32.gmra.mxu0 %v6822
        %v7947 = vpop.f32.mrf.mxu0
        %v7948 = vadd.f32 0.0, %v7947
        %v7949 = vpop.f32.mrf.mxu0
        %7950 = vmatprep.mubr.f32.mxu0 0.0
        %7951 = vmatmul.mubr.f32.gmra.mxu0 %v6823
        %v7952 = vpop.f32.mrf.mxu0
        %v7953 = vadd.f32 0.0, %v7952
        %v7954 = vpop.f32.mrf.mxu0
        %7955 = vmatprep.mubr.f32.mxu0 0.0
        %7956 = vmatmul.mubr.f32.gmra.mxu0 %v6824
        %v7957 = vpop.f32.mrf.mxu0
        %v7958 = vadd.f32 0.0, %v7957
        %v7959 = vpop.f32.mrf.mxu0
        %7960 = vmatprep.mubr.f32.mxu0 0.0
        %7961 = vmatmul.mubr.f32.gmra.mxu0 %v6825
        %v7962 = vpop.f32.mrf.mxu0
        %v7963 = vadd.f32 0.0, %v7962
        %v7964 = vpop.f32.mrf.mxu0
        %7965 = vmatprep.mubr.f32.mxu0 0.0
        %7966 = vmatmul.mubr.f32.gmra.mxu0 %v6826
        %v7967 = vpop.f32.mrf.mxu0
        %v7968 = vadd.f32 0.0, %v7967
        %v7969 = vpop.f32.mrf.mxu0
        %7970 = vmatprep.mubr.f32.mxu0 0.0
        %7971 = vmatmul.mubr.f32.gmra.mxu0 %v6827
        %v7972 = vpop.f32.mrf.mxu0
        %v7973 = vadd.f32 0.0, %v7972
        %v7974 = vpop.f32.mrf.mxu0
        %7975 = vmatprep.mubr.f32.mxu0 0.0
        %7976 = vmatmul.mubr.f32.gmra.mxu0 %v6828
        %v7977 = vpop.f32.mrf.mxu0
        %v7978 = vadd.f32 0.0, %v7977
        %v7979 = vpop.f32.mrf.mxu0
        %7980 = vmatprep.mubr.f32.mxu0 0.0
        %7981 = vmatmul.mubr.f32.gmra.mxu0 %v6829
        %v7982 = vpop.f32.mrf.mxu0
        %v7983 = vadd.f32 0.0, %v7982
        %v7984 = vpop.f32.mrf.mxu0
        %7985 = vmatprep.mubr.f32.mxu0 0.0
        %7986 = vmatmul.mubr.f32.gmra.mxu0 %v6830
        %v7987 = vpop.f32.mrf.mxu0
        %v7988 = vadd.f32 0.0, %v7987
        %v7989 = vpop.f32.mrf.mxu0
        %7990 = vmatprep.mubr.f32.mxu0 0.0
        %7991 = vmatmul.mubr.f32.gmra.mxu0 %v6831
        %v7992 = vpop.f32.mrf.mxu0
        %v7993 = vadd.f32 0.0, %v7992
        %v7994 = vpop.f32.mrf.mxu0
        %7995 = vmatprep.mubr.f32.mxu0 0.0
        %7996 = vmatmul.mubr.f32.gmra.mxu0 %v6832
        %v7997 = vpop.f32.mrf.mxu0
        %v7998 = vadd.f32 0.0, %v7997
        %v7999 = vpop.f32.mrf.mxu0
        %8000 = vmatprep.mubr.f32.mxu0 0.0
        %8001 = vmatmul.mubr.f32.gmra.mxu0 %v6833
        %v8002 = vpop.f32.mrf.mxu0
        %v8003 = vadd.f32 0.0, %v8002
        %v8004 = vpop.f32.mrf.mxu0
        %8005 = vmatprep.mubr.f32.mxu0 0.0
        %8006 = vmatmul.mubr.f32.gmra.mxu0 %v6834
        %v8007 = vpop.f32.mrf.mxu0
        %v8008 = vadd.f32 0.0, %v8007
        %v8009 = vpop.f32.mrf.mxu0
        %8010 = vmatprep.mubr.f32.mxu0 0.0
        %8011 = vmatmul.mubr.f32.gmra.mxu0 %v6835
        %v8012 = vpop.f32.mrf.mxu0
        %v8013 = vadd.f32 0.0, %v8012
        %v8014 = vpop.f32.mrf.mxu0
        %8015 = vmatprep.mubr.f32.mxu0 0.0
        %8016 = vmatmul.mubr.f32.gmra.mxu0 %v6836
        %v8017 = vpop.f32.mrf.mxu0
        %v8018 = vadd.f32 0.0, %v8017
        %v8019 = vpop.f32.mrf.mxu0
        %8020 = vmatprep.mubr.f32.mxu0 0.0
        %8021 = vmatmul.mubr.f32.gmra.mxu0 %v6837
        %v8022 = vpop.f32.mrf.mxu0
        %v8023 = vadd.f32 0.0, %v8022
        %v8024 = vpop.f32.mrf.mxu0
        %8025 = vmatprep.mubr.f32.mxu0 0.0
        %8026 = vmatmul.mubr.f32.gmra.mxu0 %v6838
        %v8027 = vpop.f32.mrf.mxu0
        %v8028 = vadd.f32 0.0, %v8027
        %v8029 = vpop.f32.mrf.mxu0
        %8030 = vmatprep.mubr.f32.mxu0 0.0
        %8031 = vmatmul.mubr.f32.gmra.mxu0 %v6839
        %v8032 = vpop.f32.mrf.mxu0
        %v8033 = vadd.f32 0.0, %v8032
        %v8034 = vpop.f32.mrf.mxu0
        %8035 = vmatprep.mubr.f32.mxu0 0.0
        %8036 = vmatmul.mubr.f32.gmra.mxu0 %v6840
        %v8037 = vpop.f32.mrf.mxu0
        %v8038 = vadd.f32 0.0, %v8037
        %v8039 = vpop.f32.mrf.mxu0
        %8040 = vmatprep.mubr.f32.mxu0 0.0
        %8041 = vmatmul.mubr.f32.gmra.mxu0 %v6841
        %v8042 = vpop.f32.mrf.mxu0
        %v8043 = vadd.f32 0.0, %v8042
        %v8044 = vpop.f32.mrf.mxu0
        %8045 = vdwg.mxu0
        %8046 = vmatprep.subr.mxu0 0.0
        %8047 = vmatpush1.msra.mxu0 %v7804
        %8048 = vmatprep.subr.mxu0 0.0
        %8049 = vmatpush1.msra.mxu0 %v7803
        %8050 = vmatprep.subr.mxu0 0.0
        %8051 = vmatpush1.msra.mxu0 %v7802
        %8052 = vmatprep.subr.mxu0 0.0
        %8053 = vmatpush1.msra.mxu0 %v7801
        %8054 = vmatprep.subr.mxu0 0.0
        %8055 = vmatpush1.msra.mxu0 %v7800
        %8056 = vmatprep.subr.mxu0 0.0
        %8057 = vmatpush1.msra.mxu0 %v7799
        %8058 = vmatprep.subr.mxu0 0.0
        %8059 = vmatpush1.msra.mxu0 %v7798
        %8060 = vmatprep.subr.mxu0 0.0
        %8061 = vmatpush1.msra.mxu0 %v7797
        %8062 = vmatprep.subr.mxu0 0.0
        %8063 = vmatpush1.msra.mxu0 %v7796
        %8064 = vmatprep.subr.mxu0 0.0
        %8065 = vmatpush1.msra.mxu0 %v7795
        %8066 = vmatprep.subr.mxu0 0.0
        %8067 = vmatpush1.msra.mxu0 %v7794
        %8068 = vmatprep.subr.mxu0 0.0
        %8069 = vmatpush1.msra.mxu0 %v7793
        %8070 = vmatprep.subr.mxu0 0.0
        %8071 = vmatpush1.msra.mxu0 %v7792
        %8072 = vmatprep.subr.mxu0 0.0
        %8073 = vmatpush1.msra.mxu0 %v7791
        %8074 = vmatprep.subr.mxu0 0.0
        %8075 = vmatpush1.msra.mxu0 %v7790
        %8076 = vmatprep.subr.mxu0 0.0
        %8077 = vmatpush1.msra.mxu0 %v7789
        %8078 = vmatprep.subr.mxu0 0.0
        %8079 = vmatpush2.msra.mxu0 0.0
        %8080 = vmatprep.subr.mxu0 0.0
        %8081 = vmatpush2.msra.mxu0 0.0
        %8082 = vmatprep.subr.mxu0 0.0
        %8083 = vmatpush2.msra.mxu0 0.0
        %8084 = vmatprep.subr.mxu0 0.0
        %8085 = vmatpush2.msra.mxu0 0.0
        %8086 = vmatprep.subr.mxu0 0.0
        %8087 = vmatpush2.msra.mxu0 0.0
        %8088 = vmatprep.subr.mxu0 0.0
        %8089 = vmatpush2.msra.mxu0 0.0
        %8090 = vmatprep.subr.mxu0 0.0
        %8091 = vmatpush2.msra.mxu0 0.0
        %8092 = vmatprep.subr.mxu0 0.0
        %8093 = vmatpush2.msra.mxu0 0.0
        %8094 = vmatprep.subr.mxu0 0.0
        %8095 = vmatpush2.msra.mxu0 0.0
        %8096 = vmatprep.subr.mxu0 0.0
        %8097 = vmatpush2.msra.mxu0 0.0
        %8098 = vmatprep.subr.mxu0 0.0
        %8099 = vmatpush2.msra.mxu0 0.0
        %8100 = vmatprep.subr.mxu0 0.0
        %8101 = vmatpush2.msra.mxu0 0.0
        %8102 = vmatprep.subr.mxu0 0.0
        %8103 = vmatpush2.msra.mxu0 0.0
        %8104 = vmatprep.subr.mxu0 0.0
        %8105 = vmatpush2.msra.mxu0 0.0
        %8106 = vmatprep.subr.mxu0 0.0
        %8107 = vmatpush2.msra.mxu0 0.0
        %8108 = vmatprep.subr.mxu0 0.0
        %8109 = vmatpush2.msra.mxu0 0.0
        %8110 = vmatprep.mubr.f32.mxu0 0.0
        %8111 = vmatmul.mubr.f32.gmra.mxu0 %v6906
        %v8112 = vpop.f32.mrf.mxu0
        %v8113 = vadd.f32 %v7888, %v8112
        %v8114 = vpop.f32.mrf.mxu0
        %8115 = vmatprep.mubr.f32.mxu0 0.0
        %8116 = vmatmul.mubr.f32.gmra.mxu0 %v6907
        %v8117 = vpop.f32.mrf.mxu0
        %v8118 = vadd.f32 %v7893, %v8117
        %v8119 = vpop.f32.mrf.mxu0
        %8120 = vmatprep.mubr.f32.mxu0 0.0
        %8121 = vmatmul.mubr.f32.gmra.mxu0 %v6908
        %v8122 = vpop.f32.mrf.mxu0
        %v8123 = vadd.f32 %v7898, %v8122
        %v8124 = vpop.f32.mrf.mxu0
        %8125 = vmatprep.mubr.f32.mxu0 0.0
        %8126 = vmatmul.mubr.f32.gmra.mxu0 %v6909
        %v8127 = vpop.f32.mrf.mxu0
        %v8128 = vadd.f32 %v7903, %v8127
        %v8129 = vpop.f32.mrf.mxu0
        %8130 = vmatprep.mubr.f32.mxu0 0.0
        %8131 = vmatmul.mubr.f32.gmra.mxu0 %v6910
        %v8132 = vpop.f32.mrf.mxu0
        %v8133 = vadd.f32 %v7908, %v8132
        %v8134 = vpop.f32.mrf.mxu0
        %8135 = vmatprep.mubr.f32.mxu0 0.0
        %8136 = vmatmul.mubr.f32.gmra.mxu0 %v6911
        %v8137 = vpop.f32.mrf.mxu0
        %v8138 = vadd.f32 %v7913, %v8137
        %v8139 = vpop.f32.mrf.mxu0
        %8140 = vmatprep.mubr.f32.mxu0 0.0
        %8141 = vmatmul.mubr.f32.gmra.mxu0 %v6912
        %v8142 = vpop.f32.mrf.mxu0
        %v8143 = vadd.f32 %v7918, %v8142
        %v8144 = vpop.f32.mrf.mxu0
        %8145 = vmatprep.mubr.f32.mxu0 0.0
        %8146 = vmatmul.mubr.f32.gmra.mxu0 %v6913
        %v8147 = vpop.f32.mrf.mxu0
        %v8148 = vadd.f32 %v7923, %v8147
        %v8149 = vpop.f32.mrf.mxu0
        %8150 = vmatprep.mubr.f32.mxu0 0.0
        %8151 = vmatmul.mubr.f32.gmra.mxu0 %v6914
        %v8152 = vpop.f32.mrf.mxu0
        %v8153 = vadd.f32 %v7928, %v8152
        %v8154 = vpop.f32.mrf.mxu0
        %8155 = vmatprep.mubr.f32.mxu0 0.0
        %8156 = vmatmul.mubr.f32.gmra.mxu0 %v6915
        %v8157 = vpop.f32.mrf.mxu0
        %v8158 = vadd.f32 %v7933, %v8157
        %v8159 = vpop.f32.mrf.mxu0
        %8160 = vmatprep.mubr.f32.mxu0 0.0
        %8161 = vmatmul.mubr.f32.gmra.mxu0 %v6916
        %v8162 = vpop.f32.mrf.mxu0
        %v8163 = vadd.f32 %v7938, %v8162
        %v8164 = vpop.f32.mrf.mxu0
        %8165 = vmatprep.mubr.f32.mxu0 0.0
        %8166 = vmatmul.mubr.f32.gmra.mxu0 %v6917
        %v8167 = vpop.f32.mrf.mxu0
        %v8168 = vadd.f32 %v7943, %v8167
        %v8169 = vpop.f32.mrf.mxu0
        %8170 = vmatprep.mubr.f32.mxu0 0.0
        %8171 = vmatmul.mubr.f32.gmra.mxu0 %v6918
        %v8172 = vpop.f32.mrf.mxu0
        %v8173 = vadd.f32 %v7948, %v8172
        %v8174 = vpop.f32.mrf.mxu0
        %8175 = vmatprep.mubr.f32.mxu0 0.0
        %8176 = vmatmul.mubr.f32.gmra.mxu0 %v6919
        %v8177 = vpop.f32.mrf.mxu0
        %v8178 = vadd.f32 %v7953, %v8177
        %v8179 = vpop.f32.mrf.mxu0
        %8180 = vmatprep.mubr.f32.mxu0 0.0
        %8181 = vmatmul.mubr.f32.gmra.mxu0 %v6920
        %v8182 = vpop.f32.mrf.mxu0
        %v8183 = vadd.f32 %v7958, %v8182
        %v8184 = vpop.f32.mrf.mxu0
        %8185 = vmatprep.mubr.f32.mxu0 0.0
        %8186 = vmatmul.mubr.f32.gmra.mxu0 %v6921
        %v8187 = vpop.f32.mrf.mxu0
        %v8188 = vadd.f32 %v7963, %v8187
        %v8189 = vpop.f32.mrf.mxu0
        %8190 = vmatprep.mubr.f32.mxu0 0.0
        %8191 = vmatmul.mubr.f32.gmra.mxu0 %v6922
        %v8192 = vpop.f32.mrf.mxu0
        %v8193 = vadd.f32 %v7968, %v8192
        %v8194 = vpop.f32.mrf.mxu0
        %8195 = vmatprep.mubr.f32.mxu0 0.0
        %8196 = vmatmul.mubr.f32.gmra.mxu0 %v6923
        %v8197 = vpop.f32.mrf.mxu0
        %v8198 = vadd.f32 %v7973, %v8197
        %v8199 = vpop.f32.mrf.mxu0
        %8200 = vmatprep.mubr.f32.mxu0 0.0
        %8201 = vmatmul.mubr.f32.gmra.mxu0 %v6924
        %v8202 = vpop.f32.mrf.mxu0
        %v8203 = vadd.f32 %v7978, %v8202
        %v8204 = vpop.f32.mrf.mxu0
        %8205 = vmatprep.mubr.f32.mxu0 0.0
        %8206 = vmatmul.mubr.f32.gmra.mxu0 %v6925
        %v8207 = vpop.f32.mrf.mxu0
        %v8208 = vadd.f32 %v7983, %v8207
        %v8209 = vpop.f32.mrf.mxu0
        %8210 = vmatprep.mubr.f32.mxu0 0.0
        %8211 = vmatmul.mubr.f32.gmra.mxu0 %v6926
        %v8212 = vpop.f32.mrf.mxu0
        %v8213 = vadd.f32 %v7988, %v8212
        %v8214 = vpop.f32.mrf.mxu0
        %8215 = vmatprep.mubr.f32.mxu0 0.0
        %8216 = vmatmul.mubr.f32.gmra.mxu0 %v6927
        %v8217 = vpop.f32.mrf.mxu0
        %v8218 = vadd.f32 %v7993, %v8217
        %v8219 = vpop.f32.mrf.mxu0
        %8220 = vmatprep.mubr.f32.mxu0 0.0
        %8221 = vmatmul.mubr.f32.gmra.mxu0 %v6928
        %v8222 = vpop.f32.mrf.mxu0
        %v8223 = vadd.f32 %v7998, %v8222
        %v8224 = vpop.f32.mrf.mxu0
        %8225 = vmatprep.mubr.f32.mxu0 0.0
        %8226 = vmatmul.mubr.f32.gmra.mxu0 %v6929
        %v8227 = vpop.f32.mrf.mxu0
        %v8228 = vadd.f32 %v8003, %v8227
        %v8229 = vpop.f32.mrf.mxu0
        %8230 = vmatprep.mubr.f32.mxu0 0.0
        %8231 = vmatmul.mubr.f32.gmra.mxu0 %v6930
        %v8232 = vpop.f32.mrf.mxu0
        %v8233 = vadd.f32 %v8008, %v8232
        %v8234 = vpop.f32.mrf.mxu0
        %8235 = vmatprep.mubr.f32.mxu0 0.0
        %8236 = vmatmul.mubr.f32.gmra.mxu0 %v6931
        %v8237 = vpop.f32.mrf.mxu0
        %v8238 = vadd.f32 %v8013, %v8237
        %v8239 = vpop.f32.mrf.mxu0
        %8240 = vmatprep.mubr.f32.mxu0 0.0
        %8241 = vmatmul.mubr.f32.gmra.mxu0 %v6932
        %v8242 = vpop.f32.mrf.mxu0
        %v8243 = vadd.f32 %v8018, %v8242
        %v8244 = vpop.f32.mrf.mxu0
        %8245 = vmatprep.mubr.f32.mxu0 0.0
        %8246 = vmatmul.mubr.f32.gmra.mxu0 %v6933
        %v8247 = vpop.f32.mrf.mxu0
        %v8248 = vadd.f32 %v8023, %v8247
        %v8249 = vpop.f32.mrf.mxu0
        %8250 = vmatprep.mubr.f32.mxu0 0.0
        %8251 = vmatmul.mubr.f32.gmra.mxu0 %v6934
        %v8252 = vpop.f32.mrf.mxu0
        %v8253 = vadd.f32 %v8028, %v8252
        %v8254 = vpop.f32.mrf.mxu0
        %8255 = vmatprep.mubr.f32.mxu0 0.0
        %8256 = vmatmul.mubr.f32.gmra.mxu0 %v6935
        %v8257 = vpop.f32.mrf.mxu0
        %v8258 = vadd.f32 %v8033, %v8257
        %v8259 = vpop.f32.mrf.mxu0
        %8260 = vmatprep.mubr.f32.mxu0 0.0
        %8261 = vmatmul.mubr.f32.gmra.mxu0 %v6936
        %v8262 = vpop.f32.mrf.mxu0
        %v8263 = vadd.f32 %v8038, %v8262
        %v8264 = vpop.f32.mrf.mxu0
        %8265 = vmatprep.mubr.f32.mxu0 0.0
        %8266 = vmatmul.mubr.f32.gmra.mxu0 %v6937
        %v8267 = vpop.f32.mrf.mxu0
        %v8268 = vadd.f32 %v8043, %v8267
        %v8269 = vpop.f32.mrf.mxu0
        %8270 = vdwg.mxu0
        %v8271 = vld [vmem:[#allocation10 + $0x280] sm:$0xff]
        %v8272 = vld [vmem:[#allocation10 + $0x288] sm:$0xff]
        %v8273 = vld [vmem:[#allocation10 + $0x290] sm:$0xff]
        %v8274 = vld [vmem:[#allocation10 + $0x298] sm:$0xff]
        %v8275 = vld [vmem:[#allocation10 + $0x2a0] sm:$0xff]
        %v8276 = vld [vmem:[#allocation10 + $0x2a8] sm:$0xff]
        %v8277 = vld [vmem:[#allocation10 + $0x2b0] sm:$0xff]
        %v8278 = vld [vmem:[#allocation10 + $0x2b8] sm:$0xff]
        %v8279 = vld [vmem:[#allocation10 + $0x2c0] sm:$0xff]
        %v8280 = vld [vmem:[#allocation10 + $0x2c8] sm:$0xff]
        %v8281 = vld [vmem:[#allocation10 + $0x2d0] sm:$0xff]
        %v8282 = vld [vmem:[#allocation10 + $0x2d8] sm:$0xff]
        %v8283 = vld [vmem:[#allocation10 + $0x2e0] sm:$0xff]
        %v8284 = vld [vmem:[#allocation10 + $0x2e8] sm:$0xff]
        %v8285 = vld [vmem:[#allocation10 + $0x2f0] sm:$0xff]
        %v8286 = vld [vmem:[#allocation10 + $0x2f8] sm:$0xff]
        %8287 = vmatprep.subr.mxu0 0.0
        %8288 = vmatpush1.msra.mxu0 %v8286
        %8289 = vmatprep.subr.mxu0 0.0
        %8290 = vmatpush1.msra.mxu0 %v8285
        %8291 = vmatprep.subr.mxu0 0.0
        %8292 = vmatpush1.msra.mxu0 %v8284
        %8293 = vmatprep.subr.mxu0 0.0
        %8294 = vmatpush1.msra.mxu0 %v8283
        %8295 = vmatprep.subr.mxu0 0.0
        %8296 = vmatpush1.msra.mxu0 %v8282
        %8297 = vmatprep.subr.mxu0 0.0
        %8298 = vmatpush1.msra.mxu0 %v8281
        %8299 = vmatprep.subr.mxu0 0.0
        %8300 = vmatpush1.msra.mxu0 %v8280
        %8301 = vmatprep.subr.mxu0 0.0
        %8302 = vmatpush1.msra.mxu0 %v8279
        %8303 = vmatprep.subr.mxu0 0.0
        %8304 = vmatpush1.msra.mxu0 %v8278
        %8305 = vmatprep.subr.mxu0 0.0
        %8306 = vmatpush1.msra.mxu0 %v8277
        %8307 = vmatprep.subr.mxu0 0.0
        %8308 = vmatpush1.msra.mxu0 %v8276
        %8309 = vmatprep.subr.mxu0 0.0
        %8310 = vmatpush1.msra.mxu0 %v8275
        %8311 = vmatprep.subr.mxu0 0.0
        %8312 = vmatpush1.msra.mxu0 %v8274
        %8313 = vmatprep.subr.mxu0 0.0
        %8314 = vmatpush1.msra.mxu0 %v8273
        %8315 = vmatprep.subr.mxu0 0.0
        %8316 = vmatpush1.msra.mxu0 %v8272
        %8317 = vmatprep.subr.mxu0 0.0
        %8318 = vmatpush1.msra.mxu0 %v8271
        %8319 = vmatprep.subr.mxu0 0.0
        %8320 = vmatpush2.msra.mxu0 0.0
        %8321 = vmatprep.subr.mxu0 0.0
        %8322 = vmatpush2.msra.mxu0 0.0
        %8323 = vmatprep.subr.mxu0 0.0
        %8324 = vmatpush2.msra.mxu0 0.0
        %8325 = vmatprep.subr.mxu0 0.0
        %8326 = vmatpush2.msra.mxu0 0.0
        %8327 = vmatprep.subr.mxu0 0.0
        %8328 = vmatpush2.msra.mxu0 0.0
        %8329 = vmatprep.subr.mxu0 0.0
        %8330 = vmatpush2.msra.mxu0 0.0
        %8331 = vmatprep.subr.mxu0 0.0
        %8332 = vmatpush2.msra.mxu0 0.0
        %8333 = vmatprep.subr.mxu0 0.0
        %8334 = vmatpush2.msra.mxu0 0.0
        %8335 = vmatprep.subr.mxu0 0.0
        %8336 = vmatpush2.msra.mxu0 0.0
        %8337 = vmatprep.subr.mxu0 0.0
        %8338 = vmatpush2.msra.mxu0 0.0
        %8339 = vmatprep.subr.mxu0 0.0
        %8340 = vmatpush2.msra.mxu0 0.0
        %8341 = vmatprep.subr.mxu0 0.0
        %8342 = vmatpush2.msra.mxu0 0.0
        %8343 = vmatprep.subr.mxu0 0.0
        %8344 = vmatpush2.msra.mxu0 0.0
        %8345 = vmatprep.subr.mxu0 0.0
        %8346 = vmatpush2.msra.mxu0 0.0
        %8347 = vmatprep.subr.mxu0 0.0
        %8348 = vmatpush2.msra.mxu0 0.0
        %8349 = vmatprep.subr.mxu0 0.0
        %8350 = vmatpush2.msra.mxu0 0.0
        %8351 = vmatprep.mubr.f32.mxu0 0.0
        %8352 = vmatmul.mubr.f32.gmra.mxu0 %v7002
        %v8353 = vpop.f32.mrf.mxu0
        %v8354 = vadd.f32 0.0, %v8353
        %v8355 = vpop.f32.mrf.mxu0
        %8356 = vmatprep.mubr.f32.mxu0 0.0
        %8357 = vmatmul.mubr.f32.gmra.mxu0 %v7003
        %v8358 = vpop.f32.mrf.mxu0
        %v8359 = vadd.f32 0.0, %v8358
        %v8360 = vpop.f32.mrf.mxu0
        %8361 = vmatprep.mubr.f32.mxu0 0.0
        %8362 = vmatmul.mubr.f32.gmra.mxu0 %v7004
        %v8363 = vpop.f32.mrf.mxu0
        %v8364 = vadd.f32 0.0, %v8363
        %v8365 = vpop.f32.mrf.mxu0
        %8366 = vmatprep.mubr.f32.mxu0 0.0
        %8367 = vmatmul.mubr.f32.gmra.mxu0 %v7005
        %v8368 = vpop.f32.mrf.mxu0
        %v8369 = vadd.f32 0.0, %v8368
        %v8370 = vpop.f32.mrf.mxu0
        %8371 = vmatprep.mubr.f32.mxu0 0.0
        %8372 = vmatmul.mubr.f32.gmra.mxu0 %v7006
        %v8373 = vpop.f32.mrf.mxu0
        %v8374 = vadd.f32 0.0, %v8373
        %v8375 = vpop.f32.mrf.mxu0
        %8376 = vmatprep.mubr.f32.mxu0 0.0
        %8377 = vmatmul.mubr.f32.gmra.mxu0 %v7007
        %v8378 = vpop.f32.mrf.mxu0
        %v8379 = vadd.f32 0.0, %v8378
        %v8380 = vpop.f32.mrf.mxu0
        %8381 = vmatprep.mubr.f32.mxu0 0.0
        %8382 = vmatmul.mubr.f32.gmra.mxu0 %v7008
        %v8383 = vpop.f32.mrf.mxu0
        %v8384 = vadd.f32 0.0, %v8383
        %v8385 = vpop.f32.mrf.mxu0
        %8386 = vmatprep.mubr.f32.mxu0 0.0
        %8387 = vmatmul.mubr.f32.gmra.mxu0 %v7009
        %v8388 = vpop.f32.mrf.mxu0
        %v8389 = vadd.f32 0.0, %v8388
        %v8390 = vpop.f32.mrf.mxu0
        %8391 = vmatprep.mubr.f32.mxu0 0.0
        %8392 = vmatmul.mubr.f32.gmra.mxu0 %v7010
        %v8393 = vpop.f32.mrf.mxu0
        %v8394 = vadd.f32 0.0, %v8393
        %v8395 = vpop.f32.mrf.mxu0
        %8396 = vmatprep.mubr.f32.mxu0 0.0
        %8397 = vmatmul.mubr.f32.gmra.mxu0 %v7011
        %v8398 = vpop.f32.mrf.mxu0
        %v8399 = vadd.f32 0.0, %v8398
        %v8400 = vpop.f32.mrf.mxu0
        %8401 = vmatprep.mubr.f32.mxu0 0.0
        %8402 = vmatmul.mubr.f32.gmra.mxu0 %v7012
        %v8403 = vpop.f32.mrf.mxu0
        %v8404 = vadd.f32 0.0, %v8403
        %v8405 = vpop.f32.mrf.mxu0
        %8406 = vmatprep.mubr.f32.mxu0 0.0
        %8407 = vmatmul.mubr.f32.gmra.mxu0 %v7013
        %v8408 = vpop.f32.mrf.mxu0
        %v8409 = vadd.f32 0.0, %v8408
        %v8410 = vpop.f32.mrf.mxu0
        %8411 = vmatprep.mubr.f32.mxu0 0.0
        %8412 = vmatmul.mubr.f32.gmra.mxu0 %v7014
        %v8413 = vpop.f32.mrf.mxu0
        %v8414 = vadd.f32 0.0, %v8413
        %v8415 = vpop.f32.mrf.mxu0
        %8416 = vmatprep.mubr.f32.mxu0 0.0
        %8417 = vmatmul.mubr.f32.gmra.mxu0 %v7015
        %v8418 = vpop.f32.mrf.mxu0
        %v8419 = vadd.f32 0.0, %v8418
        %v8420 = vpop.f32.mrf.mxu0
        %8421 = vmatprep.mubr.f32.mxu0 0.0
        %8422 = vmatmul.mubr.f32.gmra.mxu0 %v7016
        %v8423 = vpop.f32.mrf.mxu0
        %v8424 = vadd.f32 0.0, %v8423
        %v8425 = vpop.f32.mrf.mxu0
        %8426 = vmatprep.mubr.f32.mxu0 0.0
        %8427 = vmatmul.mubr.f32.gmra.mxu0 %v7017
        %v8428 = vpop.f32.mrf.mxu0
        %v8429 = vadd.f32 0.0, %v8428
        %v8430 = vpop.f32.mrf.mxu0
        %8431 = vmatprep.mubr.f32.mxu0 0.0
        %8432 = vmatmul.mubr.f32.gmra.mxu0 %v7018
        %v8433 = vpop.f32.mrf.mxu0
        %v8434 = vadd.f32 0.0, %v8433
        %v8435 = vpop.f32.mrf.mxu0
        %8436 = vmatprep.mubr.f32.mxu0 0.0
        %8437 = vmatmul.mubr.f32.gmra.mxu0 %v7019
        %v8438 = vpop.f32.mrf.mxu0
        %v8439 = vadd.f32 0.0, %v8438
        %v8440 = vpop.f32.mrf.mxu0
        %8441 = vmatprep.mubr.f32.mxu0 0.0
        %8442 = vmatmul.mubr.f32.gmra.mxu0 %v7020
        %v8443 = vpop.f32.mrf.mxu0
        %v8444 = vadd.f32 0.0, %v8443
        %v8445 = vpop.f32.mrf.mxu0
        %8446 = vmatprep.mubr.f32.mxu0 0.0
        %8447 = vmatmul.mubr.f32.gmra.mxu0 %v7021
        %v8448 = vpop.f32.mrf.mxu0
        %v8449 = vadd.f32 0.0, %v8448
        %v8450 = vpop.f32.mrf.mxu0
        %8451 = vmatprep.mubr.f32.mxu0 0.0
        %8452 = vmatmul.mubr.f32.gmra.mxu0 %v7022
        %v8453 = vpop.f32.mrf.mxu0
        %v8454 = vadd.f32 0.0, %v8453
        %v8455 = vpop.f32.mrf.mxu0
        %8456 = vmatprep.mubr.f32.mxu0 0.0
        %8457 = vmatmul.mubr.f32.gmra.mxu0 %v7023
        %v8458 = vpop.f32.mrf.mxu0
        %v8459 = vadd.f32 0.0, %v8458
        %v8460 = vpop.f32.mrf.mxu0
        %8461 = vmatprep.mubr.f32.mxu0 0.0
        %8462 = vmatmul.mubr.f32.gmra.mxu0 %v7024
        %v8463 = vpop.f32.mrf.mxu0
        %v8464 = vadd.f32 0.0, %v8463
        %v8465 = vpop.f32.mrf.mxu0
        %8466 = vmatprep.mubr.f32.mxu0 0.0
        %8467 = vmatmul.mubr.f32.gmra.mxu0 %v7025
        %v8468 = vpop.f32.mrf.mxu0
        %v8469 = vadd.f32 0.0, %v8468
        %v8470 = vpop.f32.mrf.mxu0
        %8471 = vmatprep.mubr.f32.mxu0 0.0
        %8472 = vmatmul.mubr.f32.gmra.mxu0 %v7026
        %v8473 = vpop.f32.mrf.mxu0
        %v8474 = vadd.f32 0.0, %v8473
        %v8475 = vpop.f32.mrf.mxu0
        %8476 = vmatprep.mubr.f32.mxu0 0.0
        %8477 = vmatmul.mubr.f32.gmra.mxu0 %v7027
        %v8478 = vpop.f32.mrf.mxu0
        %v8479 = vadd.f32 0.0, %v8478
        %v8480 = vpop.f32.mrf.mxu0
        %8481 = vmatprep.mubr.f32.mxu0 0.0
        %8482 = vmatmul.mubr.f32.gmra.mxu0 %v7028
        %v8483 = vpop.f32.mrf.mxu0
        %v8484 = vadd.f32 0.0, %v8483
        %v8485 = vpop.f32.mrf.mxu0
        %8486 = vmatprep.mubr.f32.mxu0 0.0
        %8487 = vmatmul.mubr.f32.gmra.mxu0 %v7029
        %v8488 = vpop.f32.mrf.mxu0
        %v8489 = vadd.f32 0.0, %v8488
        %v8490 = vpop.f32.mrf.mxu0
        %8491 = vmatprep.mubr.f32.mxu0 0.0
        %8492 = vmatmul.mubr.f32.gmra.mxu0 %v7030
        %v8493 = vpop.f32.mrf.mxu0
        %v8494 = vadd.f32 0.0, %v8493
        %v8495 = vpop.f32.mrf.mxu0
        %8496 = vmatprep.mubr.f32.mxu0 0.0
        %8497 = vmatmul.mubr.f32.gmra.mxu0 %v7031
        %v8498 = vpop.f32.mrf.mxu0
        %v8499 = vadd.f32 0.0, %v8498
        %v8500 = vpop.f32.mrf.mxu0
        %8501 = vmatprep.mubr.f32.mxu0 0.0
        %8502 = vmatmul.mubr.f32.gmra.mxu0 %v7032
        %v8503 = vpop.f32.mrf.mxu0
        %v8504 = vadd.f32 0.0, %v8503
        %v8505 = vpop.f32.mrf.mxu0
        %8506 = vmatprep.mubr.f32.mxu0 0.0
        %8507 = vmatmul.mubr.f32.gmra.mxu0 %v7033
        %v8508 = vpop.f32.mrf.mxu0
        %v8509 = vadd.f32 0.0, %v8508
        %v8510 = vpop.f32.mrf.mxu0
        %8511 = vdwg.mxu0
        %v8512 = vadd.f32 %v8113, %v8354
        %v8513 = vadd.f32 %v8118, %v8359
        %v8514 = vadd.f32 %v8123, %v8364
        %v8515 = vadd.f32 %v8128, %v8369
        %v8516 = vadd.f32 %v8133, %v8374
        %v8517 = vadd.f32 %v8138, %v8379
        %v8518 = vadd.f32 %v8143, %v8384
        %v8519 = vadd.f32 %v8148, %v8389
        %v8520 = vadd.f32 %v8153, %v8394
        %v8521 = vadd.f32 %v8158, %v8399
        %v8522 = vadd.f32 %v8163, %v8404
        %v8523 = vadd.f32 %v8168, %v8409
        %v8524 = vadd.f32 %v8173, %v8414
        %v8525 = vadd.f32 %v8178, %v8419
        %v8526 = vadd.f32 %v8183, %v8424
        %v8527 = vadd.f32 %v8188, %v8429
        %v8528 = vadd.f32 %v8193, %v8434
        %v8529 = vadd.f32 %v8198, %v8439
        %v8530 = vadd.f32 %v8203, %v8444
        %v8531 = vadd.f32 %v8208, %v8449
        %v8532 = vadd.f32 %v8213, %v8454
        %v8533 = vadd.f32 %v8218, %v8459
        %v8534 = vadd.f32 %v8223, %v8464
        %v8535 = vadd.f32 %v8228, %v8469
        %v8536 = vadd.f32 %v8233, %v8474
        %v8537 = vadd.f32 %v8238, %v8479
        %v8538 = vadd.f32 %v8243, %v8484
        %v8539 = vadd.f32 %v8248, %v8489
        %v8540 = vadd.f32 %v8253, %v8494
        %v8541 = vadd.f32 %v8258, %v8499
        %v8542 = vadd.f32 %v8263, %v8504
        %v8543 = vadd.f32 %v8268, %v8509
        %v8544 = vld [vmem:[#allocation10 + $0x300] sm:$0xff]
        %v8545 = vld [vmem:[#allocation10 + $0x308] sm:$0xff]
        %v8546 = vld [vmem:[#allocation10 + $0x310] sm:$0xff]
        %v8547 = vld [vmem:[#allocation10 + $0x318] sm:$0xff]
        %v8548 = vld [vmem:[#allocation10 + $0x320] sm:$0xff]
        %v8549 = vld [vmem:[#allocation10 + $0x328] sm:$0xff]
        %v8550 = vld [vmem:[#allocation10 + $0x330] sm:$0xff]
        %v8551 = vld [vmem:[#allocation10 + $0x338] sm:$0xff]
        %v8552 = vld [vmem:[#allocation10 + $0x340] sm:$0xff]
        %v8553 = vld [vmem:[#allocation10 + $0x348] sm:$0xff]
        %v8554 = vld [vmem:[#allocation10 + $0x350] sm:$0xff]
        %v8555 = vld [vmem:[#allocation10 + $0x358] sm:$0xff]
        %v8556 = vld [vmem:[#allocation10 + $0x360] sm:$0xff]
        %v8557 = vld [vmem:[#allocation10 + $0x368] sm:$0xff]
        %v8558 = vld [vmem:[#allocation10 + $0x370] sm:$0xff]
        %v8559 = vld [vmem:[#allocation10 + $0x378] sm:$0xff]
        %v8560 = vld [vmem:[#allocation10 + $0x380] sm:$0xff]
        %v8561 = vld [vmem:[#allocation10 + $0x388] sm:$0xff]
        %v8562 = vld [vmem:[#allocation10 + $0x390] sm:$0xff]
        %v8563 = vld [vmem:[#allocation10 + $0x398] sm:$0xff]
        %v8564 = vld [vmem:[#allocation10 + $0x3a0] sm:$0xff]
        %v8565 = vld [vmem:[#allocation10 + $0x3a8] sm:$0xff]
        %v8566 = vld [vmem:[#allocation10 + $0x3b0] sm:$0xff]
        %v8567 = vld [vmem:[#allocation10 + $0x3b8] sm:$0xff]
        %v8568 = vld [vmem:[#allocation10 + $0x3c0] sm:$0xff]
        %v8569 = vld [vmem:[#allocation10 + $0x3c8] sm:$0xff]
        %v8570 = vld [vmem:[#allocation10 + $0x3d0] sm:$0xff]
        %v8571 = vld [vmem:[#allocation10 + $0x3d8] sm:$0xff]
        %v8572 = vld [vmem:[#allocation10 + $0x3e0] sm:$0xff]
        %v8573 = vld [vmem:[#allocation10 + $0x3e8] sm:$0xff]
        %v8574 = vld [vmem:[#allocation10 + $0x3f0] sm:$0xff]
        %v8575 = vld [vmem:[#allocation10 + $0x3f8] sm:$0xff]
        %8576 = vmatprep.subr.mxu0 0.0
        %8577 = vmatpush1.msra.mxu0 %v8575
        %8578 = vmatprep.subr.mxu0 0.0
        %8579 = vmatpush1.msra.mxu0 %v8574
        %8580 = vmatprep.subr.mxu0 0.0
        %8581 = vmatpush1.msra.mxu0 %v8573
        %8582 = vmatprep.subr.mxu0 0.0
        %8583 = vmatpush1.msra.mxu0 %v8572
        %8584 = vmatprep.subr.mxu0 0.0
        %8585 = vmatpush1.msra.mxu0 %v8571
        %8586 = vmatprep.subr.mxu0 0.0
        %8587 = vmatpush1.msra.mxu0 %v8570
        %8588 = vmatprep.subr.mxu0 0.0
        %8589 = vmatpush1.msra.mxu0 %v8569
        %8590 = vmatprep.subr.mxu0 0.0
        %8591 = vmatpush1.msra.mxu0 %v8568
        %8592 = vmatprep.subr.mxu0 0.0
        %8593 = vmatpush1.msra.mxu0 %v8567
        %8594 = vmatprep.subr.mxu0 0.0
        %8595 = vmatpush1.msra.mxu0 %v8566
        %8596 = vmatprep.subr.mxu0 0.0
        %8597 = vmatpush1.msra.mxu0 %v8565
        %8598 = vmatprep.subr.mxu0 0.0
        %8599 = vmatpush1.msra.mxu0 %v8564
        %8600 = vmatprep.subr.mxu0 0.0
        %8601 = vmatpush1.msra.mxu0 %v8563
        %8602 = vmatprep.subr.mxu0 0.0
        %8603 = vmatpush1.msra.mxu0 %v8562
        %8604 = vmatprep.subr.mxu0 0.0
        %8605 = vmatpush1.msra.mxu0 %v8561
        %8606 = vmatprep.subr.mxu0 0.0
        %8607 = vmatpush1.msra.mxu0 %v8560
        %8608 = vmatprep.subr.mxu0 0.0
        %8609 = vmatpush2.msra.mxu0 0.0
        %8610 = vmatprep.subr.mxu0 0.0
        %8611 = vmatpush2.msra.mxu0 0.0
        %8612 = vmatprep.subr.mxu0 0.0
        %8613 = vmatpush2.msra.mxu0 0.0
        %8614 = vmatprep.subr.mxu0 0.0
        %8615 = vmatpush2.msra.mxu0 0.0
        %8616 = vmatprep.subr.mxu0 0.0
        %8617 = vmatpush2.msra.mxu0 0.0
        %8618 = vmatprep.subr.mxu0 0.0
        %8619 = vmatpush2.msra.mxu0 0.0
        %8620 = vmatprep.subr.mxu0 0.0
        %8621 = vmatpush2.msra.mxu0 0.0
        %8622 = vmatprep.subr.mxu0 0.0
        %8623 = vmatpush2.msra.mxu0 0.0
        %8624 = vmatprep.subr.mxu0 0.0
        %8625 = vmatpush2.msra.mxu0 0.0
        %8626 = vmatprep.subr.mxu0 0.0
        %8627 = vmatpush2.msra.mxu0 0.0
        %8628 = vmatprep.subr.mxu0 0.0
        %8629 = vmatpush2.msra.mxu0 0.0
        %8630 = vmatprep.subr.mxu0 0.0
        %8631 = vmatpush2.msra.mxu0 0.0
        %8632 = vmatprep.subr.mxu0 0.0
        %8633 = vmatpush2.msra.mxu0 0.0
        %8634 = vmatprep.subr.mxu0 0.0
        %8635 = vmatpush2.msra.mxu0 0.0
        %8636 = vmatprep.subr.mxu0 0.0
        %8637 = vmatpush2.msra.mxu0 0.0
        %8638 = vmatprep.subr.mxu0 0.0
        %8639 = vmatpush2.msra.mxu0 0.0
        %8640 = vmatprep.mubr.f32.mxu0 0.0
        %8641 = vmatmul.mubr.f32.gmra.mxu0 %v6810
        %v8642 = vpop.f32.mrf.mxu0
        %v8643 = vadd.f32 0.0, %v8642
        %v8644 = vpop.f32.mrf.mxu0
        %8645 = vmatprep.mubr.f32.mxu0 0.0
        %8646 = vmatmul.mubr.f32.gmra.mxu0 %v6811
        %v8647 = vpop.f32.mrf.mxu0
        %v8648 = vadd.f32 0.0, %v8647
        %v8649 = vpop.f32.mrf.mxu0
        %8650 = vmatprep.mubr.f32.mxu0 0.0
        %8651 = vmatmul.mubr.f32.gmra.mxu0 %v6812
        %v8652 = vpop.f32.mrf.mxu0
        %v8653 = vadd.f32 0.0, %v8652
        %v8654 = vpop.f32.mrf.mxu0
        %8655 = vmatprep.mubr.f32.mxu0 0.0
        %8656 = vmatmul.mubr.f32.gmra.mxu0 %v6813
        %v8657 = vpop.f32.mrf.mxu0
        %v8658 = vadd.f32 0.0, %v8657
        %v8659 = vpop.f32.mrf.mxu0
        %8660 = vmatprep.mubr.f32.mxu0 0.0
        %8661 = vmatmul.mubr.f32.gmra.mxu0 %v6814
        %v8662 = vpop.f32.mrf.mxu0
        %v8663 = vadd.f32 0.0, %v8662
        %v8664 = vpop.f32.mrf.mxu0
        %8665 = vmatprep.mubr.f32.mxu0 0.0
        %8666 = vmatmul.mubr.f32.gmra.mxu0 %v6815
        %v8667 = vpop.f32.mrf.mxu0
        %v8668 = vadd.f32 0.0, %v8667
        %v8669 = vpop.f32.mrf.mxu0
        %8670 = vmatprep.mubr.f32.mxu0 0.0
        %8671 = vmatmul.mubr.f32.gmra.mxu0 %v6816
        %v8672 = vpop.f32.mrf.mxu0
        %v8673 = vadd.f32 0.0, %v8672
        %v8674 = vpop.f32.mrf.mxu0
        %8675 = vmatprep.mubr.f32.mxu0 0.0
        %8676 = vmatmul.mubr.f32.gmra.mxu0 %v6817
        %v8677 = vpop.f32.mrf.mxu0
        %v8678 = vadd.f32 0.0, %v8677
        %v8679 = vpop.f32.mrf.mxu0
        %8680 = vmatprep.mubr.f32.mxu0 0.0
        %8681 = vmatmul.mubr.f32.gmra.mxu0 %v6818
        %v8682 = vpop.f32.mrf.mxu0
        %v8683 = vadd.f32 0.0, %v8682
        %v8684 = vpop.f32.mrf.mxu0
        %8685 = vmatprep.mubr.f32.mxu0 0.0
        %8686 = vmatmul.mubr.f32.gmra.mxu0 %v6819
        %v8687 = vpop.f32.mrf.mxu0
        %v8688 = vadd.f32 0.0, %v8687
        %v8689 = vpop.f32.mrf.mxu0
        %8690 = vmatprep.mubr.f32.mxu0 0.0
        %8691 = vmatmul.mubr.f32.gmra.mxu0 %v6820
        %v8692 = vpop.f32.mrf.mxu0
        %v8693 = vadd.f32 0.0, %v8692
        %v8694 = vpop.f32.mrf.mxu0
        %8695 = vmatprep.mubr.f32.mxu0 0.0
        %8696 = vmatmul.mubr.f32.gmra.mxu0 %v6821
        %v8697 = vpop.f32.mrf.mxu0
        %v8698 = vadd.f32 0.0, %v8697
        %v8699 = vpop.f32.mrf.mxu0
        %8700 = vmatprep.mubr.f32.mxu0 0.0
        %8701 = vmatmul.mubr.f32.gmra.mxu0 %v6822
        %v8702 = vpop.f32.mrf.mxu0
        %v8703 = vadd.f32 0.0, %v8702
        %v8704 = vpop.f32.mrf.mxu0
        %8705 = vmatprep.mubr.f32.mxu0 0.0
        %8706 = vmatmul.mubr.f32.gmra.mxu0 %v6823
        %v8707 = vpop.f32.mrf.mxu0
        %v8708 = vadd.f32 0.0, %v8707
        %v8709 = vpop.f32.mrf.mxu0
        %8710 = vmatprep.mubr.f32.mxu0 0.0
        %8711 = vmatmul.mubr.f32.gmra.mxu0 %v6824
        %v8712 = vpop.f32.mrf.mxu0
        %v8713 = vadd.f32 0.0, %v8712
        %v8714 = vpop.f32.mrf.mxu0
        %8715 = vmatprep.mubr.f32.mxu0 0.0
        %8716 = vmatmul.mubr.f32.gmra.mxu0 %v6825
        %v8717 = vpop.f32.mrf.mxu0
        %v8718 = vadd.f32 0.0, %v8717
        %v8719 = vpop.f32.mrf.mxu0
        %8720 = vmatprep.mubr.f32.mxu0 0.0
        %8721 = vmatmul.mubr.f32.gmra.mxu0 %v6826
        %v8722 = vpop.f32.mrf.mxu0
        %v8723 = vadd.f32 0.0, %v8722
        %v8724 = vpop.f32.mrf.mxu0
        %8725 = vmatprep.mubr.f32.mxu0 0.0
        %8726 = vmatmul.mubr.f32.gmra.mxu0 %v6827
        %v8727 = vpop.f32.mrf.mxu0
        %v8728 = vadd.f32 0.0, %v8727
        %v8729 = vpop.f32.mrf.mxu0
        %8730 = vmatprep.mubr.f32.mxu0 0.0
        %8731 = vmatmul.mubr.f32.gmra.mxu0 %v6828
        %v8732 = vpop.f32.mrf.mxu0
        %v8733 = vadd.f32 0.0, %v8732
        %v8734 = vpop.f32.mrf.mxu0
        %8735 = vmatprep.mubr.f32.mxu0 0.0
        %8736 = vmatmul.mubr.f32.gmra.mxu0 %v6829
        %v8737 = vpop.f32.mrf.mxu0
        %v8738 = vadd.f32 0.0, %v8737
        %v8739 = vpop.f32.mrf.mxu0
        %8740 = vmatprep.mubr.f32.mxu0 0.0
        %8741 = vmatmul.mubr.f32.gmra.mxu0 %v6830
        %v8742 = vpop.f32.mrf.mxu0
        %v8743 = vadd.f32 0.0, %v8742
        %v8744 = vpop.f32.mrf.mxu0
        %8745 = vmatprep.mubr.f32.mxu0 0.0
        %8746 = vmatmul.mubr.f32.gmra.mxu0 %v6831
        %v8747 = vpop.f32.mrf.mxu0
        %v8748 = vadd.f32 0.0, %v8747
        %v8749 = vpop.f32.mrf.mxu0
        %8750 = vmatprep.mubr.f32.mxu0 0.0
        %8751 = vmatmul.mubr.f32.gmra.mxu0 %v6832
        %v8752 = vpop.f32.mrf.mxu0
        %v8753 = vadd.f32 0.0, %v8752
        %v8754 = vpop.f32.mrf.mxu0
        %8755 = vmatprep.mubr.f32.mxu0 0.0
        %8756 = vmatmul.mubr.f32.gmra.mxu0 %v6833
        %v8757 = vpop.f32.mrf.mxu0
        %v8758 = vadd.f32 0.0, %v8757
        %v8759 = vpop.f32.mrf.mxu0
        %8760 = vmatprep.mubr.f32.mxu0 0.0
        %8761 = vmatmul.mubr.f32.gmra.mxu0 %v6834
        %v8762 = vpop.f32.mrf.mxu0
        %v8763 = vadd.f32 0.0, %v8762
        %v8764 = vpop.f32.mrf.mxu0
        %8765 = vmatprep.mubr.f32.mxu0 0.0
        %8766 = vmatmul.mubr.f32.gmra.mxu0 %v6835
        %v8767 = vpop.f32.mrf.mxu0
        %v8768 = vadd.f32 0.0, %v8767
        %v8769 = vpop.f32.mrf.mxu0
        %8770 = vmatprep.mubr.f32.mxu0 0.0
        %8771 = vmatmul.mubr.f32.gmra.mxu0 %v6836
        %v8772 = vpop.f32.mrf.mxu0
        %v8773 = vadd.f32 0.0, %v8772
        %v8774 = vpop.f32.mrf.mxu0
        %8775 = vmatprep.mubr.f32.mxu0 0.0
        %8776 = vmatmul.mubr.f32.gmra.mxu0 %v6837
        %v8777 = vpop.f32.mrf.mxu0
        %v8778 = vadd.f32 0.0, %v8777
        %v8779 = vpop.f32.mrf.mxu0
        %8780 = vmatprep.mubr.f32.mxu0 0.0
        %8781 = vmatmul.mubr.f32.gmra.mxu0 %v6838
        %v8782 = vpop.f32.mrf.mxu0
        %v8783 = vadd.f32 0.0, %v8782
        %v8784 = vpop.f32.mrf.mxu0
        %8785 = vmatprep.mubr.f32.mxu0 0.0
        %8786 = vmatmul.mubr.f32.gmra.mxu0 %v6839
        %v8787 = vpop.f32.mrf.mxu0
        %v8788 = vadd.f32 0.0, %v8787
        %v8789 = vpop.f32.mrf.mxu0
        %8790 = vmatprep.mubr.f32.mxu0 0.0
        %8791 = vmatmul.mubr.f32.gmra.mxu0 %v6840
        %v8792 = vpop.f32.mrf.mxu0
        %v8793 = vadd.f32 0.0, %v8792
        %v8794 = vpop.f32.mrf.mxu0
        %8795 = vmatprep.mubr.f32.mxu0 0.0
        %8796 = vmatmul.mubr.f32.gmra.mxu0 %v6841
        %v8797 = vpop.f32.mrf.mxu0
        %v8798 = vadd.f32 0.0, %v8797
        %v8799 = vpop.f32.mrf.mxu0
        %8800 = vdwg.mxu0
        %8801 = vmatprep.subr.mxu0 0.0
        %8802 = vmatpush1.msra.mxu0 %v8559
        %8803 = vmatprep.subr.mxu0 0.0
        %8804 = vmatpush1.msra.mxu0 %v8558
        %8805 = vmatprep.subr.mxu0 0.0
        %8806 = vmatpush1.msra.mxu0 %v8557
        %8807 = vmatprep.subr.mxu0 0.0
        %8808 = vmatpush1.msra.mxu0 %v8556
        %8809 = vmatprep.subr.mxu0 0.0
        %8810 = vmatpush1.msra.mxu0 %v8555
        %8811 = vmatprep.subr.mxu0 0.0
        %8812 = vmatpush1.msra.mxu0 %v8554
        %8813 = vmatprep.subr.mxu0 0.0
        %8814 = vmatpush1.msra.mxu0 %v8553
        %8815 = vmatprep.subr.mxu0 0.0
        %8816 = vmatpush1.msra.mxu0 %v8552
        %8817 = vmatprep.subr.mxu0 0.0
        %8818 = vmatpush1.msra.mxu0 %v8551
        %8819 = vmatprep.subr.mxu0 0.0
        %8820 = vmatpush1.msra.mxu0 %v8550
        %8821 = vmatprep.subr.mxu0 0.0
        %8822 = vmatpush1.msra.mxu0 %v8549
        %8823 = vmatprep.subr.mxu0 0.0
        %8824 = vmatpush1.msra.mxu0 %v8548
        %8825 = vmatprep.subr.mxu0 0.0
        %8826 = vmatpush1.msra.mxu0 %v8547
        %8827 = vmatprep.subr.mxu0 0.0
        %8828 = vmatpush1.msra.mxu0 %v8546
        %8829 = vmatprep.subr.mxu0 0.0
        %8830 = vmatpush1.msra.mxu0 %v8545
        %8831 = vmatprep.subr.mxu0 0.0
        %8832 = vmatpush1.msra.mxu0 %v8544
        %8833 = vmatprep.subr.mxu0 0.0
        %8834 = vmatpush2.msra.mxu0 0.0
        %8835 = vmatprep.subr.mxu0 0.0
        %8836 = vmatpush2.msra.mxu0 0.0
        %8837 = vmatprep.subr.mxu0 0.0
        %8838 = vmatpush2.msra.mxu0 0.0
        %8839 = vmatprep.subr.mxu0 0.0
        %8840 = vmatpush2.msra.mxu0 0.0
        %8841 = vmatprep.subr.mxu0 0.0
        %8842 = vmatpush2.msra.mxu0 0.0
        %8843 = vmatprep.subr.mxu0 0.0
        %8844 = vmatpush2.msra.mxu0 0.0
        %8845 = vmatprep.subr.mxu0 0.0
        %8846 = vmatpush2.msra.mxu0 0.0
        %8847 = vmatprep.subr.mxu0 0.0
        %8848 = vmatpush2.msra.mxu0 0.0
        %8849 = vmatprep.subr.mxu0 0.0
        %8850 = vmatpush2.msra.mxu0 0.0
        %8851 = vmatprep.subr.mxu0 0.0
        %8852 = vmatpush2.msra.mxu0 0.0
        %8853 = vmatprep.subr.mxu0 0.0
        %8854 = vmatpush2.msra.mxu0 0.0
        %8855 = vmatprep.subr.mxu0 0.0
        %8856 = vmatpush2.msra.mxu0 0.0
        %8857 = vmatprep.subr.mxu0 0.0
        %8858 = vmatpush2.msra.mxu0 0.0
        %8859 = vmatprep.subr.mxu0 0.0
        %8860 = vmatpush2.msra.mxu0 0.0
        %8861 = vmatprep.subr.mxu0 0.0
        %8862 = vmatpush2.msra.mxu0 0.0
        %8863 = vmatprep.subr.mxu0 0.0
        %8864 = vmatpush2.msra.mxu0 0.0
        %8865 = vmatprep.mubr.f32.mxu0 0.0
        %8866 = vmatmul.mubr.f32.gmra.mxu0 %v6906
        %v8867 = vpop.f32.mrf.mxu0
        %v8868 = vadd.f32 %v8643, %v8867
        %v8869 = vpop.f32.mrf.mxu0
        %8870 = vmatprep.mubr.f32.mxu0 0.0
        %8871 = vmatmul.mubr.f32.gmra.mxu0 %v6907
        %v8872 = vpop.f32.mrf.mxu0
        %v8873 = vadd.f32 %v8648, %v8872
        %v8874 = vpop.f32.mrf.mxu0
        %8875 = vmatprep.mubr.f32.mxu0 0.0
        %8876 = vmatmul.mubr.f32.gmra.mxu0 %v6908
        %v8877 = vpop.f32.mrf.mxu0
        %v8878 = vadd.f32 %v8653, %v8877
        %v8879 = vpop.f32.mrf.mxu0
        %8880 = vmatprep.mubr.f32.mxu0 0.0
        %8881 = vmatmul.mubr.f32.gmra.mxu0 %v6909
        %v8882 = vpop.f32.mrf.mxu0
        %v8883 = vadd.f32 %v8658, %v8882
        %v8884 = vpop.f32.mrf.mxu0
        %8885 = vmatprep.mubr.f32.mxu0 0.0
        %8886 = vmatmul.mubr.f32.gmra.mxu0 %v6910
        %v8887 = vpop.f32.mrf.mxu0
        %v8888 = vadd.f32 %v8663, %v8887
        %v8889 = vpop.f32.mrf.mxu0
        %8890 = vmatprep.mubr.f32.mxu0 0.0
        %8891 = vmatmul.mubr.f32.gmra.mxu0 %v6911
        %v8892 = vpop.f32.mrf.mxu0
        %v8893 = vadd.f32 %v8668, %v8892
        %v8894 = vpop.f32.mrf.mxu0
        %8895 = vmatprep.mubr.f32.mxu0 0.0
        %8896 = vmatmul.mubr.f32.gmra.mxu0 %v6912
        %v8897 = vpop.f32.mrf.mxu0
        %v8898 = vadd.f32 %v8673, %v8897
        %v8899 = vpop.f32.mrf.mxu0
        %8900 = vmatprep.mubr.f32.mxu0 0.0
        %8901 = vmatmul.mubr.f32.gmra.mxu0 %v6913
        %v8902 = vpop.f32.mrf.mxu0
        %v8903 = vadd.f32 %v8678, %v8902
        %v8904 = vpop.f32.mrf.mxu0
        %8905 = vmatprep.mubr.f32.mxu0 0.0
        %8906 = vmatmul.mubr.f32.gmra.mxu0 %v6914
        %v8907 = vpop.f32.mrf.mxu0
        %v8908 = vadd.f32 %v8683, %v8907
        %v8909 = vpop.f32.mrf.mxu0
        %8910 = vmatprep.mubr.f32.mxu0 0.0
        %8911 = vmatmul.mubr.f32.gmra.mxu0 %v6915
        %v8912 = vpop.f32.mrf.mxu0
        %v8913 = vadd.f32 %v8688, %v8912
        %v8914 = vpop.f32.mrf.mxu0
        %8915 = vmatprep.mubr.f32.mxu0 0.0
        %8916 = vmatmul.mubr.f32.gmra.mxu0 %v6916
        %v8917 = vpop.f32.mrf.mxu0
        %v8918 = vadd.f32 %v8693, %v8917
        %v8919 = vpop.f32.mrf.mxu0
        %8920 = vmatprep.mubr.f32.mxu0 0.0
        %8921 = vmatmul.mubr.f32.gmra.mxu0 %v6917
        %v8922 = vpop.f32.mrf.mxu0
        %v8923 = vadd.f32 %v8698, %v8922
        %v8924 = vpop.f32.mrf.mxu0
        %8925 = vmatprep.mubr.f32.mxu0 0.0
        %8926 = vmatmul.mubr.f32.gmra.mxu0 %v6918
        %v8927 = vpop.f32.mrf.mxu0
        %v8928 = vadd.f32 %v8703, %v8927
        %v8929 = vpop.f32.mrf.mxu0
        %8930 = vmatprep.mubr.f32.mxu0 0.0
        %8931 = vmatmul.mubr.f32.gmra.mxu0 %v6919
        %v8932 = vpop.f32.mrf.mxu0
        %v8933 = vadd.f32 %v8708, %v8932
        %v8934 = vpop.f32.mrf.mxu0
        %8935 = vmatprep.mubr.f32.mxu0 0.0
        %8936 = vmatmul.mubr.f32.gmra.mxu0 %v6920
        %v8937 = vpop.f32.mrf.mxu0
        %v8938 = vadd.f32 %v8713, %v8937
        %v8939 = vpop.f32.mrf.mxu0
        %8940 = vmatprep.mubr.f32.mxu0 0.0
        %8941 = vmatmul.mubr.f32.gmra.mxu0 %v6921
        %v8942 = vpop.f32.mrf.mxu0
        %v8943 = vadd.f32 %v8718, %v8942
        %v8944 = vpop.f32.mrf.mxu0
        %8945 = vmatprep.mubr.f32.mxu0 0.0
        %8946 = vmatmul.mubr.f32.gmra.mxu0 %v6922
        %v8947 = vpop.f32.mrf.mxu0
        %v8948 = vadd.f32 %v8723, %v8947
        %v8949 = vpop.f32.mrf.mxu0
        %8950 = vmatprep.mubr.f32.mxu0 0.0
        %8951 = vmatmul.mubr.f32.gmra.mxu0 %v6923
        %v8952 = vpop.f32.mrf.mxu0
        %v8953 = vadd.f32 %v8728, %v8952
        %v8954 = vpop.f32.mrf.mxu0
        %8955 = vmatprep.mubr.f32.mxu0 0.0
        %8956 = vmatmul.mubr.f32.gmra.mxu0 %v6924
        %v8957 = vpop.f32.mrf.mxu0
        %v8958 = vadd.f32 %v8733, %v8957
        %v8959 = vpop.f32.mrf.mxu0
        %8960 = vmatprep.mubr.f32.mxu0 0.0
        %8961 = vmatmul.mubr.f32.gmra.mxu0 %v6925
        %v8962 = vpop.f32.mrf.mxu0
        %v8963 = vadd.f32 %v8738, %v8962
        %v8964 = vpop.f32.mrf.mxu0
        %8965 = vmatprep.mubr.f32.mxu0 0.0
        %8966 = vmatmul.mubr.f32.gmra.mxu0 %v6926
        %v8967 = vpop.f32.mrf.mxu0
        %v8968 = vadd.f32 %v8743, %v8967
        %v8969 = vpop.f32.mrf.mxu0
        %8970 = vmatprep.mubr.f32.mxu0 0.0
        %8971 = vmatmul.mubr.f32.gmra.mxu0 %v6927
        %v8972 = vpop.f32.mrf.mxu0
        %v8973 = vadd.f32 %v8748, %v8972
        %v8974 = vpop.f32.mrf.mxu0
        %8975 = vmatprep.mubr.f32.mxu0 0.0
        %8976 = vmatmul.mubr.f32.gmra.mxu0 %v6928
        %v8977 = vpop.f32.mrf.mxu0
        %v8978 = vadd.f32 %v8753, %v8977
        %v8979 = vpop.f32.mrf.mxu0
        %8980 = vmatprep.mubr.f32.mxu0 0.0
        %8981 = vmatmul.mubr.f32.gmra.mxu0 %v6929
        %v8982 = vpop.f32.mrf.mxu0
        %v8983 = vadd.f32 %v8758, %v8982
        %v8984 = vpop.f32.mrf.mxu0
        %8985 = vmatprep.mubr.f32.mxu0 0.0
        %8986 = vmatmul.mubr.f32.gmra.mxu0 %v6930
        %v8987 = vpop.f32.mrf.mxu0
        %v8988 = vadd.f32 %v8763, %v8987
        %v8989 = vpop.f32.mrf.mxu0
        %8990 = vmatprep.mubr.f32.mxu0 0.0
        %8991 = vmatmul.mubr.f32.gmra.mxu0 %v6931
        %v8992 = vpop.f32.mrf.mxu0
        %v8993 = vadd.f32 %v8768, %v8992
        %v8994 = vpop.f32.mrf.mxu0
        %8995 = vmatprep.mubr.f32.mxu0 0.0
        %8996 = vmatmul.mubr.f32.gmra.mxu0 %v6932
        %v8997 = vpop.f32.mrf.mxu0
        %v8998 = vadd.f32 %v8773, %v8997
        %v8999 = vpop.f32.mrf.mxu0
        %9000 = vmatprep.mubr.f32.mxu0 0.0
        %9001 = vmatmul.mubr.f32.gmra.mxu0 %v6933
        %v9002 = vpop.f32.mrf.mxu0
        %v9003 = vadd.f32 %v8778, %v9002
        %v9004 = vpop.f32.mrf.mxu0
        %9005 = vmatprep.mubr.f32.mxu0 0.0
        %9006 = vmatmul.mubr.f32.gmra.mxu0 %v6934
        %v9007 = vpop.f32.mrf.mxu0
        %v9008 = vadd.f32 %v8783, %v9007
        %v9009 = vpop.f32.mrf.mxu0
        %9010 = vmatprep.mubr.f32.mxu0 0.0
        %9011 = vmatmul.mubr.f32.gmra.mxu0 %v6935
        %v9012 = vpop.f32.mrf.mxu0
        %v9013 = vadd.f32 %v8788, %v9012
        %v9014 = vpop.f32.mrf.mxu0
        %9015 = vmatprep.mubr.f32.mxu0 0.0
        %9016 = vmatmul.mubr.f32.gmra.mxu0 %v6936
        %v9017 = vpop.f32.mrf.mxu0
        %v9018 = vadd.f32 %v8793, %v9017
        %v9019 = vpop.f32.mrf.mxu0
        %9020 = vmatprep.mubr.f32.mxu0 0.0
        %9021 = vmatmul.mubr.f32.gmra.mxu0 %v6937
        %v9022 = vpop.f32.mrf.mxu0
        %v9023 = vadd.f32 %v8798, %v9022
        %v9024 = vpop.f32.mrf.mxu0
        %9025 = vdwg.mxu0
        %v9026 = vld [vmem:[#allocation10 + $0x400] sm:$0xff]
        %v9027 = vld [vmem:[#allocation10 + $0x408] sm:$0xff]
        %v9028 = vld [vmem:[#allocation10 + $0x410] sm:$0xff]
        %v9029 = vld [vmem:[#allocation10 + $0x418] sm:$0xff]
        %v9030 = vld [vmem:[#allocation10 + $0x420] sm:$0xff]
        %v9031 = vld [vmem:[#allocation10 + $0x428] sm:$0xff]
        %v9032 = vld [vmem:[#allocation10 + $0x430] sm:$0xff]
        %v9033 = vld [vmem:[#allocation10 + $0x438] sm:$0xff]
        %v9034 = vld [vmem:[#allocation10 + $0x440] sm:$0xff]
        %v9035 = vld [vmem:[#allocation10 + $0x448] sm:$0xff]
        %v9036 = vld [vmem:[#allocation10 + $0x450] sm:$0xff]
        %v9037 = vld [vmem:[#allocation10 + $0x458] sm:$0xff]
        %v9038 = vld [vmem:[#allocation10 + $0x460] sm:$0xff]
        %v9039 = vld [vmem:[#allocation10 + $0x468] sm:$0xff]
        %v9040 = vld [vmem:[#allocation10 + $0x470] sm:$0xff]
        %v9041 = vld [vmem:[#allocation10 + $0x478] sm:$0xff]
        %9042 = vmatprep.subr.mxu0 0.0
        %9043 = vmatpush1.msra.mxu0 %v9041
        %9044 = vmatprep.subr.mxu0 0.0
        %9045 = vmatpush1.msra.mxu0 %v9040
        %9046 = vmatprep.subr.mxu0 0.0
        %9047 = vmatpush1.msra.mxu0 %v9039
        %9048 = vmatprep.subr.mxu0 0.0
        %9049 = vmatpush1.msra.mxu0 %v9038
        %9050 = vmatprep.subr.mxu0 0.0
        %9051 = vmatpush1.msra.mxu0 %v9037
        %9052 = vmatprep.subr.mxu0 0.0
        %9053 = vmatpush1.msra.mxu0 %v9036
        %9054 = vmatprep.subr.mxu0 0.0
        %9055 = vmatpush1.msra.mxu0 %v9035
        %9056 = vmatprep.subr.mxu0 0.0
        %9057 = vmatpush1.msra.mxu0 %v9034
        %9058 = vmatprep.subr.mxu0 0.0
        %9059 = vmatpush1.msra.mxu0 %v9033
        %9060 = vmatprep.subr.mxu0 0.0
        %9061 = vmatpush1.msra.mxu0 %v9032
        %9062 = vmatprep.subr.mxu0 0.0
        %9063 = vmatpush1.msra.mxu0 %v9031
        %9064 = vmatprep.subr.mxu0 0.0
        %9065 = vmatpush1.msra.mxu0 %v9030
        %9066 = vmatprep.subr.mxu0 0.0
        %9067 = vmatpush1.msra.mxu0 %v9029
        %9068 = vmatprep.subr.mxu0 0.0
        %9069 = vmatpush1.msra.mxu0 %v9028
        %9070 = vmatprep.subr.mxu0 0.0
        %9071 = vmatpush1.msra.mxu0 %v9027
        %9072 = vmatprep.subr.mxu0 0.0
        %9073 = vmatpush1.msra.mxu0 %v9026
        %9074 = vmatprep.subr.mxu0 0.0
        %9075 = vmatpush2.msra.mxu0 0.0
        %9076 = vmatprep.subr.mxu0 0.0
        %9077 = vmatpush2.msra.mxu0 0.0
        %9078 = vmatprep.subr.mxu0 0.0
        %9079 = vmatpush2.msra.mxu0 0.0
        %9080 = vmatprep.subr.mxu0 0.0
        %9081 = vmatpush2.msra.mxu0 0.0
        %9082 = vmatprep.subr.mxu0 0.0
        %9083 = vmatpush2.msra.mxu0 0.0
        %9084 = vmatprep.subr.mxu0 0.0
        %9085 = vmatpush2.msra.mxu0 0.0
        %9086 = vmatprep.subr.mxu0 0.0
        %9087 = vmatpush2.msra.mxu0 0.0
        %9088 = vmatprep.subr.mxu0 0.0
        %9089 = vmatpush2.msra.mxu0 0.0
        %9090 = vmatprep.subr.mxu0 0.0
        %9091 = vmatpush2.msra.mxu0 0.0
        %9092 = vmatprep.subr.mxu0 0.0
        %9093 = vmatpush2.msra.mxu0 0.0
        %9094 = vmatprep.subr.mxu0 0.0
        %9095 = vmatpush2.msra.mxu0 0.0
        %9096 = vmatprep.subr.mxu0 0.0
        %9097 = vmatpush2.msra.mxu0 0.0
        %9098 = vmatprep.subr.mxu0 0.0
        %9099 = vmatpush2.msra.mxu0 0.0
        %9100 = vmatprep.subr.mxu0 0.0
        %9101 = vmatpush2.msra.mxu0 0.0
        %9102 = vmatprep.subr.mxu0 0.0
        %9103 = vmatpush2.msra.mxu0 0.0
        %9104 = vmatprep.subr.mxu0 0.0
        %9105 = vmatpush2.msra.mxu0 0.0
        %9106 = vmatprep.mubr.f32.mxu0 0.0
        %9107 = vmatmul.mubr.f32.gmra.mxu0 %v7002
        %v9108 = vpop.f32.mrf.mxu0
        %v9109 = vadd.f32 0.0, %v9108
        %v9110 = vpop.f32.mrf.mxu0
        %9111 = vmatprep.mubr.f32.mxu0 0.0
        %9112 = vmatmul.mubr.f32.gmra.mxu0 %v7003
        %v9113 = vpop.f32.mrf.mxu0
        %v9114 = vadd.f32 0.0, %v9113
        %v9115 = vpop.f32.mrf.mxu0
        %9116 = vmatprep.mubr.f32.mxu0 0.0
        %9117 = vmatmul.mubr.f32.gmra.mxu0 %v7004
        %v9118 = vpop.f32.mrf.mxu0
        %v9119 = vadd.f32 0.0, %v9118
        %v9120 = vpop.f32.mrf.mxu0
        %9121 = vmatprep.mubr.f32.mxu0 0.0
        %9122 = vmatmul.mubr.f32.gmra.mxu0 %v7005
        %v9123 = vpop.f32.mrf.mxu0
        %v9124 = vadd.f32 0.0, %v9123
        %v9125 = vpop.f32.mrf.mxu0
        %9126 = vmatprep.mubr.f32.mxu0 0.0
        %9127 = vmatmul.mubr.f32.gmra.mxu0 %v7006
        %v9128 = vpop.f32.mrf.mxu0
        %v9129 = vadd.f32 0.0, %v9128
        %v9130 = vpop.f32.mrf.mxu0
        %9131 = vmatprep.mubr.f32.mxu0 0.0
        %9132 = vmatmul.mubr.f32.gmra.mxu0 %v7007
        %v9133 = vpop.f32.mrf.mxu0
        %v9134 = vadd.f32 0.0, %v9133
        %v9135 = vpop.f32.mrf.mxu0
        %9136 = vmatprep.mubr.f32.mxu0 0.0
        %9137 = vmatmul.mubr.f32.gmra.mxu0 %v7008
        %v9138 = vpop.f32.mrf.mxu0
        %v9139 = vadd.f32 0.0, %v9138
        %v9140 = vpop.f32.mrf.mxu0
        %9141 = vmatprep.mubr.f32.mxu0 0.0
        %9142 = vmatmul.mubr.f32.gmra.mxu0 %v7009
        %v9143 = vpop.f32.mrf.mxu0
        %v9144 = vadd.f32 0.0, %v9143
        %v9145 = vpop.f32.mrf.mxu0
        %9146 = vmatprep.mubr.f32.mxu0 0.0
        %9147 = vmatmul.mubr.f32.gmra.mxu0 %v7010
        %v9148 = vpop.f32.mrf.mxu0
        %v9149 = vadd.f32 0.0, %v9148
        %v9150 = vpop.f32.mrf.mxu0
        %9151 = vmatprep.mubr.f32.mxu0 0.0
        %9152 = vmatmul.mubr.f32.gmra.mxu0 %v7011
        %v9153 = vpop.f32.mrf.mxu0
        %v9154 = vadd.f32 0.0, %v9153
        %v9155 = vpop.f32.mrf.mxu0
        %9156 = vmatprep.mubr.f32.mxu0 0.0
        %9157 = vmatmul.mubr.f32.gmra.mxu0 %v7012
        %v9158 = vpop.f32.mrf.mxu0
        %v9159 = vadd.f32 0.0, %v9158
        %v9160 = vpop.f32.mrf.mxu0
        %9161 = vmatprep.mubr.f32.mxu0 0.0
        %9162 = vmatmul.mubr.f32.gmra.mxu0 %v7013
        %v9163 = vpop.f32.mrf.mxu0
        %v9164 = vadd.f32 0.0, %v9163
        %v9165 = vpop.f32.mrf.mxu0
        %9166 = vmatprep.mubr.f32.mxu0 0.0
        %9167 = vmatmul.mubr.f32.gmra.mxu0 %v7014
        %v9168 = vpop.f32.mrf.mxu0
        %v9169 = vadd.f32 0.0, %v9168
        %v9170 = vpop.f32.mrf.mxu0
        %9171 = vmatprep.mubr.f32.mxu0 0.0
        %9172 = vmatmul.mubr.f32.gmra.mxu0 %v7015
        %v9173 = vpop.f32.mrf.mxu0
        %v9174 = vadd.f32 0.0, %v9173
        %v9175 = vpop.f32.mrf.mxu0
        %9176 = vmatprep.mubr.f32.mxu0 0.0
        %9177 = vmatmul.mubr.f32.gmra.mxu0 %v7016
        %v9178 = vpop.f32.mrf.mxu0
        %v9179 = vadd.f32 0.0, %v9178
        %v9180 = vpop.f32.mrf.mxu0
        %9181 = vmatprep.mubr.f32.mxu0 0.0
        %9182 = vmatmul.mubr.f32.gmra.mxu0 %v7017
        %v9183 = vpop.f32.mrf.mxu0
        %v9184 = vadd.f32 0.0, %v9183
        %v9185 = vpop.f32.mrf.mxu0
        %9186 = vmatprep.mubr.f32.mxu0 0.0
        %9187 = vmatmul.mubr.f32.gmra.mxu0 %v7018
        %v9188 = vpop.f32.mrf.mxu0
        %v9189 = vadd.f32 0.0, %v9188
        %v9190 = vpop.f32.mrf.mxu0
        %9191 = vmatprep.mubr.f32.mxu0 0.0
        %9192 = vmatmul.mubr.f32.gmra.mxu0 %v7019
        %v9193 = vpop.f32.mrf.mxu0
        %v9194 = vadd.f32 0.0, %v9193
        %v9195 = vpop.f32.mrf.mxu0
        %9196 = vmatprep.mubr.f32.mxu0 0.0
        %9197 = vmatmul.mubr.f32.gmra.mxu0 %v7020
        %v9198 = vpop.f32.mrf.mxu0
        %v9199 = vadd.f32 0.0, %v9198
        %v9200 = vpop.f32.mrf.mxu0
        %9201 = vmatprep.mubr.f32.mxu0 0.0
        %9202 = vmatmul.mubr.f32.gmra.mxu0 %v7021
        %v9203 = vpop.f32.mrf.mxu0
        %v9204 = vadd.f32 0.0, %v9203
        %v9205 = vpop.f32.mrf.mxu0
        %9206 = vmatprep.mubr.f32.mxu0 0.0
        %9207 = vmatmul.mubr.f32.gmra.mxu0 %v7022
        %v9208 = vpop.f32.mrf.mxu0
        %v9209 = vadd.f32 0.0, %v9208
        %v9210 = vpop.f32.mrf.mxu0
        %9211 = vmatprep.mubr.f32.mxu0 0.0
        %9212 = vmatmul.mubr.f32.gmra.mxu0 %v7023
        %v9213 = vpop.f32.mrf.mxu0
        %v9214 = vadd.f32 0.0, %v9213
        %v9215 = vpop.f32.mrf.mxu0
        %9216 = vmatprep.mubr.f32.mxu0 0.0
        %9217 = vmatmul.mubr.f32.gmra.mxu0 %v7024
        %v9218 = vpop.f32.mrf.mxu0
        %v9219 = vadd.f32 0.0, %v9218
        %v9220 = vpop.f32.mrf.mxu0
        %9221 = vmatprep.mubr.f32.mxu0 0.0
        %9222 = vmatmul.mubr.f32.gmra.mxu0 %v7025
        %v9223 = vpop.f32.mrf.mxu0
        %v9224 = vadd.f32 0.0, %v9223
        %v9225 = vpop.f32.mrf.mxu0
        %9226 = vmatprep.mubr.f32.mxu0 0.0
        %9227 = vmatmul.mubr.f32.gmra.mxu0 %v7026
        %v9228 = vpop.f32.mrf.mxu0
        %v9229 = vadd.f32 0.0, %v9228
        %v9230 = vpop.f32.mrf.mxu0
        %9231 = vmatprep.mubr.f32.mxu0 0.0
        %9232 = vmatmul.mubr.f32.gmra.mxu0 %v7027
        %v9233 = vpop.f32.mrf.mxu0
        %v9234 = vadd.f32 0.0, %v9233
        %v9235 = vpop.f32.mrf.mxu0
        %9236 = vmatprep.mubr.f32.mxu0 0.0
        %9237 = vmatmul.mubr.f32.gmra.mxu0 %v7028
        %v9238 = vpop.f32.mrf.mxu0
        %v9239 = vadd.f32 0.0, %v9238
        %v9240 = vpop.f32.mrf.mxu0
        %9241 = vmatprep.mubr.f32.mxu0 0.0
        %9242 = vmatmul.mubr.f32.gmra.mxu0 %v7029
        %v9243 = vpop.f32.mrf.mxu0
        %v9244 = vadd.f32 0.0, %v9243
        %v9245 = vpop.f32.mrf.mxu0
        %9246 = vmatprep.mubr.f32.mxu0 0.0
        %9247 = vmatmul.mubr.f32.gmra.mxu0 %v7030
        %v9248 = vpop.f32.mrf.mxu0
        %v9249 = vadd.f32 0.0, %v9248
        %v9250 = vpop.f32.mrf.mxu0
        %9251 = vmatprep.mubr.f32.mxu0 0.0
        %9252 = vmatmul.mubr.f32.gmra.mxu0 %v7031
        %v9253 = vpop.f32.mrf.mxu0
        %v9254 = vadd.f32 0.0, %v9253
        %v9255 = vpop.f32.mrf.mxu0
        %9256 = vmatprep.mubr.f32.mxu0 0.0
        %9257 = vmatmul.mubr.f32.gmra.mxu0 %v7032
        %v9258 = vpop.f32.mrf.mxu0
        %v9259 = vadd.f32 0.0, %v9258
        %v9260 = vpop.f32.mrf.mxu0
        %9261 = vmatprep.mubr.f32.mxu0 0.0
        %9262 = vmatmul.mubr.f32.gmra.mxu0 %v7033
        %v9263 = vpop.f32.mrf.mxu0
        %v9264 = vadd.f32 0.0, %v9263
        %v9265 = vpop.f32.mrf.mxu0
        %9266 = vdwg.mxu0
        %v9267 = vadd.f32 %v8868, %v9109
        %v9268 = vadd.f32 %v8873, %v9114
        %v9269 = vadd.f32 %v8878, %v9119
        %v9270 = vadd.f32 %v8883, %v9124
        %v9271 = vadd.f32 %v8888, %v9129
        %v9272 = vadd.f32 %v8893, %v9134
        %v9273 = vadd.f32 %v8898, %v9139
        %v9274 = vadd.f32 %v8903, %v9144
        %v9275 = vadd.f32 %v8908, %v9149
        %v9276 = vadd.f32 %v8913, %v9154
        %v9277 = vadd.f32 %v8918, %v9159
        %v9278 = vadd.f32 %v8923, %v9164
        %v9279 = vadd.f32 %v8928, %v9169
        %v9280 = vadd.f32 %v8933, %v9174
        %v9281 = vadd.f32 %v8938, %v9179
        %v9282 = vadd.f32 %v8943, %v9184
        %v9283 = vadd.f32 %v8948, %v9189
        %v9284 = vadd.f32 %v8953, %v9194
        %v9285 = vadd.f32 %v8958, %v9199
        %v9286 = vadd.f32 %v8963, %v9204
        %v9287 = vadd.f32 %v8968, %v9209
        %v9288 = vadd.f32 %v8973, %v9214
        %v9289 = vadd.f32 %v8978, %v9219
        %v9290 = vadd.f32 %v8983, %v9224
        %v9291 = vadd.f32 %v8988, %v9229
        %v9292 = vadd.f32 %v8993, %v9234
        %v9293 = vadd.f32 %v8998, %v9239
        %v9294 = vadd.f32 %v9003, %v9244
        %v9295 = vadd.f32 %v9008, %v9249
        %v9296 = vadd.f32 %v9013, %v9254
        %v9297 = vadd.f32 %v9018, %v9259
        %v9298 = vadd.f32 %v9023, %v9264
        %v9299 = vsel %vm3891, 0.0, %v7787
        %v9300 = vsel %vm3892, 0.0, %v7788
        %v9301 = vsel %vm3893, 0.0, %v7757
        %v9302 = vsel %vm3894, 0.0, %v7758
        %v9303 = vsel %vm3895, 0.0, %v7759
        %v9304 = vsel %vm3896, 0.0, %v7760
        %v9305 = vsel %vm3897, 0.0, %v7761
        %v9306 = vsel %vm3898, 0.0, %v7762
        %v9307 = vsel %vm3899, 0.0, %v7763
        %v9308 = vsel %vm3900, 0.0, %v7764
        %v9309 = vsel %vm3901, 0.0, %v7765
        %v9310 = vsel %vm3902, 0.0, %v7766
        %v9311 = vsel %vm3903, 0.0, %v7767
        %v9312 = vsel %vm3904, 0.0, %v7768
        %v9313 = vsel %vm3905, 0.0, %v7769
        %v9314 = vsel %vm3906, 0.0, %v7770
        %v9315 = vsel %vm3907, 0.0, %v7771
        %v9316 = vsel %vm3908, 0.0, %v7772
        %v9317 = vsel %vm3909, 0.0, %v7773
        %v9318 = vsel %vm3910, 0.0, %v7774
        %v9319 = vsel %vm3911, 0.0, %v7775
        %v9320 = vsel %vm3912, 0.0, %v7776
        %v9321 = vsel %vm3913, 0.0, %v7777
        %v9322 = vsel %vm3914, 0.0, %v7778
        %v9323 = vsel %vm3915, 0.0, %v7779
        %v9324 = vsel %vm3916, 0.0, %v7780
        %v9325 = vsel %vm3917, 0.0, %v7781
        %v9326 = vsel %vm3918, 0.0, %v7782
        %v9327 = vsel %vm3919, 0.0, %v7783
        %v9328 = vsel %vm3920, 0.0, %v7784
        %v9329 = vsel %vm3921, 0.0, %v7785
        %v9330 = vsel %vm3922, 0.0, %v7786
        %v9331 = vadd.f32 %v8512, %v9299
        %v9332 = vadd.f32 %v8513, %v9300
        %v9333 = vadd.f32 %v8514, %v9301
        %v9334 = vadd.f32 %v8515, %v9302
        %v9335 = vadd.f32 %v8516, %v9303
        %v9336 = vadd.f32 %v8517, %v9304
        %v9337 = vadd.f32 %v8518, %v9305
        %v9338 = vadd.f32 %v8519, %v9306
        %v9339 = vadd.f32 %v8520, %v9307
        %v9340 = vadd.f32 %v8521, %v9308
        %v9341 = vadd.f32 %v8522, %v9309
        %v9342 = vadd.f32 %v8523, %v9310
        %v9343 = vadd.f32 %v8524, %v9311
        %v9344 = vadd.f32 %v8525, %v9312
        %v9345 = vadd.f32 %v8526, %v9313
        %v9346 = vadd.f32 %v8527, %v9314
        %v9347 = vadd.f32 %v8528, %v9315
        %v9348 = vadd.f32 %v8529, %v9316
        %v9349 = vadd.f32 %v8530, %v9317
        %v9350 = vadd.f32 %v8531, %v9318
        %v9351 = vadd.f32 %v8532, %v9319
        %v9352 = vadd.f32 %v8533, %v9320
        %v9353 = vadd.f32 %v8534, %v9321
        %v9354 = vadd.f32 %v8535, %v9322
        %v9355 = vadd.f32 %v8536, %v9323
        %v9356 = vadd.f32 %v8537, %v9324
        %v9357 = vadd.f32 %v8538, %v9325
        %v9358 = vadd.f32 %v8539, %v9326
        %v9359 = vadd.f32 %v8540, %v9327
        %v9360 = vadd.f32 %v8541, %v9328
        %v9361 = vadd.f32 %v8542, %v9329
        %v9362 = vadd.f32 %v8543, %v9330
        %v9363 = vsel %vm4019, 0.0, %v9269
        %v9364 = vsel %vm4020, 0.0, %v9270
        %v9365 = vsel %vm4021, 0.0, %v9271
        %v9366 = vsel %vm4022, 0.0, %v9272
        %v9367 = vsel %vm4023, 0.0, %v9273
        %v9368 = vsel %vm4024, 0.0, %v9274
        %v9369 = vsel %vm4025, 0.0, %v9275
        %v9370 = vsel %vm4026, 0.0, %v9276
        %v9371 = vsel %vm4027, 0.0, %v9277
        %v9372 = vsel %vm4028, 0.0, %v9278
        %v9373 = vsel %vm4029, 0.0, %v9279
        %v9374 = vsel %vm4030, 0.0, %v9280
        %v9375 = vsel %vm4031, 0.0, %v9281
        %v9376 = vsel %vm4032, 0.0, %v9282
        %v9377 = vsel %vm4033, 0.0, %v9283
        %v9378 = vsel %vm4034, 0.0, %v9284
        %v9379 = vsel %vm4035, 0.0, %v9285
        %v9380 = vsel %vm4036, 0.0, %v9286
        %v9381 = vsel %vm4037, 0.0, %v9287
        %v9382 = vsel %vm4038, 0.0, %v9288
        %v9383 = vsel %vm4039, 0.0, %v9289
        %v9384 = vsel %vm4040, 0.0, %v9290
        %v9385 = vsel %vm4041, 0.0, %v9291
        %v9386 = vsel %vm4042, 0.0, %v9292
        %v9387 = vsel %vm4043, 0.0, %v9293
        %v9388 = vsel %vm4044, 0.0, %v9294
        %v9389 = vsel %vm4045, 0.0, %v9295
        %v9390 = vsel %vm4046, 0.0, %v9296
        %v9391 = vsel %vm4047, 0.0, %v9297
        %v9392 = vsel %vm4048, 0.0, %v9298
        %v9393 = vsel %vm4049, 0.0, %v9267
        %v9394 = vsel %vm4050, 0.0, %v9268
        %v9395 = vadd.f32 %v9331, %v9363
        %v9396 = vadd.f32 %v9332, %v9364
        %v9397 = vadd.f32 %v9333, %v9365
        %v9398 = vadd.f32 %v9334, %v9366
        %v9399 = vadd.f32 %v9335, %v9367
        %v9400 = vadd.f32 %v9336, %v9368
        %v9401 = vadd.f32 %v9337, %v9369
        %v9402 = vadd.f32 %v9338, %v9370
        %v9403 = vadd.f32 %v9339, %v9371
        %v9404 = vadd.f32 %v9340, %v9372
        %v9405 = vadd.f32 %v9341, %v9373
        %v9406 = vadd.f32 %v9342, %v9374
        %v9407 = vadd.f32 %v9343, %v9375
        %v9408 = vadd.f32 %v9344, %v9376
        %v9409 = vadd.f32 %v9345, %v9377
        %v9410 = vadd.f32 %v9346, %v9378
        %v9411 = vadd.f32 %v9347, %v9379
        %v9412 = vadd.f32 %v9348, %v9380
        %v9413 = vadd.f32 %v9349, %v9381
        %v9414 = vadd.f32 %v9350, %v9382
        %v9415 = vadd.f32 %v9351, %v9383
        %v9416 = vadd.f32 %v9352, %v9384
        %v9417 = vadd.f32 %v9353, %v9385
        %v9418 = vadd.f32 %v9354, %v9386
        %v9419 = vadd.f32 %v9355, %v9387
        %v9420 = vadd.f32 %v9356, %v9388
        %v9421 = vadd.f32 %v9357, %v9389
        %v9422 = vadd.f32 %v9358, %v9390
        %v9423 = vadd.f32 %v9359, %v9391
        %v9424 = vadd.f32 %v9360, %v9392
        %v9425 = vadd.f32 %v9361, %v9393
        %v9426 = vadd.f32 %v9362, %v9394
        %v9427 = vld [vmem:[%s7] sm:$0x1]
        %v9429 = vlaneseq
        %v9430 = vshrl.u32 %v9429, 7
        %v9431 = vsub.s32 0, %v9430
        %v9432 = vrot.slane %v9427, %v9431
        %v9434 = vadd.f32 %v9395, %v9432
        %v9435 = vadd.f32 %v9396, %v9432
        %v9436 = vadd.f32 %v9397, %v9432
        %v9437 = vadd.f32 %v9398, %v9432
        %v9438 = vadd.f32 %v9399, %v9432
        %v9439 = vadd.f32 %v9400, %v9432
        %v9440 = vadd.f32 %v9401, %v9432
        %v9441 = vadd.f32 %v9402, %v9432
        %v9442 = vadd.f32 %v9403, %v9432
        %v9443 = vadd.f32 %v9404, %v9432
        %v9444 = vadd.f32 %v9405, %v9432
        %v9445 = vadd.f32 %v9406, %v9432
        %v9446 = vadd.f32 %v9407, %v9432
        %v9447 = vadd.f32 %v9408, %v9432
        %v9448 = vadd.f32 %v9409, %v9432
        %v9449 = vadd.f32 %v9410, %v9432
        %v9450 = vadd.f32 %v9411, %v9432
        %v9451 = vadd.f32 %v9412, %v9432
        %v9452 = vadd.f32 %v9413, %v9432
        %v9453 = vadd.f32 %v9414, %v9432
        %v9454 = vadd.f32 %v9415, %v9432
        %v9455 = vadd.f32 %v9416, %v9432
        %v9456 = vadd.f32 %v9417, %v9432
        %v9457 = vadd.f32 %v9418, %v9432
        %v9458 = vadd.f32 %v9419, %v9432
        %v9459 = vadd.f32 %v9420, %v9432
        %v9460 = vadd.f32 %v9421, %v9432
        %v9461 = vadd.f32 %v9422, %v9432
        %v9462 = vadd.f32 %v9423, %v9432
        %v9463 = vadd.f32 %v9424, %v9432
        %v9464 = vadd.f32 %v9425, %v9432
        %v9465 = vadd.f32 %v9426, %v9432
        %v9466 = vmax.f32 %v9434, 0.0
        %v9467 = vmax.f32 %v9435, 0.0
        %v9468 = vmax.f32 %v9436, 0.0
        %v9469 = vmax.f32 %v9437, 0.0
        %v9470 = vmax.f32 %v9438, 0.0
        %v9471 = vmax.f32 %v9439, 0.0
        %v9472 = vmax.f32 %v9440, 0.0
        %v9473 = vmax.f32 %v9441, 0.0
        %v9474 = vmax.f32 %v9442, 0.0
        %v9475 = vmax.f32 %v9443, 0.0
        %v9476 = vmax.f32 %v9444, 0.0
        %v9477 = vmax.f32 %v9445, 0.0
        %v9478 = vmax.f32 %v9446, 0.0
        %v9479 = vmax.f32 %v9447, 0.0
        %v9480 = vmax.f32 %v9448, 0.0
        %v9481 = vmax.f32 %v9449, 0.0
        %v9482 = vmax.f32 %v9450, 0.0
        %v9483 = vmax.f32 %v9451, 0.0
        %v9484 = vmax.f32 %v9452, 0.0
        %v9485 = vmax.f32 %v9453, 0.0
        %v9486 = vmax.f32 %v9454, 0.0
        %v9487 = vmax.f32 %v9455, 0.0
        %v9488 = vmax.f32 %v9456, 0.0
        %v9489 = vmax.f32 %v9457, 0.0
        %v9490 = vmax.f32 %v9458, 0.0
        %v9491 = vmax.f32 %v9459, 0.0
        %v9492 = vmax.f32 %v9460, 0.0
        %v9493 = vmax.f32 %v9461, 0.0
        %v9494 = vmax.f32 %v9462, 0.0
        %v9495 = vmax.f32 %v9463, 0.0
        %v9496 = vmax.f32 %v9464, 0.0
        %v9497 = vmax.f32 %v9465, 0.0
        %9498 = vst [vmem:[%s406] sm:$0xff] %v9466
        %9499 = vst [vmem:[%s406 + $0x8] sm:$0xff] %v9467
        %9500 = vst [vmem:[%s406 + $0x10] sm:$0xff] %v9468
        %9501 = vst [vmem:[%s406 + $0x18] sm:$0xff] %v9469
        %9502 = vst [vmem:[%s406 + $0x20] sm:$0xff] %v9470
        %9503 = vst [vmem:[%s406 + $0x28] sm:$0xff] %v9471
        %9504 = vst [vmem:[%s406 + $0x30] sm:$0xff] %v9472
        %9505 = vst [vmem:[%s406 + $0x38] sm:$0xff] %v9473
        %9506 = vst [vmem:[%s406 + $0x40] sm:$0xff] %v9474
        %9507 = vst [vmem:[%s406 + $0x48] sm:$0xff] %v9475
        %9508 = vst [vmem:[%s406 + $0x50] sm:$0xff] %v9476
        %9509 = vst [vmem:[%s406 + $0x58] sm:$0xff] %v9477
        %9510 = vst [vmem:[%s406 + $0x60] sm:$0xff] %v9478
        %9511 = vst [vmem:[%s406 + $0x68] sm:$0xff] %v9479
        %9512 = vst [vmem:[%s406 + $0x70] sm:$0xff] %v9480
        %9513 = vst [vmem:[%s406 + $0x78] sm:$0xff] %v9481
        %9514 = vst [vmem:[%s406 + $0x80] sm:$0xff] %v9482
        %9515 = vst [vmem:[%s406 + $0x88] sm:$0xff] %v9483
        %9516 = vst [vmem:[%s406 + $0x90] sm:$0xff] %v9484
        %9517 = vst [vmem:[%s406 + $0x98] sm:$0xff] %v9485
        %9518 = vst [vmem:[%s406 + $0xa0] sm:$0xff] %v9486
        %9519 = vst [vmem:[%s406 + $0xa8] sm:$0xff] %v9487
        %9520 = vst [vmem:[%s406 + $0xb0] sm:$0xff] %v9488
        %9521 = vst [vmem:[%s406 + $0xb8] sm:$0xff] %v9489
        %9522 = vst [vmem:[%s406 + $0xc0] sm:$0xff] %v9490
        %9523 = vst [vmem:[%s406 + $0xc8] sm:$0xff] %v9491
        %9524 = vst [vmem:[%s406 + $0xd0] sm:$0xff] %v9492
        %9525 = vst [vmem:[%s406 + $0xd8] sm:$0xff] %v9493
        %9526 = vst [vmem:[%s406 + $0xe0] sm:$0xff] %v9494
        %9527 = vst [vmem:[%s406 + $0xe8] sm:$0xff] %v9495
        %9528 = vst [vmem:[%s406 + $0xf0] sm:$0xff] %v9496
        %9529 = vst [vmem:[%s406 + $0xf8] sm:$0xff] %v9497
        %s9530 = sand.u32 %s215, 1
        %s9531 = scalar_lea.sflag [#allocation4], %s9530
        %s9532 = sand.u32 %s215, 1
        %s9533 = smul.addr %s9532, 256
        %s9534 = scalar_lea.vmem [#allocation11], %s9533
        // Predicated region
        $region73: #{tpu_custom_call.1} parent=51 // pred_check
          %p9535 = pneg %p225
        $region74: #{tpu_custom_call.1} parent=51 // pred_check_branch
          %9537 = sbr.rel (%p9535) target = $region76
        $region75: #{tpu_custom_call.1} parent=51 // pred_region
          %s9539 = ssub.s32 4096, 4096
          %9540 = vsyncadd %s9531, %s9539
          %s9541 = smul.addr %s29, 32
          %s9542 = smul.addr %s9541, 128
          %s9543 = scalar_lea.hbm %s8, %s9542
          %s9544 = sshll.u32 %s9534, 4
          %s9545 = int_to_ptr.vmem [resolvable:$true] %s9544
          %9550 = dma.vmem_to_hbm [thread:$0]  %s9545, 4096, %s9543, %s9531, 128, 128, 8
        $region76: #{tpu_custom_call.1} parent=51 // pred_fallthru
          _
      $region52: #{tpu_custom_call.1} parent=5 // pred_fallthru
        _
      %p9551 = scmp.le.s32.totalorder 2, %s24
      // Predicated region
      $region77: #{tpu_custom_call.1} parent=5 // pred_check
        %p9552 = pneg %p9551
      $region78: #{tpu_custom_call.1} parent=5 // pred_check_branch
        %9554 = sbr.rel (%p9552) target = $region80
      $region79: #{tpu_custom_call.1} parent=5 // pred_region
        %s9555 = ssub.s32 %s24, 2
        // Predicated region
        $region81: #{tpu_custom_call.1} parent=79 // pred_check
          %p9556 = pneg %p231
        $region82: #{tpu_custom_call.1} parent=79 // pred_check_branch
          %9558 = sbr.rel (%p9556) target = $region84
        $region83: #{tpu_custom_call.1} parent=79 // pred_region
          %s9559 = sand.u32 %s216, 1
          %s9560 = scalar_lea.sflag [#allocation4], %s9559
          %s9561 = sand.u32 %s216, 1
          %s9562 = smul.addr %s9561, 256
          %s9563 = scalar_lea.vmem [#allocation11], %s9562
          %9564 = dma.done %s9560, 4096
        $region84: #{tpu_custom_call.1} parent=79 // pred_fallthru
          _
      $region80: #{tpu_custom_call.1} parent=5 // pred_fallthru
        _
    $region6: #{tpu_custom_call.1} parent=1 // loop_footer
      %s28 = sadd.s32 1, %s24
    $region7: #{tpu_custom_call.1} parent=1 // loop_footer_branch
      %23 = sbr.rel target = $region3
    $region8: #{tpu_custom_call.1} parent=1 // loop_exit
      _
    %9565 = vsyncpa [#allocation3], 1
    %s9566 = scalar_lea.sflag [#allocation3], 1
    %9567 = vsyncpa %s9566, 1
    %9568 = vsyncpa [#allocation6], 1
    %s9569 = scalar_lea.sflag [#allocation6], 1
    %9570 = vsyncpa %s9569, 1
    %9571 = vsyncpa [#allocation9], 1
    %9572 = vsyncpa [#allocation4], 1
    %s9573 = scalar_lea.sflag [#allocation4], 1
    %9574 = vsyncpa %s9573, 1

</llo_original>
